<compile_context>
chip_gen: v7x
topology: tpu7x:2x2x1
jax: 0.10.0
libtpu: 0.0.40
codegen_flags: <defaults>
</compile_context>

<pallas_src>
import functools

import jax
import jax.numpy as jnp
import numpy as np
from jax.experimental import pallas as pl
from jax.experimental.pallas import tpu as pltpu


# ----------------------------------------------------------------------------
# Pallas kernel: one grid step == one batch element.  Fuses conv1+ReLU, conv2,
# channel attention, spatial attention, gating and the residual add.
# ----------------------------------------------------------------------------
def _afrm_kernel(H, W, C, Wpad, col0,
                 x_ref, w1_ref, b1_ref, w2_ref, b2_ref,
                 wc1_ref, bc1_ref, wc2_ref, bc2_ref, ws_ref,
                 o_ref,
                 xp_ref, y1p_ref, y2p_ref, y2_ref):
    HW = H * W
    bf16 = jnp.bfloat16

    # ---- re-zero only the halo of the padded bf16 scratches --------------------
    # Interiors (rows 1..H, cols col0..col0+W-1) are fully rewritten every step.
    # The halo (pad rows 0 / H+1 and the zero column slabs either side of the
    # data, which provide the 3x3 "SAME" zero padding) is re-zeroed every step:
    # the scratch is per-core and uninitialized, and gating on program_id(0)==0
    # would be unsafe when the "parallel" batch axis is sharded across cores.
    # All stores below are 16-row (bf16 tile) aligned.
    zrow = jnp.zeros((Wpad, C), bf16)
    zside = jnp.zeros((H, col0, C), bf16)
    for ref in (xp_ref, y1p_ref, y2p_ref):
        ref[0, :, :] = zrow
        ref[H + 1, :, :] = zrow
        ref[1:1 + H, 0:col0, :] = zside
        ref[1:1 + H, col0 + W:Wpad, :] = zside

    # ---- stage the input interior once, cast to bf16 (MXU operand) -------------
    xp_ref[1:1 + H, col0:col0 + W, :] = x_ref[0].astype(bf16)

    # ---- K-packed 3x3 "SAME" conv ----------------------------------------------
    # For each horizontal tap dx, the three vertical taps are concatenated along
    # the MXU K axis (K = 3*C), so the whole conv is 3 bf16 matmuls whose f32
    # results are summed in vregs (no VMEM accumulator RMW -> MRB-friendly on
    # v7x, minimal store-slot pressure on v5e).
    def conv3x3(src_ref, wk_ref):
        acc = None
        for dx in range(3):
            c = col0 - 1 + dx
            blk = src_ref[:, c:c + W, :]                          # (H+2, W, C) bf16
            patch = jnp.concatenate(
                [blk[0:H], blk[1:1 + H], blk[2:2 + H]], axis=-1)  # (H, W, 3C)
            d = jnp.dot(patch.reshape(HW, 3 * C), wk_ref[dx],
                        preferred_element_type=jnp.float32)       # (HW, C) f32
            acc = d if acc is None else acc + d
        return acc

    # ---- conv_start_1 (3x3, C->C) + bias + ReLU -> bf16 y1 interior ------------
    y1 = jnp.maximum(conv3x3(xp_ref, w1_ref) + b1_ref[...], 0.0)
    y1p_ref[1:1 + H, col0:col0 + W, :] = y1.reshape(H, W, C).astype(bf16)

    # ---- conv_start_2 (3x3, C->C) + bias ----------------------------------------
    # y2 kept in an f32 scratch (GAP / gating need full precision); the bf16 copy
    # feeds the spatial-attention conv.
    y2 = conv3x3(y1p_ref, w2_ref) + b2_ref[...]                   # (HW, C) f32
    y2_ref[...] = y2
    y2p_ref[1:1 + H, col0:col0 + W, :] = y2.reshape(H, W, C).astype(bf16)

    # ---- channel attention: GAP -> 1x1 -> LeakyReLU(0.01) -> 1x1 -> sigmoid ----
    pooled = jnp.mean(y2, axis=0, keepdims=True)                  # (1, C) f32
    h = jnp.dot(pooled, wc1_ref[...],
                preferred_element_type=jnp.float32) + bc1_ref[...]
    h = jnp.where(h > 0, h, 0.01 * h)                             # LeakyReLU
    a = jnp.dot(h, wc2_ref[...],
                preferred_element_type=jnp.float32) + bc2_ref[...]
    chan = jax.nn.sigmoid(a)                                      # (1, C)

    # ---- spatial attention: 3x3 conv C->1 on VPU + one lane reduce --------------
    # Per-tap f32 multiply-accumulate with the (1, C) weight row, then a single
    # last-axis (lane) reduce; keeps this 1-channel conv off the MXU entirely.
    sacc = None
    for dy in range(3):
        for dx in range(3):
            c = col0 - 1 + dx
            p = y2p_ref[dy:dy + H, c:c + W, :].astype(jnp.float32)   # (H, W, C)
            t = p * ws_ref[dy * 3 + dx]                              # * (1, C)
            sacc = t if sacc is None else sacc + t
    spat = jnp.sum(sacc, axis=-1, keepdims=True)                  # (H, W, 1)

    # ---- combine, gate, residual (input re-read here, not kept live) -----------
    comb = chan.reshape(1, 1, C) + spat                           # (H, W, C)
    o_ref[0] = x_ref[0] + y2_ref[...].reshape(H, W, C) * comb


# ----------------------------------------------------------------------------
# Wrapper: NCHW <-> NHWC plumbing + pallas_call setup.
# ----------------------------------------------------------------------------
def afrm_forward(x_nchw, kparams):
    w1k, b1, w2k, b2, wc1, bc1, wc2, bc2, ws = kparams
    B, C, H, W = x_nchw.shape
    Cmid = wc1.shape[1]
    assert C == 128, "demo kernel maps channels onto the 128-lane axis"
    assert W % 8 == 0, "demo kernel assumes a sublane-aligned width"
    # TODO(synk): C=2048 (the module's real width) needs channel-tiled
    # reduction grid axes + explicit vmem_limit_bytes; demo keeps C = 128.

    col0 = 16                        # bf16-tile aligned data column offset
    Wpad = W + 2 * col0              # zero slabs left/right provide conv padding
    Hp = H + 2

    x = jnp.transpose(x_nchw, (0, 2, 3, 1))                       # NHWC

    kernel = functools.partial(_afrm_kernel, H, W, C, Wpad, col0)

    def rep_spec(shape):
        return pl.BlockSpec(shape, lambda b: (0,) * len(shape))

    flops = int(B * (2 * 3 * 2 * H * W * (3 * C) * C          # two K-packed convs
                     + 9 * 2 * H * W * C                       # spatial conv (VPU)
                     + 4 * C * Cmid                            # channel attention
                     + 6 * H * W * C))                         # elementwise
    bytes_accessed = int(2 * x.size * 4
                         + sum(int(p.size) * p.dtype.itemsize for p in kparams))

    out_nhwc = pl.pallas_call(
        kernel,
        out_shape=jax.ShapeDtypeStruct((B, H, W, C), jnp.float32),
        grid_spec=pltpu.PrefetchScalarGridSpec(
            num_scalar_prefetch=0,
            grid=(B,),
            in_specs=[
                pl.BlockSpec((1, H, W, C), lambda b: (b, 0, 0, 0)),  # input, f32
                rep_spec((3, 3 * C, C)),   # conv1 weight, K-stacked per dx, bf16
                rep_spec((1, C)),          # conv1 bias, f32
                rep_spec((3, 3 * C, C)),   # conv2 weight, bf16
                rep_spec((1, C)),          # conv2 bias, f32
                rep_spec((C, Cmid)),       # chan-attn 1x1 #1, f32
                rep_spec((1, Cmid)),
                rep_spec((Cmid, C)),       # chan-attn 1x1 #2, f32
                rep_spec((1, C)),
                rep_spec((9, 1, C)),       # spatial 3x3 conv weights, f32
            ],
            out_specs=pl.BlockSpec((1, H, W, C), lambda b: (b, 0, 0, 0)),
            scratch_shapes=[
                pltpu.VMEM((Hp, Wpad, C), jnp.bfloat16),   # padded x  (bf16)
                pltpu.VMEM((Hp, Wpad, C), jnp.bfloat16),   # padded y1 (bf16)
                pltpu.VMEM((Hp, Wpad, C), jnp.bfloat16),   # padded y2 (bf16)
                pltpu.VMEM((H * W, C), jnp.float32),       # y2 (f32, GAP/gating)
            ],
        ),
        compiler_params=pltpu.CompilerParams(dimension_semantics=("parallel",)),
        cost_estimate=pl.CostEstimate(flops=flops,
                                      transcendentals=int(B * C),
                                      bytes_accessed=bytes_accessed),
    )(x, w1k, b1, w2k, b2, wc1, bc1, wc2, bc2, ws)

    return jnp.transpose(out_nhwc, (0, 3, 1, 2))                  # back to NCHW


# ----------------------------------------------------------------------------
# Deterministic parameter init (shapes follow the module's __init__).
# ----------------------------------------------------------------------------
def init_params(key, C, red):
    Cmid = C // red
    ks = jax.random.split(key, 9)
    s3 = 1.0 / np.sqrt(9.0 * C)
    w1_hwio = jax.random.normal(ks[0], (3, 3, C, C), jnp.float32) * s3
    b1 = jax.random.normal(ks[1], (C,), jnp.float32) * 0.01
    w2_hwio = jax.random.normal(ks[2], (3, 3, C, C), jnp.float32) * s3
    b2 = jax.random.normal(ks[3], (C,), jnp.float32) * 0.01
    wc1 = jax.random.normal(ks[4], (C, Cmid), jnp.float32) * (1.0 / np.sqrt(C))
    bc1 = jax.random.normal(ks[5], (Cmid,), jnp.float32) * 0.01
    wc2 = jax.random.normal(ks[6], (Cmid, C), jnp.float32) * (1.0 / np.sqrt(Cmid))
    bc2 = jax.random.normal(ks[7], (C,), jnp.float32) * 0.01
    ws_hwio = jax.random.normal(ks[8], (3, 3, C, 1), jnp.float32) * s3

    hwio_params = (w1_hwio, b1, w2_hwio, b2, wc1, bc1, wc2, bc2, ws_hwio)

    # K-stacked conv weights: per dx, rows are [dy=0 | dy=1 | dy=2] C-blocks.
    def kstack(w_hwio):
        return jnp.transpose(w_hwio, (1, 0, 2, 3)).reshape(3, 3 * C, C)

    kernel_params = (
        kstack(w1_hwio).astype(jnp.bfloat16), b1.reshape(1, C),
        kstack(w2_hwio).astype(jnp.bfloat16), b2.reshape(1, C),
        wc1, bc1.reshape(1, Cmid),
        wc2, bc2.reshape(1, C),
        ws_hwio.reshape(9, C).reshape(9, 1, C),          # f32, row k = (dy*3+dx)
    )
    return hwio_params, kernel_params


# ----------------------------------------------------------------------------
# Pure-JAX reference (mirrors the PyTorch forward with the same bf16-operand /
# f32-accumulate conv policy the kernel uses) for correctness checking.
# ----------------------------------------------------------------------------
def ref_forward(x_nchw, hwio_params):
    w1, b1, w2, b2, wc1, bc1, wc2, bc2, ws = hwio_params
    x = jnp.transpose(x_nchw, (0, 2, 3, 1))                       # NHWC
    dn = ("NHWC", "HWIO", "NHWC")

    def conv_bf16(inp, w):
        return jax.lax.conv_general_dilated(
            inp.astype(jnp.bfloat16), w.astype(jnp.bfloat16), (1, 1), "SAME",
            dimension_numbers=dn, preferred_element_type=jnp.float32)

    y1 = jax.nn.relu(conv_bf16(x, w1) + b1)
    y2 = conv_bf16(y1, w2) + b2
    pooled = jnp.mean(y2, axis=(1, 2))                            # (B, C)
    h = jax.nn.leaky_relu(pooled @ wc1 + bc1, negative_slope=0.01)
    chan = jax.nn.sigmoid(h @ wc2 + bc2)                          # (B, C)
    # Kernel stores y2 as bf16 and does the 1-channel conv in f32 with f32 weights.
    y2q = y2.astype(jnp.bfloat16).astype(jnp.float32)
    spat = jax.lax.conv_general_dilated(
        y2q, ws, (1, 1), "SAME", dimension_numbers=dn,
        precision=jax.lax.Precision.HIGHEST,
        preferred_element_type=jnp.float32)                       # (B, H, W, 1)
    comb = chan[:, None, None, :] + spat
    out = x + y2 * comb
    return jnp.transpose(out, (0, 3, 1, 2))                       # NCHW


if __name__ == "__main__":
    B, C, H, W, red = 2, 128, 16, 16, 16
    key = jax.random.PRNGKey(0)
    kx, kp = jax.random.split(key)
    x = jax.random.normal(kx, (B, C, H, W), jnp.float32)
    hwio_params, kernel_params = init_params(kp, C, red)

    out = afrm_forward(x, kernel_params)
    out = jax.block_until_ready(out)

    ref = ref_forward(x, hwio_params)
    assert out.shape == x.shape and out.dtype == jnp.float32
    np.testing.assert_allclose(np.asarray(out), np.asarray(ref),
                               rtol=3e-3, atol=3e-3)
    print("KERNEL_OK")
</pallas_src>

<mosaic_0001>
module attributes {stable_mosaic.version = 11 : i64} {
  func.func @_afrm_kernel(%arg0: i32, %arg1: memref<1x16x16x128xf32, #tpu.memory_space<vmem>>, %arg2: memref<3x384x128xbf16, #tpu.memory_space<vmem>>, %arg3: memref<1x128xf32, #tpu.memory_space<vmem>>, %arg4: memref<3x384x128xbf16, #tpu.memory_space<vmem>>, %arg5: memref<1x128xf32, #tpu.memory_space<vmem>>, %arg6: memref<128x8xf32, #tpu.memory_space<vmem>>, %arg7: memref<1x8xf32, #tpu.memory_space<vmem>>, %arg8: memref<8x128xf32, #tpu.memory_space<vmem>>, %arg9: memref<1x128xf32, #tpu.memory_space<vmem>>, %arg10: memref<9x1x128xf32, #tpu.memory_space<vmem>>, %arg11: memref<1x16x16x128xf32, #tpu.memory_space<vmem>>, %arg12: memref<18x48x128xbf16, #tpu.memory_space<vmem>>, %arg13: memref<18x48x128xbf16, #tpu.memory_space<vmem>>, %arg14: memref<18x48x128xbf16, #tpu.memory_space<vmem>>, %arg15: memref<256x128xf32, #tpu.memory_space<vmem>>) attributes {dimension_semantics = [#tpu.dimension_semantics<parallel>], iteration_bounds = array<i64: 2>, scalar_prefetch = 0 : i64, scratch_operands = 4 : i64, tpu.core_type = #tpu.core_type<tc>, window_params = [{transform_indices = @transform_0, window_bounds = array<i64: 1, 16, 16, 128>}, {pipeline_mode = #tpu.pipeline_mode<synchronous>, transform_indices = @transform_1, window_bounds = array<i64: 3, 384, 128>}, {pipeline_mode = #tpu.pipeline_mode<synchronous>, transform_indices = @transform_2, window_bounds = array<i64: 1, 128>}, {pipeline_mode = #tpu.pipeline_mode<synchronous>, transform_indices = @transform_3, window_bounds = array<i64: 3, 384, 128>}, {pipeline_mode = #tpu.pipeline_mode<synchronous>, transform_indices = @transform_4, window_bounds = array<i64: 1, 128>}, {pipeline_mode = #tpu.pipeline_mode<synchronous>, transform_indices = @transform_5, window_bounds = array<i64: 128, 8>}, {pipeline_mode = #tpu.pipeline_mode<synchronous>, transform_indices = @transform_6, window_bounds = array<i64: 1, 8>}, {pipeline_mode = #tpu.pipeline_mode<synchronous>, transform_indices = @transform_7, window_bounds = array<i64: 8, 128>}, {pipeline_mode = #tpu.pipeline_mode<synchronous>, transform_indices = @transform_8, window_bounds = array<i64: 1, 128>}, {pipeline_mode = #tpu.pipeline_mode<synchronous>, transform_indices = @transform_9, window_bounds = array<i64: 9, 1, 128>}, {transform_indices = @transform_10, window_bounds = array<i64: 1, 16, 16, 128>}]} {
    %cst = arith.constant 0.000000e+00 : bf16
    %0 = vector.broadcast %cst : bf16 to vector<48x128xbf16>
    %cst_0 = arith.constant 0.000000e+00 : bf16
    %1 = vector.broadcast %cst_0 : bf16 to vector<16x16x128xbf16>
    %c0 = arith.constant 0 : index
    %c0_1 = arith.constant 0 : index
    %c0_2 = arith.constant 0 : index
    %2 = vector.load %arg12[%c0, %c0_1, %c0_2] : memref<18x48x128xbf16, #tpu.memory_space<vmem>>, vector<1x48x128xbf16>
    %3 = vector.shape_cast %2 : vector<1x48x128xbf16> to vector<48x128xbf16>
    %4 = vector.shape_cast %0 : vector<48x128xbf16> to vector<1x48x128xbf16>
    tpu.vector_store %arg12[%c0, %c0_1, %c0_2], %4 {strides = array<i32>} : memref<18x48x128xbf16, #tpu.memory_space<vmem>>, vector<1x48x128xbf16>,
    %c17 = arith.constant 17 : index
    %c0_3 = arith.constant 0 : index
    %c0_4 = arith.constant 0 : index
    %5 = vector.load %arg12[%c17, %c0_3, %c0_4] : memref<18x48x128xbf16, #tpu.memory_space<vmem>>, vector<1x48x128xbf16>
    %6 = vector.shape_cast %5 : vector<1x48x128xbf16> to vector<48x128xbf16>
    %7 = vector.shape_cast %0 : vector<48x128xbf16> to vector<1x48x128xbf16>
    tpu.vector_store %arg12[%c17, %c0_3, %c0_4], %7 {strides = array<i32>} : memref<18x48x128xbf16, #tpu.memory_space<vmem>>, vector<1x48x128xbf16>,
    %c1 = arith.constant 1 : index
    %c0_5 = arith.constant 0 : index
    %c0_6 = arith.constant 0 : index
    %8 = vector.load %arg12[%c1, %c0_5, %c0_6] : memref<18x48x128xbf16, #tpu.memory_space<vmem>>, vector<16x16x128xbf16>
    tpu.vector_store %arg12[%c1, %c0_5, %c0_6], %1 {strides = array<i32>} : memref<18x48x128xbf16, #tpu.memory_space<vmem>>, vector<16x16x128xbf16>,
    %c1_7 = arith.constant 1 : index
    %c32 = arith.constant 32 : index
    %c0_8 = arith.constant 0 : index
    %9 = vector.load %arg12[%c1_7, %c32, %c0_8] : memref<18x48x128xbf16, #tpu.memory_space<vmem>>, vector<16x16x128xbf16>
    tpu.vector_store %arg12[%c1_7, %c32, %c0_8], %1 {strides = array<i32>} : memref<18x48x128xbf16, #tpu.memory_space<vmem>>, vector<16x16x128xbf16>,
    %c0_9 = arith.constant 0 : index
    %c0_10 = arith.constant 0 : index
    %c0_11 = arith.constant 0 : index
    %10 = vector.load %arg13[%c0_9, %c0_10, %c0_11] : memref<18x48x128xbf16, #tpu.memory_space<vmem>>, vector<1x48x128xbf16>
    %11 = vector.shape_cast %10 : vector<1x48x128xbf16> to vector<48x128xbf16>
    %12 = vector.shape_cast %0 : vector<48x128xbf16> to vector<1x48x128xbf16>
    tpu.vector_store %arg13[%c0_9, %c0_10, %c0_11], %12 {strides = array<i32>} : memref<18x48x128xbf16, #tpu.memory_space<vmem>>, vector<1x48x128xbf16>,
    %c17_12 = arith.constant 17 : index
    %c0_13 = arith.constant 0 : index
    %c0_14 = arith.constant 0 : index
    %13 = vector.load %arg13[%c17_12, %c0_13, %c0_14] : memref<18x48x128xbf16, #tpu.memory_space<vmem>>, vector<1x48x128xbf16>
    %14 = vector.shape_cast %13 : vector<1x48x128xbf16> to vector<48x128xbf16>
    %15 = vector.shape_cast %0 : vector<48x128xbf16> to vector<1x48x128xbf16>
    tpu.vector_store %arg13[%c17_12, %c0_13, %c0_14], %15 {strides = array<i32>} : memref<18x48x128xbf16, #tpu.memory_space<vmem>>, vector<1x48x128xbf16>,
    %c1_15 = arith.constant 1 : index
    %c0_16 = arith.constant 0 : index
    %c0_17 = arith.constant 0 : index
    %16 = vector.load %arg13[%c1_15, %c0_16, %c0_17] : memref<18x48x128xbf16, #tpu.memory_space<vmem>>, vector<16x16x128xbf16>
    tpu.vector_store %arg13[%c1_15, %c0_16, %c0_17], %1 {strides = array<i32>} : memref<18x48x128xbf16, #tpu.memory_space<vmem>>, vector<16x16x128xbf16>,
    %c1_18 = arith.constant 1 : index
    %c32_19 = arith.constant 32 : index
    %c0_20 = arith.constant 0 : index
    %17 = vector.load %arg13[%c1_18, %c32_19, %c0_20] : memref<18x48x128xbf16, #tpu.memory_space<vmem>>, vector<16x16x128xbf16>
    tpu.vector_store %arg13[%c1_18, %c32_19, %c0_20], %1 {strides = array<i32>} : memref<18x48x128xbf16, #tpu.memory_space<vmem>>, vector<16x16x128xbf16>,
    %c0_21 = arith.constant 0 : index
    %c0_22 = arith.constant 0 : index
    %c0_23 = arith.constant 0 : index
    %18 = vector.load %arg14[%c0_21, %c0_22, %c0_23] : memref<18x48x128xbf16, #tpu.memory_space<vmem>>, vector<1x48x128xbf16>
    %19 = vector.shape_cast %18 : vector<1x48x128xbf16> to vector<48x128xbf16>
    %20 = vector.shape_cast %0 : vector<48x128xbf16> to vector<1x48x128xbf16>
    tpu.vector_store %arg14[%c0_21, %c0_22, %c0_23], %20 {strides = array<i32>} : memref<18x48x128xbf16, #tpu.memory_space<vmem>>, vector<1x48x128xbf16>,
    %c17_24 = arith.constant 17 : index
    %c0_25 = arith.constant 0 : index
    %c0_26 = arith.constant 0 : index
    %21 = vector.load %arg14[%c17_24, %c0_25, %c0_26] : memref<18x48x128xbf16, #tpu.memory_space<vmem>>, vector<1x48x128xbf16>
    %22 = vector.shape_cast %21 : vector<1x48x128xbf16> to vector<48x128xbf16>
    %23 = vector.shape_cast %0 : vector<48x128xbf16> to vector<1x48x128xbf16>
    tpu.vector_store %arg14[%c17_24, %c0_25, %c0_26], %23 {strides = array<i32>} : memref<18x48x128xbf16, #tpu.memory_space<vmem>>, vector<1x48x128xbf16>,
    %c1_27 = arith.constant 1 : index
    %c0_28 = arith.constant 0 : index
    %c0_29 = arith.constant 0 : index
    %24 = vector.load %arg14[%c1_27, %c0_28, %c0_29] : memref<18x48x128xbf16, #tpu.memory_space<vmem>>, vector<16x16x128xbf16>
    tpu.vector_store %arg14[%c1_27, %c0_28, %c0_29], %1 {strides = array<i32>} : memref<18x48x128xbf16, #tpu.memory_space<vmem>>, vector<16x16x128xbf16>,
    %c1_30 = arith.constant 1 : index
    %c32_31 = arith.constant 32 : index
    %c0_32 = arith.constant 0 : index
    %25 = vector.load %arg14[%c1_30, %c32_31, %c0_32] : memref<18x48x128xbf16, #tpu.memory_space<vmem>>, vector<16x16x128xbf16>
    tpu.vector_store %arg14[%c1_30, %c32_31, %c0_32], %1 {strides = array<i32>} : memref<18x48x128xbf16, #tpu.memory_space<vmem>>, vector<16x16x128xbf16>,
    %c0_33 = arith.constant 0 : index
    %c0_34 = arith.constant 0 : index
    %c0_35 = arith.constant 0 : index
    %c0_36 = arith.constant 0 : index
    %26 = vector.load %arg1[%c0_33, %c0_34, %c0_35, %c0_36] : memref<1x16x16x128xf32, #tpu.memory_space<vmem>>, vector<1x16x16x128xf32>
    %27 = vector.shape_cast %26 : vector<1x16x16x128xf32> to vector<16x16x128xf32>
    %28 = arith.truncf %27 : vector<16x16x128xf32> to vector<16x16x128xbf16>
    %c1_37 = arith.constant 1 : index
    %c16 = arith.constant 16 : index
    %c0_38 = arith.constant 0 : index
    %29 = vector.load %arg12[%c1_37, %c16, %c0_38] : memref<18x48x128xbf16, #tpu.memory_space<vmem>>, vector<16x16x128xbf16>
    tpu.vector_store %arg12[%c1_37, %c16, %c0_38], %28 {strides = array<i32>} : memref<18x48x128xbf16, #tpu.memory_space<vmem>>, vector<16x16x128xbf16>,
    %c0_39 = arith.constant 0 : index
    %c15 = arith.constant 15 : index
    %c0_40 = arith.constant 0 : index
    %30 = vector.load %arg12[%c0_39, %c15, %c0_40] : memref<18x48x128xbf16, #tpu.memory_space<vmem>>, vector<18x16x128xbf16>
    %31 = vector.extract_strided_slice %30 {offsets = [0, 0, 0], sizes = [16, 16, 128], strides = [1, 1, 1]} : vector<18x16x128xbf16> to vector<16x16x128xbf16>
    %32 = vector.extract_strided_slice %30 {offsets = [1, 0, 0], sizes = [16, 16, 128], strides = [1, 1, 1]} : vector<18x16x128xbf16> to vector<16x16x128xbf16>
    %33 = vector.extract_strided_slice %30 {offsets = [2, 0, 0], sizes = [16, 16, 128], strides = [1, 1, 1]} : vector<18x16x128xbf16> to vector<16x16x128xbf16>
    %34 = tpu.concatenate %31, %32, %33 in 2 : vector<16x16x128xbf16>, vector<16x16x128xbf16>, vector<16x16x128xbf16> -> vector<16x16x384xbf16>
    %35 = vector.shape_cast %34 : vector<16x16x384xbf16> to vector<256x384xbf16>
    %c0_41 = arith.constant 0 : index
    %c0_42 = arith.constant 0 : index
    %c0_43 = arith.constant 0 : index
    %36 = vector.load %arg2[%c0_41, %c0_42, %c0_43] : memref<3x384x128xbf16, #tpu.memory_space<vmem>>, vector<1x384x128xbf16>
    %37 = vector.shape_cast %36 : vector<1x384x128xbf16> to vector<384x128xbf16>
    %cst_44 = arith.constant dense<0.000000e+00> : vector<256x128xf32>
    %38 = tpu.matmul %35, %37, %cst_44 {dimension_numbers = #tpu.dot_dimension_numbers<[1], [0], [0], [1], [0, 0, 1, 1], [], []>} : vector<256x384xbf16>, vector<384x128xbf16>, vector<256x128xf32> -> vector<256x128xf32>
    %c0_45 = arith.constant 0 : index
    %c16_46 = arith.constant 16 : index
    %c0_47 = arith.constant 0 : index
    %39 = vector.load %arg12[%c0_45, %c16_46, %c0_47] : memref<18x48x128xbf16, #tpu.memory_space<vmem>>, vector<18x16x128xbf16>
    %40 = vector.extract_strided_slice %39 {offsets = [0, 0, 0], sizes = [16, 16, 128], strides = [1, 1, 1]} : vector<18x16x128xbf16> to vector<16x16x128xbf16>
    %41 = vector.extract_strided_slice %39 {offsets = [1, 0, 0], sizes = [16, 16, 128], strides = [1, 1, 1]} : vector<18x16x128xbf16> to vector<16x16x128xbf16>
    %42 = vector.extract_strided_slice %39 {offsets = [2, 0, 0], sizes = [16, 16, 128], strides = [1, 1, 1]} : vector<18x16x128xbf16> to vector<16x16x128xbf16>
    %43 = tpu.concatenate %40, %41, %42 in 2 : vector<16x16x128xbf16>, vector<16x16x128xbf16>, vector<16x16x128xbf16> -> vector<16x16x384xbf16>
    %44 = vector.shape_cast %43 : vector<16x16x384xbf16> to vector<256x384xbf16>
    %c1_48 = arith.constant 1 : index
    %c0_49 = arith.constant 0 : index
    %c0_50 = arith.constant 0 : index
    %45 = vector.load %arg2[%c1_48, %c0_49, %c0_50] : memref<3x384x128xbf16, #tpu.memory_space<vmem>>, vector<1x384x128xbf16>
    %46 = vector.shape_cast %45 : vector<1x384x128xbf16> to vector<384x128xbf16>
    %cst_51 = arith.constant dense<0.000000e+00> : vector<256x128xf32>
    %47 = tpu.matmul %44, %46, %cst_51 {dimension_numbers = #tpu.dot_dimension_numbers<[1], [0], [0], [1], [0, 0, 1, 1], [], []>} : vector<256x384xbf16>, vector<384x128xbf16>, vector<256x128xf32> -> vector<256x128xf32>
    %48 = arith.addf %38, %47 : vector<256x128xf32>
    %c0_52 = arith.constant 0 : index
    %c17_53 = arith.constant 17 : index
    %c0_54 = arith.constant 0 : index
    %49 = vector.load %arg12[%c0_52, %c17_53, %c0_54] : memref<18x48x128xbf16, #tpu.memory_space<vmem>>, vector<18x16x128xbf16>
    %50 = vector.extract_strided_slice %49 {offsets = [0, 0, 0], sizes = [16, 16, 128], strides = [1, 1, 1]} : vector<18x16x128xbf16> to vector<16x16x128xbf16>
    %51 = vector.extract_strided_slice %49 {offsets = [1, 0, 0], sizes = [16, 16, 128], strides = [1, 1, 1]} : vector<18x16x128xbf16> to vector<16x16x128xbf16>
    %52 = vector.extract_strided_slice %49 {offsets = [2, 0, 0], sizes = [16, 16, 128], strides = [1, 1, 1]} : vector<18x16x128xbf16> to vector<16x16x128xbf16>
    %53 = tpu.concatenate %50, %51, %52 in 2 : vector<16x16x128xbf16>, vector<16x16x128xbf16>, vector<16x16x128xbf16> -> vector<16x16x384xbf16>
    %54 = vector.shape_cast %53 : vector<16x16x384xbf16> to vector<256x384xbf16>
    %c2 = arith.constant 2 : index
    %c0_55 = arith.constant 0 : index
    %c0_56 = arith.constant 0 : index
    %55 = vector.load %arg2[%c2, %c0_55, %c0_56] : memref<3x384x128xbf16, #tpu.memory_space<vmem>>, vector<1x384x128xbf16>
    %56 = vector.shape_cast %55 : vector<1x384x128xbf16> to vector<384x128xbf16>
    %cst_57 = arith.constant dense<0.000000e+00> : vector<256x128xf32>
    %57 = tpu.matmul %54, %56, %cst_57 {dimension_numbers = #tpu.dot_dimension_numbers<[1], [0], [0], [1], [0, 0, 1, 1], [], []>} : vector<256x384xbf16>, vector<384x128xbf16>, vector<256x128xf32> -> vector<256x128xf32>
    %58 = arith.addf %48, %57 : vector<256x128xf32>
    %c0_58 = arith.constant 0 : index
    %c0_59 = arith.constant 0 : index
    %59 = vector.load %arg3[%c0_58, %c0_59] : memref<1x128xf32, #tpu.memory_space<vmem>>, vector<1x128xf32>
    %60 = vector.broadcast %59 : vector<1x128xf32> to vector<256x128xf32>
    %61 = arith.addf %58, %60 : vector<256x128xf32>
    %cst_60 = arith.constant 0.000000e+00 : f32
    %62 = vector.broadcast %cst_60 : f32 to vector<256x128xf32>
    %63 = arith.maximumf %61, %62 : vector<256x128xf32>
    %64 = vector.shape_cast %63 : vector<256x128xf32> to vector<16x16x128xf32>
    %65 = arith.truncf %64 : vector<16x16x128xf32> to vector<16x16x128xbf16>
    %c1_61 = arith.constant 1 : index
    %c16_62 = arith.constant 16 : index
    %c0_63 = arith.constant 0 : index
    %66 = vector.load %arg13[%c1_61, %c16_62, %c0_63] : memref<18x48x128xbf16, #tpu.memory_space<vmem>>, vector<16x16x128xbf16>
    tpu.vector_store %arg13[%c1_61, %c16_62, %c0_63], %65 {strides = array<i32>} : memref<18x48x128xbf16, #tpu.memory_space<vmem>>, vector<16x16x128xbf16>,
    %c0_64 = arith.constant 0 : index
    %c15_65 = arith.constant 15 : index
    %c0_66 = arith.constant 0 : index
    %67 = vector.load %arg13[%c0_64, %c15_65, %c0_66] : memref<18x48x128xbf16, #tpu.memory_space<vmem>>, vector<18x16x128xbf16>
    %68 = vector.extract_strided_slice %67 {offsets = [0, 0, 0], sizes = [16, 16, 128], strides = [1, 1, 1]} : vector<18x16x128xbf16> to vector<16x16x128xbf16>
    %69 = vector.extract_strided_slice %67 {offsets = [1, 0, 0], sizes = [16, 16, 128], strides = [1, 1, 1]} : vector<18x16x128xbf16> to vector<16x16x128xbf16>
    %70 = vector.extract_strided_slice %67 {offsets = [2, 0, 0], sizes = [16, 16, 128], strides = [1, 1, 1]} : vector<18x16x128xbf16> to vector<16x16x128xbf16>
    %71 = tpu.concatenate %68, %69, %70 in 2 : vector<16x16x128xbf16>, vector<16x16x128xbf16>, vector<16x16x128xbf16> -> vector<16x16x384xbf16>
    %72 = vector.shape_cast %71 : vector<16x16x384xbf16> to vector<256x384xbf16>
    %c0_67 = arith.constant 0 : index
    %c0_68 = arith.constant 0 : index
    %c0_69 = arith.constant 0 : index
    %73 = vector.load %arg4[%c0_67, %c0_68, %c0_69] : memref<3x384x128xbf16, #tpu.memory_space<vmem>>, vector<1x384x128xbf16>
    %74 = vector.shape_cast %73 : vector<1x384x128xbf16> to vector<384x128xbf16>
    %cst_70 = arith.constant dense<0.000000e+00> : vector<256x128xf32>
    %75 = tpu.matmul %72, %74, %cst_70 {dimension_numbers = #tpu.dot_dimension_numbers<[1], [0], [0], [1], [0, 0, 1, 1], [], []>} : vector<256x384xbf16>, vector<384x128xbf16>, vector<256x128xf32> -> vector<256x128xf32>
    %c0_71 = arith.constant 0 : index
    %c16_72 = arith.constant 16 : index
    %c0_73 = arith.constant 0 : index
    %76 = vector.load %arg13[%c0_71, %c16_72, %c0_73] : memref<18x48x128xbf16, #tpu.memory_space<vmem>>, vector<18x16x128xbf16>
    %77 = vector.extract_strided_slice %76 {offsets = [0, 0, 0], sizes = [16, 16, 128], strides = [1, 1, 1]} : vector<18x16x128xbf16> to vector<16x16x128xbf16>
    %78 = vector.extract_strided_slice %76 {offsets = [1, 0, 0], sizes = [16, 16, 128], strides = [1, 1, 1]} : vector<18x16x128xbf16> to vector<16x16x128xbf16>
    %79 = vector.extract_strided_slice %76 {offsets = [2, 0, 0], sizes = [16, 16, 128], strides = [1, 1, 1]} : vector<18x16x128xbf16> to vector<16x16x128xbf16>
    %80 = tpu.concatenate %77, %78, %79 in 2 : vector<16x16x128xbf16>, vector<16x16x128xbf16>, vector<16x16x128xbf16> -> vector<16x16x384xbf16>
    %81 = vector.shape_cast %80 : vector<16x16x384xbf16> to vector<256x384xbf16>
    %c1_74 = arith.constant 1 : index
    %c0_75 = arith.constant 0 : index
    %c0_76 = arith.constant 0 : index
    %82 = vector.load %arg4[%c1_74, %c0_75, %c0_76] : memref<3x384x128xbf16, #tpu.memory_space<vmem>>, vector<1x384x128xbf16>
    %83 = vector.shape_cast %82 : vector<1x384x128xbf16> to vector<384x128xbf16>
    %cst_77 = arith.constant dense<0.000000e+00> : vector<256x128xf32>
    %84 = tpu.matmul %81, %83, %cst_77 {dimension_numbers = #tpu.dot_dimension_numbers<[1], [0], [0], [1], [0, 0, 1, 1], [], []>} : vector<256x384xbf16>, vector<384x128xbf16>, vector<256x128xf32> -> vector<256x128xf32>
    %85 = arith.addf %75, %84 : vector<256x128xf32>
    %c0_78 = arith.constant 0 : index
    %c17_79 = arith.constant 17 : index
    %c0_80 = arith.constant 0 : index
    %86 = vector.load %arg13[%c0_78, %c17_79, %c0_80] : memref<18x48x128xbf16, #tpu.memory_space<vmem>>, vector<18x16x128xbf16>
    %87 = vector.extract_strided_slice %86 {offsets = [0, 0, 0], sizes = [16, 16, 128], strides = [1, 1, 1]} : vector<18x16x128xbf16> to vector<16x16x128xbf16>
    %88 = vector.extract_strided_slice %86 {offsets = [1, 0, 0], sizes = [16, 16, 128], strides = [1, 1, 1]} : vector<18x16x128xbf16> to vector<16x16x128xbf16>
    %89 = vector.extract_strided_slice %86 {offsets = [2, 0, 0], sizes = [16, 16, 128], strides = [1, 1, 1]} : vector<18x16x128xbf16> to vector<16x16x128xbf16>
    %90 = tpu.concatenate %87, %88, %89 in 2 : vector<16x16x128xbf16>, vector<16x16x128xbf16>, vector<16x16x128xbf16> -> vector<16x16x384xbf16>
    %91 = vector.shape_cast %90 : vector<16x16x384xbf16> to vector<256x384xbf16>
    %c2_81 = arith.constant 2 : index
    %c0_82 = arith.constant 0 : index
    %c0_83 = arith.constant 0 : index
    %92 = vector.load %arg4[%c2_81, %c0_82, %c0_83] : memref<3x384x128xbf16, #tpu.memory_space<vmem>>, vector<1x384x128xbf16>
    %93 = vector.shape_cast %92 : vector<1x384x128xbf16> to vector<384x128xbf16>
    %cst_84 = arith.constant dense<0.000000e+00> : vector<256x128xf32>
    %94 = tpu.matmul %91, %93, %cst_84 {dimension_numbers = #tpu.dot_dimension_numbers<[1], [0], [0], [1], [0, 0, 1, 1], [], []>} : vector<256x384xbf16>, vector<384x128xbf16>, vector<256x128xf32> -> vector<256x128xf32>
    %95 = arith.addf %85, %94 : vector<256x128xf32>
    %c0_85 = arith.constant 0 : index
    %c0_86 = arith.constant 0 : index
    %96 = vector.load %arg5[%c0_85, %c0_86] : memref<1x128xf32, #tpu.memory_space<vmem>>, vector<1x128xf32>
    %97 = vector.broadcast %96 : vector<1x128xf32> to vector<256x128xf32>
    %98 = arith.addf %95, %97 : vector<256x128xf32>
    %c0_87 = arith.constant 0 : index
    %c0_88 = arith.constant 0 : index
    %99 = vector.load %arg15[%c0_87, %c0_88] : memref<256x128xf32, #tpu.memory_space<vmem>>, vector<256x128xf32>
    tpu.vector_store %arg15[%c0_87, %c0_88], %98 {strides = array<i32>} : memref<256x128xf32, #tpu.memory_space<vmem>>, vector<256x128xf32>,
    %100 = vector.shape_cast %98 : vector<256x128xf32> to vector<16x16x128xf32>
    %101 = arith.truncf %100 : vector<16x16x128xf32> to vector<16x16x128xbf16>
    %c1_89 = arith.constant 1 : index
    %c16_90 = arith.constant 16 : index
    %c0_91 = arith.constant 0 : index
    %102 = vector.load %arg14[%c1_89, %c16_90, %c0_91] : memref<18x48x128xbf16, #tpu.memory_space<vmem>>, vector<16x16x128xbf16>
    tpu.vector_store %arg14[%c1_89, %c16_90, %c0_91], %101 {strides = array<i32>} : memref<18x48x128xbf16, #tpu.memory_space<vmem>>, vector<16x16x128xbf16>,
    %cst_92 = arith.constant dense<0.000000e+00> : vector<128xf32>
    %103 = vector.multi_reduction <add>, %98, %cst_92 [0] : vector<256x128xf32> to vector<128xf32>
    %104 = vector.shape_cast %103 : vector<128xf32> to vector<1x128xf32>
    %cst_93 = arith.constant 2.560000e+02 : f32
    %105 = vector.broadcast %cst_93 : f32 to vector<1x128xf32>
    %106 = arith.divf %104, %105 : vector<1x128xf32>
    %c0_94 = arith.constant 0 : index
    %c0_95 = arith.constant 0 : index
    %107 = vector.load %arg6[%c0_94, %c0_95] : memref<128x8xf32, #tpu.memory_space<vmem>>, vector<128x8xf32>
    %cst_96 = arith.constant dense<0.000000e+00> : vector<1x8xf32>
    %108 = tpu.matmul %106, %107, %cst_96 {dimension_numbers = #tpu.dot_dimension_numbers<[1], [0], [0], [1], [0, 0, 1, 1], [], []>} : vector<1x128xf32>, vector<128x8xf32>, vector<1x8xf32> -> vector<1x8xf32>
    %c0_97 = arith.constant 0 : index
    %c0_98 = arith.constant 0 : index
    %109 = vector.load %arg7[%c0_97, %c0_98] : memref<1x8xf32, #tpu.memory_space<vmem>>, vector<1x8xf32>
    %110 = arith.addf %108, %109 : vector<1x8xf32>
    %cst_99 = arith.constant 0.000000e+00 : f32
    %111 = vector.broadcast %cst_99 : f32 to vector<1x8xf32>
    %112 = arith.cmpf ogt, %110, %111 : vector<1x8xf32>
    %cst_100 = arith.constant 0.00999999977 : f32
    %113 = vector.broadcast %cst_100 : f32 to vector<1x8xf32>
    %114 = arith.mulf %113, %110 : vector<1x8xf32>
    %115 = arith.select %112, %110, %114 : vector<1x8xi1>, vector<1x8xf32>
    %c0_101 = arith.constant 0 : index
    %c0_102 = arith.constant 0 : index
    %116 = vector.load %arg8[%c0_101, %c0_102] : memref<8x128xf32, #tpu.memory_space<vmem>>, vector<8x128xf32>
    %cst_103 = arith.constant dense<0.000000e+00> : vector<1x128xf32>
    %117 = tpu.matmul %115, %116, %cst_103 {dimension_numbers = #tpu.dot_dimension_numbers<[1], [0], [0], [1], [0, 0, 1, 1], [], []>} : vector<1x8xf32>, vector<8x128xf32>, vector<1x128xf32> -> vector<1x128xf32>
    %c0_104 = arith.constant 0 : index
    %c0_105 = arith.constant 0 : index
    %118 = vector.load %arg9[%c0_104, %c0_105] : memref<1x128xf32, #tpu.memory_space<vmem>>, vector<1x128xf32>
    %119 = arith.addf %117, %118 : vector<1x128xf32>
    %120 = arith.negf %119 : vector<1x128xf32>
    %121 = math.exp %120 : vector<1x128xf32>
    %cst_106 = arith.constant 1.000000e+00 : f32
    %122 = vector.broadcast %cst_106 : f32 to vector<1x128xf32>
    %123 = arith.addf %122, %121 : vector<1x128xf32>
    %124 = arith.divf %122, %123 : vector<1x128xf32>
    %c0_107 = arith.constant 0 : index
    %c15_108 = arith.constant 15 : index
    %c0_109 = arith.constant 0 : index
    %125 = vector.load %arg14[%c0_107, %c15_108, %c0_109] : memref<18x48x128xbf16, #tpu.memory_space<vmem>>, vector<16x16x128xbf16>
    %126 = arith.extf %125 : vector<16x16x128xbf16> to vector<16x16x128xf32>
    %c0_110 = arith.constant 0 : index
    %c0_111 = arith.constant 0 : index
    %c0_112 = arith.constant 0 : index
    %127 = vector.load %arg10[%c0_110, %c0_111, %c0_112] : memref<9x1x128xf32, #tpu.memory_space<vmem>>, vector<1x1x128xf32>
    %128 = vector.shape_cast %127 : vector<1x1x128xf32> to vector<1x128xf32>
    %129 = vector.shape_cast %128 : vector<1x128xf32> to vector<1x1x128xf32>
    %130 = vector.broadcast %129 : vector<1x1x128xf32> to vector<16x16x128xf32>
    %131 = arith.mulf %126, %130 : vector<16x16x128xf32>
    %c0_113 = arith.constant 0 : index
    %c16_114 = arith.constant 16 : index
    %c0_115 = arith.constant 0 : index
    %132 = vector.load %arg14[%c0_113, %c16_114, %c0_115] : memref<18x48x128xbf16, #tpu.memory_space<vmem>>, vector<16x16x128xbf16>
    %133 = arith.extf %132 : vector<16x16x128xbf16> to vector<16x16x128xf32>
    %c1_116 = arith.constant 1 : index
    %c0_117 = arith.constant 0 : index
    %c0_118 = arith.constant 0 : index
    %134 = vector.load %arg10[%c1_116, %c0_117, %c0_118] : memref<9x1x128xf32, #tpu.memory_space<vmem>>, vector<1x1x128xf32>
    %135 = vector.shape_cast %134 : vector<1x1x128xf32> to vector<1x128xf32>
    %136 = vector.shape_cast %135 : vector<1x128xf32> to vector<1x1x128xf32>
    %137 = vector.broadcast %136 : vector<1x1x128xf32> to vector<16x16x128xf32>
    %138 = arith.mulf %133, %137 : vector<16x16x128xf32>
    %139 = arith.addf %131, %138 : vector<16x16x128xf32>
    %c0_119 = arith.constant 0 : index
    %c17_120 = arith.constant 17 : index
    %c0_121 = arith.constant 0 : index
    %140 = vector.load %arg14[%c0_119, %c17_120, %c0_121] : memref<18x48x128xbf16, #tpu.memory_space<vmem>>, vector<16x16x128xbf16>
    %141 = arith.extf %140 : vector<16x16x128xbf16> to vector<16x16x128xf32>
    %c2_122 = arith.constant 2 : index
    %c0_123 = arith.constant 0 : index
    %c0_124 = arith.constant 0 : index
    %142 = vector.load %arg10[%c2_122, %c0_123, %c0_124] : memref<9x1x128xf32, #tpu.memory_space<vmem>>, vector<1x1x128xf32>
    %143 = vector.shape_cast %142 : vector<1x1x128xf32> to vector<1x128xf32>
    %144 = vector.shape_cast %143 : vector<1x128xf32> to vector<1x1x128xf32>
    %145 = vector.broadcast %144 : vector<1x1x128xf32> to vector<16x16x128xf32>
    %146 = arith.mulf %141, %145 : vector<16x16x128xf32>
    %147 = arith.addf %139, %146 : vector<16x16x128xf32>
    %c1_125 = arith.constant 1 : index
    %c15_126 = arith.constant 15 : index
    %c0_127 = arith.constant 0 : index
    %148 = vector.load %arg14[%c1_125, %c15_126, %c0_127] : memref<18x48x128xbf16, #tpu.memory_space<vmem>>, vector<16x16x128xbf16>
    %149 = arith.extf %148 : vector<16x16x128xbf16> to vector<16x16x128xf32>
    %c3 = arith.constant 3 : index
    %c0_128 = arith.constant 0 : index
    %c0_129 = arith.constant 0 : index
    %150 = vector.load %arg10[%c3, %c0_128, %c0_129] : memref<9x1x128xf32, #tpu.memory_space<vmem>>, vector<1x1x128xf32>
    %151 = vector.shape_cast %150 : vector<1x1x128xf32> to vector<1x128xf32>
    %152 = vector.shape_cast %151 : vector<1x128xf32> to vector<1x1x128xf32>
    %153 = vector.broadcast %152 : vector<1x1x128xf32> to vector<16x16x128xf32>
    %154 = arith.mulf %149, %153 : vector<16x16x128xf32>
    %155 = arith.addf %147, %154 : vector<16x16x128xf32>
    %c1_130 = arith.constant 1 : index
    %c16_131 = arith.constant 16 : index
    %c0_132 = arith.constant 0 : index
    %156 = vector.load %arg14[%c1_130, %c16_131, %c0_132] : memref<18x48x128xbf16, #tpu.memory_space<vmem>>, vector<16x16x128xbf16>
    %157 = arith.extf %156 : vector<16x16x128xbf16> to vector<16x16x128xf32>
    %c4 = arith.constant 4 : index
    %c0_133 = arith.constant 0 : index
    %c0_134 = arith.constant 0 : index
    %158 = vector.load %arg10[%c4, %c0_133, %c0_134] : memref<9x1x128xf32, #tpu.memory_space<vmem>>, vector<1x1x128xf32>
    %159 = vector.shape_cast %158 : vector<1x1x128xf32> to vector<1x128xf32>
    %160 = vector.shape_cast %159 : vector<1x128xf32> to vector<1x1x128xf32>
    %161 = vector.broadcast %160 : vector<1x1x128xf32> to vector<16x16x128xf32>
    %162 = arith.mulf %157, %161 : vector<16x16x128xf32>
    %163 = arith.addf %155, %162 : vector<16x16x128xf32>
    %c1_135 = arith.constant 1 : index
    %c17_136 = arith.constant 17 : index
    %c0_137 = arith.constant 0 : index
    %164 = vector.load %arg14[%c1_135, %c17_136, %c0_137] : memref<18x48x128xbf16, #tpu.memory_space<vmem>>, vector<16x16x128xbf16>
    %165 = arith.extf %164 : vector<16x16x128xbf16> to vector<16x16x128xf32>
    %c5 = arith.constant 5 : index
    %c0_138 = arith.constant 0 : index
    %c0_139 = arith.constant 0 : index
    %166 = vector.load %arg10[%c5, %c0_138, %c0_139] : memref<9x1x128xf32, #tpu.memory_space<vmem>>, vector<1x1x128xf32>
    %167 = vector.shape_cast %166 : vector<1x1x128xf32> to vector<1x128xf32>
    %168 = vector.shape_cast %167 : vector<1x128xf32> to vector<1x1x128xf32>
    %169 = vector.broadcast %168 : vector<1x1x128xf32> to vector<16x16x128xf32>
    %170 = arith.mulf %165, %169 : vector<16x16x128xf32>
    %171 = arith.addf %163, %170 : vector<16x16x128xf32>
    %c2_140 = arith.constant 2 : index
    %c15_141 = arith.constant 15 : index
    %c0_142 = arith.constant 0 : index
    %172 = vector.load %arg14[%c2_140, %c15_141, %c0_142] : memref<18x48x128xbf16, #tpu.memory_space<vmem>>, vector<16x16x128xbf16>
    %173 = arith.extf %172 : vector<16x16x128xbf16> to vector<16x16x128xf32>
    %c6 = arith.constant 6 : index
    %c0_143 = arith.constant 0 : index
    %c0_144 = arith.constant 0 : index
    %174 = vector.load %arg10[%c6, %c0_143, %c0_144] : memref<9x1x128xf32, #tpu.memory_space<vmem>>, vector<1x1x128xf32>
    %175 = vector.shape_cast %174 : vector<1x1x128xf32> to vector<1x128xf32>
    %176 = vector.shape_cast %175 : vector<1x128xf32> to vector<1x1x128xf32>
    %177 = vector.broadcast %176 : vector<1x1x128xf32> to vector<16x16x128xf32>
    %178 = arith.mulf %173, %177 : vector<16x16x128xf32>
    %179 = arith.addf %171, %178 : vector<16x16x128xf32>
    %c2_145 = arith.constant 2 : index
    %c16_146 = arith.constant 16 : index
    %c0_147 = arith.constant 0 : index
    %180 = vector.load %arg14[%c2_145, %c16_146, %c0_147] : memref<18x48x128xbf16, #tpu.memory_space<vmem>>, vector<16x16x128xbf16>
    %181 = arith.extf %180 : vector<16x16x128xbf16> to vector<16x16x128xf32>
    %c7 = arith.constant 7 : index
    %c0_148 = arith.constant 0 : index
    %c0_149 = arith.constant 0 : index
    %182 = vector.load %arg10[%c7, %c0_148, %c0_149] : memref<9x1x128xf32, #tpu.memory_space<vmem>>, vector<1x1x128xf32>
    %183 = vector.shape_cast %182 : vector<1x1x128xf32> to vector<1x128xf32>
    %184 = vector.shape_cast %183 : vector<1x128xf32> to vector<1x1x128xf32>
    %185 = vector.broadcast %184 : vector<1x1x128xf32> to vector<16x16x128xf32>
    %186 = arith.mulf %181, %185 : vector<16x16x128xf32>
    %187 = arith.addf %179, %186 : vector<16x16x128xf32>
    %c2_150 = arith.constant 2 : index
    %c17_151 = arith.constant 17 : index
    %c0_152 = arith.constant 0 : index
    %188 = vector.load %arg14[%c2_150, %c17_151, %c0_152] : memref<18x48x128xbf16, #tpu.memory_space<vmem>>, vector<16x16x128xbf16>
    %189 = arith.extf %188 : vector<16x16x128xbf16> to vector<16x16x128xf32>
    %c8 = arith.constant 8 : index
    %c0_153 = arith.constant 0 : index
    %c0_154 = arith.constant 0 : index
    %190 = vector.load %arg10[%c8, %c0_153, %c0_154] : memref<9x1x128xf32, #tpu.memory_space<vmem>>, vector<1x1x128xf32>
    %191 = vector.shape_cast %190 : vector<1x1x128xf32> to vector<1x128xf32>
    %192 = vector.shape_cast %191 : vector<1x128xf32> to vector<1x1x128xf32>
    %193 = vector.broadcast %192 : vector<1x1x128xf32> to vector<16x16x128xf32>
    %194 = arith.mulf %189, %193 : vector<16x16x128xf32>
    %195 = arith.addf %187, %194 : vector<16x16x128xf32>
    %cst_155 = arith.constant dense<0.000000e+00> : vector<16x16xf32>
    %196 = vector.multi_reduction <add>, %195, %cst_155 [2] : vector<16x16x128xf32> to vector<16x16xf32>
    %197 = vector.shape_cast %196 : vector<16x16xf32> to vector<16x16x1xf32>
    %198 = vector.shape_cast %124 : vector<1x128xf32> to vector<1x1x128xf32>
    %199 = vector.broadcast %198 : vector<1x1x128xf32> to vector<16x16x128xf32>
    %200 = vector.broadcast %197 : vector<16x16x1xf32> to vector<16x16x128xf32>
    %201 = arith.addf %199, %200 : vector<16x16x128xf32>
    %c0_156 = arith.constant 0 : index
    %c0_157 = arith.constant 0 : index
    %c0_158 = arith.constant 0 : index
    %c0_159 = arith.constant 0 : index
    %202 = vector.load %arg1[%c0_156, %c0_157, %c0_158, %c0_159] : memref<1x16x16x128xf32, #tpu.memory_space<vmem>>, vector<1x16x16x128xf32>
    %203 = vector.shape_cast %202 : vector<1x16x16x128xf32> to vector<16x16x128xf32>
    %c0_160 = arith.constant 0 : index
    %c0_161 = arith.constant 0 : index
    %204 = vector.load %arg15[%c0_160, %c0_161] : memref<256x128xf32, #tpu.memory_space<vmem>>, vector<256x128xf32>
    %205 = vector.shape_cast %204 : vector<256x128xf32> to vector<16x16x128xf32>
    %206 = arith.mulf %205, %201 : vector<16x16x128xf32>
    %207 = arith.addf %203, %206 : vector<16x16x128xf32>
    %c0_162 = arith.constant 0 : index
    %c0_163 = arith.constant 0 : index
    %c0_164 = arith.constant 0 : index
    %c0_165 = arith.constant 0 : index
    %208 = vector.load %arg11[%c0_162, %c0_163, %c0_164, %c0_165] : memref<1x16x16x128xf32, #tpu.memory_space<vmem>>, vector<1x16x16x128xf32>
    %209 = vector.shape_cast %208 : vector<1x16x16x128xf32> to vector<16x16x128xf32>
    %210 = vector.shape_cast %207 : vector<16x16x128xf32> to vector<1x16x16x128xf32>
    tpu.vector_store %arg11[%c0_162, %c0_163, %c0_164, %c0_165], %210 {strides = array<i32>} : memref<1x16x16x128xf32, #tpu.memory_space<vmem>>, vector<1x16x16x128xf32>,
    return
  }
  func.func @transform_0(%arg0: i32) -> (i32, i32, i32, i32) {
    %c0_i32 = arith.constant 0 : i32
    %c0_i32_0 = arith.constant 0 : i32
    %c0_i32_1 = arith.constant 0 : i32
    %c0_i32_2 = arith.constant 0 : i32
    return %arg0, %c0_i32, %c0_i32_0, %c0_i32_1 : i32, i32, i32, i32
  }
  func.func @transform_1(%arg0: i32) -> (i32, i32, i32) {
    %c0_i32 = arith.constant 0 : i32
    %c0_i32_0 = arith.constant 0 : i32
    %c0_i32_1 = arith.constant 0 : i32
    %c0_i32_2 = arith.constant 0 : i32
    return %c0_i32, %c0_i32_0, %c0_i32_1 : i32, i32, i32
  }
  func.func @transform_2(%arg0: i32) -> (i32, i32) {
    %c0_i32 = arith.constant 0 : i32
    %c0_i32_0 = arith.constant 0 : i32
    %c0_i32_1 = arith.constant 0 : i32
    return %c0_i32, %c0_i32_0 : i32, i32
  }
  func.func @transform_3(%arg0: i32) -> (i32, i32, i32) {
    %c0_i32 = arith.constant 0 : i32
    %c0_i32_0 = arith.constant 0 : i32
    %c0_i32_1 = arith.constant 0 : i32
    %c0_i32_2 = arith.constant 0 : i32
    return %c0_i32, %c0_i32_0, %c0_i32_1 : i32, i32, i32
  }
  func.func @transform_4(%arg0: i32) -> (i32, i32) {
    %c0_i32 = arith.constant 0 : i32
    %c0_i32_0 = arith.constant 0 : i32
    %c0_i32_1 = arith.constant 0 : i32
    return %c0_i32, %c0_i32_0 : i32, i32
  }
  func.func @transform_5(%arg0: i32) -> (i32, i32) {
    %c0_i32 = arith.constant 0 : i32
    %c0_i32_0 = arith.constant 0 : i32
    %c0_i32_1 = arith.constant 0 : i32
    return %c0_i32, %c0_i32_0 : i32, i32
  }
  func.func @transform_6(%arg0: i32) -> (i32, i32) {
    %c0_i32 = arith.constant 0 : i32
    %c0_i32_0 = arith.constant 0 : i32
    %c0_i32_1 = arith.constant 0 : i32
    return %c0_i32, %c0_i32_0 : i32, i32
  }
  func.func @transform_7(%arg0: i32) -> (i32, i32) {
    %c0_i32 = arith.constant 0 : i32
    %c0_i32_0 = arith.constant 0 : i32
    %c0_i32_1 = arith.constant 0 : i32
    return %c0_i32, %c0_i32_0 : i32, i32
  }
  func.func @transform_8(%arg0: i32) -> (i32, i32) {
    %c0_i32 = arith.constant 0 : i32
    %c0_i32_0 = arith.constant 0 : i32
    %c0_i32_1 = arith.constant 0 : i32
    return %c0_i32, %c0_i32_0 : i32, i32
  }
  func.func @transform_9(%arg0: i32) -> (i32, i32, i32) {
    %c0_i32 = arith.constant 0 : i32
    %c0_i32_0 = arith.constant 0 : i32
    %c0_i32_1 = arith.constant 0 : i32
    %c0_i32_2 = arith.constant 0 : i32
    return %c0_i32, %c0_i32_0, %c0_i32_1 : i32, i32, i32
  }
  func.func @transform_10(%arg0: i32) -> (i32, i32, i32, i32) {
    %c0_i32 = arith.constant 0 : i32
    %c0_i32_0 = arith.constant 0 : i32
    %c0_i32_1 = arith.constant 0 : i32
    %c0_i32_2 = arith.constant 0 : i32
    return %arg0, %c0_i32, %c0_i32_0, %c0_i32_1 : i32, i32, i32, i32
  }
}

</mosaic_0001>

<llo_original>
// kernel: tpu_custom_call.1
$region0: #{tpu_custom_call.1}
  #allocation0 [shape = 'u32[]', space=smem, size = 0x4, offset = 0x4, fixed_abs, tag = 'smem constant byte address 0x4 - core index']
  #allocation1 [shape = 'u32[144,128]{1,0:T(1,128)}', space=vmem, size = 0x12000, scoped, tag = 'internal scratch']
  #allocation2 [shape = 'bf16[18,48,128]{2,1,0:T(16,128)(2,1)}', space=vmem, size = 0x36000, scoped, tag = 'scratch operand']
  #allocation3 [shape = 'bf16[18,48,128]{2,1,0:T(16,128)(2,1)}', space=vmem, size = 0x36000, scoped, tag = 'scratch operand']
  #allocation4 [shape = 'bf16[18,48,128]{2,1,0:T(16,128)(2,1)}', space=vmem, size = 0x36000, scoped, tag = 'scratch operand']
  #allocation5 [shape = 'f32[256,128]{1,0:T(8,128)}', space=vmem, size = 0x20000, scoped, tag = 'scratch operand']
  %s0 = inlined_call_operand.hbm [shape: f32[2,16,16,128], index: 0, kind: input, shape index: {}]
  %s1 = inlined_call_operand.hbm [shape: bf16[3,384,128], index: 1, kind: input, shape index: {}]
  %s2 = inlined_call_operand.vmem [shape: f32[1,128], index: 2, kind: input, shape index: {}]
  %s3 = inlined_call_operand.hbm [shape: bf16[3,384,128], index: 3, kind: input, shape index: {}]
  %s4 = inlined_call_operand.vmem [shape: f32[1,128], index: 4, kind: input, shape index: {}]
  %s5 = inlined_call_operand.vmem [shape: f32[128,8], index: 5, kind: input, shape index: {}]
  %s6 = inlined_call_operand.vmem [shape: f32[1,8], index: 6, kind: input, shape index: {}]
  %s7 = inlined_call_operand.vmem [shape: f32[8,128], index: 7, kind: input, shape index: {}]
  %s8 = inlined_call_operand.vmem [shape: f32[1,128], index: 8, kind: input, shape index: {}]
  %s9 = inlined_call_operand.vmem [shape: f32[9,1,128], index: 9, kind: input, shape index: {}]
  %s10 = inlined_call_operand.hbm [shape: f32[2,16,16,128], index: 10, kind: output, shape index: {}]
  %s11 = sld [smem:[#allocation0]]
  $region85: #{tpu_custom_call.1} parent=0
    _
  %s13 = ssub.s32 1, %s11
  %s14 = scalar_select 0, %s13, %s11
  $region1: #{tpu_custom_call.1} parent=0
    #allocation6 [shape = 'u8[262144]{0}', space=vmem, size = 0x40000, scoped, tag = 'input window, operand 0']
    #allocation7 [shape = 's32[2]{0}', space=sflag, size = 0x8, scoped, tag = 'scoped memory for tpu_custom_call.1']
    #allocation8 [shape = 's32[2]{0}', space=sflag, size = 0x8, scoped, tag = 'scoped memory for tpu_custom_call.1']
    #allocation9 [shape = 'u8[294912]{0}', space=vmem, size = 0x48000, scoped, tag = 'input window, operand 1, single buffered']
    #allocation10 [shape = 's32[1]{0}', space=sflag, size = 0x4, scoped, tag = 'scoped memory for tpu_custom_call.1']
    #allocation11 [shape = 'u8[294912]{0}', space=vmem, size = 0x48000, scoped, tag = 'input window, operand 3, single buffered']
    #allocation12 [shape = 'u8[262144]{0}', space=vmem, size = 0x40000, scoped, tag = 'output window, operand 0']
    %15 = vsyncpa [#allocation7], 0
    %s16 = scalar_lea.sflag [#allocation7], 1
    %17 = vsyncpa %s16, 0
    %18 = vsyncpa [#allocation10], 0
    %19 = vsyncpa [#allocation8], 0
    %s20 = scalar_lea.sflag [#allocation8], 1
    %21 = vsyncpa %s20, 0
    loop: start=0, step=1, limit=4
    $region2: #{tpu_custom_call.1} parent=1 // loop_pre_header
      _
    $region3: #{tpu_custom_call.1} parent=1 // loop_header
      %s23 = sphi 0, %s27
      %p24 = scmp.ge.s32.totalorder %s23, 4
      %s33 = sphi 0, %s35
      %s36 = sphi 0, %s33
      %s37 = sphi 0, %s36
      %s53 = sphi 0, %s37
      %s57 = sphi 0, %s57
      %s59 = sphi 0, %s57
      %s60 = sphi 0, %s59
      %s74 = sphi 0, %s60
      %s78 = sphi 0, %s78
      %s80 = sphi 0, %s78
      %s81 = sphi 0, %s80
      %s95 = sphi 0, %s81
      %s99 = sphi 0, %s99
      %s101 = sphi 0, %s99
      %s102 = sphi 0, %s101
      %s116 = sphi 0, %s102
      %s120 = sphi 0, %s120
      %s122 = sphi 0, %s120
      %s123 = sphi 0, %s122
      %s137 = sphi 0, %s123
      %s141 = sphi 0, %s141
      %s143 = sphi 0, %s141
      %s144 = sphi 0, %s143
      %s158 = sphi 0, %s144
      %s162 = sphi 0, %s162
      %s164 = sphi 0, %s162
      %s165 = sphi 0, %s164
      %s179 = sphi 0, %s165
      %s183 = sphi 0, %s183
      %s185 = sphi 0, %s183
      %s186 = sphi 0, %s185
      %s200 = sphi 0, %s186
      %s204 = sphi 0, %s204
      %s206 = sphi 0, %s204
      %s207 = sphi 0, %s206
      %s221 = sphi 0, %s207
      %s225 = sphi 0, %s225
      %s227 = sphi 0, %s225
      %s228 = sphi 0, %s227
      %s242 = sphi 0, %s228
      %s248 = sphi 0, %s250
      %s251 = sphi 0, %s248
      %s252 = sphi 0, %s251
      %s268 = sphi 0, %s252
    $region4: #{tpu_custom_call.1} parent=1 // loop_header_branch
      %26 = sbr.rel (%p24) target = $region8
    $region5: #{tpu_custom_call.1} parent=1 // loop_body
      %s28 = ssub.s32 %s23, 1
      %s29 = ssub.s32 %s23, 2
      %s30 = sadd.s32 %s23, 1
      %s31 = ssub.s32 %s23, %s30
      %p32 = scmp.eq.s32.totalorder %s31, 0
      %s34 = sadd.s32 %s33, 1
      %s35 = scalar_select %p32, %s33, %s34
      %p38 = pneg %p32
      %p39 = scmp.eq.s32.totalorder %s23, 1
      %p40 = por %p38, %p39
      %p41 = scmp.ne.s32.totalorder %s33, %s36
      %p42 = scmp.eq.s32.totalorder %s23, 0
      %p43 = por %p41, %p42
      %p44 = scmp.ne.s32.totalorder %s33, %s36
      %p45 = scmp.eq.s32.totalorder %s28, 1
      %p46 = por %p44, %p45
      %p47 = scmp.ne.s32.totalorder %s36, %s37
      %p48 = scmp.eq.s32.totalorder %s28, 0
      %p49 = por %p47, %p48
      %p50 = scmp.ne.s32.totalorder %s36, %s37
      %p51 = scmp.eq.s32.totalorder %s29, 1
      %p52 = por %p50, %p51
      %p54 = scmp.ne.s32.totalorder %s37, %s53
      %p55 = scmp.eq.s32.totalorder %s29, 0
      %p56 = por %p54, %p55
      %s58 = sadd.s32 %s57, 1
      %p61 = scmp.eq.s32.totalorder %s23, 1
      %p62 = scmp.ne.s32.totalorder %s57, %s59
      %p63 = scmp.eq.s32.totalorder %s23, 0
      %p64 = por %p62, %p63
      %p65 = scmp.ne.s32.totalorder %s57, %s59
      %p66 = scmp.eq.s32.totalorder %s28, 1
      %p67 = por %p65, %p66
      %p68 = scmp.ne.s32.totalorder %s59, %s60
      %p69 = scmp.eq.s32.totalorder %s28, 0
      %p70 = por %p68, %p69
      %p71 = scmp.ne.s32.totalorder %s59, %s60
      %p72 = scmp.eq.s32.totalorder %s29, 1
      %p73 = por %p71, %p72
      %p75 = scmp.ne.s32.totalorder %s60, %s74
      %p76 = scmp.eq.s32.totalorder %s29, 0
      %p77 = por %p75, %p76
      %s79 = sadd.s32 %s78, 1
      %p82 = scmp.eq.s32.totalorder %s23, 1
      %p83 = scmp.ne.s32.totalorder %s78, %s80
      %p84 = scmp.eq.s32.totalorder %s23, 0
      %p85 = por %p83, %p84
      %p86 = scmp.ne.s32.totalorder %s78, %s80
      %p87 = scmp.eq.s32.totalorder %s28, 1
      %p88 = por %p86, %p87
      %p89 = scmp.ne.s32.totalorder %s80, %s81
      %p90 = scmp.eq.s32.totalorder %s28, 0
      %p91 = por %p89, %p90
      %p92 = scmp.ne.s32.totalorder %s80, %s81
      %p93 = scmp.eq.s32.totalorder %s29, 1
      %p94 = por %p92, %p93
      %p96 = scmp.ne.s32.totalorder %s81, %s95
      %p97 = scmp.eq.s32.totalorder %s29, 0
      %p98 = por %p96, %p97
      %s100 = sadd.s32 %s99, 1
      %p103 = scmp.eq.s32.totalorder %s23, 1
      %p104 = scmp.ne.s32.totalorder %s99, %s101
      %p105 = scmp.eq.s32.totalorder %s23, 0
      %p106 = por %p104, %p105
      %p107 = scmp.ne.s32.totalorder %s99, %s101
      %p108 = scmp.eq.s32.totalorder %s28, 1
      %p109 = por %p107, %p108
      %p110 = scmp.ne.s32.totalorder %s101, %s102
      %p111 = scmp.eq.s32.totalorder %s28, 0
      %p112 = por %p110, %p111
      %p113 = scmp.ne.s32.totalorder %s101, %s102
      %p114 = scmp.eq.s32.totalorder %s29, 1
      %p115 = por %p113, %p114
      %p117 = scmp.ne.s32.totalorder %s102, %s116
      %p118 = scmp.eq.s32.totalorder %s29, 0
      %p119 = por %p117, %p118
      %s121 = sadd.s32 %s120, 1
      %p124 = scmp.eq.s32.totalorder %s23, 1
      %p125 = scmp.ne.s32.totalorder %s120, %s122
      %p126 = scmp.eq.s32.totalorder %s23, 0
      %p127 = por %p125, %p126
      %p128 = scmp.ne.s32.totalorder %s120, %s122
      %p129 = scmp.eq.s32.totalorder %s28, 1
      %p130 = por %p128, %p129
      %p131 = scmp.ne.s32.totalorder %s122, %s123
      %p132 = scmp.eq.s32.totalorder %s28, 0
      %p133 = por %p131, %p132
      %p134 = scmp.ne.s32.totalorder %s122, %s123
      %p135 = scmp.eq.s32.totalorder %s29, 1
      %p136 = por %p134, %p135
      %p138 = scmp.ne.s32.totalorder %s123, %s137
      %p139 = scmp.eq.s32.totalorder %s29, 0
      %p140 = por %p138, %p139
      %s142 = sadd.s32 %s141, 1
      %p145 = scmp.eq.s32.totalorder %s23, 1
      %p146 = scmp.ne.s32.totalorder %s141, %s143
      %p147 = scmp.eq.s32.totalorder %s23, 0
      %p148 = por %p146, %p147
      %p149 = scmp.ne.s32.totalorder %s141, %s143
      %p150 = scmp.eq.s32.totalorder %s28, 1
      %p151 = por %p149, %p150
      %p152 = scmp.ne.s32.totalorder %s143, %s144
      %p153 = scmp.eq.s32.totalorder %s28, 0
      %p154 = por %p152, %p153
      %p155 = scmp.ne.s32.totalorder %s143, %s144
      %p156 = scmp.eq.s32.totalorder %s29, 1
      %p157 = por %p155, %p156
      %p159 = scmp.ne.s32.totalorder %s144, %s158
      %p160 = scmp.eq.s32.totalorder %s29, 0
      %p161 = por %p159, %p160
      %s163 = sadd.s32 %s162, 1
      %p166 = scmp.eq.s32.totalorder %s23, 1
      %p167 = scmp.ne.s32.totalorder %s162, %s164
      %p168 = scmp.eq.s32.totalorder %s23, 0
      %p169 = por %p167, %p168
      %p170 = scmp.ne.s32.totalorder %s162, %s164
      %p171 = scmp.eq.s32.totalorder %s28, 1
      %p172 = por %p170, %p171
      %p173 = scmp.ne.s32.totalorder %s164, %s165
      %p174 = scmp.eq.s32.totalorder %s28, 0
      %p175 = por %p173, %p174
      %p176 = scmp.ne.s32.totalorder %s164, %s165
      %p177 = scmp.eq.s32.totalorder %s29, 1
      %p178 = por %p176, %p177
      %p180 = scmp.ne.s32.totalorder %s165, %s179
      %p181 = scmp.eq.s32.totalorder %s29, 0
      %p182 = por %p180, %p181
      %s184 = sadd.s32 %s183, 1
      %p187 = scmp.eq.s32.totalorder %s23, 1
      %p188 = scmp.ne.s32.totalorder %s183, %s185
      %p189 = scmp.eq.s32.totalorder %s23, 0
      %p190 = por %p188, %p189
      %p191 = scmp.ne.s32.totalorder %s183, %s185
      %p192 = scmp.eq.s32.totalorder %s28, 1
      %p193 = por %p191, %p192
      %p194 = scmp.ne.s32.totalorder %s185, %s186
      %p195 = scmp.eq.s32.totalorder %s28, 0
      %p196 = por %p194, %p195
      %p197 = scmp.ne.s32.totalorder %s185, %s186
      %p198 = scmp.eq.s32.totalorder %s29, 1
      %p199 = por %p197, %p198
      %p201 = scmp.ne.s32.totalorder %s186, %s200
      %p202 = scmp.eq.s32.totalorder %s29, 0
      %p203 = por %p201, %p202
      %s205 = sadd.s32 %s204, 1
      %p208 = scmp.eq.s32.totalorder %s23, 1
      %p209 = scmp.ne.s32.totalorder %s204, %s206
      %p210 = scmp.eq.s32.totalorder %s23, 0
      %p211 = por %p209, %p210
      %p212 = scmp.ne.s32.totalorder %s204, %s206
      %p213 = scmp.eq.s32.totalorder %s28, 1
      %p214 = por %p212, %p213
      %p215 = scmp.ne.s32.totalorder %s206, %s207
      %p216 = scmp.eq.s32.totalorder %s28, 0
      %p217 = por %p215, %p216
      %p218 = scmp.ne.s32.totalorder %s206, %s207
      %p219 = scmp.eq.s32.totalorder %s29, 1
      %p220 = por %p218, %p219
      %p222 = scmp.ne.s32.totalorder %s207, %s221
      %p223 = scmp.eq.s32.totalorder %s29, 0
      %p224 = por %p222, %p223
      %s226 = sadd.s32 %s225, 1
      %p229 = scmp.eq.s32.totalorder %s23, 1
      %p230 = scmp.ne.s32.totalorder %s225, %s227
      %p231 = scmp.eq.s32.totalorder %s23, 0
      %p232 = por %p230, %p231
      %p233 = scmp.ne.s32.totalorder %s225, %s227
      %p234 = scmp.eq.s32.totalorder %s28, 1
      %p235 = por %p233, %p234
      %p236 = scmp.ne.s32.totalorder %s227, %s228
      %p237 = scmp.eq.s32.totalorder %s28, 0
      %p238 = por %p236, %p237
      %p239 = scmp.ne.s32.totalorder %s227, %s228
      %p240 = scmp.eq.s32.totalorder %s29, 1
      %p241 = por %p239, %p240
      %p243 = scmp.ne.s32.totalorder %s228, %s242
      %p244 = scmp.eq.s32.totalorder %s29, 0
      %p245 = por %p243, %p244
      %s246 = ssub.s32 %s23, %s30
      %p247 = scmp.eq.s32.totalorder %s246, 0
      %s249 = sadd.s32 %s248, 1
      %s250 = scalar_select %p247, %s248, %s249
      %p253 = pneg %p247
      %p254 = scmp.eq.s32.totalorder %s23, 1
      %p255 = por %p253, %p254
      %p256 = scmp.ne.s32.totalorder %s248, %s251
      %p257 = scmp.eq.s32.totalorder %s23, 0
      %p258 = por %p256, %p257
      %p259 = scmp.ne.s32.totalorder %s248, %s251
      %p260 = scmp.eq.s32.totalorder %s28, 1
      %p261 = por %p259, %p260
      %p262 = scmp.ne.s32.totalorder %s251, %s252
      %p263 = scmp.eq.s32.totalorder %s28, 0
      %p264 = por %p262, %p263
      %p265 = scmp.ne.s32.totalorder %s251, %s252
      %p266 = scmp.eq.s32.totalorder %s29, 1
      %p267 = por %p265, %p266
      %p269 = scmp.ne.s32.totalorder %s252, %s268
      %p270 = scmp.eq.s32.totalorder %s29, 0
      %p271 = por %p269, %p270
      %p272 = scmp.le.s32.totalorder 1, %s23
      %p273 = scmp.lt.s32.totalorder %s23, 3
      %p274 = pnand %p272, %p273
      %p275 = pneg %p274
      // Predicated region
      $region9: #{tpu_custom_call.1} parent=5 // pred_check
        _
      $region10: #{tpu_custom_call.1} parent=5 // pred_check_branch
        %277 = sbr.rel (%p274) target = $region12
      $region11: #{tpu_custom_call.1} parent=5 // pred_region
        %s278 = ssub.s32 %s23, 1
        // Predicated region
        $region13: #{tpu_custom_call.1} parent=11 // pred_check
          %p279 = pneg %p70
        $region14: #{tpu_custom_call.1} parent=11 // pred_check_branch
          %281 = sbr.rel (%p279) target = $region16
        $region15: #{tpu_custom_call.1} parent=11 // pred_region
          %s283 = ssub.s32 9216, 9216
          %284 = vsyncadd [#allocation10], %s283
          %s285 = sshll.u32 [#allocation9], 4
          %s286 = int_to_ptr.vmem [resolvable:$true] %s285
          %291 = dma.hbm_to_vmem [thread:$0]  %s1, 9216, %s286, [#allocation10], 64, 64, 4
        $region16: #{tpu_custom_call.1} parent=11 // pred_fallthru
          _
        // Predicated region
        $region17: #{tpu_custom_call.1} parent=11 // pred_check
          %p292 = pneg %p91
        $region18: #{tpu_custom_call.1} parent=11 // pred_check_branch
          %294 = sbr.rel (%p292) target = $region20
        $region19: #{tpu_custom_call.1} parent=11 // pred_region
          _
        $region20: #{tpu_custom_call.1} parent=11 // pred_fallthru
          _
        // Predicated region
        $region21: #{tpu_custom_call.1} parent=11 // pred_check
          %p295 = pneg %p112
        $region22: #{tpu_custom_call.1} parent=11 // pred_check_branch
          %297 = sbr.rel (%p295) target = $region24
        $region23: #{tpu_custom_call.1} parent=11 // pred_region
          %s299 = ssub.s32 9216, 9216
          %300 = vsyncadd [#allocation10], %s299
          %s301 = sshll.u32 [#allocation11], 4
          %s302 = int_to_ptr.vmem [resolvable:$true] %s301
          %307 = dma.hbm_to_vmem [thread:$0]  %s3, 9216, %s302, [#allocation10], 64, 64, 4
        $region24: #{tpu_custom_call.1} parent=11 // pred_fallthru
          _
        // Predicated region
        $region25: #{tpu_custom_call.1} parent=11 // pred_check
          %p308 = pneg %p133
        $region26: #{tpu_custom_call.1} parent=11 // pred_check_branch
          %310 = sbr.rel (%p308) target = $region28
        $region27: #{tpu_custom_call.1} parent=11 // pred_region
          _
        $region28: #{tpu_custom_call.1} parent=11 // pred_fallthru
          _
        // Predicated region
        $region29: #{tpu_custom_call.1} parent=11 // pred_check
          %p311 = pneg %p154
        $region30: #{tpu_custom_call.1} parent=11 // pred_check_branch
          %313 = sbr.rel (%p311) target = $region32
        $region31: #{tpu_custom_call.1} parent=11 // pred_region
          _
        $region32: #{tpu_custom_call.1} parent=11 // pred_fallthru
          _
        // Predicated region
        $region33: #{tpu_custom_call.1} parent=11 // pred_check
          %p314 = pneg %p175
        $region34: #{tpu_custom_call.1} parent=11 // pred_check_branch
          %316 = sbr.rel (%p314) target = $region36
        $region35: #{tpu_custom_call.1} parent=11 // pred_region
          _
        $region36: #{tpu_custom_call.1} parent=11 // pred_fallthru
          _
        // Predicated region
        $region37: #{tpu_custom_call.1} parent=11 // pred_check
          %p317 = pneg %p196
        $region38: #{tpu_custom_call.1} parent=11 // pred_check_branch
          %319 = sbr.rel (%p317) target = $region40
        $region39: #{tpu_custom_call.1} parent=11 // pred_region
          _
        $region40: #{tpu_custom_call.1} parent=11 // pred_fallthru
          _
        // Predicated region
        $region41: #{tpu_custom_call.1} parent=11 // pred_check
          %p320 = pneg %p217
        $region42: #{tpu_custom_call.1} parent=11 // pred_check_branch
          %322 = sbr.rel (%p320) target = $region44
        $region43: #{tpu_custom_call.1} parent=11 // pred_region
          _
        $region44: #{tpu_custom_call.1} parent=11 // pred_fallthru
          _
        // Predicated region
        $region45: #{tpu_custom_call.1} parent=11 // pred_check
          %p323 = pneg %p238
        $region46: #{tpu_custom_call.1} parent=11 // pred_check_branch
          %325 = sbr.rel (%p323) target = $region48
        $region47: #{tpu_custom_call.1} parent=11 // pred_region
          _
        $region48: #{tpu_custom_call.1} parent=11 // pred_fallthru
          _
      $region12: #{tpu_custom_call.1} parent=5 // pred_fallthru
        _
      %p326 = scmp.lt.s32.totalorder %s23, 2
      // Predicated region
      $region49: #{tpu_custom_call.1} parent=5 // pred_check
        %p327 = pneg %p326
      $region50: #{tpu_custom_call.1} parent=5 // pred_check_branch
        %329 = sbr.rel (%p327) target = $region52
      $region51: #{tpu_custom_call.1} parent=5 // pred_region
        // Predicated region
        $region53: #{tpu_custom_call.1} parent=51 // pred_check
          %p330 = pneg %p43
        $region54: #{tpu_custom_call.1} parent=51 // pred_check_branch
          %332 = sbr.rel (%p330) target = $region56
        $region55: #{tpu_custom_call.1} parent=51 // pred_region
          %s333 = sand.u32 %s33, 1
          %s334 = scalar_lea.sflag [#allocation7], %s333
          %s335 = sand.u32 %s33, 1
          %s336 = smul.addr %s335, 256
          %s337 = scalar_lea.vmem [#allocation6], %s336
          %s339 = ssub.s32 4096, 4096
          %340 = vsyncadd %s334, %s339
          %s341 = smul.addr %s23, 32
          %s342 = smul.addr %s341, 128
          %s343 = scalar_lea.hbm %s0, %s342
          %s344 = sshll.u32 %s337, 4
          %s345 = int_to_ptr.vmem [resolvable:$true] %s344
          %350 = dma.hbm_to_vmem [thread:$0]  %s343, 4096, %s345, %s334, 128, 128, 8
        $region56: #{tpu_custom_call.1} parent=51 // pred_fallthru
          _
      $region52: #{tpu_custom_call.1} parent=5 // pred_fallthru
        _
      %p351 = scmp.le.s32.totalorder 1, %s23
      %p352 = scmp.lt.s32.totalorder %s23, 3
      %p353 = pnand %p351, %p352
      %p354 = pneg %p353
      // Predicated region
      $region57: #{tpu_custom_call.1} parent=5 // pred_check
        _
      $region58: #{tpu_custom_call.1} parent=5 // pred_check_branch
        %356 = sbr.rel (%p353) target = $region60
      $region59: #{tpu_custom_call.1} parent=5 // pred_region
        %s357 = ssub.s32 %s23, 1
        %s358 = sand.u32 %s36, 1
        %s359 = scalar_lea.sflag [#allocation7], %s358
        %s360 = sand.u32 %s36, 1
        %s361 = smul.addr %s360, 256
        %s362 = scalar_lea.vmem [#allocation6], %s361
        // Predicated region
        $region61: #{tpu_custom_call.1} parent=59 // pred_check
          %p363 = pneg %p49
        $region62: #{tpu_custom_call.1} parent=59 // pred_check_branch
          %365 = sbr.rel (%p363) target = $region64
        $region63: #{tpu_custom_call.1} parent=59 // pred_region
          %366 = dma.done %s359, 4096
        $region64: #{tpu_custom_call.1} parent=59 // pred_fallthru
          _
        // Predicated region
        $region65: #{tpu_custom_call.1} parent=59 // pred_check
          %p367 = pneg %p70
        $region66: #{tpu_custom_call.1} parent=59 // pred_check_branch
          %369 = sbr.rel (%p367) target = $region68
        $region67: #{tpu_custom_call.1} parent=59 // pred_region
          %370 = dma.done [#allocation10], 9216
        $region68: #{tpu_custom_call.1} parent=59 // pred_fallthru
          _
        // Predicated region
        $region69: #{tpu_custom_call.1} parent=59 // pred_check
          %p371 = pneg %p112
        $region70: #{tpu_custom_call.1} parent=59 // pred_check_branch
          %373 = sbr.rel (%p371) target = $region72
        $region71: #{tpu_custom_call.1} parent=59 // pred_region
          %374 = dma.done [#allocation10], 9216
        $region72: #{tpu_custom_call.1} parent=59 // pred_fallthru
          _
        %s375 = sand.u32 %s36, 1
        %s376 = scalar_lea.sflag [#allocation7], %s375
        %s377 = sand.u32 %s36, 1
        %s378 = smul.addr %s377, 256
        %s379 = scalar_lea.vmem [#allocation6], %s378
        %p380 = pneg %p49
        %p381 = pneg %p46
        %p382 = pneg %p70
        %p383 = pneg %p67
        %p384 = pneg %p91
        %p385 = pneg %p88
        %p386 = pneg %p112
        %p387 = pneg %p109
        %p388 = pneg %p133
        %p389 = pneg %p130
        %p390 = pneg %p154
        %p391 = pneg %p151
        %p392 = pneg %p175
        %p393 = pneg %p172
        %p394 = pneg %p196
        %p395 = pneg %p193
        %p396 = pneg %p217
        %p397 = pneg %p214
        %p398 = pneg %p238
        %p399 = pneg %p235
        %p400 = pneg %p264
        %p401 = pneg %p261
        %s402 = sand.u32 %s251, 1
        %s403 = scalar_lea.sflag [#allocation8], %s402
        %s404 = sand.u32 %s251, 1
        %s405 = smul.addr %s404, 256
        %s406 = scalar_lea.vmem [#allocation12], %s405
        %408 = vst [vmem:[#allocation2] sm:$0xff] 0
        %409 = vst [vmem:[#allocation2 + $0x8] sm:$0xff] 0
        %410 = vst [vmem:[#allocation2 + $0x10] sm:$0xff] 0
        %s411 = scalar_lea.vmem [#allocation2], 408
        %412 = vst [vmem:[%s411] sm:$0xff] 0
        %413 = vst [vmem:[%s411 + $0x8] sm:$0xff] 0
        %414 = vst [vmem:[%s411 + $0x10] sm:$0xff] 0
        %s415 = scalar_lea.vmem [#allocation2], 24
        %416 = vst [vmem:[%s415] sm:$0xff] 0
        %417 = vst [vmem:[%s415 + $0x18] sm:$0xff] 0
        %418 = vst [vmem:[%s415 + $0x30] sm:$0xff] 0
        %419 = vst [vmem:[%s415 + $0x48] sm:$0xff] 0
        %420 = vst [vmem:[%s415 + $0x60] sm:$0xff] 0
        %421 = vst [vmem:[%s415 + $0x78] sm:$0xff] 0
        %422 = vst [vmem:[%s415 + $0x90] sm:$0xff] 0
        %423 = vst [vmem:[%s415 + $0xa8] sm:$0xff] 0
        %424 = vst [vmem:[%s415 + $0xc0] sm:$0xff] 0
        %425 = vst [vmem:[%s415 + $0xd8] sm:$0xff] 0
        %426 = vst [vmem:[%s415 + $0xf0] sm:$0xff] 0
        %427 = vst [vmem:[%s415 + $0x108] sm:$0xff] 0
        %428 = vst [vmem:[%s415 + $0x120] sm:$0xff] 0
        %429 = vst [vmem:[%s415 + $0x138] sm:$0xff] 0
        %430 = vst [vmem:[%s415 + $0x150] sm:$0xff] 0
        %431 = vst [vmem:[%s415 + $0x168] sm:$0xff] 0
        %432 = vst [vmem:[%s415 + $0x10] sm:$0xff] 0
        %433 = vst [vmem:[%s415 + $0x28] sm:$0xff] 0
        %434 = vst [vmem:[%s415 + $0x40] sm:$0xff] 0
        %435 = vst [vmem:[%s415 + $0x58] sm:$0xff] 0
        %436 = vst [vmem:[%s415 + $0x70] sm:$0xff] 0
        %437 = vst [vmem:[%s415 + $0x88] sm:$0xff] 0
        %438 = vst [vmem:[%s415 + $0xa0] sm:$0xff] 0
        %439 = vst [vmem:[%s415 + $0xb8] sm:$0xff] 0
        %440 = vst [vmem:[%s415 + $0xd0] sm:$0xff] 0
        %441 = vst [vmem:[%s415 + $0xe8] sm:$0xff] 0
        %442 = vst [vmem:[%s415 + $0x100] sm:$0xff] 0
        %443 = vst [vmem:[%s415 + $0x118] sm:$0xff] 0
        %444 = vst [vmem:[%s415 + $0x130] sm:$0xff] 0
        %445 = vst [vmem:[%s415 + $0x148] sm:$0xff] 0
        %446 = vst [vmem:[%s415 + $0x160] sm:$0xff] 0
        %447 = vst [vmem:[%s415 + $0x178] sm:$0xff] 0
        %448 = vst [vmem:[#allocation3] sm:$0xff] 0
        %449 = vst [vmem:[#allocation3 + $0x8] sm:$0xff] 0
        %450 = vst [vmem:[#allocation3 + $0x10] sm:$0xff] 0
        %s451 = scalar_lea.vmem [#allocation3], 408
        %452 = vst [vmem:[%s451] sm:$0xff] 0
        %453 = vst [vmem:[%s451 + $0x8] sm:$0xff] 0
        %454 = vst [vmem:[%s451 + $0x10] sm:$0xff] 0
        %s455 = scalar_lea.vmem [#allocation3], 24
        %456 = vst [vmem:[%s455] sm:$0xff] 0
        %457 = vst [vmem:[%s455 + $0x18] sm:$0xff] 0
        %458 = vst [vmem:[%s455 + $0x30] sm:$0xff] 0
        %459 = vst [vmem:[%s455 + $0x48] sm:$0xff] 0
        %460 = vst [vmem:[%s455 + $0x60] sm:$0xff] 0
        %461 = vst [vmem:[%s455 + $0x78] sm:$0xff] 0
        %462 = vst [vmem:[%s455 + $0x90] sm:$0xff] 0
        %463 = vst [vmem:[%s455 + $0xa8] sm:$0xff] 0
        %464 = vst [vmem:[%s455 + $0xc0] sm:$0xff] 0
        %465 = vst [vmem:[%s455 + $0xd8] sm:$0xff] 0
        %466 = vst [vmem:[%s455 + $0xf0] sm:$0xff] 0
        %467 = vst [vmem:[%s455 + $0x108] sm:$0xff] 0
        %468 = vst [vmem:[%s455 + $0x120] sm:$0xff] 0
        %469 = vst [vmem:[%s455 + $0x138] sm:$0xff] 0
        %470 = vst [vmem:[%s455 + $0x150] sm:$0xff] 0
        %471 = vst [vmem:[%s455 + $0x168] sm:$0xff] 0
        %472 = vst [vmem:[%s455 + $0x10] sm:$0xff] 0
        %473 = vst [vmem:[%s455 + $0x28] sm:$0xff] 0
        %474 = vst [vmem:[%s455 + $0x40] sm:$0xff] 0
        %475 = vst [vmem:[%s455 + $0x58] sm:$0xff] 0
        %476 = vst [vmem:[%s455 + $0x70] sm:$0xff] 0
        %477 = vst [vmem:[%s455 + $0x88] sm:$0xff] 0
        %478 = vst [vmem:[%s455 + $0xa0] sm:$0xff] 0
        %479 = vst [vmem:[%s455 + $0xb8] sm:$0xff] 0
        %480 = vst [vmem:[%s455 + $0xd0] sm:$0xff] 0
        %481 = vst [vmem:[%s455 + $0xe8] sm:$0xff] 0
        %482 = vst [vmem:[%s455 + $0x100] sm:$0xff] 0
        %483 = vst [vmem:[%s455 + $0x118] sm:$0xff] 0
        %484 = vst [vmem:[%s455 + $0x130] sm:$0xff] 0
        %485 = vst [vmem:[%s455 + $0x148] sm:$0xff] 0
        %486 = vst [vmem:[%s455 + $0x160] sm:$0xff] 0
        %487 = vst [vmem:[%s455 + $0x178] sm:$0xff] 0
        %488 = vst [vmem:[#allocation4] sm:$0xff] 0
        %489 = vst [vmem:[#allocation4 + $0x8] sm:$0xff] 0
        %490 = vst [vmem:[#allocation4 + $0x10] sm:$0xff] 0
        %s491 = scalar_lea.vmem [#allocation4], 408
        %492 = vst [vmem:[%s491] sm:$0xff] 0
        %493 = vst [vmem:[%s491 + $0x8] sm:$0xff] 0
        %494 = vst [vmem:[%s491 + $0x10] sm:$0xff] 0
        %s495 = scalar_lea.vmem [#allocation4], 24
        %496 = vst [vmem:[%s495] sm:$0xff] 0
        %497 = vst [vmem:[%s495 + $0x18] sm:$0xff] 0
        %498 = vst [vmem:[%s495 + $0x30] sm:$0xff] 0
        %499 = vst [vmem:[%s495 + $0x48] sm:$0xff] 0
        %500 = vst [vmem:[%s495 + $0x60] sm:$0xff] 0
        %501 = vst [vmem:[%s495 + $0x78] sm:$0xff] 0
        %502 = vst [vmem:[%s495 + $0x90] sm:$0xff] 0
        %503 = vst [vmem:[%s495 + $0xa8] sm:$0xff] 0
        %504 = vst [vmem:[%s495 + $0xc0] sm:$0xff] 0
        %505 = vst [vmem:[%s495 + $0xd8] sm:$0xff] 0
        %506 = vst [vmem:[%s495 + $0xf0] sm:$0xff] 0
        %507 = vst [vmem:[%s495 + $0x108] sm:$0xff] 0
        %508 = vst [vmem:[%s495 + $0x120] sm:$0xff] 0
        %509 = vst [vmem:[%s495 + $0x138] sm:$0xff] 0
        %510 = vst [vmem:[%s495 + $0x150] sm:$0xff] 0
        %511 = vst [vmem:[%s495 + $0x168] sm:$0xff] 0
        %512 = vst [vmem:[%s495 + $0x10] sm:$0xff] 0
        %513 = vst [vmem:[%s495 + $0x28] sm:$0xff] 0
        %514 = vst [vmem:[%s495 + $0x40] sm:$0xff] 0
        %515 = vst [vmem:[%s495 + $0x58] sm:$0xff] 0
        %516 = vst [vmem:[%s495 + $0x70] sm:$0xff] 0
        %517 = vst [vmem:[%s495 + $0x88] sm:$0xff] 0
        %518 = vst [vmem:[%s495 + $0xa0] sm:$0xff] 0
        %519 = vst [vmem:[%s495 + $0xb8] sm:$0xff] 0
        %520 = vst [vmem:[%s495 + $0xd0] sm:$0xff] 0
        %521 = vst [vmem:[%s495 + $0xe8] sm:$0xff] 0
        %522 = vst [vmem:[%s495 + $0x100] sm:$0xff] 0
        %523 = vst [vmem:[%s495 + $0x118] sm:$0xff] 0
        %524 = vst [vmem:[%s495 + $0x130] sm:$0xff] 0
        %525 = vst [vmem:[%s495 + $0x148] sm:$0xff] 0
        %526 = vst [vmem:[%s495 + $0x160] sm:$0xff] 0
        %527 = vst [vmem:[%s495 + $0x178] sm:$0xff] 0
        %v528 = vld [vmem:[%s362] sm:$0xff]
        %v529 = vld [vmem:[%s362 + $0x8] sm:$0xff]
        %v530 = vld [vmem:[%s362 + $0x10] sm:$0xff]
        %v531 = vld [vmem:[%s362 + $0x18] sm:$0xff]
        %v532 = vld [vmem:[%s362 + $0x20] sm:$0xff]
        %v533 = vld [vmem:[%s362 + $0x28] sm:$0xff]
        %v534 = vld [vmem:[%s362 + $0x30] sm:$0xff]
        %v535 = vld [vmem:[%s362 + $0x38] sm:$0xff]
        %v536 = vld [vmem:[%s362 + $0x40] sm:$0xff]
        %v537 = vld [vmem:[%s362 + $0x48] sm:$0xff]
        %v538 = vld [vmem:[%s362 + $0x50] sm:$0xff]
        %v539 = vld [vmem:[%s362 + $0x58] sm:$0xff]
        %v540 = vld [vmem:[%s362 + $0x60] sm:$0xff]
        %v541 = vld [vmem:[%s362 + $0x68] sm:$0xff]
        %v542 = vld [vmem:[%s362 + $0x70] sm:$0xff]
        %v543 = vld [vmem:[%s362 + $0x78] sm:$0xff]
        %v544 = vld [vmem:[%s362 + $0x80] sm:$0xff]
        %v545 = vld [vmem:[%s362 + $0x88] sm:$0xff]
        %v546 = vld [vmem:[%s362 + $0x90] sm:$0xff]
        %v547 = vld [vmem:[%s362 + $0x98] sm:$0xff]
        %v548 = vld [vmem:[%s362 + $0xa0] sm:$0xff]
        %v549 = vld [vmem:[%s362 + $0xa8] sm:$0xff]
        %v550 = vld [vmem:[%s362 + $0xb0] sm:$0xff]
        %v551 = vld [vmem:[%s362 + $0xb8] sm:$0xff]
        %v552 = vld [vmem:[%s362 + $0xc0] sm:$0xff]
        %v553 = vld [vmem:[%s362 + $0xc8] sm:$0xff]
        %v554 = vld [vmem:[%s362 + $0xd0] sm:$0xff]
        %v555 = vld [vmem:[%s362 + $0xd8] sm:$0xff]
        %v556 = vld [vmem:[%s362 + $0xe0] sm:$0xff]
        %v557 = vld [vmem:[%s362 + $0xe8] sm:$0xff]
        %v558 = vld [vmem:[%s362 + $0xf0] sm:$0xff]
        %v559 = vld [vmem:[%s362 + $0xf8] sm:$0xff]
        %v560 = vpack.c.bf16 %v529, %v528
        %v561 = vpack.c.bf16 %v531, %v530
        %v562 = vpack.c.bf16 %v533, %v532
        %v563 = vpack.c.bf16 %v535, %v534
        %v564 = vpack.c.bf16 %v537, %v536
        %v565 = vpack.c.bf16 %v539, %v538
        %v566 = vpack.c.bf16 %v541, %v540
        %v567 = vpack.c.bf16 %v543, %v542
        %v568 = vpack.c.bf16 %v545, %v544
        %v569 = vpack.c.bf16 %v547, %v546
        %v570 = vpack.c.bf16 %v549, %v548
        %v571 = vpack.c.bf16 %v551, %v550
        %v572 = vpack.c.bf16 %v553, %v552
        %v573 = vpack.c.bf16 %v555, %v554
        %v574 = vpack.c.bf16 %v557, %v556
        %v575 = vpack.c.bf16 %v559, %v558
        %576 = vst [vmem:[%s415 + $0x8] sm:$0xff] %v560
        %577 = vst [vmem:[%s415 + $0x20] sm:$0xff] %v561
        %578 = vst [vmem:[%s415 + $0x38] sm:$0xff] %v562
        %579 = vst [vmem:[%s415 + $0x50] sm:$0xff] %v563
        %580 = vst [vmem:[%s415 + $0x68] sm:$0xff] %v564
        %581 = vst [vmem:[%s415 + $0x80] sm:$0xff] %v565
        %582 = vst [vmem:[%s415 + $0x98] sm:$0xff] %v566
        %583 = vst [vmem:[%s415 + $0xb0] sm:$0xff] %v567
        %584 = vst [vmem:[%s415 + $0xc8] sm:$0xff] %v568
        %585 = vst [vmem:[%s415 + $0xe0] sm:$0xff] %v569
        %586 = vst [vmem:[%s415 + $0xf8] sm:$0xff] %v570
        %587 = vst [vmem:[%s415 + $0x110] sm:$0xff] %v571
        %588 = vst [vmem:[%s415 + $0x128] sm:$0xff] %v572
        %589 = vst [vmem:[%s415 + $0x140] sm:$0xff] %v573
        %590 = vst [vmem:[%s415 + $0x158] sm:$0xff] %v574
        %591 = vst [vmem:[%s415 + $0x170] sm:$0xff] %v575
        %v592 = vld [vmem:[#allocation2] sm:$0x80]
        %v593 = vld [vmem:[#allocation2 + $0x8] sm:$0xff]
        %v594 = vld [vmem:[#allocation2 + $0x18] sm:$0x80]
        %v595 = vld [vmem:[#allocation2 + $0x20] sm:$0xff]
        %v596 = vld [vmem:[#allocation2 + $0x30] sm:$0x80]
        %v597 = vld [vmem:[#allocation2 + $0x38] sm:$0xff]
        %v598 = vld [vmem:[#allocation2 + $0x48] sm:$0x80]
        %v599 = vld [vmem:[#allocation2 + $0x50] sm:$0xff]
        %v600 = vld [vmem:[#allocation2 + $0x60] sm:$0x80]
        %v601 = vld [vmem:[#allocation2 + $0x68] sm:$0xff]
        %v602 = vld [vmem:[#allocation2 + $0x78] sm:$0x80]
        %v603 = vld [vmem:[#allocation2 + $0x80] sm:$0xff]
        %v604 = vld [vmem:[#allocation2 + $0x90] sm:$0x80]
        %v605 = vld [vmem:[#allocation2 + $0x98] sm:$0xff]
        %v606 = vld [vmem:[#allocation2 + $0xa8] sm:$0x80]
        %v607 = vld [vmem:[#allocation2 + $0xb0] sm:$0xff]
        %v608 = vld [vmem:[#allocation2 + $0xc0] sm:$0x80]
        %v609 = vld [vmem:[#allocation2 + $0xc8] sm:$0xff]
        %v610 = vld [vmem:[#allocation2 + $0xd8] sm:$0x80]
        %v611 = vld [vmem:[#allocation2 + $0xe0] sm:$0xff]
        %v612 = vld [vmem:[#allocation2 + $0xf0] sm:$0x80]
        %v613 = vld [vmem:[#allocation2 + $0xf8] sm:$0xff]
        %v614 = vld [vmem:[#allocation2 + $0x108] sm:$0x80]
        %v615 = vld [vmem:[#allocation2 + $0x110] sm:$0xff]
        %v616 = vld [vmem:[#allocation2 + $0x120] sm:$0x80]
        %v617 = vld [vmem:[#allocation2 + $0x128] sm:$0xff]
        %v618 = vld [vmem:[#allocation2 + $0x138] sm:$0x80]
        %v619 = vld [vmem:[#allocation2 + $0x140] sm:$0xff]
        %v620 = vld [vmem:[#allocation2 + $0x150] sm:$0x80]
        %v621 = vld [vmem:[#allocation2 + $0x158] sm:$0xff]
        %v622 = vld [vmem:[#allocation2 + $0x168] sm:$0x80]
        %v623 = vld [vmem:[#allocation2 + $0x170] sm:$0xff]
        %v624 = vld [vmem:[#allocation2 + $0x180] sm:$0x80]
        %v625 = vld [vmem:[#allocation2 + $0x188] sm:$0xff]
        %v626 = vld [vmem:[#allocation2 + $0x198] sm:$0x80]
        %v627 = vld [vmem:[#allocation2 + $0x1a0] sm:$0xff]
        %vm628 = vsmask.f32 256
        %v630 = vshrl.u32 %v592, 16
        %v632 = vrot.slane %v630, 7
        %v634 = vshrl.u32 %v593, 16
        %v636 = vrot.slane %v634, 7
        %v637 = vshll.u32 %v593, 16
        %v639 = vor.u32 %v636, %v637
        %v640 = vsel %vm628, %v632, %v639
        %v642 = vshrl.u32 %v594, 16
        %v644 = vrot.slane %v642, 7
        %v646 = vshrl.u32 %v595, 16
        %v648 = vrot.slane %v646, 7
        %v649 = vshll.u32 %v595, 16
        %v651 = vor.u32 %v648, %v649
        %v652 = vsel %vm628, %v644, %v651
        %v654 = vshrl.u32 %v596, 16
        %v656 = vrot.slane %v654, 7
        %v658 = vshrl.u32 %v597, 16
        %v660 = vrot.slane %v658, 7
        %v661 = vshll.u32 %v597, 16
        %v663 = vor.u32 %v660, %v661
        %v664 = vsel %vm628, %v656, %v663
        %v666 = vshrl.u32 %v598, 16
        %v668 = vrot.slane %v666, 7
        %v670 = vshrl.u32 %v599, 16
        %v672 = vrot.slane %v670, 7
        %v673 = vshll.u32 %v599, 16
        %v675 = vor.u32 %v672, %v673
        %v676 = vsel %vm628, %v668, %v675
        %v678 = vshrl.u32 %v600, 16
        %v680 = vrot.slane %v678, 7
        %v682 = vshrl.u32 %v601, 16
        %v684 = vrot.slane %v682, 7
        %v685 = vshll.u32 %v601, 16
        %v687 = vor.u32 %v684, %v685
        %v688 = vsel %vm628, %v680, %v687
        %v690 = vshrl.u32 %v602, 16
        %v692 = vrot.slane %v690, 7
        %v694 = vshrl.u32 %v603, 16
        %v696 = vrot.slane %v694, 7
        %v697 = vshll.u32 %v603, 16
        %v699 = vor.u32 %v696, %v697
        %v700 = vsel %vm628, %v692, %v699
        %v702 = vshrl.u32 %v604, 16
        %v704 = vrot.slane %v702, 7
        %v706 = vshrl.u32 %v605, 16
        %v708 = vrot.slane %v706, 7
        %v709 = vshll.u32 %v605, 16
        %v711 = vor.u32 %v708, %v709
        %v712 = vsel %vm628, %v704, %v711
        %v714 = vshrl.u32 %v606, 16
        %v716 = vrot.slane %v714, 7
        %v718 = vshrl.u32 %v607, 16
        %v720 = vrot.slane %v718, 7
        %v721 = vshll.u32 %v607, 16
        %v723 = vor.u32 %v720, %v721
        %v724 = vsel %vm628, %v716, %v723
        %v726 = vshrl.u32 %v608, 16
        %v728 = vrot.slane %v726, 7
        %v730 = vshrl.u32 %v609, 16
        %v732 = vrot.slane %v730, 7
        %v733 = vshll.u32 %v609, 16
        %v735 = vor.u32 %v732, %v733
        %v736 = vsel %vm628, %v728, %v735
        %v738 = vshrl.u32 %v610, 16
        %v740 = vrot.slane %v738, 7
        %v742 = vshrl.u32 %v611, 16
        %v744 = vrot.slane %v742, 7
        %v745 = vshll.u32 %v611, 16
        %v747 = vor.u32 %v744, %v745
        %v748 = vsel %vm628, %v740, %v747
        %v750 = vshrl.u32 %v612, 16
        %v752 = vrot.slane %v750, 7
        %v754 = vshrl.u32 %v613, 16
        %v756 = vrot.slane %v754, 7
        %v757 = vshll.u32 %v613, 16
        %v759 = vor.u32 %v756, %v757
        %v760 = vsel %vm628, %v752, %v759
        %v762 = vshrl.u32 %v614, 16
        %v764 = vrot.slane %v762, 7
        %v766 = vshrl.u32 %v615, 16
        %v768 = vrot.slane %v766, 7
        %v769 = vshll.u32 %v615, 16
        %v771 = vor.u32 %v768, %v769
        %v772 = vsel %vm628, %v764, %v771
        %v774 = vshrl.u32 %v616, 16
        %v776 = vrot.slane %v774, 7
        %v778 = vshrl.u32 %v617, 16
        %v780 = vrot.slane %v778, 7
        %v781 = vshll.u32 %v617, 16
        %v783 = vor.u32 %v780, %v781
        %v784 = vsel %vm628, %v776, %v783
        %v786 = vshrl.u32 %v618, 16
        %v788 = vrot.slane %v786, 7
        %v790 = vshrl.u32 %v619, 16
        %v792 = vrot.slane %v790, 7
        %v793 = vshll.u32 %v619, 16
        %v795 = vor.u32 %v792, %v793
        %v796 = vsel %vm628, %v788, %v795
        %v798 = vshrl.u32 %v620, 16
        %v800 = vrot.slane %v798, 7
        %v802 = vshrl.u32 %v621, 16
        %v804 = vrot.slane %v802, 7
        %v805 = vshll.u32 %v621, 16
        %v807 = vor.u32 %v804, %v805
        %v808 = vsel %vm628, %v800, %v807
        %v810 = vshrl.u32 %v622, 16
        %v812 = vrot.slane %v810, 7
        %v814 = vshrl.u32 %v623, 16
        %v816 = vrot.slane %v814, 7
        %v817 = vshll.u32 %v623, 16
        %v819 = vor.u32 %v816, %v817
        %v820 = vsel %vm628, %v812, %v819
        %v822 = vshrl.u32 %v624, 16
        %v824 = vrot.slane %v822, 7
        %v826 = vshrl.u32 %v625, 16
        %v828 = vrot.slane %v826, 7
        %v829 = vshll.u32 %v625, 16
        %v831 = vor.u32 %v828, %v829
        %v832 = vsel %vm628, %v824, %v831
        %v834 = vshrl.u32 %v626, 16
        %v836 = vrot.slane %v834, 7
        %v838 = vshrl.u32 %v627, 16
        %v840 = vrot.slane %v838, 7
        %v841 = vshll.u32 %v627, 16
        %v843 = vor.u32 %v840, %v841
        %v844 = vsel %vm628, %v836, %v843
        %v863 = vld [vmem:[#allocation9] sm:$0xf]
        %v864 = vld [vmem:[#allocation9 + $0x4] sm:$0xf]
        %v865 = vld [vmem:[#allocation9 + $0x8] sm:$0xf]
        %v866 = vld [vmem:[#allocation9 + $0xc] sm:$0xf]
        %v867 = vld [vmem:[#allocation9 + $0x10] sm:$0xf]
        %v868 = vld [vmem:[#allocation9 + $0x14] sm:$0xf]
        %v869 = vld [vmem:[#allocation9 + $0x18] sm:$0xf]
        %v870 = vld [vmem:[#allocation9 + $0x1c] sm:$0xf]
        %v871 = vld [vmem:[#allocation9 + $0x20] sm:$0xf]
        %v872 = vld [vmem:[#allocation9 + $0x24] sm:$0xf]
        %v873 = vld [vmem:[#allocation9 + $0x28] sm:$0xf]
        %v874 = vld [vmem:[#allocation9 + $0x2c] sm:$0xf]
        %v875 = vld [vmem:[#allocation9 + $0x30] sm:$0xf]
        %v876 = vld [vmem:[#allocation9 + $0x34] sm:$0xf]
        %v877 = vld [vmem:[#allocation9 + $0x38] sm:$0xf]
        %v878 = vld [vmem:[#allocation9 + $0x3c] sm:$0xf]
        %v879 = vld [vmem:[#allocation9 + $0x40] sm:$0xf]
        %v880 = vld [vmem:[#allocation9 + $0x44] sm:$0xf]
        %v881 = vld [vmem:[#allocation9 + $0x48] sm:$0xf]
        %v882 = vld [vmem:[#allocation9 + $0x4c] sm:$0xf]
        %v883 = vld [vmem:[#allocation9 + $0x50] sm:$0xf]
        %v884 = vld [vmem:[#allocation9 + $0x54] sm:$0xf]
        %v885 = vld [vmem:[#allocation9 + $0x58] sm:$0xf]
        %v886 = vld [vmem:[#allocation9 + $0x5c] sm:$0xf]
        %v887 = vld [vmem:[#allocation9 + $0x60] sm:$0xf]
        %v888 = vld [vmem:[#allocation9 + $0x64] sm:$0xf]
        %v889 = vld [vmem:[#allocation9 + $0x68] sm:$0xf]
        %v890 = vld [vmem:[#allocation9 + $0x6c] sm:$0xf]
        %v891 = vld [vmem:[#allocation9 + $0x70] sm:$0xf]
        %v892 = vld [vmem:[#allocation9 + $0x74] sm:$0xf]
        %v893 = vld [vmem:[#allocation9 + $0x78] sm:$0xf]
        %v894 = vld [vmem:[#allocation9 + $0x7c] sm:$0xf]
        %v895 = vld [vmem:[#allocation9 + $0x80] sm:$0xf]
        %v896 = vld [vmem:[#allocation9 + $0x84] sm:$0xf]
        %v897 = vld [vmem:[#allocation9 + $0x88] sm:$0xf]
        %v898 = vld [vmem:[#allocation9 + $0x8c] sm:$0xf]
        %v899 = vld [vmem:[#allocation9 + $0x90] sm:$0xf]
        %v900 = vld [vmem:[#allocation9 + $0x94] sm:$0xf]
        %v901 = vld [vmem:[#allocation9 + $0x98] sm:$0xf]
        %v902 = vld [vmem:[#allocation9 + $0x9c] sm:$0xf]
        %v903 = vld [vmem:[#allocation9 + $0xa0] sm:$0xf]
        %v904 = vld [vmem:[#allocation9 + $0xa4] sm:$0xf]
        %v905 = vld [vmem:[#allocation9 + $0xa8] sm:$0xf]
        %v906 = vld [vmem:[#allocation9 + $0xac] sm:$0xf]
        %v907 = vld [vmem:[#allocation9 + $0xb0] sm:$0xf]
        %v908 = vld [vmem:[#allocation9 + $0xb4] sm:$0xf]
        %v909 = vld [vmem:[#allocation9 + $0xb8] sm:$0xf]
        %v910 = vld [vmem:[#allocation9 + $0xbc] sm:$0xf]
        %s911 = scalar_lea.vmem [#allocation9], 192
        %v912 = vld [vmem:[%s911] sm:$0xf]
        %v913 = vld [vmem:[%s911 + $0x4] sm:$0xf]
        %v914 = vld [vmem:[%s911 + $0x8] sm:$0xf]
        %v915 = vld [vmem:[%s911 + $0xc] sm:$0xf]
        %v916 = vld [vmem:[%s911 + $0x10] sm:$0xf]
        %v917 = vld [vmem:[%s911 + $0x14] sm:$0xf]
        %v918 = vld [vmem:[%s911 + $0x18] sm:$0xf]
        %v919 = vld [vmem:[%s911 + $0x1c] sm:$0xf]
        %v920 = vld [vmem:[%s911 + $0x20] sm:$0xf]
        %v921 = vld [vmem:[%s911 + $0x24] sm:$0xf]
        %v922 = vld [vmem:[%s911 + $0x28] sm:$0xf]
        %v923 = vld [vmem:[%s911 + $0x2c] sm:$0xf]
        %v924 = vld [vmem:[%s911 + $0x30] sm:$0xf]
        %v925 = vld [vmem:[%s911 + $0x34] sm:$0xf]
        %v926 = vld [vmem:[%s911 + $0x38] sm:$0xf]
        %v927 = vld [vmem:[%s911 + $0x3c] sm:$0xf]
        %v928 = vld [vmem:[%s911 + $0x40] sm:$0xf]
        %v929 = vld [vmem:[%s911 + $0x44] sm:$0xf]
        %v930 = vld [vmem:[%s911 + $0x48] sm:$0xf]
        %v931 = vld [vmem:[%s911 + $0x4c] sm:$0xf]
        %v932 = vld [vmem:[%s911 + $0x50] sm:$0xf]
        %v933 = vld [vmem:[%s911 + $0x54] sm:$0xf]
        %v934 = vld [vmem:[%s911 + $0x58] sm:$0xf]
        %v935 = vld [vmem:[%s911 + $0x5c] sm:$0xf]
        %v936 = vld [vmem:[%s911 + $0x60] sm:$0xf]
        %v937 = vld [vmem:[%s911 + $0x64] sm:$0xf]
        %v938 = vld [vmem:[%s911 + $0x68] sm:$0xf]
        %v939 = vld [vmem:[%s911 + $0x6c] sm:$0xf]
        %v940 = vld [vmem:[%s911 + $0x70] sm:$0xf]
        %v941 = vld [vmem:[%s911 + $0x74] sm:$0xf]
        %v942 = vld [vmem:[%s911 + $0x78] sm:$0xf]
        %v943 = vld [vmem:[%s911 + $0x7c] sm:$0xf]
        %v944 = vld [vmem:[%s911 + $0x80] sm:$0xf]
        %v945 = vld [vmem:[%s911 + $0x84] sm:$0xf]
        %v946 = vld [vmem:[%s911 + $0x88] sm:$0xf]
        %v947 = vld [vmem:[%s911 + $0x8c] sm:$0xf]
        %v948 = vld [vmem:[%s911 + $0x90] sm:$0xf]
        %v949 = vld [vmem:[%s911 + $0x94] sm:$0xf]
        %v950 = vld [vmem:[%s911 + $0x98] sm:$0xf]
        %v951 = vld [vmem:[%s911 + $0x9c] sm:$0xf]
        %v952 = vld [vmem:[%s911 + $0xa0] sm:$0xf]
        %v953 = vld [vmem:[%s911 + $0xa4] sm:$0xf]
        %v954 = vld [vmem:[%s911 + $0xa8] sm:$0xf]
        %v955 = vld [vmem:[%s911 + $0xac] sm:$0xf]
        %v956 = vld [vmem:[%s911 + $0xb0] sm:$0xf]
        %v957 = vld [vmem:[%s911 + $0xb4] sm:$0xf]
        %v958 = vld [vmem:[%s911 + $0xb8] sm:$0xf]
        %v959 = vld [vmem:[%s911 + $0xbc] sm:$0xf]
        %v1008 = vunpack.c.l.b16 %v912
        %v1009 = vunpack.c.l.b16 %v913
        %v1010 = vunpack.c.l.b16 %v914
        %v1011 = vunpack.c.l.b16 %v915
        %v1012 = vunpack.c.l.b16 %v916
        %v1013 = vunpack.c.l.b16 %v917
        %v1014 = vunpack.c.l.b16 %v918
        %v1015 = vunpack.c.l.b16 %v919
        %v1016 = vunpack.c.l.b16 %v920
        %v1017 = vunpack.c.l.b16 %v921
        %v1018 = vunpack.c.l.b16 %v922
        %v1019 = vunpack.c.l.b16 %v923
        %v1020 = vunpack.c.l.b16 %v924
        %v1021 = vunpack.c.l.b16 %v925
        %v1022 = vunpack.c.l.b16 %v926
        %v1023 = vunpack.c.l.b16 %v927
        %v1024 = vunpack.c.l.b16 %v928
        %v1025 = vunpack.c.l.b16 %v929
        %v1026 = vunpack.c.l.b16 %v930
        %v1027 = vunpack.c.l.b16 %v931
        %v1028 = vunpack.c.l.b16 %v932
        %v1029 = vunpack.c.l.b16 %v933
        %v1030 = vunpack.c.l.b16 %v934
        %v1031 = vunpack.c.l.b16 %v935
        %v1032 = vunpack.c.l.b16 %v936
        %v1033 = vunpack.c.l.b16 %v937
        %v1034 = vunpack.c.l.b16 %v938
        %v1035 = vunpack.c.l.b16 %v939
        %v1036 = vunpack.c.l.b16 %v940
        %v1037 = vunpack.c.l.b16 %v941
        %v1038 = vunpack.c.l.b16 %v942
        %v1039 = vunpack.c.l.b16 %v943
        %v1040 = vunpack.c.l.b16 %v944
        %v1041 = vunpack.c.l.b16 %v945
        %v1042 = vunpack.c.l.b16 %v946
        %v1043 = vunpack.c.l.b16 %v947
        %v1044 = vunpack.c.l.b16 %v948
        %v1045 = vunpack.c.l.b16 %v949
        %v1046 = vunpack.c.l.b16 %v950
        %v1047 = vunpack.c.l.b16 %v951
        %v1048 = vunpack.c.l.b16 %v952
        %v1049 = vunpack.c.l.b16 %v953
        %v1050 = vunpack.c.l.b16 %v954
        %v1051 = vunpack.c.l.b16 %v955
        %v1052 = vunpack.c.l.b16 %v956
        %v1053 = vunpack.c.l.b16 %v957
        %v1054 = vunpack.c.l.b16 %v958
        %v1055 = vunpack.c.l.b16 %v959
        %v1056 = vpack.c.b16 %v1009, %v1008
        %v1057 = vpack.c.b16 %v1011, %v1010
        %v1058 = vpack.c.b16 %v1013, %v1012
        %v1059 = vpack.c.b16 %v1015, %v1014
        %v1060 = vpack.c.b16 %v1017, %v1016
        %v1061 = vpack.c.b16 %v1019, %v1018
        %v1062 = vpack.c.b16 %v1021, %v1020
        %v1063 = vpack.c.b16 %v1023, %v1022
        %v1064 = vpack.c.b16 %v1025, %v1024
        %v1065 = vpack.c.b16 %v1027, %v1026
        %v1066 = vpack.c.b16 %v1029, %v1028
        %v1067 = vpack.c.b16 %v1031, %v1030
        %v1068 = vpack.c.b16 %v1033, %v1032
        %v1069 = vpack.c.b16 %v1035, %v1034
        %v1070 = vpack.c.b16 %v1037, %v1036
        %v1071 = vpack.c.b16 %v1039, %v1038
        %v1072 = vpack.c.b16 %v1041, %v1040
        %v1073 = vpack.c.b16 %v1043, %v1042
        %v1074 = vpack.c.b16 %v1045, %v1044
        %v1075 = vpack.c.b16 %v1047, %v1046
        %v1076 = vpack.c.b16 %v1049, %v1048
        %v1077 = vpack.c.b16 %v1051, %v1050
        %v1078 = vpack.c.b16 %v1053, %v1052
        %v1079 = vpack.c.b16 %v1055, %v1054
        %1104 = vmatprep.subr.bf16.mxu0 0
        %1105 = vmatpush1.bf16.msra.mxu0 %v1056
        %1106 = vmatprep.subr.bf16.mxu0 0
        %1107 = vmatpush1.bf16.msra.mxu0 %v1057
        %1108 = vmatprep.subr.bf16.mxu0 0
        %1109 = vmatpush1.bf16.msra.mxu0 %v1058
        %1110 = vmatprep.subr.bf16.mxu0 0
        %1111 = vmatpush1.bf16.msra.mxu0 %v1059
        %1112 = vmatprep.subr.bf16.mxu0 0
        %1113 = vmatpush1.bf16.msra.mxu0 %v1060
        %1114 = vmatprep.subr.bf16.mxu0 0
        %1115 = vmatpush1.bf16.msra.mxu0 %v1061
        %1116 = vmatprep.subr.bf16.mxu0 0
        %1117 = vmatpush1.bf16.msra.mxu0 %v1062
        %1118 = vmatprep.subr.bf16.mxu0 0
        %1119 = vmatpush1.bf16.msra.mxu0 %v1063
        %1120 = vmatprep.subr.bf16.mxu0 0
        %1121 = vmatpush1.bf16.msra.mxu0 %v1064
        %1122 = vmatprep.subr.bf16.mxu0 0
        %1123 = vmatpush1.bf16.msra.mxu0 %v1065
        %1124 = vmatprep.subr.bf16.mxu0 0
        %1125 = vmatpush1.bf16.msra.mxu0 %v1066
        %1126 = vmatprep.subr.bf16.mxu0 0
        %1127 = vmatpush1.bf16.msra.mxu0 %v1067
        %1128 = vmatprep.subr.bf16.mxu0 0
        %1129 = vmatpush1.bf16.msra.mxu0 %v1068
        %1130 = vmatprep.subr.bf16.mxu0 0
        %1131 = vmatpush1.bf16.msra.mxu0 %v1069
        %1132 = vmatprep.subr.bf16.mxu0 0
        %1133 = vmatpush1.bf16.msra.mxu0 %v1070
        %1134 = vmatprep.subr.bf16.mxu0 0
        %1135 = vmatpush1.bf16.msra.mxu0 %v1071
        %1136 = vmatprep.mubr.bf16.mxu0 %v595
        %1137 = vmatmul.mubr.bf16.gmra.mrb[0].mxu0 %v593
        %v1138 = vpop.f32.mrb[0].mxu0
        %v1139 = vadd.f32 0.0, %v1138
        %v1140 = vpop.f32.mrb[0].mxu0
        %v1141 = vpop.f32.mrb[0].mxu0
        %v1142 = vadd.f32 0.0, %v1141
        %v1143 = vpop.f32.mrb[0].mxu0
        %1144 = vmatprep.mubr.bf16.mxu0 %v597
        %1145 = vmatmul.mubr.bf16.gmra.mrb[0].mxu0 %v595
        %v1146 = vpop.f32.mrb[0].mxu0
        %v1147 = vadd.f32 0.0, %v1146
        %v1148 = vpop.f32.mrb[0].mxu0
        %v1149 = vpop.f32.mrb[0].mxu0
        %v1150 = vadd.f32 0.0, %v1149
        %v1151 = vpop.f32.mrb[0].mxu0
        %1152 = vmatprep.mubr.bf16.mxu0 %v599
        %1153 = vmatmul.mubr.bf16.gmra.mrb[0].mxu0 %v597
        %v1154 = vpop.f32.mrb[0].mxu0
        %v1155 = vadd.f32 0.0, %v1154
        %v1156 = vpop.f32.mrb[0].mxu0
        %v1157 = vpop.f32.mrb[0].mxu0
        %v1158 = vadd.f32 0.0, %v1157
        %v1159 = vpop.f32.mrb[0].mxu0
        %1160 = vmatprep.mubr.bf16.mxu0 %v601
        %1161 = vmatmul.mubr.bf16.gmra.mrb[0].mxu0 %v599
        %v1162 = vpop.f32.mrb[0].mxu0
        %v1163 = vadd.f32 0.0, %v1162
        %v1164 = vpop.f32.mrb[0].mxu0
        %v1165 = vpop.f32.mrb[0].mxu0
        %v1166 = vadd.f32 0.0, %v1165
        %v1167 = vpop.f32.mrb[0].mxu0
        %1168 = vmatprep.mubr.bf16.mxu0 %v603
        %1169 = vmatmul.mubr.bf16.gmra.mrb[0].mxu0 %v601
        %v1170 = vpop.f32.mrb[0].mxu0
        %v1171 = vadd.f32 0.0, %v1170
        %v1172 = vpop.f32.mrb[0].mxu0
        %v1173 = vpop.f32.mrb[0].mxu0
        %v1174 = vadd.f32 0.0, %v1173
        %v1175 = vpop.f32.mrb[0].mxu0
        %1176 = vmatprep.mubr.bf16.mxu0 %v605
        %1177 = vmatmul.mubr.bf16.gmra.mrb[0].mxu0 %v603
        %v1178 = vpop.f32.mrb[0].mxu0
        %v1179 = vadd.f32 0.0, %v1178
        %v1180 = vpop.f32.mrb[0].mxu0
        %v1181 = vpop.f32.mrb[0].mxu0
        %v1182 = vadd.f32 0.0, %v1181
        %v1183 = vpop.f32.mrb[0].mxu0
        %1184 = vmatprep.mubr.bf16.mxu0 %v607
        %1185 = vmatmul.mubr.bf16.gmra.mrb[0].mxu0 %v605
        %v1186 = vpop.f32.mrb[0].mxu0
        %v1187 = vadd.f32 0.0, %v1186
        %v1188 = vpop.f32.mrb[0].mxu0
        %v1189 = vpop.f32.mrb[0].mxu0
        %v1190 = vadd.f32 0.0, %v1189
        %v1191 = vpop.f32.mrb[0].mxu0
        %1192 = vmatprep.mubr.bf16.mxu0 %v609
        %1193 = vmatmul.mubr.bf16.gmra.mrb[0].mxu0 %v607
        %v1194 = vpop.f32.mrb[0].mxu0
        %v1195 = vadd.f32 0.0, %v1194
        %v1196 = vpop.f32.mrb[0].mxu0
        %v1197 = vpop.f32.mrb[0].mxu0
        %v1198 = vadd.f32 0.0, %v1197
        %v1199 = vpop.f32.mrb[0].mxu0
        %1200 = vmatprep.mubr.bf16.mxu0 %v611
        %1201 = vmatmul.mubr.bf16.gmra.mrb[0].mxu0 %v609
        %v1202 = vpop.f32.mrb[0].mxu0
        %v1203 = vadd.f32 0.0, %v1202
        %v1204 = vpop.f32.mrb[0].mxu0
        %v1205 = vpop.f32.mrb[0].mxu0
        %v1206 = vadd.f32 0.0, %v1205
        %v1207 = vpop.f32.mrb[0].mxu0
        %1208 = vmatprep.mubr.bf16.mxu0 %v613
        %1209 = vmatmul.mubr.bf16.gmra.mrb[0].mxu0 %v611
        %v1210 = vpop.f32.mrb[0].mxu0
        %v1211 = vadd.f32 0.0, %v1210
        %v1212 = vpop.f32.mrb[0].mxu0
        %v1213 = vpop.f32.mrb[0].mxu0
        %v1214 = vadd.f32 0.0, %v1213
        %v1215 = vpop.f32.mrb[0].mxu0
        %1216 = vmatprep.mubr.bf16.mxu0 %v615
        %1217 = vmatmul.mubr.bf16.gmra.mrb[0].mxu0 %v613
        %v1218 = vpop.f32.mrb[0].mxu0
        %v1219 = vadd.f32 0.0, %v1218
        %v1220 = vpop.f32.mrb[0].mxu0
        %v1221 = vpop.f32.mrb[0].mxu0
        %v1222 = vadd.f32 0.0, %v1221
        %v1223 = vpop.f32.mrb[0].mxu0
        %1224 = vmatprep.mubr.bf16.mxu0 %v617
        %1225 = vmatmul.mubr.bf16.gmra.mrb[0].mxu0 %v615
        %v1226 = vpop.f32.mrb[0].mxu0
        %v1227 = vadd.f32 0.0, %v1226
        %v1228 = vpop.f32.mrb[0].mxu0
        %v1229 = vpop.f32.mrb[0].mxu0
        %v1230 = vadd.f32 0.0, %v1229
        %v1231 = vpop.f32.mrb[0].mxu0
        %1232 = vmatprep.mubr.bf16.mxu0 %v619
        %1233 = vmatmul.mubr.bf16.gmra.mrb[0].mxu0 %v617
        %v1234 = vpop.f32.mrb[0].mxu0
        %v1235 = vadd.f32 0.0, %v1234
        %v1236 = vpop.f32.mrb[0].mxu0
        %v1237 = vpop.f32.mrb[0].mxu0
        %v1238 = vadd.f32 0.0, %v1237
        %v1239 = vpop.f32.mrb[0].mxu0
        %1240 = vmatprep.mubr.bf16.mxu0 %v621
        %1241 = vmatmul.mubr.bf16.gmra.mrb[0].mxu0 %v619
        %v1242 = vpop.f32.mrb[0].mxu0
        %v1243 = vadd.f32 0.0, %v1242
        %v1244 = vpop.f32.mrb[0].mxu0
        %v1245 = vpop.f32.mrb[0].mxu0
        %v1246 = vadd.f32 0.0, %v1245
        %v1247 = vpop.f32.mrb[0].mxu0
        %1248 = vmatprep.mubr.bf16.mxu0 %v623
        %1249 = vmatmul.mubr.bf16.gmra.mrb[0].mxu0 %v621
        %v1250 = vpop.f32.mrb[0].mxu0
        %v1251 = vadd.f32 0.0, %v1250
        %v1252 = vpop.f32.mrb[0].mxu0
        %v1253 = vpop.f32.mrb[0].mxu0
        %v1254 = vadd.f32 0.0, %v1253
        %v1255 = vpop.f32.mrb[0].mxu0
        %1256 = vmatprep.mubr.bf16.mxu0 %v625
        %1257 = vmatmul.mubr.bf16.gmra.mrb[0].mxu0 %v623
        %v1258 = vpop.f32.mrb[0].mxu0
        %v1259 = vadd.f32 0.0, %v1258
        %v1260 = vpop.f32.mrb[0].mxu0
        %v1261 = vpop.f32.mrb[0].mxu0
        %v1262 = vadd.f32 0.0, %v1261
        %v1263 = vpop.f32.mrb[0].mxu0
        %1264 = vdwg.mxu0
        %1265 = vmatprep.subr.bf16.mxu0 0
        %1266 = vmatpush1.bf16.msra.mxu0 %v1072
        %1267 = vmatprep.subr.bf16.mxu0 0
        %1268 = vmatpush1.bf16.msra.mxu0 %v1073
        %1269 = vmatprep.subr.bf16.mxu0 0
        %1270 = vmatpush1.bf16.msra.mxu0 %v1074
        %1271 = vmatprep.subr.bf16.mxu0 0
        %1272 = vmatpush1.bf16.msra.mxu0 %v1075
        %1273 = vmatprep.subr.bf16.mxu0 0
        %1274 = vmatpush1.bf16.msra.mxu0 %v1076
        %1275 = vmatprep.subr.bf16.mxu0 0
        %1276 = vmatpush1.bf16.msra.mxu0 %v1077
        %1277 = vmatprep.subr.bf16.mxu0 0
        %1278 = vmatpush1.bf16.msra.mxu0 %v1078
        %1279 = vmatprep.subr.bf16.mxu0 0
        %1280 = vmatpush1.bf16.msra.mxu0 %v1079
        %1281 = vmatprep.subr.bf16.mxu0 0
        %1282 = vmatpush1.bf16.msra.mxu0 0
        %1283 = vmatprep.subr.bf16.mxu0 0
        %1284 = vmatpush1.bf16.msra.mxu0 0
        %1285 = vmatprep.subr.bf16.mxu0 0
        %1286 = vmatpush1.bf16.msra.mxu0 0
        %1287 = vmatprep.subr.bf16.mxu0 0
        %1288 = vmatpush1.bf16.msra.mxu0 0
        %1289 = vmatprep.subr.bf16.mxu0 0
        %1290 = vmatpush1.bf16.msra.mxu0 0
        %1291 = vmatprep.subr.bf16.mxu0 0
        %1292 = vmatpush1.bf16.msra.mxu0 0
        %1293 = vmatprep.subr.bf16.mxu0 0
        %1294 = vmatpush1.bf16.msra.mxu0 0
        %1295 = vmatprep.subr.bf16.mxu0 0
        %1296 = vmatpush1.bf16.msra.mxu0 0
        %1297 = vmatprep.mubr.bf16.mxu0 0
        %1298 = vmatmul.mubr.bf16.gmra.mrb[0].mxu0 %v597
        %v1299 = vpop.f32.mrb[0].mxu0
        %v1300 = vadd.f32 %v1139, %v1299
        %v1301 = vpop.f32.mrb[0].mxu0
        %v1302 = vpop.f32.mrb[0].mxu0
        %v1303 = vadd.f32 %v1142, %v1302
        %v1304 = vpop.f32.mrb[0].mxu0
        %1305 = vmatprep.mubr.bf16.mxu0 0
        %1306 = vmatmul.mubr.bf16.gmra.mrb[0].mxu0 %v599
        %v1307 = vpop.f32.mrb[0].mxu0
        %v1308 = vadd.f32 %v1147, %v1307
        %v1309 = vpop.f32.mrb[0].mxu0
        %v1310 = vpop.f32.mrb[0].mxu0
        %v1311 = vadd.f32 %v1150, %v1310
        %v1312 = vpop.f32.mrb[0].mxu0
        %1313 = vmatprep.mubr.bf16.mxu0 0
        %1314 = vmatmul.mubr.bf16.gmra.mrb[0].mxu0 %v601
        %v1315 = vpop.f32.mrb[0].mxu0
        %v1316 = vadd.f32 %v1155, %v1315
        %v1317 = vpop.f32.mrb[0].mxu0
        %v1318 = vpop.f32.mrb[0].mxu0
        %v1319 = vadd.f32 %v1158, %v1318
        %v1320 = vpop.f32.mrb[0].mxu0
        %1321 = vmatprep.mubr.bf16.mxu0 0
        %1322 = vmatmul.mubr.bf16.gmra.mrb[0].mxu0 %v603
        %v1323 = vpop.f32.mrb[0].mxu0
        %v1324 = vadd.f32 %v1163, %v1323
        %v1325 = vpop.f32.mrb[0].mxu0
        %v1326 = vpop.f32.mrb[0].mxu0
        %v1327 = vadd.f32 %v1166, %v1326
        %v1328 = vpop.f32.mrb[0].mxu0
        %1329 = vmatprep.mubr.bf16.mxu0 0
        %1330 = vmatmul.mubr.bf16.gmra.mrb[0].mxu0 %v605
        %v1331 = vpop.f32.mrb[0].mxu0
        %v1332 = vadd.f32 %v1171, %v1331
        %v1333 = vpop.f32.mrb[0].mxu0
        %v1334 = vpop.f32.mrb[0].mxu0
        %v1335 = vadd.f32 %v1174, %v1334
        %v1336 = vpop.f32.mrb[0].mxu0
        %1337 = vmatprep.mubr.bf16.mxu0 0
        %1338 = vmatmul.mubr.bf16.gmra.mrb[0].mxu0 %v607
        %v1339 = vpop.f32.mrb[0].mxu0
        %v1340 = vadd.f32 %v1179, %v1339
        %v1341 = vpop.f32.mrb[0].mxu0
        %v1342 = vpop.f32.mrb[0].mxu0
        %v1343 = vadd.f32 %v1182, %v1342
        %v1344 = vpop.f32.mrb[0].mxu0
        %1345 = vmatprep.mubr.bf16.mxu0 0
        %1346 = vmatmul.mubr.bf16.gmra.mrb[0].mxu0 %v609
        %v1347 = vpop.f32.mrb[0].mxu0
        %v1348 = vadd.f32 %v1187, %v1347
        %v1349 = vpop.f32.mrb[0].mxu0
        %v1350 = vpop.f32.mrb[0].mxu0
        %v1351 = vadd.f32 %v1190, %v1350
        %v1352 = vpop.f32.mrb[0].mxu0
        %1353 = vmatprep.mubr.bf16.mxu0 0
        %1354 = vmatmul.mubr.bf16.gmra.mrb[0].mxu0 %v611
        %v1355 = vpop.f32.mrb[0].mxu0
        %v1356 = vadd.f32 %v1195, %v1355
        %v1357 = vpop.f32.mrb[0].mxu0
        %v1358 = vpop.f32.mrb[0].mxu0
        %v1359 = vadd.f32 %v1198, %v1358
        %v1360 = vpop.f32.mrb[0].mxu0
        %1361 = vmatprep.mubr.bf16.mxu0 0
        %1362 = vmatmul.mubr.bf16.gmra.mrb[0].mxu0 %v613
        %v1363 = vpop.f32.mrb[0].mxu0
        %v1364 = vadd.f32 %v1203, %v1363
        %v1365 = vpop.f32.mrb[0].mxu0
        %v1366 = vpop.f32.mrb[0].mxu0
        %v1367 = vadd.f32 %v1206, %v1366
        %v1368 = vpop.f32.mrb[0].mxu0
        %1369 = vmatprep.mubr.bf16.mxu0 0
        %1370 = vmatmul.mubr.bf16.gmra.mrb[0].mxu0 %v615
        %v1371 = vpop.f32.mrb[0].mxu0
        %v1372 = vadd.f32 %v1211, %v1371
        %v1373 = vpop.f32.mrb[0].mxu0
        %v1374 = vpop.f32.mrb[0].mxu0
        %v1375 = vadd.f32 %v1214, %v1374
        %v1376 = vpop.f32.mrb[0].mxu0
        %1377 = vmatprep.mubr.bf16.mxu0 0
        %1378 = vmatmul.mubr.bf16.gmra.mrb[0].mxu0 %v617
        %v1379 = vpop.f32.mrb[0].mxu0
        %v1380 = vadd.f32 %v1219, %v1379
        %v1381 = vpop.f32.mrb[0].mxu0
        %v1382 = vpop.f32.mrb[0].mxu0
        %v1383 = vadd.f32 %v1222, %v1382
        %v1384 = vpop.f32.mrb[0].mxu0
        %1385 = vmatprep.mubr.bf16.mxu0 0
        %1386 = vmatmul.mubr.bf16.gmra.mrb[0].mxu0 %v619
        %v1387 = vpop.f32.mrb[0].mxu0
        %v1388 = vadd.f32 %v1227, %v1387
        %v1389 = vpop.f32.mrb[0].mxu0
        %v1390 = vpop.f32.mrb[0].mxu0
        %v1391 = vadd.f32 %v1230, %v1390
        %v1392 = vpop.f32.mrb[0].mxu0
        %1393 = vmatprep.mubr.bf16.mxu0 0
        %1394 = vmatmul.mubr.bf16.gmra.mrb[0].mxu0 %v621
        %v1395 = vpop.f32.mrb[0].mxu0
        %v1396 = vadd.f32 %v1235, %v1395
        %v1397 = vpop.f32.mrb[0].mxu0
        %v1398 = vpop.f32.mrb[0].mxu0
        %v1399 = vadd.f32 %v1238, %v1398
        %v1400 = vpop.f32.mrb[0].mxu0
        %1401 = vmatprep.mubr.bf16.mxu0 0
        %1402 = vmatmul.mubr.bf16.gmra.mrb[0].mxu0 %v623
        %v1403 = vpop.f32.mrb[0].mxu0
        %v1404 = vadd.f32 %v1243, %v1403
        %v1405 = vpop.f32.mrb[0].mxu0
        %v1406 = vpop.f32.mrb[0].mxu0
        %v1407 = vadd.f32 %v1246, %v1406
        %v1408 = vpop.f32.mrb[0].mxu0
        %1409 = vmatprep.mubr.bf16.mxu0 0
        %1410 = vmatmul.mubr.bf16.gmra.mrb[0].mxu0 %v625
        %v1411 = vpop.f32.mrb[0].mxu0
        %v1412 = vadd.f32 %v1251, %v1411
        %v1413 = vpop.f32.mrb[0].mxu0
        %v1414 = vpop.f32.mrb[0].mxu0
        %v1415 = vadd.f32 %v1254, %v1414
        %v1416 = vpop.f32.mrb[0].mxu0
        %1417 = vmatprep.mubr.bf16.mxu0 0
        %1418 = vmatmul.mubr.bf16.gmra.mrb[0].mxu0 %v627
        %v1419 = vpop.f32.mrb[0].mxu0
        %v1420 = vadd.f32 %v1259, %v1419
        %v1421 = vpop.f32.mrb[0].mxu0
        %v1422 = vpop.f32.mrb[0].mxu0
        %v1423 = vadd.f32 %v1262, %v1422
        %v1424 = vpop.f32.mrb[0].mxu0
        %1425 = vdwg.mxu0
        %v1474 = vunpack.c.l.b16 %v863
        %v1475 = vunpack.c.l.b16 %v864
        %v1476 = vunpack.c.l.b16 %v865
        %v1477 = vunpack.c.l.b16 %v866
        %v1478 = vunpack.c.l.b16 %v867
        %v1479 = vunpack.c.l.b16 %v868
        %v1480 = vunpack.c.l.b16 %v869
        %v1481 = vunpack.c.l.b16 %v870
        %v1482 = vunpack.c.l.b16 %v871
        %v1483 = vunpack.c.l.b16 %v872
        %v1484 = vunpack.c.l.b16 %v873
        %v1485 = vunpack.c.l.b16 %v874
        %v1486 = vunpack.c.l.b16 %v875
        %v1487 = vunpack.c.l.b16 %v876
        %v1488 = vunpack.c.l.b16 %v877
        %v1489 = vunpack.c.l.b16 %v878
        %v1490 = vunpack.c.l.b16 %v879
        %v1491 = vunpack.c.l.b16 %v880
        %v1492 = vunpack.c.l.b16 %v881
        %v1493 = vunpack.c.l.b16 %v882
        %v1494 = vunpack.c.l.b16 %v883
        %v1495 = vunpack.c.l.b16 %v884
        %v1496 = vunpack.c.l.b16 %v885
        %v1497 = vunpack.c.l.b16 %v886
        %v1498 = vunpack.c.l.b16 %v887
        %v1499 = vunpack.c.l.b16 %v888
        %v1500 = vunpack.c.l.b16 %v889
        %v1501 = vunpack.c.l.b16 %v890
        %v1502 = vunpack.c.l.b16 %v891
        %v1503 = vunpack.c.l.b16 %v892
        %v1504 = vunpack.c.l.b16 %v893
        %v1505 = vunpack.c.l.b16 %v894
        %v1506 = vunpack.c.l.b16 %v895
        %v1507 = vunpack.c.l.b16 %v896
        %v1508 = vunpack.c.l.b16 %v897
        %v1509 = vunpack.c.l.b16 %v898
        %v1510 = vunpack.c.l.b16 %v899
        %v1511 = vunpack.c.l.b16 %v900
        %v1512 = vunpack.c.l.b16 %v901
        %v1513 = vunpack.c.l.b16 %v902
        %v1514 = vunpack.c.l.b16 %v903
        %v1515 = vunpack.c.l.b16 %v904
        %v1516 = vunpack.c.l.b16 %v905
        %v1517 = vunpack.c.l.b16 %v906
        %v1518 = vunpack.c.l.b16 %v907
        %v1519 = vunpack.c.l.b16 %v908
        %v1520 = vunpack.c.l.b16 %v909
        %v1521 = vunpack.c.l.b16 %v910
        %v1522 = vpack.c.b16 %v1475, %v1474
        %v1523 = vpack.c.b16 %v1477, %v1476
        %v1524 = vpack.c.b16 %v1479, %v1478
        %v1525 = vpack.c.b16 %v1481, %v1480
        %v1526 = vpack.c.b16 %v1483, %v1482
        %v1527 = vpack.c.b16 %v1485, %v1484
        %v1528 = vpack.c.b16 %v1487, %v1486
        %v1529 = vpack.c.b16 %v1489, %v1488
        %v1530 = vpack.c.b16 %v1491, %v1490
        %v1531 = vpack.c.b16 %v1493, %v1492
        %v1532 = vpack.c.b16 %v1495, %v1494
        %v1533 = vpack.c.b16 %v1497, %v1496
        %v1534 = vpack.c.b16 %v1499, %v1498
        %v1535 = vpack.c.b16 %v1501, %v1500
        %v1536 = vpack.c.b16 %v1503, %v1502
        %v1537 = vpack.c.b16 %v1505, %v1504
        %v1538 = vpack.c.b16 %v1507, %v1506
        %v1539 = vpack.c.b16 %v1509, %v1508
        %v1540 = vpack.c.b16 %v1511, %v1510
        %v1541 = vpack.c.b16 %v1513, %v1512
        %v1542 = vpack.c.b16 %v1515, %v1514
        %v1543 = vpack.c.b16 %v1517, %v1516
        %v1544 = vpack.c.b16 %v1519, %v1518
        %v1545 = vpack.c.b16 %v1521, %v1520
        %1570 = vmatprep.subr.bf16.mxu0 0
        %1571 = vmatpush1.bf16.msra.mxu0 %v1522
        %1572 = vmatprep.subr.bf16.mxu0 0
        %1573 = vmatpush1.bf16.msra.mxu0 %v1523
        %1574 = vmatprep.subr.bf16.mxu0 0
        %1575 = vmatpush1.bf16.msra.mxu0 %v1524
        %1576 = vmatprep.subr.bf16.mxu0 0
        %1577 = vmatpush1.bf16.msra.mxu0 %v1525
        %1578 = vmatprep.subr.bf16.mxu0 0
        %1579 = vmatpush1.bf16.msra.mxu0 %v1526
        %1580 = vmatprep.subr.bf16.mxu0 0
        %1581 = vmatpush1.bf16.msra.mxu0 %v1527
        %1582 = vmatprep.subr.bf16.mxu0 0
        %1583 = vmatpush1.bf16.msra.mxu0 %v1528
        %1584 = vmatprep.subr.bf16.mxu0 0
        %1585 = vmatpush1.bf16.msra.mxu0 %v1529
        %1586 = vmatprep.subr.bf16.mxu0 0
        %1587 = vmatpush1.bf16.msra.mxu0 %v1530
        %1588 = vmatprep.subr.bf16.mxu0 0
        %1589 = vmatpush1.bf16.msra.mxu0 %v1531
        %1590 = vmatprep.subr.bf16.mxu0 0
        %1591 = vmatpush1.bf16.msra.mxu0 %v1532
        %1592 = vmatprep.subr.bf16.mxu0 0
        %1593 = vmatpush1.bf16.msra.mxu0 %v1533
        %1594 = vmatprep.subr.bf16.mxu0 0
        %1595 = vmatpush1.bf16.msra.mxu0 %v1534
        %1596 = vmatprep.subr.bf16.mxu0 0
        %1597 = vmatpush1.bf16.msra.mxu0 %v1535
        %1598 = vmatprep.subr.bf16.mxu0 0
        %1599 = vmatpush1.bf16.msra.mxu0 %v1536
        %1600 = vmatprep.subr.bf16.mxu0 0
        %1601 = vmatpush1.bf16.msra.mxu0 %v1537
        %1602 = vmatprep.mubr.bf16.mxu0 %v652
        %1603 = vmatmul.mubr.bf16.gmra.mrb[0].mxu0 %v640
        %v1604 = vpop.f32.mrb[0].mxu0
        %v1605 = vadd.f32 %v1300, %v1604
        %v1606 = vpop.f32.mrb[0].mxu0
        %v1607 = vpop.f32.mrb[0].mxu0
        %v1608 = vadd.f32 %v1303, %v1607
        %v1609 = vpop.f32.mrb[0].mxu0
        %1610 = vmatprep.mubr.bf16.mxu0 %v664
        %1611 = vmatmul.mubr.bf16.gmra.mrb[0].mxu0 %v652
        %v1612 = vpop.f32.mrb[0].mxu0
        %v1613 = vadd.f32 %v1308, %v1612
        %v1614 = vpop.f32.mrb[0].mxu0
        %v1615 = vpop.f32.mrb[0].mxu0
        %v1616 = vadd.f32 %v1311, %v1615
        %v1617 = vpop.f32.mrb[0].mxu0
        %1618 = vmatprep.mubr.bf16.mxu0 %v676
        %1619 = vmatmul.mubr.bf16.gmra.mrb[0].mxu0 %v664
        %v1620 = vpop.f32.mrb[0].mxu0
        %v1621 = vadd.f32 %v1316, %v1620
        %v1622 = vpop.f32.mrb[0].mxu0
        %v1623 = vpop.f32.mrb[0].mxu0
        %v1624 = vadd.f32 %v1319, %v1623
        %v1625 = vpop.f32.mrb[0].mxu0
        %1626 = vmatprep.mubr.bf16.mxu0 %v688
        %1627 = vmatmul.mubr.bf16.gmra.mrb[0].mxu0 %v676
        %v1628 = vpop.f32.mrb[0].mxu0
        %v1629 = vadd.f32 %v1324, %v1628
        %v1630 = vpop.f32.mrb[0].mxu0
        %v1631 = vpop.f32.mrb[0].mxu0
        %v1632 = vadd.f32 %v1327, %v1631
        %v1633 = vpop.f32.mrb[0].mxu0
        %1634 = vmatprep.mubr.bf16.mxu0 %v700
        %1635 = vmatmul.mubr.bf16.gmra.mrb[0].mxu0 %v688
        %v1636 = vpop.f32.mrb[0].mxu0
        %v1637 = vadd.f32 %v1332, %v1636
        %v1638 = vpop.f32.mrb[0].mxu0
        %v1639 = vpop.f32.mrb[0].mxu0
        %v1640 = vadd.f32 %v1335, %v1639
        %v1641 = vpop.f32.mrb[0].mxu0
        %1642 = vmatprep.mubr.bf16.mxu0 %v712
        %1643 = vmatmul.mubr.bf16.gmra.mrb[0].mxu0 %v700
        %v1644 = vpop.f32.mrb[0].mxu0
        %v1645 = vadd.f32 %v1340, %v1644
        %v1646 = vpop.f32.mrb[0].mxu0
        %v1647 = vpop.f32.mrb[0].mxu0
        %v1648 = vadd.f32 %v1343, %v1647
        %v1649 = vpop.f32.mrb[0].mxu0
        %1650 = vmatprep.mubr.bf16.mxu0 %v724
        %1651 = vmatmul.mubr.bf16.gmra.mrb[0].mxu0 %v712
        %v1652 = vpop.f32.mrb[0].mxu0
        %v1653 = vadd.f32 %v1348, %v1652
        %v1654 = vpop.f32.mrb[0].mxu0
        %v1655 = vpop.f32.mrb[0].mxu0
        %v1656 = vadd.f32 %v1351, %v1655
        %v1657 = vpop.f32.mrb[0].mxu0
        %1658 = vmatprep.mubr.bf16.mxu0 %v736
        %1659 = vmatmul.mubr.bf16.gmra.mrb[0].mxu0 %v724
        %v1660 = vpop.f32.mrb[0].mxu0
        %v1661 = vadd.f32 %v1356, %v1660
        %v1662 = vpop.f32.mrb[0].mxu0
        %v1663 = vpop.f32.mrb[0].mxu0
        %v1664 = vadd.f32 %v1359, %v1663
        %v1665 = vpop.f32.mrb[0].mxu0
        %1666 = vmatprep.mubr.bf16.mxu0 %v748
        %1667 = vmatmul.mubr.bf16.gmra.mrb[0].mxu0 %v736
        %v1668 = vpop.f32.mrb[0].mxu0
        %v1669 = vadd.f32 %v1364, %v1668
        %v1670 = vpop.f32.mrb[0].mxu0
        %v1671 = vpop.f32.mrb[0].mxu0
        %v1672 = vadd.f32 %v1367, %v1671
        %v1673 = vpop.f32.mrb[0].mxu0
        %1674 = vmatprep.mubr.bf16.mxu0 %v760
        %1675 = vmatmul.mubr.bf16.gmra.mrb[0].mxu0 %v748
        %v1676 = vpop.f32.mrb[0].mxu0
        %v1677 = vadd.f32 %v1372, %v1676
        %v1678 = vpop.f32.mrb[0].mxu0
        %v1679 = vpop.f32.mrb[0].mxu0
        %v1680 = vadd.f32 %v1375, %v1679
        %v1681 = vpop.f32.mrb[0].mxu0
        %1682 = vmatprep.mubr.bf16.mxu0 %v772
        %1683 = vmatmul.mubr.bf16.gmra.mrb[0].mxu0 %v760
        %v1684 = vpop.f32.mrb[0].mxu0
        %v1685 = vadd.f32 %v1380, %v1684
        %v1686 = vpop.f32.mrb[0].mxu0
        %v1687 = vpop.f32.mrb[0].mxu0
        %v1688 = vadd.f32 %v1383, %v1687
        %v1689 = vpop.f32.mrb[0].mxu0
        %1690 = vmatprep.mubr.bf16.mxu0 %v784
        %1691 = vmatmul.mubr.bf16.gmra.mrb[0].mxu0 %v772
        %v1692 = vpop.f32.mrb[0].mxu0
        %v1693 = vadd.f32 %v1388, %v1692
        %v1694 = vpop.f32.mrb[0].mxu0
        %v1695 = vpop.f32.mrb[0].mxu0
        %v1696 = vadd.f32 %v1391, %v1695
        %v1697 = vpop.f32.mrb[0].mxu0
        %1698 = vmatprep.mubr.bf16.mxu0 %v796
        %1699 = vmatmul.mubr.bf16.gmra.mrb[0].mxu0 %v784
        %v1700 = vpop.f32.mrb[0].mxu0
        %v1701 = vadd.f32 %v1396, %v1700
        %v1702 = vpop.f32.mrb[0].mxu0
        %v1703 = vpop.f32.mrb[0].mxu0
        %v1704 = vadd.f32 %v1399, %v1703
        %v1705 = vpop.f32.mrb[0].mxu0
        %1706 = vmatprep.mubr.bf16.mxu0 %v808
        %1707 = vmatmul.mubr.bf16.gmra.mrb[0].mxu0 %v796
        %v1708 = vpop.f32.mrb[0].mxu0
        %v1709 = vadd.f32 %v1404, %v1708
        %v1710 = vpop.f32.mrb[0].mxu0
        %v1711 = vpop.f32.mrb[0].mxu0
        %v1712 = vadd.f32 %v1407, %v1711
        %v1713 = vpop.f32.mrb[0].mxu0
        %1714 = vmatprep.mubr.bf16.mxu0 %v820
        %1715 = vmatmul.mubr.bf16.gmra.mrb[0].mxu0 %v808
        %v1716 = vpop.f32.mrb[0].mxu0
        %v1717 = vadd.f32 %v1412, %v1716
        %v1718 = vpop.f32.mrb[0].mxu0
        %v1719 = vpop.f32.mrb[0].mxu0
        %v1720 = vadd.f32 %v1415, %v1719
        %v1721 = vpop.f32.mrb[0].mxu0
        %1722 = vmatprep.mubr.bf16.mxu0 %v832
        %1723 = vmatmul.mubr.bf16.gmra.mrb[0].mxu0 %v820
        %v1724 = vpop.f32.mrb[0].mxu0
        %v1725 = vadd.f32 %v1420, %v1724
        %v1726 = vpop.f32.mrb[0].mxu0
        %v1727 = vpop.f32.mrb[0].mxu0
        %v1728 = vadd.f32 %v1423, %v1727
        %v1729 = vpop.f32.mrb[0].mxu0
        %1730 = vdwg.mxu0
        %1731 = vmatprep.subr.bf16.mxu0 0
        %1732 = vmatpush1.bf16.msra.mxu0 %v1538
        %1733 = vmatprep.subr.bf16.mxu0 0
        %1734 = vmatpush1.bf16.msra.mxu0 %v1539
        %1735 = vmatprep.subr.bf16.mxu0 0
        %1736 = vmatpush1.bf16.msra.mxu0 %v1540
        %1737 = vmatprep.subr.bf16.mxu0 0
        %1738 = vmatpush1.bf16.msra.mxu0 %v1541
        %1739 = vmatprep.subr.bf16.mxu0 0
        %1740 = vmatpush1.bf16.msra.mxu0 %v1542
        %1741 = vmatprep.subr.bf16.mxu0 0
        %1742 = vmatpush1.bf16.msra.mxu0 %v1543
        %1743 = vmatprep.subr.bf16.mxu0 0
        %1744 = vmatpush1.bf16.msra.mxu0 %v1544
        %1745 = vmatprep.subr.bf16.mxu0 0
        %1746 = vmatpush1.bf16.msra.mxu0 %v1545
        %1747 = vmatprep.subr.bf16.mxu0 0
        %1748 = vmatpush1.bf16.msra.mxu0 0
        %1749 = vmatprep.subr.bf16.mxu0 0
        %1750 = vmatpush1.bf16.msra.mxu0 0
        %1751 = vmatprep.subr.bf16.mxu0 0
        %1752 = vmatpush1.bf16.msra.mxu0 0
        %1753 = vmatprep.subr.bf16.mxu0 0
        %1754 = vmatpush1.bf16.msra.mxu0 0
        %1755 = vmatprep.subr.bf16.mxu0 0
        %1756 = vmatpush1.bf16.msra.mxu0 0
        %1757 = vmatprep.subr.bf16.mxu0 0
        %1758 = vmatpush1.bf16.msra.mxu0 0
        %1759 = vmatprep.subr.bf16.mxu0 0
        %1760 = vmatpush1.bf16.msra.mxu0 0
        %1761 = vmatprep.subr.bf16.mxu0 0
        %1762 = vmatpush1.bf16.msra.mxu0 0
        %1763 = vmatprep.mubr.bf16.mxu0 0
        %1764 = vmatmul.mubr.bf16.gmra.mrb[0].mxu0 %v664
        %v1765 = vpop.f32.mrb[0].mxu0
        %v1766 = vadd.f32 %v1605, %v1765
        %v1767 = vpop.f32.mrb[0].mxu0
        %v1768 = vpop.f32.mrb[0].mxu0
        %v1769 = vadd.f32 %v1608, %v1768
        %v1770 = vpop.f32.mrb[0].mxu0
        %1771 = vmatprep.mubr.bf16.mxu0 0
        %1772 = vmatmul.mubr.bf16.gmra.mrb[0].mxu0 %v676
        %v1773 = vpop.f32.mrb[0].mxu0
        %v1774 = vadd.f32 %v1613, %v1773
        %v1775 = vpop.f32.mrb[0].mxu0
        %v1776 = vpop.f32.mrb[0].mxu0
        %v1777 = vadd.f32 %v1616, %v1776
        %v1778 = vpop.f32.mrb[0].mxu0
        %1779 = vmatprep.mubr.bf16.mxu0 0
        %1780 = vmatmul.mubr.bf16.gmra.mrb[0].mxu0 %v688
        %v1781 = vpop.f32.mrb[0].mxu0
        %v1782 = vadd.f32 %v1621, %v1781
        %v1783 = vpop.f32.mrb[0].mxu0
        %v1784 = vpop.f32.mrb[0].mxu0
        %v1785 = vadd.f32 %v1624, %v1784
        %v1786 = vpop.f32.mrb[0].mxu0
        %1787 = vmatprep.mubr.bf16.mxu0 0
        %1788 = vmatmul.mubr.bf16.gmra.mrb[0].mxu0 %v700
        %v1789 = vpop.f32.mrb[0].mxu0
        %v1790 = vadd.f32 %v1629, %v1789
        %v1791 = vpop.f32.mrb[0].mxu0
        %v1792 = vpop.f32.mrb[0].mxu0
        %v1793 = vadd.f32 %v1632, %v1792
        %v1794 = vpop.f32.mrb[0].mxu0
        %1795 = vmatprep.mubr.bf16.mxu0 0
        %1796 = vmatmul.mubr.bf16.gmra.mrb[0].mxu0 %v712
        %v1797 = vpop.f32.mrb[0].mxu0
        %v1798 = vadd.f32 %v1637, %v1797
        %v1799 = vpop.f32.mrb[0].mxu0
        %v1800 = vpop.f32.mrb[0].mxu0
        %v1801 = vadd.f32 %v1640, %v1800
        %v1802 = vpop.f32.mrb[0].mxu0
        %1803 = vmatprep.mubr.bf16.mxu0 0
        %1804 = vmatmul.mubr.bf16.gmra.mrb[0].mxu0 %v724
        %v1805 = vpop.f32.mrb[0].mxu0
        %v1806 = vadd.f32 %v1645, %v1805
        %v1807 = vpop.f32.mrb[0].mxu0
        %v1808 = vpop.f32.mrb[0].mxu0
        %v1809 = vadd.f32 %v1648, %v1808
        %v1810 = vpop.f32.mrb[0].mxu0
        %1811 = vmatprep.mubr.bf16.mxu0 0
        %1812 = vmatmul.mubr.bf16.gmra.mrb[0].mxu0 %v736
        %v1813 = vpop.f32.mrb[0].mxu0
        %v1814 = vadd.f32 %v1653, %v1813
        %v1815 = vpop.f32.mrb[0].mxu0
        %v1816 = vpop.f32.mrb[0].mxu0
        %v1817 = vadd.f32 %v1656, %v1816
        %v1818 = vpop.f32.mrb[0].mxu0
        %1819 = vmatprep.mubr.bf16.mxu0 0
        %1820 = vmatmul.mubr.bf16.gmra.mrb[0].mxu0 %v748
        %v1821 = vpop.f32.mrb[0].mxu0
        %v1822 = vadd.f32 %v1661, %v1821
        %v1823 = vpop.f32.mrb[0].mxu0
        %v1824 = vpop.f32.mrb[0].mxu0
        %v1825 = vadd.f32 %v1664, %v1824
        %v1826 = vpop.f32.mrb[0].mxu0
        %1827 = vmatprep.mubr.bf16.mxu0 0
        %1828 = vmatmul.mubr.bf16.gmra.mrb[0].mxu0 %v760
        %v1829 = vpop.f32.mrb[0].mxu0
        %v1830 = vadd.f32 %v1669, %v1829
        %v1831 = vpop.f32.mrb[0].mxu0
        %v1832 = vpop.f32.mrb[0].mxu0
        %v1833 = vadd.f32 %v1672, %v1832
        %v1834 = vpop.f32.mrb[0].mxu0
        %1835 = vmatprep.mubr.bf16.mxu0 0
        %1836 = vmatmul.mubr.bf16.gmra.mrb[0].mxu0 %v772
        %v1837 = vpop.f32.mrb[0].mxu0
        %v1838 = vadd.f32 %v1677, %v1837
        %v1839 = vpop.f32.mrb[0].mxu0
        %v1840 = vpop.f32.mrb[0].mxu0
        %v1841 = vadd.f32 %v1680, %v1840
        %v1842 = vpop.f32.mrb[0].mxu0
        %1843 = vmatprep.mubr.bf16.mxu0 0
        %1844 = vmatmul.mubr.bf16.gmra.mrb[0].mxu0 %v784
        %v1845 = vpop.f32.mrb[0].mxu0
        %v1846 = vadd.f32 %v1685, %v1845
        %v1847 = vpop.f32.mrb[0].mxu0
        %v1848 = vpop.f32.mrb[0].mxu0
        %v1849 = vadd.f32 %v1688, %v1848
        %v1850 = vpop.f32.mrb[0].mxu0
        %1851 = vmatprep.mubr.bf16.mxu0 0
        %1852 = vmatmul.mubr.bf16.gmra.mrb[0].mxu0 %v796
        %v1853 = vpop.f32.mrb[0].mxu0
        %v1854 = vadd.f32 %v1693, %v1853
        %v1855 = vpop.f32.mrb[0].mxu0
        %v1856 = vpop.f32.mrb[0].mxu0
        %v1857 = vadd.f32 %v1696, %v1856
        %v1858 = vpop.f32.mrb[0].mxu0
        %1859 = vmatprep.mubr.bf16.mxu0 0
        %1860 = vmatmul.mubr.bf16.gmra.mrb[0].mxu0 %v808
        %v1861 = vpop.f32.mrb[0].mxu0
        %v1862 = vadd.f32 %v1701, %v1861
        %v1863 = vpop.f32.mrb[0].mxu0
        %v1864 = vpop.f32.mrb[0].mxu0
        %v1865 = vadd.f32 %v1704, %v1864
        %v1866 = vpop.f32.mrb[0].mxu0
        %1867 = vmatprep.mubr.bf16.mxu0 0
        %1868 = vmatmul.mubr.bf16.gmra.mrb[0].mxu0 %v820
        %v1869 = vpop.f32.mrb[0].mxu0
        %v1870 = vadd.f32 %v1709, %v1869
        %v1871 = vpop.f32.mrb[0].mxu0
        %v1872 = vpop.f32.mrb[0].mxu0
        %v1873 = vadd.f32 %v1712, %v1872
        %v1874 = vpop.f32.mrb[0].mxu0
        %1875 = vmatprep.mubr.bf16.mxu0 0
        %1876 = vmatmul.mubr.bf16.gmra.mrb[0].mxu0 %v832
        %v1877 = vpop.f32.mrb[0].mxu0
        %v1878 = vadd.f32 %v1717, %v1877
        %v1879 = vpop.f32.mrb[0].mxu0
        %v1880 = vpop.f32.mrb[0].mxu0
        %v1881 = vadd.f32 %v1720, %v1880
        %v1882 = vpop.f32.mrb[0].mxu0
        %1883 = vmatprep.mubr.bf16.mxu0 0
        %1884 = vmatmul.mubr.bf16.gmra.mrb[0].mxu0 %v844
        %v1885 = vpop.f32.mrb[0].mxu0
        %v1886 = vadd.f32 %v1725, %v1885
        %v1887 = vpop.f32.mrb[0].mxu0
        %v1888 = vpop.f32.mrb[0].mxu0
        %v1889 = vadd.f32 %v1728, %v1888
        %v1890 = vpop.f32.mrb[0].mxu0
        %1891 = vdwg.mxu0
        %v1892 = vld [vmem:[#allocation2 + $0x8] sm:$0xff]
        %v1893 = vld [vmem:[#allocation2 + $0x10] sm:$0x1]
        %v1894 = vld [vmem:[#allocation2 + $0x20] sm:$0xff]
        %v1895 = vld [vmem:[#allocation2 + $0x28] sm:$0x1]
        %v1896 = vld [vmem:[#allocation2 + $0x38] sm:$0xff]
        %v1897 = vld [vmem:[#allocation2 + $0x40] sm:$0x1]
        %v1898 = vld [vmem:[#allocation2 + $0x50] sm:$0xff]
        %v1899 = vld [vmem:[#allocation2 + $0x58] sm:$0x1]
        %v1900 = vld [vmem:[#allocation2 + $0x68] sm:$0xff]
        %v1901 = vld [vmem:[#allocation2 + $0x70] sm:$0x1]
        %v1902 = vld [vmem:[#allocation2 + $0x80] sm:$0xff]
        %v1903 = vld [vmem:[#allocation2 + $0x88] sm:$0x1]
        %v1904 = vld [vmem:[#allocation2 + $0x98] sm:$0xff]
        %v1905 = vld [vmem:[#allocation2 + $0xa0] sm:$0x1]
        %v1906 = vld [vmem:[#allocation2 + $0xb0] sm:$0xff]
        %v1907 = vld [vmem:[#allocation2 + $0xb8] sm:$0x1]
        %v1908 = vld [vmem:[#allocation2 + $0xc8] sm:$0xff]
        %v1909 = vld [vmem:[#allocation2 + $0xd0] sm:$0x1]
        %v1910 = vld [vmem:[#allocation2 + $0xe0] sm:$0xff]
        %v1911 = vld [vmem:[#allocation2 + $0xe8] sm:$0x1]
        %v1912 = vld [vmem:[#allocation2 + $0xf8] sm:$0xff]
        %v1913 = vld [vmem:[#allocation2 + $0x100] sm:$0x1]
        %v1914 = vld [vmem:[#allocation2 + $0x110] sm:$0xff]
        %v1915 = vld [vmem:[#allocation2 + $0x118] sm:$0x1]
        %v1916 = vld [vmem:[#allocation2 + $0x128] sm:$0xff]
        %v1917 = vld [vmem:[#allocation2 + $0x130] sm:$0x1]
        %v1918 = vld [vmem:[#allocation2 + $0x140] sm:$0xff]
        %v1919 = vld [vmem:[#allocation2 + $0x148] sm:$0x1]
        %v1920 = vld [vmem:[#allocation2 + $0x158] sm:$0xff]
        %v1921 = vld [vmem:[#allocation2 + $0x160] sm:$0x1]
        %v1922 = vld [vmem:[#allocation2 + $0x170] sm:$0xff]
        %v1923 = vld [vmem:[#allocation2 + $0x178] sm:$0x1]
        %v1924 = vld [vmem:[#allocation2 + $0x188] sm:$0xff]
        %v1925 = vld [vmem:[#allocation2 + $0x190] sm:$0x1]
        %v1926 = vld [vmem:[#allocation2 + $0x1a0] sm:$0xff]
        %v1927 = vld [vmem:[#allocation2 + $0x1a8] sm:$0x1]
        %vm1928 = vsmask.f32 7424
        %v1930 = vshrl.u32 %v1892, 16
        %v1932 = vshll.u32 %v1892, 16
        %v1934 = vrot.slane %v1932, 1
        %v1935 = vor.u32 %v1930, %v1934
        %v1937 = vshll.u32 %v1893, 16
        %v1939 = vrot.slane %v1937, 1
        %v1940 = vsel %vm1928, %v1935, %v1939
        %v1942 = vshrl.u32 %v1894, 16
        %v1944 = vshll.u32 %v1894, 16
        %v1946 = vrot.slane %v1944, 1
        %v1947 = vor.u32 %v1942, %v1946
        %v1949 = vshll.u32 %v1895, 16
        %v1951 = vrot.slane %v1949, 1
        %v1952 = vsel %vm1928, %v1947, %v1951
        %v1954 = vshrl.u32 %v1896, 16
        %v1956 = vshll.u32 %v1896, 16
        %v1958 = vrot.slane %v1956, 1
        %v1959 = vor.u32 %v1954, %v1958
        %v1961 = vshll.u32 %v1897, 16
        %v1963 = vrot.slane %v1961, 1
        %v1964 = vsel %vm1928, %v1959, %v1963
        %v1966 = vshrl.u32 %v1898, 16
        %v1968 = vshll.u32 %v1898, 16
        %v1970 = vrot.slane %v1968, 1
        %v1971 = vor.u32 %v1966, %v1970
        %v1973 = vshll.u32 %v1899, 16
        %v1975 = vrot.slane %v1973, 1
        %v1976 = vsel %vm1928, %v1971, %v1975
        %v1978 = vshrl.u32 %v1900, 16
        %v1980 = vshll.u32 %v1900, 16
        %v1982 = vrot.slane %v1980, 1
        %v1983 = vor.u32 %v1978, %v1982
        %v1985 = vshll.u32 %v1901, 16
        %v1987 = vrot.slane %v1985, 1
        %v1988 = vsel %vm1928, %v1983, %v1987
        %v1990 = vshrl.u32 %v1902, 16
        %v1992 = vshll.u32 %v1902, 16
        %v1994 = vrot.slane %v1992, 1
        %v1995 = vor.u32 %v1990, %v1994
        %v1997 = vshll.u32 %v1903, 16
        %v1999 = vrot.slane %v1997, 1
        %v2000 = vsel %vm1928, %v1995, %v1999
        %v2002 = vshrl.u32 %v1904, 16
        %v2004 = vshll.u32 %v1904, 16
        %v2006 = vrot.slane %v2004, 1
        %v2007 = vor.u32 %v2002, %v2006
        %v2009 = vshll.u32 %v1905, 16
        %v2011 = vrot.slane %v2009, 1
        %v2012 = vsel %vm1928, %v2007, %v2011
        %v2014 = vshrl.u32 %v1906, 16
        %v2016 = vshll.u32 %v1906, 16
        %v2018 = vrot.slane %v2016, 1
        %v2019 = vor.u32 %v2014, %v2018
        %v2021 = vshll.u32 %v1907, 16
        %v2023 = vrot.slane %v2021, 1
        %v2024 = vsel %vm1928, %v2019, %v2023
        %v2026 = vshrl.u32 %v1908, 16
        %v2028 = vshll.u32 %v1908, 16
        %v2030 = vrot.slane %v2028, 1
        %v2031 = vor.u32 %v2026, %v2030
        %v2033 = vshll.u32 %v1909, 16
        %v2035 = vrot.slane %v2033, 1
        %v2036 = vsel %vm1928, %v2031, %v2035
        %v2038 = vshrl.u32 %v1910, 16
        %v2040 = vshll.u32 %v1910, 16
        %v2042 = vrot.slane %v2040, 1
        %v2043 = vor.u32 %v2038, %v2042
        %v2045 = vshll.u32 %v1911, 16
        %v2047 = vrot.slane %v2045, 1
        %v2048 = vsel %vm1928, %v2043, %v2047
        %v2050 = vshrl.u32 %v1912, 16
        %v2052 = vshll.u32 %v1912, 16
        %v2054 = vrot.slane %v2052, 1
        %v2055 = vor.u32 %v2050, %v2054
        %v2057 = vshll.u32 %v1913, 16
        %v2059 = vrot.slane %v2057, 1
        %v2060 = vsel %vm1928, %v2055, %v2059
        %v2062 = vshrl.u32 %v1914, 16
        %v2064 = vshll.u32 %v1914, 16
        %v2066 = vrot.slane %v2064, 1
        %v2067 = vor.u32 %v2062, %v2066
        %v2069 = vshll.u32 %v1915, 16
        %v2071 = vrot.slane %v2069, 1
        %v2072 = vsel %vm1928, %v2067, %v2071
        %v2074 = vshrl.u32 %v1916, 16
        %v2076 = vshll.u32 %v1916, 16
        %v2078 = vrot.slane %v2076, 1
        %v2079 = vor.u32 %v2074, %v2078
        %v2081 = vshll.u32 %v1917, 16
        %v2083 = vrot.slane %v2081, 1
        %v2084 = vsel %vm1928, %v2079, %v2083
        %v2086 = vshrl.u32 %v1918, 16
        %v2088 = vshll.u32 %v1918, 16
        %v2090 = vrot.slane %v2088, 1
        %v2091 = vor.u32 %v2086, %v2090
        %v2093 = vshll.u32 %v1919, 16
        %v2095 = vrot.slane %v2093, 1
        %v2096 = vsel %vm1928, %v2091, %v2095
        %v2098 = vshrl.u32 %v1920, 16
        %v2100 = vshll.u32 %v1920, 16
        %v2102 = vrot.slane %v2100, 1
        %v2103 = vor.u32 %v2098, %v2102
        %v2105 = vshll.u32 %v1921, 16
        %v2107 = vrot.slane %v2105, 1
        %v2108 = vsel %vm1928, %v2103, %v2107
        %v2110 = vshrl.u32 %v1922, 16
        %v2112 = vshll.u32 %v1922, 16
        %v2114 = vrot.slane %v2112, 1
        %v2115 = vor.u32 %v2110, %v2114
        %v2117 = vshll.u32 %v1923, 16
        %v2119 = vrot.slane %v2117, 1
        %v2120 = vsel %vm1928, %v2115, %v2119
        %v2122 = vshrl.u32 %v1924, 16
        %v2124 = vshll.u32 %v1924, 16
        %v2126 = vrot.slane %v2124, 1
        %v2127 = vor.u32 %v2122, %v2126
        %v2129 = vshll.u32 %v1925, 16
        %v2131 = vrot.slane %v2129, 1
        %v2132 = vsel %vm1928, %v2127, %v2131
        %v2134 = vshrl.u32 %v1926, 16
        %v2136 = vshll.u32 %v1926, 16
        %v2138 = vrot.slane %v2136, 1
        %v2139 = vor.u32 %v2134, %v2138
        %v2141 = vshll.u32 %v1927, 16
        %v2143 = vrot.slane %v2141, 1
        %v2144 = vsel %vm1928, %v2139, %v2143
        %s2163 = scalar_lea.vmem [#allocation9], 384
        %v2164 = vld [vmem:[%s2163] sm:$0xf]
        %v2165 = vld [vmem:[%s2163 + $0x4] sm:$0xf]
        %v2166 = vld [vmem:[%s2163 + $0x8] sm:$0xf]
        %v2167 = vld [vmem:[%s2163 + $0xc] sm:$0xf]
        %v2168 = vld [vmem:[%s2163 + $0x10] sm:$0xf]
        %v2169 = vld [vmem:[%s2163 + $0x14] sm:$0xf]
        %v2170 = vld [vmem:[%s2163 + $0x18] sm:$0xf]
        %v2171 = vld [vmem:[%s2163 + $0x1c] sm:$0xf]
        %v2172 = vld [vmem:[%s2163 + $0x20] sm:$0xf]
        %v2173 = vld [vmem:[%s2163 + $0x24] sm:$0xf]
        %v2174 = vld [vmem:[%s2163 + $0x28] sm:$0xf]
        %v2175 = vld [vmem:[%s2163 + $0x2c] sm:$0xf]
        %v2176 = vld [vmem:[%s2163 + $0x30] sm:$0xf]
        %v2177 = vld [vmem:[%s2163 + $0x34] sm:$0xf]
        %v2178 = vld [vmem:[%s2163 + $0x38] sm:$0xf]
        %v2179 = vld [vmem:[%s2163 + $0x3c] sm:$0xf]
        %v2180 = vld [vmem:[%s2163 + $0x40] sm:$0xf]
        %v2181 = vld [vmem:[%s2163 + $0x44] sm:$0xf]
        %v2182 = vld [vmem:[%s2163 + $0x48] sm:$0xf]
        %v2183 = vld [vmem:[%s2163 + $0x4c] sm:$0xf]
        %v2184 = vld [vmem:[%s2163 + $0x50] sm:$0xf]
        %v2185 = vld [vmem:[%s2163 + $0x54] sm:$0xf]
        %v2186 = vld [vmem:[%s2163 + $0x58] sm:$0xf]
        %v2187 = vld [vmem:[%s2163 + $0x5c] sm:$0xf]
        %v2188 = vld [vmem:[%s2163 + $0x60] sm:$0xf]
        %v2189 = vld [vmem:[%s2163 + $0x64] sm:$0xf]
        %v2190 = vld [vmem:[%s2163 + $0x68] sm:$0xf]
        %v2191 = vld [vmem:[%s2163 + $0x6c] sm:$0xf]
        %v2192 = vld [vmem:[%s2163 + $0x70] sm:$0xf]
        %v2193 = vld [vmem:[%s2163 + $0x74] sm:$0xf]
        %v2194 = vld [vmem:[%s2163 + $0x78] sm:$0xf]
        %v2195 = vld [vmem:[%s2163 + $0x7c] sm:$0xf]
        %v2196 = vld [vmem:[%s2163 + $0x80] sm:$0xf]
        %v2197 = vld [vmem:[%s2163 + $0x84] sm:$0xf]
        %v2198 = vld [vmem:[%s2163 + $0x88] sm:$0xf]
        %v2199 = vld [vmem:[%s2163 + $0x8c] sm:$0xf]
        %v2200 = vld [vmem:[%s2163 + $0x90] sm:$0xf]
        %v2201 = vld [vmem:[%s2163 + $0x94] sm:$0xf]
        %v2202 = vld [vmem:[%s2163 + $0x98] sm:$0xf]
        %v2203 = vld [vmem:[%s2163 + $0x9c] sm:$0xf]
        %v2204 = vld [vmem:[%s2163 + $0xa0] sm:$0xf]
        %v2205 = vld [vmem:[%s2163 + $0xa4] sm:$0xf]
        %v2206 = vld [vmem:[%s2163 + $0xa8] sm:$0xf]
        %v2207 = vld [vmem:[%s2163 + $0xac] sm:$0xf]
        %v2208 = vld [vmem:[%s2163 + $0xb0] sm:$0xf]
        %v2209 = vld [vmem:[%s2163 + $0xb4] sm:$0xf]
        %v2210 = vld [vmem:[%s2163 + $0xb8] sm:$0xf]
        %v2211 = vld [vmem:[%s2163 + $0xbc] sm:$0xf]
        %v2260 = vunpack.c.l.b16 %v2164
        %v2261 = vunpack.c.l.b16 %v2165
        %v2262 = vunpack.c.l.b16 %v2166
        %v2263 = vunpack.c.l.b16 %v2167
        %v2264 = vunpack.c.l.b16 %v2168
        %v2265 = vunpack.c.l.b16 %v2169
        %v2266 = vunpack.c.l.b16 %v2170
        %v2267 = vunpack.c.l.b16 %v2171
        %v2268 = vunpack.c.l.b16 %v2172
        %v2269 = vunpack.c.l.b16 %v2173
        %v2270 = vunpack.c.l.b16 %v2174
        %v2271 = vunpack.c.l.b16 %v2175
        %v2272 = vunpack.c.l.b16 %v2176
        %v2273 = vunpack.c.l.b16 %v2177
        %v2274 = vunpack.c.l.b16 %v2178
        %v2275 = vunpack.c.l.b16 %v2179
        %v2276 = vunpack.c.l.b16 %v2180
        %v2277 = vunpack.c.l.b16 %v2181
        %v2278 = vunpack.c.l.b16 %v2182
        %v2279 = vunpack.c.l.b16 %v2183
        %v2280 = vunpack.c.l.b16 %v2184
        %v2281 = vunpack.c.l.b16 %v2185
        %v2282 = vunpack.c.l.b16 %v2186
        %v2283 = vunpack.c.l.b16 %v2187
        %v2284 = vunpack.c.l.b16 %v2188
        %v2285 = vunpack.c.l.b16 %v2189
        %v2286 = vunpack.c.l.b16 %v2190
        %v2287 = vunpack.c.l.b16 %v2191
        %v2288 = vunpack.c.l.b16 %v2192
        %v2289 = vunpack.c.l.b16 %v2193
        %v2290 = vunpack.c.l.b16 %v2194
        %v2291 = vunpack.c.l.b16 %v2195
        %v2292 = vunpack.c.l.b16 %v2196
        %v2293 = vunpack.c.l.b16 %v2197
        %v2294 = vunpack.c.l.b16 %v2198
        %v2295 = vunpack.c.l.b16 %v2199
        %v2296 = vunpack.c.l.b16 %v2200
        %v2297 = vunpack.c.l.b16 %v2201
        %v2298 = vunpack.c.l.b16 %v2202
        %v2299 = vunpack.c.l.b16 %v2203
        %v2300 = vunpack.c.l.b16 %v2204
        %v2301 = vunpack.c.l.b16 %v2205
        %v2302 = vunpack.c.l.b16 %v2206
        %v2303 = vunpack.c.l.b16 %v2207
        %v2304 = vunpack.c.l.b16 %v2208
        %v2305 = vunpack.c.l.b16 %v2209
        %v2306 = vunpack.c.l.b16 %v2210
        %v2307 = vunpack.c.l.b16 %v2211
        %v2308 = vpack.c.b16 %v2261, %v2260
        %v2309 = vpack.c.b16 %v2263, %v2262
        %v2310 = vpack.c.b16 %v2265, %v2264
        %v2311 = vpack.c.b16 %v2267, %v2266
        %v2312 = vpack.c.b16 %v2269, %v2268
        %v2313 = vpack.c.b16 %v2271, %v2270
        %v2314 = vpack.c.b16 %v2273, %v2272
        %v2315 = vpack.c.b16 %v2275, %v2274
        %v2316 = vpack.c.b16 %v2277, %v2276
        %v2317 = vpack.c.b16 %v2279, %v2278
        %v2318 = vpack.c.b16 %v2281, %v2280
        %v2319 = vpack.c.b16 %v2283, %v2282
        %v2320 = vpack.c.b16 %v2285, %v2284
        %v2321 = vpack.c.b16 %v2287, %v2286
        %v2322 = vpack.c.b16 %v2289, %v2288
        %v2323 = vpack.c.b16 %v2291, %v2290
        %v2324 = vpack.c.b16 %v2293, %v2292
        %v2325 = vpack.c.b16 %v2295, %v2294
        %v2326 = vpack.c.b16 %v2297, %v2296
        %v2327 = vpack.c.b16 %v2299, %v2298
        %v2328 = vpack.c.b16 %v2301, %v2300
        %v2329 = vpack.c.b16 %v2303, %v2302
        %v2330 = vpack.c.b16 %v2305, %v2304
        %v2331 = vpack.c.b16 %v2307, %v2306
        %2356 = vmatprep.subr.bf16.mxu0 0
        %2357 = vmatpush1.bf16.msra.mxu0 %v2308
        %2358 = vmatprep.subr.bf16.mxu0 0
        %2359 = vmatpush1.bf16.msra.mxu0 %v2309
        %2360 = vmatprep.subr.bf16.mxu0 0
        %2361 = vmatpush1.bf16.msra.mxu0 %v2310
        %2362 = vmatprep.subr.bf16.mxu0 0
        %2363 = vmatpush1.bf16.msra.mxu0 %v2311
        %2364 = vmatprep.subr.bf16.mxu0 0
        %2365 = vmatpush1.bf16.msra.mxu0 %v2312
        %2366 = vmatprep.subr.bf16.mxu0 0
        %2367 = vmatpush1.bf16.msra.mxu0 %v2313
        %2368 = vmatprep.subr.bf16.mxu0 0
        %2369 = vmatpush1.bf16.msra.mxu0 %v2314
        %2370 = vmatprep.subr.bf16.mxu0 0
        %2371 = vmatpush1.bf16.msra.mxu0 %v2315
        %2372 = vmatprep.subr.bf16.mxu0 0
        %2373 = vmatpush1.bf16.msra.mxu0 %v2316
        %2374 = vmatprep.subr.bf16.mxu0 0
        %2375 = vmatpush1.bf16.msra.mxu0 %v2317
        %2376 = vmatprep.subr.bf16.mxu0 0
        %2377 = vmatpush1.bf16.msra.mxu0 %v2318
        %2378 = vmatprep.subr.bf16.mxu0 0
        %2379 = vmatpush1.bf16.msra.mxu0 %v2319
        %2380 = vmatprep.subr.bf16.mxu0 0
        %2381 = vmatpush1.bf16.msra.mxu0 %v2320
        %2382 = vmatprep.subr.bf16.mxu0 0
        %2383 = vmatpush1.bf16.msra.mxu0 %v2321
        %2384 = vmatprep.subr.bf16.mxu0 0
        %2385 = vmatpush1.bf16.msra.mxu0 %v2322
        %2386 = vmatprep.subr.bf16.mxu0 0
        %2387 = vmatpush1.bf16.msra.mxu0 %v2323
        %2388 = vmatprep.mubr.bf16.mxu0 %v1952
        %2389 = vmatmul.mubr.bf16.gmra.mrb[0].mxu0 %v1940
        %v2390 = vpop.f32.mrb[0].mxu0
        %v2391 = vadd.f32 0.0, %v2390
        %v2392 = vpop.f32.mrb[0].mxu0
        %v2393 = vpop.f32.mrb[0].mxu0
        %v2394 = vadd.f32 0.0, %v2393
        %v2395 = vpop.f32.mrb[0].mxu0
        %2396 = vmatprep.mubr.bf16.mxu0 %v1964
        %2397 = vmatmul.mubr.bf16.gmra.mrb[0].mxu0 %v1952
        %v2398 = vpop.f32.mrb[0].mxu0
        %v2399 = vadd.f32 0.0, %v2398
        %v2400 = vpop.f32.mrb[0].mxu0
        %v2401 = vpop.f32.mrb[0].mxu0
        %v2402 = vadd.f32 0.0, %v2401
        %v2403 = vpop.f32.mrb[0].mxu0
        %2404 = vmatprep.mubr.bf16.mxu0 %v1976
        %2405 = vmatmul.mubr.bf16.gmra.mrb[0].mxu0 %v1964
        %v2406 = vpop.f32.mrb[0].mxu0
        %v2407 = vadd.f32 0.0, %v2406
        %v2408 = vpop.f32.mrb[0].mxu0
        %v2409 = vpop.f32.mrb[0].mxu0
        %v2410 = vadd.f32 0.0, %v2409
        %v2411 = vpop.f32.mrb[0].mxu0
        %2412 = vmatprep.mubr.bf16.mxu0 %v1988
        %2413 = vmatmul.mubr.bf16.gmra.mrb[0].mxu0 %v1976
        %v2414 = vpop.f32.mrb[0].mxu0
        %v2415 = vadd.f32 0.0, %v2414
        %v2416 = vpop.f32.mrb[0].mxu0
        %v2417 = vpop.f32.mrb[0].mxu0
        %v2418 = vadd.f32 0.0, %v2417
        %v2419 = vpop.f32.mrb[0].mxu0
        %2420 = vmatprep.mubr.bf16.mxu0 %v2000
        %2421 = vmatmul.mubr.bf16.gmra.mrb[0].mxu0 %v1988
        %v2422 = vpop.f32.mrb[0].mxu0
        %v2423 = vadd.f32 0.0, %v2422
        %v2424 = vpop.f32.mrb[0].mxu0
        %v2425 = vpop.f32.mrb[0].mxu0
        %v2426 = vadd.f32 0.0, %v2425
        %v2427 = vpop.f32.mrb[0].mxu0
        %2428 = vmatprep.mubr.bf16.mxu0 %v2012
        %2429 = vmatmul.mubr.bf16.gmra.mrb[0].mxu0 %v2000
        %v2430 = vpop.f32.mrb[0].mxu0
        %v2431 = vadd.f32 0.0, %v2430
        %v2432 = vpop.f32.mrb[0].mxu0
        %v2433 = vpop.f32.mrb[0].mxu0
        %v2434 = vadd.f32 0.0, %v2433
        %v2435 = vpop.f32.mrb[0].mxu0
        %2436 = vmatprep.mubr.bf16.mxu0 %v2024
        %2437 = vmatmul.mubr.bf16.gmra.mrb[0].mxu0 %v2012
        %v2438 = vpop.f32.mrb[0].mxu0
        %v2439 = vadd.f32 0.0, %v2438
        %v2440 = vpop.f32.mrb[0].mxu0
        %v2441 = vpop.f32.mrb[0].mxu0
        %v2442 = vadd.f32 0.0, %v2441
        %v2443 = vpop.f32.mrb[0].mxu0
        %2444 = vmatprep.mubr.bf16.mxu0 %v2036
        %2445 = vmatmul.mubr.bf16.gmra.mrb[0].mxu0 %v2024
        %v2446 = vpop.f32.mrb[0].mxu0
        %v2447 = vadd.f32 0.0, %v2446
        %v2448 = vpop.f32.mrb[0].mxu0
        %v2449 = vpop.f32.mrb[0].mxu0
        %v2450 = vadd.f32 0.0, %v2449
        %v2451 = vpop.f32.mrb[0].mxu0
        %2452 = vmatprep.mubr.bf16.mxu0 %v2048
        %2453 = vmatmul.mubr.bf16.gmra.mrb[0].mxu0 %v2036
        %v2454 = vpop.f32.mrb[0].mxu0
        %v2455 = vadd.f32 0.0, %v2454
        %v2456 = vpop.f32.mrb[0].mxu0
        %v2457 = vpop.f32.mrb[0].mxu0
        %v2458 = vadd.f32 0.0, %v2457
        %v2459 = vpop.f32.mrb[0].mxu0
        %2460 = vmatprep.mubr.bf16.mxu0 %v2060
        %2461 = vmatmul.mubr.bf16.gmra.mrb[0].mxu0 %v2048
        %v2462 = vpop.f32.mrb[0].mxu0
        %v2463 = vadd.f32 0.0, %v2462
        %v2464 = vpop.f32.mrb[0].mxu0
        %v2465 = vpop.f32.mrb[0].mxu0
        %v2466 = vadd.f32 0.0, %v2465
        %v2467 = vpop.f32.mrb[0].mxu0
        %2468 = vmatprep.mubr.bf16.mxu0 %v2072
        %2469 = vmatmul.mubr.bf16.gmra.mrb[0].mxu0 %v2060
        %v2470 = vpop.f32.mrb[0].mxu0
        %v2471 = vadd.f32 0.0, %v2470
        %v2472 = vpop.f32.mrb[0].mxu0
        %v2473 = vpop.f32.mrb[0].mxu0
        %v2474 = vadd.f32 0.0, %v2473
        %v2475 = vpop.f32.mrb[0].mxu0
        %2476 = vmatprep.mubr.bf16.mxu0 %v2084
        %2477 = vmatmul.mubr.bf16.gmra.mrb[0].mxu0 %v2072
        %v2478 = vpop.f32.mrb[0].mxu0
        %v2479 = vadd.f32 0.0, %v2478
        %v2480 = vpop.f32.mrb[0].mxu0
        %v2481 = vpop.f32.mrb[0].mxu0
        %v2482 = vadd.f32 0.0, %v2481
        %v2483 = vpop.f32.mrb[0].mxu0
        %2484 = vmatprep.mubr.bf16.mxu0 %v2096
        %2485 = vmatmul.mubr.bf16.gmra.mrb[0].mxu0 %v2084
        %v2486 = vpop.f32.mrb[0].mxu0
        %v2487 = vadd.f32 0.0, %v2486
        %v2488 = vpop.f32.mrb[0].mxu0
        %v2489 = vpop.f32.mrb[0].mxu0
        %v2490 = vadd.f32 0.0, %v2489
        %v2491 = vpop.f32.mrb[0].mxu0
        %2492 = vmatprep.mubr.bf16.mxu0 %v2108
        %2493 = vmatmul.mubr.bf16.gmra.mrb[0].mxu0 %v2096
        %v2494 = vpop.f32.mrb[0].mxu0
        %v2495 = vadd.f32 0.0, %v2494
        %v2496 = vpop.f32.mrb[0].mxu0
        %v2497 = vpop.f32.mrb[0].mxu0
        %v2498 = vadd.f32 0.0, %v2497
        %v2499 = vpop.f32.mrb[0].mxu0
        %2500 = vmatprep.mubr.bf16.mxu0 %v2120
        %2501 = vmatmul.mubr.bf16.gmra.mrb[0].mxu0 %v2108
        %v2502 = vpop.f32.mrb[0].mxu0
        %v2503 = vadd.f32 0.0, %v2502
        %v2504 = vpop.f32.mrb[0].mxu0
        %v2505 = vpop.f32.mrb[0].mxu0
        %v2506 = vadd.f32 0.0, %v2505
        %v2507 = vpop.f32.mrb[0].mxu0
        %2508 = vmatprep.mubr.bf16.mxu0 %v2132
        %2509 = vmatmul.mubr.bf16.gmra.mrb[0].mxu0 %v2120
        %v2510 = vpop.f32.mrb[0].mxu0
        %v2511 = vadd.f32 0.0, %v2510
        %v2512 = vpop.f32.mrb[0].mxu0
        %v2513 = vpop.f32.mrb[0].mxu0
        %v2514 = vadd.f32 0.0, %v2513
        %v2515 = vpop.f32.mrb[0].mxu0
        %2516 = vdwg.mxu0
        %2517 = vmatprep.subr.bf16.mxu0 0
        %2518 = vmatpush1.bf16.msra.mxu0 %v2324
        %2519 = vmatprep.subr.bf16.mxu0 0
        %2520 = vmatpush1.bf16.msra.mxu0 %v2325
        %2521 = vmatprep.subr.bf16.mxu0 0
        %2522 = vmatpush1.bf16.msra.mxu0 %v2326
        %2523 = vmatprep.subr.bf16.mxu0 0
        %2524 = vmatpush1.bf16.msra.mxu0 %v2327
        %2525 = vmatprep.subr.bf16.mxu0 0
        %2526 = vmatpush1.bf16.msra.mxu0 %v2328
        %2527 = vmatprep.subr.bf16.mxu0 0
        %2528 = vmatpush1.bf16.msra.mxu0 %v2329
        %2529 = vmatprep.subr.bf16.mxu0 0
        %2530 = vmatpush1.bf16.msra.mxu0 %v2330
        %2531 = vmatprep.subr.bf16.mxu0 0
        %2532 = vmatpush1.bf16.msra.mxu0 %v2331
        %2533 = vmatprep.subr.bf16.mxu0 0
        %2534 = vmatpush1.bf16.msra.mxu0 0
        %2535 = vmatprep.subr.bf16.mxu0 0
        %2536 = vmatpush1.bf16.msra.mxu0 0
        %2537 = vmatprep.subr.bf16.mxu0 0
        %2538 = vmatpush1.bf16.msra.mxu0 0
        %2539 = vmatprep.subr.bf16.mxu0 0
        %2540 = vmatpush1.bf16.msra.mxu0 0
        %2541 = vmatprep.subr.bf16.mxu0 0
        %2542 = vmatpush1.bf16.msra.mxu0 0
        %2543 = vmatprep.subr.bf16.mxu0 0
        %2544 = vmatpush1.bf16.msra.mxu0 0
        %2545 = vmatprep.subr.bf16.mxu0 0
        %2546 = vmatpush1.bf16.msra.mxu0 0
        %2547 = vmatprep.subr.bf16.mxu0 0
        %2548 = vmatpush1.bf16.msra.mxu0 0
        %2549 = vmatprep.mubr.bf16.mxu0 0
        %2550 = vmatmul.mubr.bf16.gmra.mrb[0].mxu0 %v1964
        %v2551 = vpop.f32.mrb[0].mxu0
        %v2552 = vadd.f32 %v2391, %v2551
        %v2553 = vpop.f32.mrb[0].mxu0
        %v2554 = vpop.f32.mrb[0].mxu0
        %v2555 = vadd.f32 %v2394, %v2554
        %v2556 = vpop.f32.mrb[0].mxu0
        %2557 = vmatprep.mubr.bf16.mxu0 0
        %2558 = vmatmul.mubr.bf16.gmra.mrb[0].mxu0 %v1976
        %v2559 = vpop.f32.mrb[0].mxu0
        %v2560 = vadd.f32 %v2399, %v2559
        %v2561 = vpop.f32.mrb[0].mxu0
        %v2562 = vpop.f32.mrb[0].mxu0
        %v2563 = vadd.f32 %v2402, %v2562
        %v2564 = vpop.f32.mrb[0].mxu0
        %2565 = vmatprep.mubr.bf16.mxu0 0
        %2566 = vmatmul.mubr.bf16.gmra.mrb[0].mxu0 %v1988
        %v2567 = vpop.f32.mrb[0].mxu0
        %v2568 = vadd.f32 %v2407, %v2567
        %v2569 = vpop.f32.mrb[0].mxu0
        %v2570 = vpop.f32.mrb[0].mxu0
        %v2571 = vadd.f32 %v2410, %v2570
        %v2572 = vpop.f32.mrb[0].mxu0
        %2573 = vmatprep.mubr.bf16.mxu0 0
        %2574 = vmatmul.mubr.bf16.gmra.mrb[0].mxu0 %v2000
        %v2575 = vpop.f32.mrb[0].mxu0
        %v2576 = vadd.f32 %v2415, %v2575
        %v2577 = vpop.f32.mrb[0].mxu0
        %v2578 = vpop.f32.mrb[0].mxu0
        %v2579 = vadd.f32 %v2418, %v2578
        %v2580 = vpop.f32.mrb[0].mxu0
        %2581 = vmatprep.mubr.bf16.mxu0 0
        %2582 = vmatmul.mubr.bf16.gmra.mrb[0].mxu0 %v2012
        %v2583 = vpop.f32.mrb[0].mxu0
        %v2584 = vadd.f32 %v2423, %v2583
        %v2585 = vpop.f32.mrb[0].mxu0
        %v2586 = vpop.f32.mrb[0].mxu0
        %v2587 = vadd.f32 %v2426, %v2586
        %v2588 = vpop.f32.mrb[0].mxu0
        %2589 = vmatprep.mubr.bf16.mxu0 0
        %2590 = vmatmul.mubr.bf16.gmra.mrb[0].mxu0 %v2024
        %v2591 = vpop.f32.mrb[0].mxu0
        %v2592 = vadd.f32 %v2431, %v2591
        %v2593 = vpop.f32.mrb[0].mxu0
        %v2594 = vpop.f32.mrb[0].mxu0
        %v2595 = vadd.f32 %v2434, %v2594
        %v2596 = vpop.f32.mrb[0].mxu0
        %2597 = vmatprep.mubr.bf16.mxu0 0
        %2598 = vmatmul.mubr.bf16.gmra.mrb[0].mxu0 %v2036
        %v2599 = vpop.f32.mrb[0].mxu0
        %v2600 = vadd.f32 %v2439, %v2599
        %v2601 = vpop.f32.mrb[0].mxu0
        %v2602 = vpop.f32.mrb[0].mxu0
        %v2603 = vadd.f32 %v2442, %v2602
        %v2604 = vpop.f32.mrb[0].mxu0
        %2605 = vmatprep.mubr.bf16.mxu0 0
        %2606 = vmatmul.mubr.bf16.gmra.mrb[0].mxu0 %v2048
        %v2607 = vpop.f32.mrb[0].mxu0
        %v2608 = vadd.f32 %v2447, %v2607
        %v2609 = vpop.f32.mrb[0].mxu0
        %v2610 = vpop.f32.mrb[0].mxu0
        %v2611 = vadd.f32 %v2450, %v2610
        %v2612 = vpop.f32.mrb[0].mxu0
        %2613 = vmatprep.mubr.bf16.mxu0 0
        %2614 = vmatmul.mubr.bf16.gmra.mrb[0].mxu0 %v2060
        %v2615 = vpop.f32.mrb[0].mxu0
        %v2616 = vadd.f32 %v2455, %v2615
        %v2617 = vpop.f32.mrb[0].mxu0
        %v2618 = vpop.f32.mrb[0].mxu0
        %v2619 = vadd.f32 %v2458, %v2618
        %v2620 = vpop.f32.mrb[0].mxu0
        %2621 = vmatprep.mubr.bf16.mxu0 0
        %2622 = vmatmul.mubr.bf16.gmra.mrb[0].mxu0 %v2072
        %v2623 = vpop.f32.mrb[0].mxu0
        %v2624 = vadd.f32 %v2463, %v2623
        %v2625 = vpop.f32.mrb[0].mxu0
        %v2626 = vpop.f32.mrb[0].mxu0
        %v2627 = vadd.f32 %v2466, %v2626
        %v2628 = vpop.f32.mrb[0].mxu0
        %2629 = vmatprep.mubr.bf16.mxu0 0
        %2630 = vmatmul.mubr.bf16.gmra.mrb[0].mxu0 %v2084
        %v2631 = vpop.f32.mrb[0].mxu0
        %v2632 = vadd.f32 %v2471, %v2631
        %v2633 = vpop.f32.mrb[0].mxu0
        %v2634 = vpop.f32.mrb[0].mxu0
        %v2635 = vadd.f32 %v2474, %v2634
        %v2636 = vpop.f32.mrb[0].mxu0
        %2637 = vmatprep.mubr.bf16.mxu0 0
        %2638 = vmatmul.mubr.bf16.gmra.mrb[0].mxu0 %v2096
        %v2639 = vpop.f32.mrb[0].mxu0
        %v2640 = vadd.f32 %v2479, %v2639
        %v2641 = vpop.f32.mrb[0].mxu0
        %v2642 = vpop.f32.mrb[0].mxu0
        %v2643 = vadd.f32 %v2482, %v2642
        %v2644 = vpop.f32.mrb[0].mxu0
        %2645 = vmatprep.mubr.bf16.mxu0 0
        %2646 = vmatmul.mubr.bf16.gmra.mrb[0].mxu0 %v2108
        %v2647 = vpop.f32.mrb[0].mxu0
        %v2648 = vadd.f32 %v2487, %v2647
        %v2649 = vpop.f32.mrb[0].mxu0
        %v2650 = vpop.f32.mrb[0].mxu0
        %v2651 = vadd.f32 %v2490, %v2650
        %v2652 = vpop.f32.mrb[0].mxu0
        %2653 = vmatprep.mubr.bf16.mxu0 0
        %2654 = vmatmul.mubr.bf16.gmra.mrb[0].mxu0 %v2120
        %v2655 = vpop.f32.mrb[0].mxu0
        %v2656 = vadd.f32 %v2495, %v2655
        %v2657 = vpop.f32.mrb[0].mxu0
        %v2658 = vpop.f32.mrb[0].mxu0
        %v2659 = vadd.f32 %v2498, %v2658
        %v2660 = vpop.f32.mrb[0].mxu0
        %2661 = vmatprep.mubr.bf16.mxu0 0
        %2662 = vmatmul.mubr.bf16.gmra.mrb[0].mxu0 %v2132
        %v2663 = vpop.f32.mrb[0].mxu0
        %v2664 = vadd.f32 %v2503, %v2663
        %v2665 = vpop.f32.mrb[0].mxu0
        %v2666 = vpop.f32.mrb[0].mxu0
        %v2667 = vadd.f32 %v2506, %v2666
        %v2668 = vpop.f32.mrb[0].mxu0
        %2669 = vmatprep.mubr.bf16.mxu0 0
        %2670 = vmatmul.mubr.bf16.gmra.mrb[0].mxu0 %v2144
        %v2671 = vpop.f32.mrb[0].mxu0
        %v2672 = vadd.f32 %v2511, %v2671
        %v2673 = vpop.f32.mrb[0].mxu0
        %v2674 = vpop.f32.mrb[0].mxu0
        %v2675 = vadd.f32 %v2514, %v2674
        %v2676 = vpop.f32.mrb[0].mxu0
        %2677 = vdwg.mxu0
        %v2678 = vadd.f32 %v1766, %v2552
        %v2679 = vadd.f32 %v1769, %v2555
        %v2680 = vadd.f32 %v1774, %v2560
        %v2681 = vadd.f32 %v1777, %v2563
        %v2682 = vadd.f32 %v1782, %v2568
        %v2683 = vadd.f32 %v1785, %v2571
        %v2684 = vadd.f32 %v1790, %v2576
        %v2685 = vadd.f32 %v1793, %v2579
        %v2686 = vadd.f32 %v1798, %v2584
        %v2687 = vadd.f32 %v1801, %v2587
        %v2688 = vadd.f32 %v1806, %v2592
        %v2689 = vadd.f32 %v1809, %v2595
        %v2690 = vadd.f32 %v1814, %v2600
        %v2691 = vadd.f32 %v1817, %v2603
        %v2692 = vadd.f32 %v1822, %v2608
        %v2693 = vadd.f32 %v1825, %v2611
        %v2694 = vadd.f32 %v1830, %v2616
        %v2695 = vadd.f32 %v1833, %v2619
        %v2696 = vadd.f32 %v1838, %v2624
        %v2697 = vadd.f32 %v1841, %v2627
        %v2698 = vadd.f32 %v1846, %v2632
        %v2699 = vadd.f32 %v1849, %v2635
        %v2700 = vadd.f32 %v1854, %v2640
        %v2701 = vadd.f32 %v1857, %v2643
        %v2702 = vadd.f32 %v1862, %v2648
        %v2703 = vadd.f32 %v1865, %v2651
        %v2704 = vadd.f32 %v1870, %v2656
        %v2705 = vadd.f32 %v1873, %v2659
        %v2706 = vadd.f32 %v1878, %v2664
        %v2707 = vadd.f32 %v1881, %v2667
        %v2708 = vadd.f32 %v1886, %v2672
        %v2709 = vadd.f32 %v1889, %v2675
        %v2710 = vld [vmem:[%s2] sm:$0x1]
        %v2712 = vlaneseq
        %v2713 = vshrl.u32 %v2712, 7
        %v2714 = vsub.s32 0, %v2713
        %v2715 = vrot.slane %v2710, %v2714
        %v2717 = vadd.f32 %v2678, %v2715
        %v2718 = vadd.f32 %v2679, %v2715
        %v2719 = vadd.f32 %v2680, %v2715
        %v2720 = vadd.f32 %v2681, %v2715
        %v2721 = vadd.f32 %v2682, %v2715
        %v2722 = vadd.f32 %v2683, %v2715
        %v2723 = vadd.f32 %v2684, %v2715
        %v2724 = vadd.f32 %v2685, %v2715
        %v2725 = vadd.f32 %v2686, %v2715
        %v2726 = vadd.f32 %v2687, %v2715
        %v2727 = vadd.f32 %v2688, %v2715
        %v2728 = vadd.f32 %v2689, %v2715
        %v2729 = vadd.f32 %v2690, %v2715
        %v2730 = vadd.f32 %v2691, %v2715
        %v2731 = vadd.f32 %v2692, %v2715
        %v2732 = vadd.f32 %v2693, %v2715
        %v2733 = vadd.f32 %v2694, %v2715
        %v2734 = vadd.f32 %v2695, %v2715
        %v2735 = vadd.f32 %v2696, %v2715
        %v2736 = vadd.f32 %v2697, %v2715
        %v2737 = vadd.f32 %v2698, %v2715
        %v2738 = vadd.f32 %v2699, %v2715
        %v2739 = vadd.f32 %v2700, %v2715
        %v2740 = vadd.f32 %v2701, %v2715
        %v2741 = vadd.f32 %v2702, %v2715
        %v2742 = vadd.f32 %v2703, %v2715
        %v2743 = vadd.f32 %v2704, %v2715
        %v2744 = vadd.f32 %v2705, %v2715
        %v2745 = vadd.f32 %v2706, %v2715
        %v2746 = vadd.f32 %v2707, %v2715
        %v2747 = vadd.f32 %v2708, %v2715
        %v2748 = vadd.f32 %v2709, %v2715
        %v2749 = vmax.f32 %v2717, 0.0
        %v2750 = vmax.f32 %v2718, 0.0
        %v2751 = vmax.f32 %v2719, 0.0
        %v2752 = vmax.f32 %v2720, 0.0
        %v2753 = vmax.f32 %v2721, 0.0
        %v2754 = vmax.f32 %v2722, 0.0
        %v2755 = vmax.f32 %v2723, 0.0
        %v2756 = vmax.f32 %v2724, 0.0
        %v2757 = vmax.f32 %v2725, 0.0
        %v2758 = vmax.f32 %v2726, 0.0
        %v2759 = vmax.f32 %v2727, 0.0
        %v2760 = vmax.f32 %v2728, 0.0
        %v2761 = vmax.f32 %v2729, 0.0
        %v2762 = vmax.f32 %v2730, 0.0
        %v2763 = vmax.f32 %v2731, 0.0
        %v2764 = vmax.f32 %v2732, 0.0
        %v2765 = vmax.f32 %v2733, 0.0
        %v2766 = vmax.f32 %v2734, 0.0
        %v2767 = vmax.f32 %v2735, 0.0
        %v2768 = vmax.f32 %v2736, 0.0
        %v2769 = vmax.f32 %v2737, 0.0
        %v2770 = vmax.f32 %v2738, 0.0
        %v2771 = vmax.f32 %v2739, 0.0
        %v2772 = vmax.f32 %v2740, 0.0
        %v2773 = vmax.f32 %v2741, 0.0
        %v2774 = vmax.f32 %v2742, 0.0
        %v2775 = vmax.f32 %v2743, 0.0
        %v2776 = vmax.f32 %v2744, 0.0
        %v2777 = vmax.f32 %v2745, 0.0
        %v2778 = vmax.f32 %v2746, 0.0
        %v2779 = vmax.f32 %v2747, 0.0
        %v2780 = vmax.f32 %v2748, 0.0
        %v2781 = vpack.c.bf16 %v2750, %v2749
        %v2782 = vpack.c.bf16 %v2752, %v2751
        %v2783 = vpack.c.bf16 %v2754, %v2753
        %v2784 = vpack.c.bf16 %v2756, %v2755
        %v2785 = vpack.c.bf16 %v2758, %v2757
        %v2786 = vpack.c.bf16 %v2760, %v2759
        %v2787 = vpack.c.bf16 %v2762, %v2761
        %v2788 = vpack.c.bf16 %v2764, %v2763
        %v2789 = vpack.c.bf16 %v2766, %v2765
        %v2790 = vpack.c.bf16 %v2768, %v2767
        %v2791 = vpack.c.bf16 %v2770, %v2769
        %v2792 = vpack.c.bf16 %v2772, %v2771
        %v2793 = vpack.c.bf16 %v2774, %v2773
        %v2794 = vpack.c.bf16 %v2776, %v2775
        %v2795 = vpack.c.bf16 %v2778, %v2777
        %v2796 = vpack.c.bf16 %v2780, %v2779
        %2797 = vst [vmem:[%s455 + $0x8] sm:$0xff] %v2781
        %2798 = vst [vmem:[%s455 + $0x20] sm:$0xff] %v2782
        %2799 = vst [vmem:[%s455 + $0x38] sm:$0xff] %v2783
        %2800 = vst [vmem:[%s455 + $0x50] sm:$0xff] %v2784
        %2801 = vst [vmem:[%s455 + $0x68] sm:$0xff] %v2785
        %2802 = vst [vmem:[%s455 + $0x80] sm:$0xff] %v2786
        %2803 = vst [vmem:[%s455 + $0x98] sm:$0xff] %v2787
        %2804 = vst [vmem:[%s455 + $0xb0] sm:$0xff] %v2788
        %2805 = vst [vmem:[%s455 + $0xc8] sm:$0xff] %v2789
        %2806 = vst [vmem:[%s455 + $0xe0] sm:$0xff] %v2790
        %2807 = vst [vmem:[%s455 + $0xf8] sm:$0xff] %v2791
        %2808 = vst [vmem:[%s455 + $0x110] sm:$0xff] %v2792
        %2809 = vst [vmem:[%s455 + $0x128] sm:$0xff] %v2793
        %2810 = vst [vmem:[%s455 + $0x140] sm:$0xff] %v2794
        %2811 = vst [vmem:[%s455 + $0x158] sm:$0xff] %v2795
        %2812 = vst [vmem:[%s455 + $0x170] sm:$0xff] %v2796
        %v2813 = vld [vmem:[#allocation3] sm:$0x80]
        %v2814 = vld [vmem:[#allocation3 + $0x8] sm:$0xff]
        %v2815 = vld [vmem:[#allocation3 + $0x18] sm:$0x80]
        %v2816 = vld [vmem:[#allocation3 + $0x20] sm:$0xff]
        %v2817 = vld [vmem:[#allocation3 + $0x30] sm:$0x80]
        %v2818 = vld [vmem:[#allocation3 + $0x38] sm:$0xff]
        %v2819 = vld [vmem:[#allocation3 + $0x48] sm:$0x80]
        %v2820 = vld [vmem:[#allocation3 + $0x50] sm:$0xff]
        %v2821 = vld [vmem:[#allocation3 + $0x60] sm:$0x80]
        %v2822 = vld [vmem:[#allocation3 + $0x68] sm:$0xff]
        %v2823 = vld [vmem:[#allocation3 + $0x78] sm:$0x80]
        %v2824 = vld [vmem:[#allocation3 + $0x80] sm:$0xff]
        %v2825 = vld [vmem:[#allocation3 + $0x90] sm:$0x80]
        %v2826 = vld [vmem:[#allocation3 + $0x98] sm:$0xff]
        %v2827 = vld [vmem:[#allocation3 + $0xa8] sm:$0x80]
        %v2828 = vld [vmem:[#allocation3 + $0xb0] sm:$0xff]
        %v2829 = vld [vmem:[#allocation3 + $0xc0] sm:$0x80]
        %v2830 = vld [vmem:[#allocation3 + $0xc8] sm:$0xff]
        %v2831 = vld [vmem:[#allocation3 + $0xd8] sm:$0x80]
        %v2832 = vld [vmem:[#allocation3 + $0xe0] sm:$0xff]
        %v2833 = vld [vmem:[#allocation3 + $0xf0] sm:$0x80]
        %v2834 = vld [vmem:[#allocation3 + $0xf8] sm:$0xff]
        %v2835 = vld [vmem:[#allocation3 + $0x108] sm:$0x80]
        %v2836 = vld [vmem:[#allocation3 + $0x110] sm:$0xff]
        %v2837 = vld [vmem:[#allocation3 + $0x120] sm:$0x80]
        %v2838 = vld [vmem:[#allocation3 + $0x128] sm:$0xff]
        %v2839 = vld [vmem:[#allocation3 + $0x138] sm:$0x80]
        %v2840 = vld [vmem:[#allocation3 + $0x140] sm:$0xff]
        %v2841 = vld [vmem:[#allocation3 + $0x150] sm:$0x80]
        %v2842 = vld [vmem:[#allocation3 + $0x158] sm:$0xff]
        %v2843 = vld [vmem:[#allocation3 + $0x168] sm:$0x80]
        %v2844 = vld [vmem:[#allocation3 + $0x170] sm:$0xff]
        %v2845 = vld [vmem:[#allocation3 + $0x180] sm:$0x80]
        %v2846 = vld [vmem:[#allocation3 + $0x188] sm:$0xff]
        %v2847 = vld [vmem:[#allocation3 + $0x198] sm:$0x80]
        %v2848 = vld [vmem:[#allocation3 + $0x1a0] sm:$0xff]
        %v2850 = vshrl.u32 %v2813, 16
        %v2852 = vrot.slane %v2850, 7
        %v2854 = vshrl.u32 %v2814, 16
        %v2856 = vrot.slane %v2854, 7
        %v2857 = vshll.u32 %v2814, 16
        %v2859 = vor.u32 %v2856, %v2857
        %v2860 = vsel %vm628, %v2852, %v2859
        %v2862 = vshrl.u32 %v2815, 16
        %v2864 = vrot.slane %v2862, 7
        %v2866 = vshrl.u32 %v2816, 16
        %v2868 = vrot.slane %v2866, 7
        %v2869 = vshll.u32 %v2816, 16
        %v2871 = vor.u32 %v2868, %v2869
        %v2872 = vsel %vm628, %v2864, %v2871
        %v2874 = vshrl.u32 %v2817, 16
        %v2876 = vrot.slane %v2874, 7
        %v2878 = vshrl.u32 %v2818, 16
        %v2880 = vrot.slane %v2878, 7
        %v2881 = vshll.u32 %v2818, 16
        %v2883 = vor.u32 %v2880, %v2881
        %v2884 = vsel %vm628, %v2876, %v2883
        %v2886 = vshrl.u32 %v2819, 16
        %v2888 = vrot.slane %v2886, 7
        %v2890 = vshrl.u32 %v2820, 16
        %v2892 = vrot.slane %v2890, 7
        %v2893 = vshll.u32 %v2820, 16
        %v2895 = vor.u32 %v2892, %v2893
        %v2896 = vsel %vm628, %v2888, %v2895
        %v2898 = vshrl.u32 %v2821, 16
        %v2900 = vrot.slane %v2898, 7
        %v2902 = vshrl.u32 %v2822, 16
        %v2904 = vrot.slane %v2902, 7
        %v2905 = vshll.u32 %v2822, 16
        %v2907 = vor.u32 %v2904, %v2905
        %v2908 = vsel %vm628, %v2900, %v2907
        %v2910 = vshrl.u32 %v2823, 16
        %v2912 = vrot.slane %v2910, 7
        %v2914 = vshrl.u32 %v2824, 16
        %v2916 = vrot.slane %v2914, 7
        %v2917 = vshll.u32 %v2824, 16
        %v2919 = vor.u32 %v2916, %v2917
        %v2920 = vsel %vm628, %v2912, %v2919
        %v2922 = vshrl.u32 %v2825, 16
        %v2924 = vrot.slane %v2922, 7
        %v2926 = vshrl.u32 %v2826, 16
        %v2928 = vrot.slane %v2926, 7
        %v2929 = vshll.u32 %v2826, 16
        %v2931 = vor.u32 %v2928, %v2929
        %v2932 = vsel %vm628, %v2924, %v2931
        %v2934 = vshrl.u32 %v2827, 16
        %v2936 = vrot.slane %v2934, 7
        %v2938 = vshrl.u32 %v2828, 16
        %v2940 = vrot.slane %v2938, 7
        %v2941 = vshll.u32 %v2828, 16
        %v2943 = vor.u32 %v2940, %v2941
        %v2944 = vsel %vm628, %v2936, %v2943
        %v2946 = vshrl.u32 %v2829, 16
        %v2948 = vrot.slane %v2946, 7
        %v2950 = vshrl.u32 %v2830, 16
        %v2952 = vrot.slane %v2950, 7
        %v2953 = vshll.u32 %v2830, 16
        %v2955 = vor.u32 %v2952, %v2953
        %v2956 = vsel %vm628, %v2948, %v2955
        %v2958 = vshrl.u32 %v2831, 16
        %v2960 = vrot.slane %v2958, 7
        %v2962 = vshrl.u32 %v2832, 16
        %v2964 = vrot.slane %v2962, 7
        %v2965 = vshll.u32 %v2832, 16
        %v2967 = vor.u32 %v2964, %v2965
        %v2968 = vsel %vm628, %v2960, %v2967
        %v2970 = vshrl.u32 %v2833, 16
        %v2972 = vrot.slane %v2970, 7
        %v2974 = vshrl.u32 %v2834, 16
        %v2976 = vrot.slane %v2974, 7
        %v2977 = vshll.u32 %v2834, 16
        %v2979 = vor.u32 %v2976, %v2977
        %v2980 = vsel %vm628, %v2972, %v2979
        %v2982 = vshrl.u32 %v2835, 16
        %v2984 = vrot.slane %v2982, 7
        %v2986 = vshrl.u32 %v2836, 16
        %v2988 = vrot.slane %v2986, 7
        %v2989 = vshll.u32 %v2836, 16
        %v2991 = vor.u32 %v2988, %v2989
        %v2992 = vsel %vm628, %v2984, %v2991
        %v2994 = vshrl.u32 %v2837, 16
        %v2996 = vrot.slane %v2994, 7
        %v2998 = vshrl.u32 %v2838, 16
        %v3000 = vrot.slane %v2998, 7
        %v3001 = vshll.u32 %v2838, 16
        %v3003 = vor.u32 %v3000, %v3001
        %v3004 = vsel %vm628, %v2996, %v3003
        %v3006 = vshrl.u32 %v2839, 16
        %v3008 = vrot.slane %v3006, 7
        %v3010 = vshrl.u32 %v2840, 16
        %v3012 = vrot.slane %v3010, 7
        %v3013 = vshll.u32 %v2840, 16
        %v3015 = vor.u32 %v3012, %v3013
        %v3016 = vsel %vm628, %v3008, %v3015
        %v3018 = vshrl.u32 %v2841, 16
        %v3020 = vrot.slane %v3018, 7
        %v3022 = vshrl.u32 %v2842, 16
        %v3024 = vrot.slane %v3022, 7
        %v3025 = vshll.u32 %v2842, 16
        %v3027 = vor.u32 %v3024, %v3025
        %v3028 = vsel %vm628, %v3020, %v3027
        %v3030 = vshrl.u32 %v2843, 16
        %v3032 = vrot.slane %v3030, 7
        %v3034 = vshrl.u32 %v2844, 16
        %v3036 = vrot.slane %v3034, 7
        %v3037 = vshll.u32 %v2844, 16
        %v3039 = vor.u32 %v3036, %v3037
        %v3040 = vsel %vm628, %v3032, %v3039
        %v3042 = vshrl.u32 %v2845, 16
        %v3044 = vrot.slane %v3042, 7
        %v3046 = vshrl.u32 %v2846, 16
        %v3048 = vrot.slane %v3046, 7
        %v3049 = vshll.u32 %v2846, 16
        %v3051 = vor.u32 %v3048, %v3049
        %v3052 = vsel %vm628, %v3044, %v3051
        %v3054 = vshrl.u32 %v2847, 16
        %v3056 = vrot.slane %v3054, 7
        %v3058 = vshrl.u32 %v2848, 16
        %v3060 = vrot.slane %v3058, 7
        %v3061 = vshll.u32 %v2848, 16
        %v3063 = vor.u32 %v3060, %v3061
        %v3064 = vsel %vm628, %v3056, %v3063
        %v3083 = vld [vmem:[#allocation11] sm:$0xf]
        %v3084 = vld [vmem:[#allocation11 + $0x4] sm:$0xf]
        %v3085 = vld [vmem:[#allocation11 + $0x8] sm:$0xf]
        %v3086 = vld [vmem:[#allocation11 + $0xc] sm:$0xf]
        %v3087 = vld [vmem:[#allocation11 + $0x10] sm:$0xf]
        %v3088 = vld [vmem:[#allocation11 + $0x14] sm:$0xf]
        %v3089 = vld [vmem:[#allocation11 + $0x18] sm:$0xf]
        %v3090 = vld [vmem:[#allocation11 + $0x1c] sm:$0xf]
        %v3091 = vld [vmem:[#allocation11 + $0x20] sm:$0xf]
        %v3092 = vld [vmem:[#allocation11 + $0x24] sm:$0xf]
        %v3093 = vld [vmem:[#allocation11 + $0x28] sm:$0xf]
        %v3094 = vld [vmem:[#allocation11 + $0x2c] sm:$0xf]
        %v3095 = vld [vmem:[#allocation11 + $0x30] sm:$0xf]
        %v3096 = vld [vmem:[#allocation11 + $0x34] sm:$0xf]
        %v3097 = vld [vmem:[#allocation11 + $0x38] sm:$0xf]
        %v3098 = vld [vmem:[#allocation11 + $0x3c] sm:$0xf]
        %v3099 = vld [vmem:[#allocation11 + $0x40] sm:$0xf]
        %v3100 = vld [vmem:[#allocation11 + $0x44] sm:$0xf]
        %v3101 = vld [vmem:[#allocation11 + $0x48] sm:$0xf]
        %v3102 = vld [vmem:[#allocation11 + $0x4c] sm:$0xf]
        %v3103 = vld [vmem:[#allocation11 + $0x50] sm:$0xf]
        %v3104 = vld [vmem:[#allocation11 + $0x54] sm:$0xf]
        %v3105 = vld [vmem:[#allocation11 + $0x58] sm:$0xf]
        %v3106 = vld [vmem:[#allocation11 + $0x5c] sm:$0xf]
        %v3107 = vld [vmem:[#allocation11 + $0x60] sm:$0xf]
        %v3108 = vld [vmem:[#allocation11 + $0x64] sm:$0xf]
        %v3109 = vld [vmem:[#allocation11 + $0x68] sm:$0xf]
        %v3110 = vld [vmem:[#allocation11 + $0x6c] sm:$0xf]
        %v3111 = vld [vmem:[#allocation11 + $0x70] sm:$0xf]
        %v3112 = vld [vmem:[#allocation11 + $0x74] sm:$0xf]
        %v3113 = vld [vmem:[#allocation11 + $0x78] sm:$0xf]
        %v3114 = vld [vmem:[#allocation11 + $0x7c] sm:$0xf]
        %v3115 = vld [vmem:[#allocation11 + $0x80] sm:$0xf]
        %v3116 = vld [vmem:[#allocation11 + $0x84] sm:$0xf]
        %v3117 = vld [vmem:[#allocation11 + $0x88] sm:$0xf]
        %v3118 = vld [vmem:[#allocation11 + $0x8c] sm:$0xf]
        %v3119 = vld [vmem:[#allocation11 + $0x90] sm:$0xf]
        %v3120 = vld [vmem:[#allocation11 + $0x94] sm:$0xf]
        %v3121 = vld [vmem:[#allocation11 + $0x98] sm:$0xf]
        %v3122 = vld [vmem:[#allocation11 + $0x9c] sm:$0xf]
        %v3123 = vld [vmem:[#allocation11 + $0xa0] sm:$0xf]
        %v3124 = vld [vmem:[#allocation11 + $0xa4] sm:$0xf]
        %v3125 = vld [vmem:[#allocation11 + $0xa8] sm:$0xf]
        %v3126 = vld [vmem:[#allocation11 + $0xac] sm:$0xf]
        %v3127 = vld [vmem:[#allocation11 + $0xb0] sm:$0xf]
        %v3128 = vld [vmem:[#allocation11 + $0xb4] sm:$0xf]
        %v3129 = vld [vmem:[#allocation11 + $0xb8] sm:$0xf]
        %v3130 = vld [vmem:[#allocation11 + $0xbc] sm:$0xf]
        %s3131 = scalar_lea.vmem [#allocation11], 192
        %v3132 = vld [vmem:[%s3131] sm:$0xf]
        %v3133 = vld [vmem:[%s3131 + $0x4] sm:$0xf]
        %v3134 = vld [vmem:[%s3131 + $0x8] sm:$0xf]
        %v3135 = vld [vmem:[%s3131 + $0xc] sm:$0xf]
        %v3136 = vld [vmem:[%s3131 + $0x10] sm:$0xf]
        %v3137 = vld [vmem:[%s3131 + $0x14] sm:$0xf]
        %v3138 = vld [vmem:[%s3131 + $0x18] sm:$0xf]
        %v3139 = vld [vmem:[%s3131 + $0x1c] sm:$0xf]
        %v3140 = vld [vmem:[%s3131 + $0x20] sm:$0xf]
        %v3141 = vld [vmem:[%s3131 + $0x24] sm:$0xf]
        %v3142 = vld [vmem:[%s3131 + $0x28] sm:$0xf]
        %v3143 = vld [vmem:[%s3131 + $0x2c] sm:$0xf]
        %v3144 = vld [vmem:[%s3131 + $0x30] sm:$0xf]
        %v3145 = vld [vmem:[%s3131 + $0x34] sm:$0xf]
        %v3146 = vld [vmem:[%s3131 + $0x38] sm:$0xf]
        %v3147 = vld [vmem:[%s3131 + $0x3c] sm:$0xf]
        %v3148 = vld [vmem:[%s3131 + $0x40] sm:$0xf]
        %v3149 = vld [vmem:[%s3131 + $0x44] sm:$0xf]
        %v3150 = vld [vmem:[%s3131 + $0x48] sm:$0xf]
        %v3151 = vld [vmem:[%s3131 + $0x4c] sm:$0xf]
        %v3152 = vld [vmem:[%s3131 + $0x50] sm:$0xf]
        %v3153 = vld [vmem:[%s3131 + $0x54] sm:$0xf]
        %v3154 = vld [vmem:[%s3131 + $0x58] sm:$0xf]
        %v3155 = vld [vmem:[%s3131 + $0x5c] sm:$0xf]
        %v3156 = vld [vmem:[%s3131 + $0x60] sm:$0xf]
        %v3157 = vld [vmem:[%s3131 + $0x64] sm:$0xf]
        %v3158 = vld [vmem:[%s3131 + $0x68] sm:$0xf]
        %v3159 = vld [vmem:[%s3131 + $0x6c] sm:$0xf]
        %v3160 = vld [vmem:[%s3131 + $0x70] sm:$0xf]
        %v3161 = vld [vmem:[%s3131 + $0x74] sm:$0xf]
        %v3162 = vld [vmem:[%s3131 + $0x78] sm:$0xf]
        %v3163 = vld [vmem:[%s3131 + $0x7c] sm:$0xf]
        %v3164 = vld [vmem:[%s3131 + $0x80] sm:$0xf]
        %v3165 = vld [vmem:[%s3131 + $0x84] sm:$0xf]
        %v3166 = vld [vmem:[%s3131 + $0x88] sm:$0xf]
        %v3167 = vld [vmem:[%s3131 + $0x8c] sm:$0xf]
        %v3168 = vld [vmem:[%s3131 + $0x90] sm:$0xf]
        %v3169 = vld [vmem:[%s3131 + $0x94] sm:$0xf]
        %v3170 = vld [vmem:[%s3131 + $0x98] sm:$0xf]
        %v3171 = vld [vmem:[%s3131 + $0x9c] sm:$0xf]
        %v3172 = vld [vmem:[%s3131 + $0xa0] sm:$0xf]
        %v3173 = vld [vmem:[%s3131 + $0xa4] sm:$0xf]
        %v3174 = vld [vmem:[%s3131 + $0xa8] sm:$0xf]
        %v3175 = vld [vmem:[%s3131 + $0xac] sm:$0xf]
        %v3176 = vld [vmem:[%s3131 + $0xb0] sm:$0xf]
        %v3177 = vld [vmem:[%s3131 + $0xb4] sm:$0xf]
        %v3178 = vld [vmem:[%s3131 + $0xb8] sm:$0xf]
        %v3179 = vld [vmem:[%s3131 + $0xbc] sm:$0xf]
        %v3228 = vunpack.c.l.b16 %v3132
        %v3229 = vunpack.c.l.b16 %v3133
        %v3230 = vunpack.c.l.b16 %v3134
        %v3231 = vunpack.c.l.b16 %v3135
        %v3232 = vunpack.c.l.b16 %v3136
        %v3233 = vunpack.c.l.b16 %v3137
        %v3234 = vunpack.c.l.b16 %v3138
        %v3235 = vunpack.c.l.b16 %v3139
        %v3236 = vunpack.c.l.b16 %v3140
        %v3237 = vunpack.c.l.b16 %v3141
        %v3238 = vunpack.c.l.b16 %v3142
        %v3239 = vunpack.c.l.b16 %v3143
        %v3240 = vunpack.c.l.b16 %v3144
        %v3241 = vunpack.c.l.b16 %v3145
        %v3242 = vunpack.c.l.b16 %v3146
        %v3243 = vunpack.c.l.b16 %v3147
        %v3244 = vunpack.c.l.b16 %v3148
        %v3245 = vunpack.c.l.b16 %v3149
        %v3246 = vunpack.c.l.b16 %v3150
        %v3247 = vunpack.c.l.b16 %v3151
        %v3248 = vunpack.c.l.b16 %v3152
        %v3249 = vunpack.c.l.b16 %v3153
        %v3250 = vunpack.c.l.b16 %v3154
        %v3251 = vunpack.c.l.b16 %v3155
        %v3252 = vunpack.c.l.b16 %v3156
        %v3253 = vunpack.c.l.b16 %v3157
        %v3254 = vunpack.c.l.b16 %v3158
        %v3255 = vunpack.c.l.b16 %v3159
        %v3256 = vunpack.c.l.b16 %v3160
        %v3257 = vunpack.c.l.b16 %v3161
        %v3258 = vunpack.c.l.b16 %v3162
        %v3259 = vunpack.c.l.b16 %v3163
        %v3260 = vunpack.c.l.b16 %v3164
        %v3261 = vunpack.c.l.b16 %v3165
        %v3262 = vunpack.c.l.b16 %v3166
        %v3263 = vunpack.c.l.b16 %v3167
        %v3264 = vunpack.c.l.b16 %v3168
        %v3265 = vunpack.c.l.b16 %v3169
        %v3266 = vunpack.c.l.b16 %v3170
        %v3267 = vunpack.c.l.b16 %v3171
        %v3268 = vunpack.c.l.b16 %v3172
        %v3269 = vunpack.c.l.b16 %v3173
        %v3270 = vunpack.c.l.b16 %v3174
        %v3271 = vunpack.c.l.b16 %v3175
        %v3272 = vunpack.c.l.b16 %v3176
        %v3273 = vunpack.c.l.b16 %v3177
        %v3274 = vunpack.c.l.b16 %v3178
        %v3275 = vunpack.c.l.b16 %v3179
        %v3276 = vpack.c.b16 %v3229, %v3228
        %v3277 = vpack.c.b16 %v3231, %v3230
        %v3278 = vpack.c.b16 %v3233, %v3232
        %v3279 = vpack.c.b16 %v3235, %v3234
        %v3280 = vpack.c.b16 %v3237, %v3236
        %v3281 = vpack.c.b16 %v3239, %v3238
        %v3282 = vpack.c.b16 %v3241, %v3240
        %v3283 = vpack.c.b16 %v3243, %v3242
        %v3284 = vpack.c.b16 %v3245, %v3244
        %v3285 = vpack.c.b16 %v3247, %v3246
        %v3286 = vpack.c.b16 %v3249, %v3248
        %v3287 = vpack.c.b16 %v3251, %v3250
        %v3288 = vpack.c.b16 %v3253, %v3252
        %v3289 = vpack.c.b16 %v3255, %v3254
        %v3290 = vpack.c.b16 %v3257, %v3256
        %v3291 = vpack.c.b16 %v3259, %v3258
        %v3292 = vpack.c.b16 %v3261, %v3260
        %v3293 = vpack.c.b16 %v3263, %v3262
        %v3294 = vpack.c.b16 %v3265, %v3264
        %v3295 = vpack.c.b16 %v3267, %v3266
        %v3296 = vpack.c.b16 %v3269, %v3268
        %v3297 = vpack.c.b16 %v3271, %v3270
        %v3298 = vpack.c.b16 %v3273, %v3272
        %v3299 = vpack.c.b16 %v3275, %v3274
        %3324 = vmatprep.subr.bf16.mxu0 0
        %3325 = vmatpush1.bf16.msra.mxu0 %v3276
        %3326 = vmatprep.subr.bf16.mxu0 0
        %3327 = vmatpush1.bf16.msra.mxu0 %v3277
        %3328 = vmatprep.subr.bf16.mxu0 0
        %3329 = vmatpush1.bf16.msra.mxu0 %v3278
        %3330 = vmatprep.subr.bf16.mxu0 0
        %3331 = vmatpush1.bf16.msra.mxu0 %v3279
        %3332 = vmatprep.subr.bf16.mxu0 0
        %3333 = vmatpush1.bf16.msra.mxu0 %v3280
        %3334 = vmatprep.subr.bf16.mxu0 0
        %3335 = vmatpush1.bf16.msra.mxu0 %v3281
        %3336 = vmatprep.subr.bf16.mxu0 0
        %3337 = vmatpush1.bf16.msra.mxu0 %v3282
        %3338 = vmatprep.subr.bf16.mxu0 0
        %3339 = vmatpush1.bf16.msra.mxu0 %v3283
        %3340 = vmatprep.subr.bf16.mxu0 0
        %3341 = vmatpush1.bf16.msra.mxu0 %v3284
        %3342 = vmatprep.subr.bf16.mxu0 0
        %3343 = vmatpush1.bf16.msra.mxu0 %v3285
        %3344 = vmatprep.subr.bf16.mxu0 0
        %3345 = vmatpush1.bf16.msra.mxu0 %v3286
        %3346 = vmatprep.subr.bf16.mxu0 0
        %3347 = vmatpush1.bf16.msra.mxu0 %v3287
        %3348 = vmatprep.subr.bf16.mxu0 0
        %3349 = vmatpush1.bf16.msra.mxu0 %v3288
        %3350 = vmatprep.subr.bf16.mxu0 0
        %3351 = vmatpush1.bf16.msra.mxu0 %v3289
        %3352 = vmatprep.subr.bf16.mxu0 0
        %3353 = vmatpush1.bf16.msra.mxu0 %v3290
        %3354 = vmatprep.subr.bf16.mxu0 0
        %3355 = vmatpush1.bf16.msra.mxu0 %v3291
        %3356 = vmatprep.mubr.bf16.mxu0 %v2816
        %3357 = vmatmul.mubr.bf16.gmra.mrb[0].mxu0 %v2814
        %v3358 = vpop.f32.mrb[0].mxu0
        %v3359 = vadd.f32 0.0, %v3358
        %v3360 = vpop.f32.mrb[0].mxu0
        %v3361 = vpop.f32.mrb[0].mxu0
        %v3362 = vadd.f32 0.0, %v3361
        %v3363 = vpop.f32.mrb[0].mxu0
        %3364 = vmatprep.mubr.bf16.mxu0 %v2818
        %3365 = vmatmul.mubr.bf16.gmra.mrb[0].mxu0 %v2816
        %v3366 = vpop.f32.mrb[0].mxu0
        %v3367 = vadd.f32 0.0, %v3366
        %v3368 = vpop.f32.mrb[0].mxu0
        %v3369 = vpop.f32.mrb[0].mxu0
        %v3370 = vadd.f32 0.0, %v3369
        %v3371 = vpop.f32.mrb[0].mxu0
        %3372 = vmatprep.mubr.bf16.mxu0 %v2820
        %3373 = vmatmul.mubr.bf16.gmra.mrb[0].mxu0 %v2818
        %v3374 = vpop.f32.mrb[0].mxu0
        %v3375 = vadd.f32 0.0, %v3374
        %v3376 = vpop.f32.mrb[0].mxu0
        %v3377 = vpop.f32.mrb[0].mxu0
        %v3378 = vadd.f32 0.0, %v3377
        %v3379 = vpop.f32.mrb[0].mxu0
        %3380 = vmatprep.mubr.bf16.mxu0 %v2822
        %3381 = vmatmul.mubr.bf16.gmra.mrb[0].mxu0 %v2820
        %v3382 = vpop.f32.mrb[0].mxu0
        %v3383 = vadd.f32 0.0, %v3382
        %v3384 = vpop.f32.mrb[0].mxu0
        %v3385 = vpop.f32.mrb[0].mxu0
        %v3386 = vadd.f32 0.0, %v3385
        %v3387 = vpop.f32.mrb[0].mxu0
        %3388 = vmatprep.mubr.bf16.mxu0 %v2824
        %3389 = vmatmul.mubr.bf16.gmra.mrb[0].mxu0 %v2822
        %v3390 = vpop.f32.mrb[0].mxu0
        %v3391 = vadd.f32 0.0, %v3390
        %v3392 = vpop.f32.mrb[0].mxu0
        %v3393 = vpop.f32.mrb[0].mxu0
        %v3394 = vadd.f32 0.0, %v3393
        %v3395 = vpop.f32.mrb[0].mxu0
        %3396 = vmatprep.mubr.bf16.mxu0 %v2826
        %3397 = vmatmul.mubr.bf16.gmra.mrb[0].mxu0 %v2824
        %v3398 = vpop.f32.mrb[0].mxu0
        %v3399 = vadd.f32 0.0, %v3398
        %v3400 = vpop.f32.mrb[0].mxu0
        %v3401 = vpop.f32.mrb[0].mxu0
        %v3402 = vadd.f32 0.0, %v3401
        %v3403 = vpop.f32.mrb[0].mxu0
        %3404 = vmatprep.mubr.bf16.mxu0 %v2828
        %3405 = vmatmul.mubr.bf16.gmra.mrb[0].mxu0 %v2826
        %v3406 = vpop.f32.mrb[0].mxu0
        %v3407 = vadd.f32 0.0, %v3406
        %v3408 = vpop.f32.mrb[0].mxu0
        %v3409 = vpop.f32.mrb[0].mxu0
        %v3410 = vadd.f32 0.0, %v3409
        %v3411 = vpop.f32.mrb[0].mxu0
        %3412 = vmatprep.mubr.bf16.mxu0 %v2830
        %3413 = vmatmul.mubr.bf16.gmra.mrb[0].mxu0 %v2828
        %v3414 = vpop.f32.mrb[0].mxu0
        %v3415 = vadd.f32 0.0, %v3414
        %v3416 = vpop.f32.mrb[0].mxu0
        %v3417 = vpop.f32.mrb[0].mxu0
        %v3418 = vadd.f32 0.0, %v3417
        %v3419 = vpop.f32.mrb[0].mxu0
        %3420 = vmatprep.mubr.bf16.mxu0 %v2832
        %3421 = vmatmul.mubr.bf16.gmra.mrb[0].mxu0 %v2830
        %v3422 = vpop.f32.mrb[0].mxu0
        %v3423 = vadd.f32 0.0, %v3422
        %v3424 = vpop.f32.mrb[0].mxu0
        %v3425 = vpop.f32.mrb[0].mxu0
        %v3426 = vadd.f32 0.0, %v3425
        %v3427 = vpop.f32.mrb[0].mxu0
        %3428 = vmatprep.mubr.bf16.mxu0 %v2834
        %3429 = vmatmul.mubr.bf16.gmra.mrb[0].mxu0 %v2832
        %v3430 = vpop.f32.mrb[0].mxu0
        %v3431 = vadd.f32 0.0, %v3430
        %v3432 = vpop.f32.mrb[0].mxu0
        %v3433 = vpop.f32.mrb[0].mxu0
        %v3434 = vadd.f32 0.0, %v3433
        %v3435 = vpop.f32.mrb[0].mxu0
        %3436 = vmatprep.mubr.bf16.mxu0 %v2836
        %3437 = vmatmul.mubr.bf16.gmra.mrb[0].mxu0 %v2834
        %v3438 = vpop.f32.mrb[0].mxu0
        %v3439 = vadd.f32 0.0, %v3438
        %v3440 = vpop.f32.mrb[0].mxu0
        %v3441 = vpop.f32.mrb[0].mxu0
        %v3442 = vadd.f32 0.0, %v3441
        %v3443 = vpop.f32.mrb[0].mxu0
        %3444 = vmatprep.mubr.bf16.mxu0 %v2838
        %3445 = vmatmul.mubr.bf16.gmra.mrb[0].mxu0 %v2836
        %v3446 = vpop.f32.mrb[0].mxu0
        %v3447 = vadd.f32 0.0, %v3446
        %v3448 = vpop.f32.mrb[0].mxu0
        %v3449 = vpop.f32.mrb[0].mxu0
        %v3450 = vadd.f32 0.0, %v3449
        %v3451 = vpop.f32.mrb[0].mxu0
        %3452 = vmatprep.mubr.bf16.mxu0 %v2840
        %3453 = vmatmul.mubr.bf16.gmra.mrb[0].mxu0 %v2838
        %v3454 = vpop.f32.mrb[0].mxu0
        %v3455 = vadd.f32 0.0, %v3454
        %v3456 = vpop.f32.mrb[0].mxu0
        %v3457 = vpop.f32.mrb[0].mxu0
        %v3458 = vadd.f32 0.0, %v3457
        %v3459 = vpop.f32.mrb[0].mxu0
        %3460 = vmatprep.mubr.bf16.mxu0 %v2842
        %3461 = vmatmul.mubr.bf16.gmra.mrb[0].mxu0 %v2840
        %v3462 = vpop.f32.mrb[0].mxu0
        %v3463 = vadd.f32 0.0, %v3462
        %v3464 = vpop.f32.mrb[0].mxu0
        %v3465 = vpop.f32.mrb[0].mxu0
        %v3466 = vadd.f32 0.0, %v3465
        %v3467 = vpop.f32.mrb[0].mxu0
        %3468 = vmatprep.mubr.bf16.mxu0 %v2844
        %3469 = vmatmul.mubr.bf16.gmra.mrb[0].mxu0 %v2842
        %v3470 = vpop.f32.mrb[0].mxu0
        %v3471 = vadd.f32 0.0, %v3470
        %v3472 = vpop.f32.mrb[0].mxu0
        %v3473 = vpop.f32.mrb[0].mxu0
        %v3474 = vadd.f32 0.0, %v3473
        %v3475 = vpop.f32.mrb[0].mxu0
        %3476 = vmatprep.mubr.bf16.mxu0 %v2846
        %3477 = vmatmul.mubr.bf16.gmra.mrb[0].mxu0 %v2844
        %v3478 = vpop.f32.mrb[0].mxu0
        %v3479 = vadd.f32 0.0, %v3478
        %v3480 = vpop.f32.mrb[0].mxu0
        %v3481 = vpop.f32.mrb[0].mxu0
        %v3482 = vadd.f32 0.0, %v3481
        %v3483 = vpop.f32.mrb[0].mxu0
        %3484 = vdwg.mxu0
        %3485 = vmatprep.subr.bf16.mxu0 0
        %3486 = vmatpush1.bf16.msra.mxu0 %v3292
        %3487 = vmatprep.subr.bf16.mxu0 0
        %3488 = vmatpush1.bf16.msra.mxu0 %v3293
        %3489 = vmatprep.subr.bf16.mxu0 0
        %3490 = vmatpush1.bf16.msra.mxu0 %v3294
        %3491 = vmatprep.subr.bf16.mxu0 0
        %3492 = vmatpush1.bf16.msra.mxu0 %v3295
        %3493 = vmatprep.subr.bf16.mxu0 0
        %3494 = vmatpush1.bf16.msra.mxu0 %v3296
        %3495 = vmatprep.subr.bf16.mxu0 0
        %3496 = vmatpush1.bf16.msra.mxu0 %v3297
        %3497 = vmatprep.subr.bf16.mxu0 0
        %3498 = vmatpush1.bf16.msra.mxu0 %v3298
        %3499 = vmatprep.subr.bf16.mxu0 0
        %3500 = vmatpush1.bf16.msra.mxu0 %v3299
        %3501 = vmatprep.subr.bf16.mxu0 0
        %3502 = vmatpush1.bf16.msra.mxu0 0
        %3503 = vmatprep.subr.bf16.mxu0 0
        %3504 = vmatpush1.bf16.msra.mxu0 0
        %3505 = vmatprep.subr.bf16.mxu0 0
        %3506 = vmatpush1.bf16.msra.mxu0 0
        %3507 = vmatprep.subr.bf16.mxu0 0
        %3508 = vmatpush1.bf16.msra.mxu0 0
        %3509 = vmatprep.subr.bf16.mxu0 0
        %3510 = vmatpush1.bf16.msra.mxu0 0
        %3511 = vmatprep.subr.bf16.mxu0 0
        %3512 = vmatpush1.bf16.msra.mxu0 0
        %3513 = vmatprep.subr.bf16.mxu0 0
        %3514 = vmatpush1.bf16.msra.mxu0 0
        %3515 = vmatprep.subr.bf16.mxu0 0
        %3516 = vmatpush1.bf16.msra.mxu0 0
        %3517 = vmatprep.mubr.bf16.mxu0 0
        %3518 = vmatmul.mubr.bf16.gmra.mrb[0].mxu0 %v2818
        %v3519 = vpop.f32.mrb[0].mxu0
        %v3520 = vadd.f32 %v3359, %v3519
        %v3521 = vpop.f32.mrb[0].mxu0
        %v3522 = vpop.f32.mrb[0].mxu0
        %v3523 = vadd.f32 %v3362, %v3522
        %v3524 = vpop.f32.mrb[0].mxu0
        %3525 = vmatprep.mubr.bf16.mxu0 0
        %3526 = vmatmul.mubr.bf16.gmra.mrb[0].mxu0 %v2820
        %v3527 = vpop.f32.mrb[0].mxu0
        %v3528 = vadd.f32 %v3367, %v3527
        %v3529 = vpop.f32.mrb[0].mxu0
        %v3530 = vpop.f32.mrb[0].mxu0
        %v3531 = vadd.f32 %v3370, %v3530
        %v3532 = vpop.f32.mrb[0].mxu0
        %3533 = vmatprep.mubr.bf16.mxu0 0
        %3534 = vmatmul.mubr.bf16.gmra.mrb[0].mxu0 %v2822
        %v3535 = vpop.f32.mrb[0].mxu0
        %v3536 = vadd.f32 %v3375, %v3535
        %v3537 = vpop.f32.mrb[0].mxu0
        %v3538 = vpop.f32.mrb[0].mxu0
        %v3539 = vadd.f32 %v3378, %v3538
        %v3540 = vpop.f32.mrb[0].mxu0
        %3541 = vmatprep.mubr.bf16.mxu0 0
        %3542 = vmatmul.mubr.bf16.gmra.mrb[0].mxu0 %v2824
        %v3543 = vpop.f32.mrb[0].mxu0
        %v3544 = vadd.f32 %v3383, %v3543
        %v3545 = vpop.f32.mrb[0].mxu0
        %v3546 = vpop.f32.mrb[0].mxu0
        %v3547 = vadd.f32 %v3386, %v3546
        %v3548 = vpop.f32.mrb[0].mxu0
        %3549 = vmatprep.mubr.bf16.mxu0 0
        %3550 = vmatmul.mubr.bf16.gmra.mrb[0].mxu0 %v2826
        %v3551 = vpop.f32.mrb[0].mxu0
        %v3552 = vadd.f32 %v3391, %v3551
        %v3553 = vpop.f32.mrb[0].mxu0
        %v3554 = vpop.f32.mrb[0].mxu0
        %v3555 = vadd.f32 %v3394, %v3554
        %v3556 = vpop.f32.mrb[0].mxu0
        %3557 = vmatprep.mubr.bf16.mxu0 0
        %3558 = vmatmul.mubr.bf16.gmra.mrb[0].mxu0 %v2828
        %v3559 = vpop.f32.mrb[0].mxu0
        %v3560 = vadd.f32 %v3399, %v3559
        %v3561 = vpop.f32.mrb[0].mxu0
        %v3562 = vpop.f32.mrb[0].mxu0
        %v3563 = vadd.f32 %v3402, %v3562
        %v3564 = vpop.f32.mrb[0].mxu0
        %3565 = vmatprep.mubr.bf16.mxu0 0
        %3566 = vmatmul.mubr.bf16.gmra.mrb[0].mxu0 %v2830
        %v3567 = vpop.f32.mrb[0].mxu0
        %v3568 = vadd.f32 %v3407, %v3567
        %v3569 = vpop.f32.mrb[0].mxu0
        %v3570 = vpop.f32.mrb[0].mxu0
        %v3571 = vadd.f32 %v3410, %v3570
        %v3572 = vpop.f32.mrb[0].mxu0
        %3573 = vmatprep.mubr.bf16.mxu0 0
        %3574 = vmatmul.mubr.bf16.gmra.mrb[0].mxu0 %v2832
        %v3575 = vpop.f32.mrb[0].mxu0
        %v3576 = vadd.f32 %v3415, %v3575
        %v3577 = vpop.f32.mrb[0].mxu0
        %v3578 = vpop.f32.mrb[0].mxu0
        %v3579 = vadd.f32 %v3418, %v3578
        %v3580 = vpop.f32.mrb[0].mxu0
        %3581 = vmatprep.mubr.bf16.mxu0 0
        %3582 = vmatmul.mubr.bf16.gmra.mrb[0].mxu0 %v2834
        %v3583 = vpop.f32.mrb[0].mxu0
        %v3584 = vadd.f32 %v3423, %v3583
        %v3585 = vpop.f32.mrb[0].mxu0
        %v3586 = vpop.f32.mrb[0].mxu0
        %v3587 = vadd.f32 %v3426, %v3586
        %v3588 = vpop.f32.mrb[0].mxu0
        %3589 = vmatprep.mubr.bf16.mxu0 0
        %3590 = vmatmul.mubr.bf16.gmra.mrb[0].mxu0 %v2836
        %v3591 = vpop.f32.mrb[0].mxu0
        %v3592 = vadd.f32 %v3431, %v3591
        %v3593 = vpop.f32.mrb[0].mxu0
        %v3594 = vpop.f32.mrb[0].mxu0
        %v3595 = vadd.f32 %v3434, %v3594
        %v3596 = vpop.f32.mrb[0].mxu0
        %3597 = vmatprep.mubr.bf16.mxu0 0
        %3598 = vmatmul.mubr.bf16.gmra.mrb[0].mxu0 %v2838
        %v3599 = vpop.f32.mrb[0].mxu0
        %v3600 = vadd.f32 %v3439, %v3599
        %v3601 = vpop.f32.mrb[0].mxu0
        %v3602 = vpop.f32.mrb[0].mxu0
        %v3603 = vadd.f32 %v3442, %v3602
        %v3604 = vpop.f32.mrb[0].mxu0
        %3605 = vmatprep.mubr.bf16.mxu0 0
        %3606 = vmatmul.mubr.bf16.gmra.mrb[0].mxu0 %v2840
        %v3607 = vpop.f32.mrb[0].mxu0
        %v3608 = vadd.f32 %v3447, %v3607
        %v3609 = vpop.f32.mrb[0].mxu0
        %v3610 = vpop.f32.mrb[0].mxu0
        %v3611 = vadd.f32 %v3450, %v3610
        %v3612 = vpop.f32.mrb[0].mxu0
        %3613 = vmatprep.mubr.bf16.mxu0 0
        %3614 = vmatmul.mubr.bf16.gmra.mrb[0].mxu0 %v2842
        %v3615 = vpop.f32.mrb[0].mxu0
        %v3616 = vadd.f32 %v3455, %v3615
        %v3617 = vpop.f32.mrb[0].mxu0
        %v3618 = vpop.f32.mrb[0].mxu0
        %v3619 = vadd.f32 %v3458, %v3618
        %v3620 = vpop.f32.mrb[0].mxu0
        %3621 = vmatprep.mubr.bf16.mxu0 0
        %3622 = vmatmul.mubr.bf16.gmra.mrb[0].mxu0 %v2844
        %v3623 = vpop.f32.mrb[0].mxu0
        %v3624 = vadd.f32 %v3463, %v3623
        %v3625 = vpop.f32.mrb[0].mxu0
        %v3626 = vpop.f32.mrb[0].mxu0
        %v3627 = vadd.f32 %v3466, %v3626
        %v3628 = vpop.f32.mrb[0].mxu0
        %3629 = vmatprep.mubr.bf16.mxu0 0
        %3630 = vmatmul.mubr.bf16.gmra.mrb[0].mxu0 %v2846
        %v3631 = vpop.f32.mrb[0].mxu0
        %v3632 = vadd.f32 %v3471, %v3631
        %v3633 = vpop.f32.mrb[0].mxu0
        %v3634 = vpop.f32.mrb[0].mxu0
        %v3635 = vadd.f32 %v3474, %v3634
        %v3636 = vpop.f32.mrb[0].mxu0
        %3637 = vmatprep.mubr.bf16.mxu0 0
        %3638 = vmatmul.mubr.bf16.gmra.mrb[0].mxu0 %v2848
        %v3639 = vpop.f32.mrb[0].mxu0
        %v3640 = vadd.f32 %v3479, %v3639
        %v3641 = vpop.f32.mrb[0].mxu0
        %v3642 = vpop.f32.mrb[0].mxu0
        %v3643 = vadd.f32 %v3482, %v3642
        %v3644 = vpop.f32.mrb[0].mxu0
        %3645 = vdwg.mxu0
        %v3694 = vunpack.c.l.b16 %v3083
        %v3695 = vunpack.c.l.b16 %v3084
        %v3696 = vunpack.c.l.b16 %v3085
        %v3697 = vunpack.c.l.b16 %v3086
        %v3698 = vunpack.c.l.b16 %v3087
        %v3699 = vunpack.c.l.b16 %v3088
        %v3700 = vunpack.c.l.b16 %v3089
        %v3701 = vunpack.c.l.b16 %v3090
        %v3702 = vunpack.c.l.b16 %v3091
        %v3703 = vunpack.c.l.b16 %v3092
        %v3704 = vunpack.c.l.b16 %v3093
        %v3705 = vunpack.c.l.b16 %v3094
        %v3706 = vunpack.c.l.b16 %v3095
        %v3707 = vunpack.c.l.b16 %v3096
        %v3708 = vunpack.c.l.b16 %v3097
        %v3709 = vunpack.c.l.b16 %v3098
        %v3710 = vunpack.c.l.b16 %v3099
        %v3711 = vunpack.c.l.b16 %v3100
        %v3712 = vunpack.c.l.b16 %v3101
        %v3713 = vunpack.c.l.b16 %v3102
        %v3714 = vunpack.c.l.b16 %v3103
        %v3715 = vunpack.c.l.b16 %v3104
        %v3716 = vunpack.c.l.b16 %v3105
        %v3717 = vunpack.c.l.b16 %v3106
        %v3718 = vunpack.c.l.b16 %v3107
        %v3719 = vunpack.c.l.b16 %v3108
        %v3720 = vunpack.c.l.b16 %v3109
        %v3721 = vunpack.c.l.b16 %v3110
        %v3722 = vunpack.c.l.b16 %v3111
        %v3723 = vunpack.c.l.b16 %v3112
        %v3724 = vunpack.c.l.b16 %v3113
        %v3725 = vunpack.c.l.b16 %v3114
        %v3726 = vunpack.c.l.b16 %v3115
        %v3727 = vunpack.c.l.b16 %v3116
        %v3728 = vunpack.c.l.b16 %v3117
        %v3729 = vunpack.c.l.b16 %v3118
        %v3730 = vunpack.c.l.b16 %v3119
        %v3731 = vunpack.c.l.b16 %v3120
        %v3732 = vunpack.c.l.b16 %v3121
        %v3733 = vunpack.c.l.b16 %v3122
        %v3734 = vunpack.c.l.b16 %v3123
        %v3735 = vunpack.c.l.b16 %v3124
        %v3736 = vunpack.c.l.b16 %v3125
        %v3737 = vunpack.c.l.b16 %v3126
        %v3738 = vunpack.c.l.b16 %v3127
        %v3739 = vunpack.c.l.b16 %v3128
        %v3740 = vunpack.c.l.b16 %v3129
        %v3741 = vunpack.c.l.b16 %v3130
        %v3742 = vpack.c.b16 %v3695, %v3694
        %v3743 = vpack.c.b16 %v3697, %v3696
        %v3744 = vpack.c.b16 %v3699, %v3698
        %v3745 = vpack.c.b16 %v3701, %v3700
        %v3746 = vpack.c.b16 %v3703, %v3702
        %v3747 = vpack.c.b16 %v3705, %v3704
        %v3748 = vpack.c.b16 %v3707, %v3706
        %v3749 = vpack.c.b16 %v3709, %v3708
        %v3750 = vpack.c.b16 %v3711, %v3710
        %v3751 = vpack.c.b16 %v3713, %v3712
        %v3752 = vpack.c.b16 %v3715, %v3714
        %v3753 = vpack.c.b16 %v3717, %v3716
        %v3754 = vpack.c.b16 %v3719, %v3718
        %v3755 = vpack.c.b16 %v3721, %v3720
        %v3756 = vpack.c.b16 %v3723, %v3722
        %v3757 = vpack.c.b16 %v3725, %v3724
        %v3758 = vpack.c.b16 %v3727, %v3726
        %v3759 = vpack.c.b16 %v3729, %v3728
        %v3760 = vpack.c.b16 %v3731, %v3730
        %v3761 = vpack.c.b16 %v3733, %v3732
        %v3762 = vpack.c.b16 %v3735, %v3734
        %v3763 = vpack.c.b16 %v3737, %v3736
        %v3764 = vpack.c.b16 %v3739, %v3738
        %v3765 = vpack.c.b16 %v3741, %v3740
        %3790 = vmatprep.subr.bf16.mxu0 0
        %3791 = vmatpush1.bf16.msra.mxu0 %v3742
        %3792 = vmatprep.subr.bf16.mxu0 0
        %3793 = vmatpush1.bf16.msra.mxu0 %v3743
        %3794 = vmatprep.subr.bf16.mxu0 0
        %3795 = vmatpush1.bf16.msra.mxu0 %v3744
        %3796 = vmatprep.subr.bf16.mxu0 0
        %3797 = vmatpush1.bf16.msra.mxu0 %v3745
        %3798 = vmatprep.subr.bf16.mxu0 0
        %3799 = vmatpush1.bf16.msra.mxu0 %v3746
        %3800 = vmatprep.subr.bf16.mxu0 0
        %3801 = vmatpush1.bf16.msra.mxu0 %v3747
        %3802 = vmatprep.subr.bf16.mxu0 0
        %3803 = vmatpush1.bf16.msra.mxu0 %v3748
        %3804 = vmatprep.subr.bf16.mxu0 0
        %3805 = vmatpush1.bf16.msra.mxu0 %v3749
        %3806 = vmatprep.subr.bf16.mxu0 0
        %3807 = vmatpush1.bf16.msra.mxu0 %v3750
        %3808 = vmatprep.subr.bf16.mxu0 0
        %3809 = vmatpush1.bf16.msra.mxu0 %v3751
        %3810 = vmatprep.subr.bf16.mxu0 0
        %3811 = vmatpush1.bf16.msra.mxu0 %v3752
        %3812 = vmatprep.subr.bf16.mxu0 0
        %3813 = vmatpush1.bf16.msra.mxu0 %v3753
        %3814 = vmatprep.subr.bf16.mxu0 0
        %3815 = vmatpush1.bf16.msra.mxu0 %v3754
        %3816 = vmatprep.subr.bf16.mxu0 0
        %3817 = vmatpush1.bf16.msra.mxu0 %v3755
        %3818 = vmatprep.subr.bf16.mxu0 0
        %3819 = vmatpush1.bf16.msra.mxu0 %v3756
        %3820 = vmatprep.subr.bf16.mxu0 0
        %3821 = vmatpush1.bf16.msra.mxu0 %v3757
        %3822 = vmatprep.mubr.bf16.mxu0 %v2872
        %3823 = vmatmul.mubr.bf16.gmra.mrb[0].mxu0 %v2860
        %v3824 = vpop.f32.mrb[0].mxu0
        %v3825 = vadd.f32 %v3520, %v3824
        %v3826 = vpop.f32.mrb[0].mxu0
        %v3827 = vpop.f32.mrb[0].mxu0
        %v3828 = vadd.f32 %v3523, %v3827
        %v3829 = vpop.f32.mrb[0].mxu0
        %3830 = vmatprep.mubr.bf16.mxu0 %v2884
        %3831 = vmatmul.mubr.bf16.gmra.mrb[0].mxu0 %v2872
        %v3832 = vpop.f32.mrb[0].mxu0
        %v3833 = vadd.f32 %v3528, %v3832
        %v3834 = vpop.f32.mrb[0].mxu0
        %v3835 = vpop.f32.mrb[0].mxu0
        %v3836 = vadd.f32 %v3531, %v3835
        %v3837 = vpop.f32.mrb[0].mxu0
        %3838 = vmatprep.mubr.bf16.mxu0 %v2896
        %3839 = vmatmul.mubr.bf16.gmra.mrb[0].mxu0 %v2884
        %v3840 = vpop.f32.mrb[0].mxu0
        %v3841 = vadd.f32 %v3536, %v3840
        %v3842 = vpop.f32.mrb[0].mxu0
        %v3843 = vpop.f32.mrb[0].mxu0
        %v3844 = vadd.f32 %v3539, %v3843
        %v3845 = vpop.f32.mrb[0].mxu0
        %3846 = vmatprep.mubr.bf16.mxu0 %v2908
        %3847 = vmatmul.mubr.bf16.gmra.mrb[0].mxu0 %v2896
        %v3848 = vpop.f32.mrb[0].mxu0
        %v3849 = vadd.f32 %v3544, %v3848
        %v3850 = vpop.f32.mrb[0].mxu0
        %v3851 = vpop.f32.mrb[0].mxu0
        %v3852 = vadd.f32 %v3547, %v3851
        %v3853 = vpop.f32.mrb[0].mxu0
        %3854 = vmatprep.mubr.bf16.mxu0 %v2920
        %3855 = vmatmul.mubr.bf16.gmra.mrb[0].mxu0 %v2908
        %v3856 = vpop.f32.mrb[0].mxu0
        %v3857 = vadd.f32 %v3552, %v3856
        %v3858 = vpop.f32.mrb[0].mxu0
        %v3859 = vpop.f32.mrb[0].mxu0
        %v3860 = vadd.f32 %v3555, %v3859
        %v3861 = vpop.f32.mrb[0].mxu0
        %3862 = vmatprep.mubr.bf16.mxu0 %v2932
        %3863 = vmatmul.mubr.bf16.gmra.mrb[0].mxu0 %v2920
        %v3864 = vpop.f32.mrb[0].mxu0
        %v3865 = vadd.f32 %v3560, %v3864
        %v3866 = vpop.f32.mrb[0].mxu0
        %v3867 = vpop.f32.mrb[0].mxu0
        %v3868 = vadd.f32 %v3563, %v3867
        %v3869 = vpop.f32.mrb[0].mxu0
        %3870 = vmatprep.mubr.bf16.mxu0 %v2944
        %3871 = vmatmul.mubr.bf16.gmra.mrb[0].mxu0 %v2932
        %v3872 = vpop.f32.mrb[0].mxu0
        %v3873 = vadd.f32 %v3568, %v3872
        %v3874 = vpop.f32.mrb[0].mxu0
        %v3875 = vpop.f32.mrb[0].mxu0
        %v3876 = vadd.f32 %v3571, %v3875
        %v3877 = vpop.f32.mrb[0].mxu0
        %3878 = vmatprep.mubr.bf16.mxu0 %v2956
        %3879 = vmatmul.mubr.bf16.gmra.mrb[0].mxu0 %v2944
        %v3880 = vpop.f32.mrb[0].mxu0
        %v3881 = vadd.f32 %v3576, %v3880
        %v3882 = vpop.f32.mrb[0].mxu0
        %v3883 = vpop.f32.mrb[0].mxu0
        %v3884 = vadd.f32 %v3579, %v3883
        %v3885 = vpop.f32.mrb[0].mxu0
        %3886 = vmatprep.mubr.bf16.mxu0 %v2968
        %3887 = vmatmul.mubr.bf16.gmra.mrb[0].mxu0 %v2956
        %v3888 = vpop.f32.mrb[0].mxu0
        %v3889 = vadd.f32 %v3584, %v3888
        %v3890 = vpop.f32.mrb[0].mxu0
        %v3891 = vpop.f32.mrb[0].mxu0
        %v3892 = vadd.f32 %v3587, %v3891
        %v3893 = vpop.f32.mrb[0].mxu0
        %3894 = vmatprep.mubr.bf16.mxu0 %v2980
        %3895 = vmatmul.mubr.bf16.gmra.mrb[0].mxu0 %v2968
        %v3896 = vpop.f32.mrb[0].mxu0
        %v3897 = vadd.f32 %v3592, %v3896
        %v3898 = vpop.f32.mrb[0].mxu0
        %v3899 = vpop.f32.mrb[0].mxu0
        %v3900 = vadd.f32 %v3595, %v3899
        %v3901 = vpop.f32.mrb[0].mxu0
        %3902 = vmatprep.mubr.bf16.mxu0 %v2992
        %3903 = vmatmul.mubr.bf16.gmra.mrb[0].mxu0 %v2980
        %v3904 = vpop.f32.mrb[0].mxu0
        %v3905 = vadd.f32 %v3600, %v3904
        %v3906 = vpop.f32.mrb[0].mxu0
        %v3907 = vpop.f32.mrb[0].mxu0
        %v3908 = vadd.f32 %v3603, %v3907
        %v3909 = vpop.f32.mrb[0].mxu0
        %3910 = vmatprep.mubr.bf16.mxu0 %v3004
        %3911 = vmatmul.mubr.bf16.gmra.mrb[0].mxu0 %v2992
        %v3912 = vpop.f32.mrb[0].mxu0
        %v3913 = vadd.f32 %v3608, %v3912
        %v3914 = vpop.f32.mrb[0].mxu0
        %v3915 = vpop.f32.mrb[0].mxu0
        %v3916 = vadd.f32 %v3611, %v3915
        %v3917 = vpop.f32.mrb[0].mxu0
        %3918 = vmatprep.mubr.bf16.mxu0 %v3016
        %3919 = vmatmul.mubr.bf16.gmra.mrb[0].mxu0 %v3004
        %v3920 = vpop.f32.mrb[0].mxu0
        %v3921 = vadd.f32 %v3616, %v3920
        %v3922 = vpop.f32.mrb[0].mxu0
        %v3923 = vpop.f32.mrb[0].mxu0
        %v3924 = vadd.f32 %v3619, %v3923
        %v3925 = vpop.f32.mrb[0].mxu0
        %3926 = vmatprep.mubr.bf16.mxu0 %v3028
        %3927 = vmatmul.mubr.bf16.gmra.mrb[0].mxu0 %v3016
        %v3928 = vpop.f32.mrb[0].mxu0
        %v3929 = vadd.f32 %v3624, %v3928
        %v3930 = vpop.f32.mrb[0].mxu0
        %v3931 = vpop.f32.mrb[0].mxu0
        %v3932 = vadd.f32 %v3627, %v3931
        %v3933 = vpop.f32.mrb[0].mxu0
        %3934 = vmatprep.mubr.bf16.mxu0 %v3040
        %3935 = vmatmul.mubr.bf16.gmra.mrb[0].mxu0 %v3028
        %v3936 = vpop.f32.mrb[0].mxu0
        %v3937 = vadd.f32 %v3632, %v3936
        %v3938 = vpop.f32.mrb[0].mxu0
        %v3939 = vpop.f32.mrb[0].mxu0
        %v3940 = vadd.f32 %v3635, %v3939
        %v3941 = vpop.f32.mrb[0].mxu0
        %3942 = vmatprep.mubr.bf16.mxu0 %v3052
        %3943 = vmatmul.mubr.bf16.gmra.mrb[0].mxu0 %v3040
        %v3944 = vpop.f32.mrb[0].mxu0
        %v3945 = vadd.f32 %v3640, %v3944
        %v3946 = vpop.f32.mrb[0].mxu0
        %v3947 = vpop.f32.mrb[0].mxu0
        %v3948 = vadd.f32 %v3643, %v3947
        %v3949 = vpop.f32.mrb[0].mxu0
        %3950 = vdwg.mxu0
        %3951 = vmatprep.subr.bf16.mxu0 0
        %3952 = vmatpush1.bf16.msra.mxu0 %v3758
        %3953 = vmatprep.subr.bf16.mxu0 0
        %3954 = vmatpush1.bf16.msra.mxu0 %v3759
        %3955 = vmatprep.subr.bf16.mxu0 0
        %3956 = vmatpush1.bf16.msra.mxu0 %v3760
        %3957 = vmatprep.subr.bf16.mxu0 0
        %3958 = vmatpush1.bf16.msra.mxu0 %v3761
        %3959 = vmatprep.subr.bf16.mxu0 0
        %3960 = vmatpush1.bf16.msra.mxu0 %v3762
        %3961 = vmatprep.subr.bf16.mxu0 0
        %3962 = vmatpush1.bf16.msra.mxu0 %v3763
        %3963 = vmatprep.subr.bf16.mxu0 0
        %3964 = vmatpush1.bf16.msra.mxu0 %v3764
        %3965 = vmatprep.subr.bf16.mxu0 0
        %3966 = vmatpush1.bf16.msra.mxu0 %v3765
        %3967 = vmatprep.subr.bf16.mxu0 0
        %3968 = vmatpush1.bf16.msra.mxu0 0
        %3969 = vmatprep.subr.bf16.mxu0 0
        %3970 = vmatpush1.bf16.msra.mxu0 0
        %3971 = vmatprep.subr.bf16.mxu0 0
        %3972 = vmatpush1.bf16.msra.mxu0 0
        %3973 = vmatprep.subr.bf16.mxu0 0
        %3974 = vmatpush1.bf16.msra.mxu0 0
        %3975 = vmatprep.subr.bf16.mxu0 0
        %3976 = vmatpush1.bf16.msra.mxu0 0
        %3977 = vmatprep.subr.bf16.mxu0 0
        %3978 = vmatpush1.bf16.msra.mxu0 0
        %3979 = vmatprep.subr.bf16.mxu0 0
        %3980 = vmatpush1.bf16.msra.mxu0 0
        %3981 = vmatprep.subr.bf16.mxu0 0
        %3982 = vmatpush1.bf16.msra.mxu0 0
        %3983 = vmatprep.mubr.bf16.mxu0 0
        %3984 = vmatmul.mubr.bf16.gmra.mrb[0].mxu0 %v2884
        %v3985 = vpop.f32.mrb[0].mxu0
        %v3986 = vadd.f32 %v3825, %v3985
        %v3987 = vpop.f32.mrb[0].mxu0
        %v3988 = vpop.f32.mrb[0].mxu0
        %v3989 = vadd.f32 %v3828, %v3988
        %v3990 = vpop.f32.mrb[0].mxu0
        %3991 = vmatprep.mubr.bf16.mxu0 0
        %3992 = vmatmul.mubr.bf16.gmra.mrb[0].mxu0 %v2896
        %v3993 = vpop.f32.mrb[0].mxu0
        %v3994 = vadd.f32 %v3833, %v3993
        %v3995 = vpop.f32.mrb[0].mxu0
        %v3996 = vpop.f32.mrb[0].mxu0
        %v3997 = vadd.f32 %v3836, %v3996
        %v3998 = vpop.f32.mrb[0].mxu0
        %3999 = vmatprep.mubr.bf16.mxu0 0
        %4000 = vmatmul.mubr.bf16.gmra.mrb[0].mxu0 %v2908
        %v4001 = vpop.f32.mrb[0].mxu0
        %v4002 = vadd.f32 %v3841, %v4001
        %v4003 = vpop.f32.mrb[0].mxu0
        %v4004 = vpop.f32.mrb[0].mxu0
        %v4005 = vadd.f32 %v3844, %v4004
        %v4006 = vpop.f32.mrb[0].mxu0
        %4007 = vmatprep.mubr.bf16.mxu0 0
        %4008 = vmatmul.mubr.bf16.gmra.mrb[0].mxu0 %v2920
        %v4009 = vpop.f32.mrb[0].mxu0
        %v4010 = vadd.f32 %v3849, %v4009
        %v4011 = vpop.f32.mrb[0].mxu0
        %v4012 = vpop.f32.mrb[0].mxu0
        %v4013 = vadd.f32 %v3852, %v4012
        %v4014 = vpop.f32.mrb[0].mxu0
        %4015 = vmatprep.mubr.bf16.mxu0 0
        %4016 = vmatmul.mubr.bf16.gmra.mrb[0].mxu0 %v2932
        %v4017 = vpop.f32.mrb[0].mxu0
        %v4018 = vadd.f32 %v3857, %v4017
        %v4019 = vpop.f32.mrb[0].mxu0
        %v4020 = vpop.f32.mrb[0].mxu0
        %v4021 = vadd.f32 %v3860, %v4020
        %v4022 = vpop.f32.mrb[0].mxu0
        %4023 = vmatprep.mubr.bf16.mxu0 0
        %4024 = vmatmul.mubr.bf16.gmra.mrb[0].mxu0 %v2944
        %v4025 = vpop.f32.mrb[0].mxu0
        %v4026 = vadd.f32 %v3865, %v4025
        %v4027 = vpop.f32.mrb[0].mxu0
        %v4028 = vpop.f32.mrb[0].mxu0
        %v4029 = vadd.f32 %v3868, %v4028
        %v4030 = vpop.f32.mrb[0].mxu0
        %4031 = vmatprep.mubr.bf16.mxu0 0
        %4032 = vmatmul.mubr.bf16.gmra.mrb[0].mxu0 %v2956
        %v4033 = vpop.f32.mrb[0].mxu0
        %v4034 = vadd.f32 %v3873, %v4033
        %v4035 = vpop.f32.mrb[0].mxu0
        %v4036 = vpop.f32.mrb[0].mxu0
        %v4037 = vadd.f32 %v3876, %v4036
        %v4038 = vpop.f32.mrb[0].mxu0
        %4039 = vmatprep.mubr.bf16.mxu0 0
        %4040 = vmatmul.mubr.bf16.gmra.mrb[0].mxu0 %v2968
        %v4041 = vpop.f32.mrb[0].mxu0
        %v4042 = vadd.f32 %v3881, %v4041
        %v4043 = vpop.f32.mrb[0].mxu0
        %v4044 = vpop.f32.mrb[0].mxu0
        %v4045 = vadd.f32 %v3884, %v4044
        %v4046 = vpop.f32.mrb[0].mxu0
        %4047 = vmatprep.mubr.bf16.mxu0 0
        %4048 = vmatmul.mubr.bf16.gmra.mrb[0].mxu0 %v2980
        %v4049 = vpop.f32.mrb[0].mxu0
        %v4050 = vadd.f32 %v3889, %v4049
        %v4051 = vpop.f32.mrb[0].mxu0
        %v4052 = vpop.f32.mrb[0].mxu0
        %v4053 = vadd.f32 %v3892, %v4052
        %v4054 = vpop.f32.mrb[0].mxu0
        %4055 = vmatprep.mubr.bf16.mxu0 0
        %4056 = vmatmul.mubr.bf16.gmra.mrb[0].mxu0 %v2992
        %v4057 = vpop.f32.mrb[0].mxu0
        %v4058 = vadd.f32 %v3897, %v4057
        %v4059 = vpop.f32.mrb[0].mxu0
        %v4060 = vpop.f32.mrb[0].mxu0
        %v4061 = vadd.f32 %v3900, %v4060
        %v4062 = vpop.f32.mrb[0].mxu0
        %4063 = vmatprep.mubr.bf16.mxu0 0
        %4064 = vmatmul.mubr.bf16.gmra.mrb[0].mxu0 %v3004
        %v4065 = vpop.f32.mrb[0].mxu0
        %v4066 = vadd.f32 %v3905, %v4065
        %v4067 = vpop.f32.mrb[0].mxu0
        %v4068 = vpop.f32.mrb[0].mxu0
        %v4069 = vadd.f32 %v3908, %v4068
        %v4070 = vpop.f32.mrb[0].mxu0
        %4071 = vmatprep.mubr.bf16.mxu0 0
        %4072 = vmatmul.mubr.bf16.gmra.mrb[0].mxu0 %v3016
        %v4073 = vpop.f32.mrb[0].mxu0
        %v4074 = vadd.f32 %v3913, %v4073
        %v4075 = vpop.f32.mrb[0].mxu0
        %v4076 = vpop.f32.mrb[0].mxu0
        %v4077 = vadd.f32 %v3916, %v4076
        %v4078 = vpop.f32.mrb[0].mxu0
        %4079 = vmatprep.mubr.bf16.mxu0 0
        %4080 = vmatmul.mubr.bf16.gmra.mrb[0].mxu0 %v3028
        %v4081 = vpop.f32.mrb[0].mxu0
        %v4082 = vadd.f32 %v3921, %v4081
        %v4083 = vpop.f32.mrb[0].mxu0
        %v4084 = vpop.f32.mrb[0].mxu0
        %v4085 = vadd.f32 %v3924, %v4084
        %v4086 = vpop.f32.mrb[0].mxu0
        %4087 = vmatprep.mubr.bf16.mxu0 0
        %4088 = vmatmul.mubr.bf16.gmra.mrb[0].mxu0 %v3040
        %v4089 = vpop.f32.mrb[0].mxu0
        %v4090 = vadd.f32 %v3929, %v4089
        %v4091 = vpop.f32.mrb[0].mxu0
        %v4092 = vpop.f32.mrb[0].mxu0
        %v4093 = vadd.f32 %v3932, %v4092
        %v4094 = vpop.f32.mrb[0].mxu0
        %4095 = vmatprep.mubr.bf16.mxu0 0
        %4096 = vmatmul.mubr.bf16.gmra.mrb[0].mxu0 %v3052
        %v4097 = vpop.f32.mrb[0].mxu0
        %v4098 = vadd.f32 %v3937, %v4097
        %v4099 = vpop.f32.mrb[0].mxu0
        %v4100 = vpop.f32.mrb[0].mxu0
        %v4101 = vadd.f32 %v3940, %v4100
        %v4102 = vpop.f32.mrb[0].mxu0
        %4103 = vmatprep.mubr.bf16.mxu0 0
        %4104 = vmatmul.mubr.bf16.gmra.mrb[0].mxu0 %v3064
        %v4105 = vpop.f32.mrb[0].mxu0
        %v4106 = vadd.f32 %v3945, %v4105
        %v4107 = vpop.f32.mrb[0].mxu0
        %v4108 = vpop.f32.mrb[0].mxu0
        %v4109 = vadd.f32 %v3948, %v4108
        %v4110 = vpop.f32.mrb[0].mxu0
        %4111 = vdwg.mxu0
        %v4112 = vld [vmem:[#allocation3 + $0x8] sm:$0xff]
        %v4113 = vld [vmem:[#allocation3 + $0x10] sm:$0x1]
        %v4114 = vld [vmem:[#allocation3 + $0x20] sm:$0xff]
        %v4115 = vld [vmem:[#allocation3 + $0x28] sm:$0x1]
        %v4116 = vld [vmem:[#allocation3 + $0x38] sm:$0xff]
        %v4117 = vld [vmem:[#allocation3 + $0x40] sm:$0x1]
        %v4118 = vld [vmem:[#allocation3 + $0x50] sm:$0xff]
        %v4119 = vld [vmem:[#allocation3 + $0x58] sm:$0x1]
        %v4120 = vld [vmem:[#allocation3 + $0x68] sm:$0xff]
        %v4121 = vld [vmem:[#allocation3 + $0x70] sm:$0x1]
        %v4122 = vld [vmem:[#allocation3 + $0x80] sm:$0xff]
        %v4123 = vld [vmem:[#allocation3 + $0x88] sm:$0x1]
        %v4124 = vld [vmem:[#allocation3 + $0x98] sm:$0xff]
        %v4125 = vld [vmem:[#allocation3 + $0xa0] sm:$0x1]
        %v4126 = vld [vmem:[#allocation3 + $0xb0] sm:$0xff]
        %v4127 = vld [vmem:[#allocation3 + $0xb8] sm:$0x1]
        %v4128 = vld [vmem:[#allocation3 + $0xc8] sm:$0xff]
        %v4129 = vld [vmem:[#allocation3 + $0xd0] sm:$0x1]
        %v4130 = vld [vmem:[#allocation3 + $0xe0] sm:$0xff]
        %v4131 = vld [vmem:[#allocation3 + $0xe8] sm:$0x1]
        %v4132 = vld [vmem:[#allocation3 + $0xf8] sm:$0xff]
        %v4133 = vld [vmem:[#allocation3 + $0x100] sm:$0x1]
        %v4134 = vld [vmem:[#allocation3 + $0x110] sm:$0xff]
        %v4135 = vld [vmem:[#allocation3 + $0x118] sm:$0x1]
        %v4136 = vld [vmem:[#allocation3 + $0x128] sm:$0xff]
        %v4137 = vld [vmem:[#allocation3 + $0x130] sm:$0x1]
        %v4138 = vld [vmem:[#allocation3 + $0x140] sm:$0xff]
        %v4139 = vld [vmem:[#allocation3 + $0x148] sm:$0x1]
        %v4140 = vld [vmem:[#allocation3 + $0x158] sm:$0xff]
        %v4141 = vld [vmem:[#allocation3 + $0x160] sm:$0x1]
        %v4142 = vld [vmem:[#allocation3 + $0x170] sm:$0xff]
        %v4143 = vld [vmem:[#allocation3 + $0x178] sm:$0x1]
        %v4144 = vld [vmem:[#allocation3 + $0x188] sm:$0xff]
        %v4145 = vld [vmem:[#allocation3 + $0x190] sm:$0x1]
        %v4146 = vld [vmem:[#allocation3 + $0x1a0] sm:$0xff]
        %v4147 = vld [vmem:[#allocation3 + $0x1a8] sm:$0x1]
        %v4149 = vshrl.u32 %v4112, 16
        %v4151 = vshll.u32 %v4112, 16
        %v4153 = vrot.slane %v4151, 1
        %v4154 = vor.u32 %v4149, %v4153
        %v4156 = vshll.u32 %v4113, 16
        %v4158 = vrot.slane %v4156, 1
        %v4159 = vsel %vm1928, %v4154, %v4158
        %v4161 = vshrl.u32 %v4114, 16
        %v4163 = vshll.u32 %v4114, 16
        %v4165 = vrot.slane %v4163, 1
        %v4166 = vor.u32 %v4161, %v4165
        %v4168 = vshll.u32 %v4115, 16
        %v4170 = vrot.slane %v4168, 1
        %v4171 = vsel %vm1928, %v4166, %v4170
        %v4173 = vshrl.u32 %v4116, 16
        %v4175 = vshll.u32 %v4116, 16
        %v4177 = vrot.slane %v4175, 1
        %v4178 = vor.u32 %v4173, %v4177
        %v4180 = vshll.u32 %v4117, 16
        %v4182 = vrot.slane %v4180, 1
        %v4183 = vsel %vm1928, %v4178, %v4182
        %v4185 = vshrl.u32 %v4118, 16
        %v4187 = vshll.u32 %v4118, 16
        %v4189 = vrot.slane %v4187, 1
        %v4190 = vor.u32 %v4185, %v4189
        %v4192 = vshll.u32 %v4119, 16
        %v4194 = vrot.slane %v4192, 1
        %v4195 = vsel %vm1928, %v4190, %v4194
        %v4197 = vshrl.u32 %v4120, 16
        %v4199 = vshll.u32 %v4120, 16
        %v4201 = vrot.slane %v4199, 1
        %v4202 = vor.u32 %v4197, %v4201
        %v4204 = vshll.u32 %v4121, 16
        %v4206 = vrot.slane %v4204, 1
        %v4207 = vsel %vm1928, %v4202, %v4206
        %v4209 = vshrl.u32 %v4122, 16
        %v4211 = vshll.u32 %v4122, 16
        %v4213 = vrot.slane %v4211, 1
        %v4214 = vor.u32 %v4209, %v4213
        %v4216 = vshll.u32 %v4123, 16
        %v4218 = vrot.slane %v4216, 1
        %v4219 = vsel %vm1928, %v4214, %v4218
        %v4221 = vshrl.u32 %v4124, 16
        %v4223 = vshll.u32 %v4124, 16
        %v4225 = vrot.slane %v4223, 1
        %v4226 = vor.u32 %v4221, %v4225
        %v4228 = vshll.u32 %v4125, 16
        %v4230 = vrot.slane %v4228, 1
        %v4231 = vsel %vm1928, %v4226, %v4230
        %v4233 = vshrl.u32 %v4126, 16
        %v4235 = vshll.u32 %v4126, 16
        %v4237 = vrot.slane %v4235, 1
        %v4238 = vor.u32 %v4233, %v4237
        %v4240 = vshll.u32 %v4127, 16
        %v4242 = vrot.slane %v4240, 1
        %v4243 = vsel %vm1928, %v4238, %v4242
        %v4245 = vshrl.u32 %v4128, 16
        %v4247 = vshll.u32 %v4128, 16
        %v4249 = vrot.slane %v4247, 1
        %v4250 = vor.u32 %v4245, %v4249
        %v4252 = vshll.u32 %v4129, 16
        %v4254 = vrot.slane %v4252, 1
        %v4255 = vsel %vm1928, %v4250, %v4254
        %v4257 = vshrl.u32 %v4130, 16
        %v4259 = vshll.u32 %v4130, 16
        %v4261 = vrot.slane %v4259, 1
        %v4262 = vor.u32 %v4257, %v4261
        %v4264 = vshll.u32 %v4131, 16
        %v4266 = vrot.slane %v4264, 1
        %v4267 = vsel %vm1928, %v4262, %v4266
        %v4269 = vshrl.u32 %v4132, 16
        %v4271 = vshll.u32 %v4132, 16
        %v4273 = vrot.slane %v4271, 1
        %v4274 = vor.u32 %v4269, %v4273
        %v4276 = vshll.u32 %v4133, 16
        %v4278 = vrot.slane %v4276, 1
        %v4279 = vsel %vm1928, %v4274, %v4278
        %v4281 = vshrl.u32 %v4134, 16
        %v4283 = vshll.u32 %v4134, 16
        %v4285 = vrot.slane %v4283, 1
        %v4286 = vor.u32 %v4281, %v4285
        %v4288 = vshll.u32 %v4135, 16
        %v4290 = vrot.slane %v4288, 1
        %v4291 = vsel %vm1928, %v4286, %v4290
        %v4293 = vshrl.u32 %v4136, 16
        %v4295 = vshll.u32 %v4136, 16
        %v4297 = vrot.slane %v4295, 1
        %v4298 = vor.u32 %v4293, %v4297
        %v4300 = vshll.u32 %v4137, 16
        %v4302 = vrot.slane %v4300, 1
        %v4303 = vsel %vm1928, %v4298, %v4302
        %v4305 = vshrl.u32 %v4138, 16
        %v4307 = vshll.u32 %v4138, 16
        %v4309 = vrot.slane %v4307, 1
        %v4310 = vor.u32 %v4305, %v4309
        %v4312 = vshll.u32 %v4139, 16
        %v4314 = vrot.slane %v4312, 1
        %v4315 = vsel %vm1928, %v4310, %v4314
        %v4317 = vshrl.u32 %v4140, 16
        %v4319 = vshll.u32 %v4140, 16
        %v4321 = vrot.slane %v4319, 1
        %v4322 = vor.u32 %v4317, %v4321
        %v4324 = vshll.u32 %v4141, 16
        %v4326 = vrot.slane %v4324, 1
        %v4327 = vsel %vm1928, %v4322, %v4326
        %v4329 = vshrl.u32 %v4142, 16
        %v4331 = vshll.u32 %v4142, 16
        %v4333 = vrot.slane %v4331, 1
        %v4334 = vor.u32 %v4329, %v4333
        %v4336 = vshll.u32 %v4143, 16
        %v4338 = vrot.slane %v4336, 1
        %v4339 = vsel %vm1928, %v4334, %v4338
        %v4341 = vshrl.u32 %v4144, 16
        %v4343 = vshll.u32 %v4144, 16
        %v4345 = vrot.slane %v4343, 1
        %v4346 = vor.u32 %v4341, %v4345
        %v4348 = vshll.u32 %v4145, 16
        %v4350 = vrot.slane %v4348, 1
        %v4351 = vsel %vm1928, %v4346, %v4350
        %v4353 = vshrl.u32 %v4146, 16
        %v4355 = vshll.u32 %v4146, 16
        %v4357 = vrot.slane %v4355, 1
        %v4358 = vor.u32 %v4353, %v4357
        %v4360 = vshll.u32 %v4147, 16
        %v4362 = vrot.slane %v4360, 1
        %v4363 = vsel %vm1928, %v4358, %v4362
        %s4382 = scalar_lea.vmem [#allocation11], 384
        %v4383 = vld [vmem:[%s4382] sm:$0xf]
        %v4384 = vld [vmem:[%s4382 + $0x4] sm:$0xf]
        %v4385 = vld [vmem:[%s4382 + $0x8] sm:$0xf]
        %v4386 = vld [vmem:[%s4382 + $0xc] sm:$0xf]
        %v4387 = vld [vmem:[%s4382 + $0x10] sm:$0xf]
        %v4388 = vld [vmem:[%s4382 + $0x14] sm:$0xf]
        %v4389 = vld [vmem:[%s4382 + $0x18] sm:$0xf]
        %v4390 = vld [vmem:[%s4382 + $0x1c] sm:$0xf]
        %v4391 = vld [vmem:[%s4382 + $0x20] sm:$0xf]
        %v4392 = vld [vmem:[%s4382 + $0x24] sm:$0xf]
        %v4393 = vld [vmem:[%s4382 + $0x28] sm:$0xf]
        %v4394 = vld [vmem:[%s4382 + $0x2c] sm:$0xf]
        %v4395 = vld [vmem:[%s4382 + $0x30] sm:$0xf]
        %v4396 = vld [vmem:[%s4382 + $0x34] sm:$0xf]
        %v4397 = vld [vmem:[%s4382 + $0x38] sm:$0xf]
        %v4398 = vld [vmem:[%s4382 + $0x3c] sm:$0xf]
        %v4399 = vld [vmem:[%s4382 + $0x40] sm:$0xf]
        %v4400 = vld [vmem:[%s4382 + $0x44] sm:$0xf]
        %v4401 = vld [vmem:[%s4382 + $0x48] sm:$0xf]
        %v4402 = vld [vmem:[%s4382 + $0x4c] sm:$0xf]
        %v4403 = vld [vmem:[%s4382 + $0x50] sm:$0xf]
        %v4404 = vld [vmem:[%s4382 + $0x54] sm:$0xf]
        %v4405 = vld [vmem:[%s4382 + $0x58] sm:$0xf]
        %v4406 = vld [vmem:[%s4382 + $0x5c] sm:$0xf]
        %v4407 = vld [vmem:[%s4382 + $0x60] sm:$0xf]
        %v4408 = vld [vmem:[%s4382 + $0x64] sm:$0xf]
        %v4409 = vld [vmem:[%s4382 + $0x68] sm:$0xf]
        %v4410 = vld [vmem:[%s4382 + $0x6c] sm:$0xf]
        %v4411 = vld [vmem:[%s4382 + $0x70] sm:$0xf]
        %v4412 = vld [vmem:[%s4382 + $0x74] sm:$0xf]
        %v4413 = vld [vmem:[%s4382 + $0x78] sm:$0xf]
        %v4414 = vld [vmem:[%s4382 + $0x7c] sm:$0xf]
        %v4415 = vld [vmem:[%s4382 + $0x80] sm:$0xf]
        %v4416 = vld [vmem:[%s4382 + $0x84] sm:$0xf]
        %v4417 = vld [vmem:[%s4382 + $0x88] sm:$0xf]
        %v4418 = vld [vmem:[%s4382 + $0x8c] sm:$0xf]
        %v4419 = vld [vmem:[%s4382 + $0x90] sm:$0xf]
        %v4420 = vld [vmem:[%s4382 + $0x94] sm:$0xf]
        %v4421 = vld [vmem:[%s4382 + $0x98] sm:$0xf]
        %v4422 = vld [vmem:[%s4382 + $0x9c] sm:$0xf]
        %v4423 = vld [vmem:[%s4382 + $0xa0] sm:$0xf]
        %v4424 = vld [vmem:[%s4382 + $0xa4] sm:$0xf]
        %v4425 = vld [vmem:[%s4382 + $0xa8] sm:$0xf]
        %v4426 = vld [vmem:[%s4382 + $0xac] sm:$0xf]
        %v4427 = vld [vmem:[%s4382 + $0xb0] sm:$0xf]
        %v4428 = vld [vmem:[%s4382 + $0xb4] sm:$0xf]
        %v4429 = vld [vmem:[%s4382 + $0xb8] sm:$0xf]
        %v4430 = vld [vmem:[%s4382 + $0xbc] sm:$0xf]
        %v4479 = vunpack.c.l.b16 %v4383
        %v4480 = vunpack.c.l.b16 %v4384
        %v4481 = vunpack.c.l.b16 %v4385
        %v4482 = vunpack.c.l.b16 %v4386
        %v4483 = vunpack.c.l.b16 %v4387
        %v4484 = vunpack.c.l.b16 %v4388
        %v4485 = vunpack.c.l.b16 %v4389
        %v4486 = vunpack.c.l.b16 %v4390
        %v4487 = vunpack.c.l.b16 %v4391
        %v4488 = vunpack.c.l.b16 %v4392
        %v4489 = vunpack.c.l.b16 %v4393
        %v4490 = vunpack.c.l.b16 %v4394
        %v4491 = vunpack.c.l.b16 %v4395
        %v4492 = vunpack.c.l.b16 %v4396
        %v4493 = vunpack.c.l.b16 %v4397
        %v4494 = vunpack.c.l.b16 %v4398
        %v4495 = vunpack.c.l.b16 %v4399
        %v4496 = vunpack.c.l.b16 %v4400
        %v4497 = vunpack.c.l.b16 %v4401
        %v4498 = vunpack.c.l.b16 %v4402
        %v4499 = vunpack.c.l.b16 %v4403
        %v4500 = vunpack.c.l.b16 %v4404
        %v4501 = vunpack.c.l.b16 %v4405
        %v4502 = vunpack.c.l.b16 %v4406
        %v4503 = vunpack.c.l.b16 %v4407
        %v4504 = vunpack.c.l.b16 %v4408
        %v4505 = vunpack.c.l.b16 %v4409
        %v4506 = vunpack.c.l.b16 %v4410
        %v4507 = vunpack.c.l.b16 %v4411
        %v4508 = vunpack.c.l.b16 %v4412
        %v4509 = vunpack.c.l.b16 %v4413
        %v4510 = vunpack.c.l.b16 %v4414
        %v4511 = vunpack.c.l.b16 %v4415
        %v4512 = vunpack.c.l.b16 %v4416
        %v4513 = vunpack.c.l.b16 %v4417
        %v4514 = vunpack.c.l.b16 %v4418
        %v4515 = vunpack.c.l.b16 %v4419
        %v4516 = vunpack.c.l.b16 %v4420
        %v4517 = vunpack.c.l.b16 %v4421
        %v4518 = vunpack.c.l.b16 %v4422
        %v4519 = vunpack.c.l.b16 %v4423
        %v4520 = vunpack.c.l.b16 %v4424
        %v4521 = vunpack.c.l.b16 %v4425
        %v4522 = vunpack.c.l.b16 %v4426
        %v4523 = vunpack.c.l.b16 %v4427
        %v4524 = vunpack.c.l.b16 %v4428
        %v4525 = vunpack.c.l.b16 %v4429
        %v4526 = vunpack.c.l.b16 %v4430
        %v4527 = vpack.c.b16 %v4480, %v4479
        %v4528 = vpack.c.b16 %v4482, %v4481
        %v4529 = vpack.c.b16 %v4484, %v4483
        %v4530 = vpack.c.b16 %v4486, %v4485
        %v4531 = vpack.c.b16 %v4488, %v4487
        %v4532 = vpack.c.b16 %v4490, %v4489
        %v4533 = vpack.c.b16 %v4492, %v4491
        %v4534 = vpack.c.b16 %v4494, %v4493
        %v4535 = vpack.c.b16 %v4496, %v4495
        %v4536 = vpack.c.b16 %v4498, %v4497
        %v4537 = vpack.c.b16 %v4500, %v4499
        %v4538 = vpack.c.b16 %v4502, %v4501
        %v4539 = vpack.c.b16 %v4504, %v4503
        %v4540 = vpack.c.b16 %v4506, %v4505
        %v4541 = vpack.c.b16 %v4508, %v4507
        %v4542 = vpack.c.b16 %v4510, %v4509
        %v4543 = vpack.c.b16 %v4512, %v4511
        %v4544 = vpack.c.b16 %v4514, %v4513
        %v4545 = vpack.c.b16 %v4516, %v4515
        %v4546 = vpack.c.b16 %v4518, %v4517
        %v4547 = vpack.c.b16 %v4520, %v4519
        %v4548 = vpack.c.b16 %v4522, %v4521
        %v4549 = vpack.c.b16 %v4524, %v4523
        %v4550 = vpack.c.b16 %v4526, %v4525
        %4575 = vmatprep.subr.bf16.mxu0 0
        %4576 = vmatpush1.bf16.msra.mxu0 %v4527
        %4577 = vmatprep.subr.bf16.mxu0 0
        %4578 = vmatpush1.bf16.msra.mxu0 %v4528
        %4579 = vmatprep.subr.bf16.mxu0 0
        %4580 = vmatpush1.bf16.msra.mxu0 %v4529
        %4581 = vmatprep.subr.bf16.mxu0 0
        %4582 = vmatpush1.bf16.msra.mxu0 %v4530
        %4583 = vmatprep.subr.bf16.mxu0 0
        %4584 = vmatpush1.bf16.msra.mxu0 %v4531
        %4585 = vmatprep.subr.bf16.mxu0 0
        %4586 = vmatpush1.bf16.msra.mxu0 %v4532
        %4587 = vmatprep.subr.bf16.mxu0 0
        %4588 = vmatpush1.bf16.msra.mxu0 %v4533
        %4589 = vmatprep.subr.bf16.mxu0 0
        %4590 = vmatpush1.bf16.msra.mxu0 %v4534
        %4591 = vmatprep.subr.bf16.mxu0 0
        %4592 = vmatpush1.bf16.msra.mxu0 %v4535
        %4593 = vmatprep.subr.bf16.mxu0 0
        %4594 = vmatpush1.bf16.msra.mxu0 %v4536
        %4595 = vmatprep.subr.bf16.mxu0 0
        %4596 = vmatpush1.bf16.msra.mxu0 %v4537
        %4597 = vmatprep.subr.bf16.mxu0 0
        %4598 = vmatpush1.bf16.msra.mxu0 %v4538
        %4599 = vmatprep.subr.bf16.mxu0 0
        %4600 = vmatpush1.bf16.msra.mxu0 %v4539
        %4601 = vmatprep.subr.bf16.mxu0 0
        %4602 = vmatpush1.bf16.msra.mxu0 %v4540
        %4603 = vmatprep.subr.bf16.mxu0 0
        %4604 = vmatpush1.bf16.msra.mxu0 %v4541
        %4605 = vmatprep.subr.bf16.mxu0 0
        %4606 = vmatpush1.bf16.msra.mxu0 %v4542
        %4607 = vmatprep.mubr.bf16.mxu0 %v4171
        %4608 = vmatmul.mubr.bf16.gmra.mrb[0].mxu0 %v4159
        %v4609 = vpop.f32.mrb[0].mxu0
        %v4610 = vadd.f32 0.0, %v4609
        %v4611 = vpop.f32.mrb[0].mxu0
        %v4612 = vpop.f32.mrb[0].mxu0
        %v4613 = vadd.f32 0.0, %v4612
        %v4614 = vpop.f32.mrb[0].mxu0
        %4615 = vmatprep.mubr.bf16.mxu0 %v4183
        %4616 = vmatmul.mubr.bf16.gmra.mrb[0].mxu0 %v4171
        %v4617 = vpop.f32.mrb[0].mxu0
        %v4618 = vadd.f32 0.0, %v4617
        %v4619 = vpop.f32.mrb[0].mxu0
        %v4620 = vpop.f32.mrb[0].mxu0
        %v4621 = vadd.f32 0.0, %v4620
        %v4622 = vpop.f32.mrb[0].mxu0
        %4623 = vmatprep.mubr.bf16.mxu0 %v4195
        %4624 = vmatmul.mubr.bf16.gmra.mrb[0].mxu0 %v4183
        %v4625 = vpop.f32.mrb[0].mxu0
        %v4626 = vadd.f32 0.0, %v4625
        %v4627 = vpop.f32.mrb[0].mxu0
        %v4628 = vpop.f32.mrb[0].mxu0
        %v4629 = vadd.f32 0.0, %v4628
        %v4630 = vpop.f32.mrb[0].mxu0
        %4631 = vmatprep.mubr.bf16.mxu0 %v4207
        %4632 = vmatmul.mubr.bf16.gmra.mrb[0].mxu0 %v4195
        %v4633 = vpop.f32.mrb[0].mxu0
        %v4634 = vadd.f32 0.0, %v4633
        %v4635 = vpop.f32.mrb[0].mxu0
        %v4636 = vpop.f32.mrb[0].mxu0
        %v4637 = vadd.f32 0.0, %v4636
        %v4638 = vpop.f32.mrb[0].mxu0
        %4639 = vmatprep.mubr.bf16.mxu0 %v4219
        %4640 = vmatmul.mubr.bf16.gmra.mrb[0].mxu0 %v4207
        %v4641 = vpop.f32.mrb[0].mxu0
        %v4642 = vadd.f32 0.0, %v4641
        %v4643 = vpop.f32.mrb[0].mxu0
        %v4644 = vpop.f32.mrb[0].mxu0
        %v4645 = vadd.f32 0.0, %v4644
        %v4646 = vpop.f32.mrb[0].mxu0
        %4647 = vmatprep.mubr.bf16.mxu0 %v4231
        %4648 = vmatmul.mubr.bf16.gmra.mrb[0].mxu0 %v4219
        %v4649 = vpop.f32.mrb[0].mxu0
        %v4650 = vadd.f32 0.0, %v4649
        %v4651 = vpop.f32.mrb[0].mxu0
        %v4652 = vpop.f32.mrb[0].mxu0
        %v4653 = vadd.f32 0.0, %v4652
        %v4654 = vpop.f32.mrb[0].mxu0
        %4655 = vmatprep.mubr.bf16.mxu0 %v4243
        %4656 = vmatmul.mubr.bf16.gmra.mrb[0].mxu0 %v4231
        %v4657 = vpop.f32.mrb[0].mxu0
        %v4658 = vadd.f32 0.0, %v4657
        %v4659 = vpop.f32.mrb[0].mxu0
        %v4660 = vpop.f32.mrb[0].mxu0
        %v4661 = vadd.f32 0.0, %v4660
        %v4662 = vpop.f32.mrb[0].mxu0
        %4663 = vmatprep.mubr.bf16.mxu0 %v4255
        %4664 = vmatmul.mubr.bf16.gmra.mrb[0].mxu0 %v4243
        %v4665 = vpop.f32.mrb[0].mxu0
        %v4666 = vadd.f32 0.0, %v4665
        %v4667 = vpop.f32.mrb[0].mxu0
        %v4668 = vpop.f32.mrb[0].mxu0
        %v4669 = vadd.f32 0.0, %v4668
        %v4670 = vpop.f32.mrb[0].mxu0
        %4671 = vmatprep.mubr.bf16.mxu0 %v4267
        %4672 = vmatmul.mubr.bf16.gmra.mrb[0].mxu0 %v4255
        %v4673 = vpop.f32.mrb[0].mxu0
        %v4674 = vadd.f32 0.0, %v4673
        %v4675 = vpop.f32.mrb[0].mxu0
        %v4676 = vpop.f32.mrb[0].mxu0
        %v4677 = vadd.f32 0.0, %v4676
        %v4678 = vpop.f32.mrb[0].mxu0
        %4679 = vmatprep.mubr.bf16.mxu0 %v4279
        %4680 = vmatmul.mubr.bf16.gmra.mrb[0].mxu0 %v4267
        %v4681 = vpop.f32.mrb[0].mxu0
        %v4682 = vadd.f32 0.0, %v4681
        %v4683 = vpop.f32.mrb[0].mxu0
        %v4684 = vpop.f32.mrb[0].mxu0
        %v4685 = vadd.f32 0.0, %v4684
        %v4686 = vpop.f32.mrb[0].mxu0
        %4687 = vmatprep.mubr.bf16.mxu0 %v4291
        %4688 = vmatmul.mubr.bf16.gmra.mrb[0].mxu0 %v4279
        %v4689 = vpop.f32.mrb[0].mxu0
        %v4690 = vadd.f32 0.0, %v4689
        %v4691 = vpop.f32.mrb[0].mxu0
        %v4692 = vpop.f32.mrb[0].mxu0
        %v4693 = vadd.f32 0.0, %v4692
        %v4694 = vpop.f32.mrb[0].mxu0
        %4695 = vmatprep.mubr.bf16.mxu0 %v4303
        %4696 = vmatmul.mubr.bf16.gmra.mrb[0].mxu0 %v4291
        %v4697 = vpop.f32.mrb[0].mxu0
        %v4698 = vadd.f32 0.0, %v4697
        %v4699 = vpop.f32.mrb[0].mxu0
        %v4700 = vpop.f32.mrb[0].mxu0
        %v4701 = vadd.f32 0.0, %v4700
        %v4702 = vpop.f32.mrb[0].mxu0
        %4703 = vmatprep.mubr.bf16.mxu0 %v4315
        %4704 = vmatmul.mubr.bf16.gmra.mrb[0].mxu0 %v4303
        %v4705 = vpop.f32.mrb[0].mxu0
        %v4706 = vadd.f32 0.0, %v4705
        %v4707 = vpop.f32.mrb[0].mxu0
        %v4708 = vpop.f32.mrb[0].mxu0
        %v4709 = vadd.f32 0.0, %v4708
        %v4710 = vpop.f32.mrb[0].mxu0
        %4711 = vmatprep.mubr.bf16.mxu0 %v4327
        %4712 = vmatmul.mubr.bf16.gmra.mrb[0].mxu0 %v4315
        %v4713 = vpop.f32.mrb[0].mxu0
        %v4714 = vadd.f32 0.0, %v4713
        %v4715 = vpop.f32.mrb[0].mxu0
        %v4716 = vpop.f32.mrb[0].mxu0
        %v4717 = vadd.f32 0.0, %v4716
        %v4718 = vpop.f32.mrb[0].mxu0
        %4719 = vmatprep.mubr.bf16.mxu0 %v4339
        %4720 = vmatmul.mubr.bf16.gmra.mrb[0].mxu0 %v4327
        %v4721 = vpop.f32.mrb[0].mxu0
        %v4722 = vadd.f32 0.0, %v4721
        %v4723 = vpop.f32.mrb[0].mxu0
        %v4724 = vpop.f32.mrb[0].mxu0
        %v4725 = vadd.f32 0.0, %v4724
        %v4726 = vpop.f32.mrb[0].mxu0
        %4727 = vmatprep.mubr.bf16.mxu0 %v4351
        %4728 = vmatmul.mubr.bf16.gmra.mrb[0].mxu0 %v4339
        %v4729 = vpop.f32.mrb[0].mxu0
        %v4730 = vadd.f32 0.0, %v4729
        %v4731 = vpop.f32.mrb[0].mxu0
        %v4732 = vpop.f32.mrb[0].mxu0
        %v4733 = vadd.f32 0.0, %v4732
        %v4734 = vpop.f32.mrb[0].mxu0
        %4735 = vdwg.mxu0
        %4736 = vmatprep.subr.bf16.mxu0 0
        %4737 = vmatpush1.bf16.msra.mxu0 %v4543
        %4738 = vmatprep.subr.bf16.mxu0 0
        %4739 = vmatpush1.bf16.msra.mxu0 %v4544
        %4740 = vmatprep.subr.bf16.mxu0 0
        %4741 = vmatpush1.bf16.msra.mxu0 %v4545
        %4742 = vmatprep.subr.bf16.mxu0 0
        %4743 = vmatpush1.bf16.msra.mxu0 %v4546
        %4744 = vmatprep.subr.bf16.mxu0 0
        %4745 = vmatpush1.bf16.msra.mxu0 %v4547
        %4746 = vmatprep.subr.bf16.mxu0 0
        %4747 = vmatpush1.bf16.msra.mxu0 %v4548
        %4748 = vmatprep.subr.bf16.mxu0 0
        %4749 = vmatpush1.bf16.msra.mxu0 %v4549
        %4750 = vmatprep.subr.bf16.mxu0 0
        %4751 = vmatpush1.bf16.msra.mxu0 %v4550
        %4752 = vmatprep.subr.bf16.mxu0 0
        %4753 = vmatpush1.bf16.msra.mxu0 0
        %4754 = vmatprep.subr.bf16.mxu0 0
        %4755 = vmatpush1.bf16.msra.mxu0 0
        %4756 = vmatprep.subr.bf16.mxu0 0
        %4757 = vmatpush1.bf16.msra.mxu0 0
        %4758 = vmatprep.subr.bf16.mxu0 0
        %4759 = vmatpush1.bf16.msra.mxu0 0
        %4760 = vmatprep.subr.bf16.mxu0 0
        %4761 = vmatpush1.bf16.msra.mxu0 0
        %4762 = vmatprep.subr.bf16.mxu0 0
        %4763 = vmatpush1.bf16.msra.mxu0 0
        %4764 = vmatprep.subr.bf16.mxu0 0
        %4765 = vmatpush1.bf16.msra.mxu0 0
        %4766 = vmatprep.subr.bf16.mxu0 0
        %4767 = vmatpush1.bf16.msra.mxu0 0
        %4768 = vmatprep.mubr.bf16.mxu0 0
        %4769 = vmatmul.mubr.bf16.gmra.mrb[0].mxu0 %v4183
        %v4770 = vpop.f32.mrb[0].mxu0
        %v4771 = vadd.f32 %v4610, %v4770
        %v4772 = vpop.f32.mrb[0].mxu0
        %v4773 = vpop.f32.mrb[0].mxu0
        %v4774 = vadd.f32 %v4613, %v4773
        %v4775 = vpop.f32.mrb[0].mxu0
        %4776 = vmatprep.mubr.bf16.mxu0 0
        %4777 = vmatmul.mubr.bf16.gmra.mrb[0].mxu0 %v4195
        %v4778 = vpop.f32.mrb[0].mxu0
        %v4779 = vadd.f32 %v4618, %v4778
        %v4780 = vpop.f32.mrb[0].mxu0
        %v4781 = vpop.f32.mrb[0].mxu0
        %v4782 = vadd.f32 %v4621, %v4781
        %v4783 = vpop.f32.mrb[0].mxu0
        %4784 = vmatprep.mubr.bf16.mxu0 0
        %4785 = vmatmul.mubr.bf16.gmra.mrb[0].mxu0 %v4207
        %v4786 = vpop.f32.mrb[0].mxu0
        %v4787 = vadd.f32 %v4626, %v4786
        %v4788 = vpop.f32.mrb[0].mxu0
        %v4789 = vpop.f32.mrb[0].mxu0
        %v4790 = vadd.f32 %v4629, %v4789
        %v4791 = vpop.f32.mrb[0].mxu0
        %4792 = vmatprep.mubr.bf16.mxu0 0
        %4793 = vmatmul.mubr.bf16.gmra.mrb[0].mxu0 %v4219
        %v4794 = vpop.f32.mrb[0].mxu0
        %v4795 = vadd.f32 %v4634, %v4794
        %v4796 = vpop.f32.mrb[0].mxu0
        %v4797 = vpop.f32.mrb[0].mxu0
        %v4798 = vadd.f32 %v4637, %v4797
        %v4799 = vpop.f32.mrb[0].mxu0
        %4800 = vmatprep.mubr.bf16.mxu0 0
        %4801 = vmatmul.mubr.bf16.gmra.mrb[0].mxu0 %v4231
        %v4802 = vpop.f32.mrb[0].mxu0
        %v4803 = vadd.f32 %v4642, %v4802
        %v4804 = vpop.f32.mrb[0].mxu0
        %v4805 = vpop.f32.mrb[0].mxu0
        %v4806 = vadd.f32 %v4645, %v4805
        %v4807 = vpop.f32.mrb[0].mxu0
        %4808 = vmatprep.mubr.bf16.mxu0 0
        %4809 = vmatmul.mubr.bf16.gmra.mrb[0].mxu0 %v4243
        %v4810 = vpop.f32.mrb[0].mxu0
        %v4811 = vadd.f32 %v4650, %v4810
        %v4812 = vpop.f32.mrb[0].mxu0
        %v4813 = vpop.f32.mrb[0].mxu0
        %v4814 = vadd.f32 %v4653, %v4813
        %v4815 = vpop.f32.mrb[0].mxu0
        %4816 = vmatprep.mubr.bf16.mxu0 0
        %4817 = vmatmul.mubr.bf16.gmra.mrb[0].mxu0 %v4255
        %v4818 = vpop.f32.mrb[0].mxu0
        %v4819 = vadd.f32 %v4658, %v4818
        %v4820 = vpop.f32.mrb[0].mxu0
        %v4821 = vpop.f32.mrb[0].mxu0
        %v4822 = vadd.f32 %v4661, %v4821
        %v4823 = vpop.f32.mrb[0].mxu0
        %4824 = vmatprep.mubr.bf16.mxu0 0
        %4825 = vmatmul.mubr.bf16.gmra.mrb[0].mxu0 %v4267
        %v4826 = vpop.f32.mrb[0].mxu0
        %v4827 = vadd.f32 %v4666, %v4826
        %v4828 = vpop.f32.mrb[0].mxu0
        %v4829 = vpop.f32.mrb[0].mxu0
        %v4830 = vadd.f32 %v4669, %v4829
        %v4831 = vpop.f32.mrb[0].mxu0
        %4832 = vmatprep.mubr.bf16.mxu0 0
        %4833 = vmatmul.mubr.bf16.gmra.mrb[0].mxu0 %v4279
        %v4834 = vpop.f32.mrb[0].mxu0
        %v4835 = vadd.f32 %v4674, %v4834
        %v4836 = vpop.f32.mrb[0].mxu0
        %v4837 = vpop.f32.mrb[0].mxu0
        %v4838 = vadd.f32 %v4677, %v4837
        %v4839 = vpop.f32.mrb[0].mxu0
        %4840 = vmatprep.mubr.bf16.mxu0 0
        %4841 = vmatmul.mubr.bf16.gmra.mrb[0].mxu0 %v4291
        %v4842 = vpop.f32.mrb[0].mxu0
        %v4843 = vadd.f32 %v4682, %v4842
        %v4844 = vpop.f32.mrb[0].mxu0
        %v4845 = vpop.f32.mrb[0].mxu0
        %v4846 = vadd.f32 %v4685, %v4845
        %v4847 = vpop.f32.mrb[0].mxu0
        %4848 = vmatprep.mubr.bf16.mxu0 0
        %4849 = vmatmul.mubr.bf16.gmra.mrb[0].mxu0 %v4303
        %v4850 = vpop.f32.mrb[0].mxu0
        %v4851 = vadd.f32 %v4690, %v4850
        %v4852 = vpop.f32.mrb[0].mxu0
        %v4853 = vpop.f32.mrb[0].mxu0
        %v4854 = vadd.f32 %v4693, %v4853
        %v4855 = vpop.f32.mrb[0].mxu0
        %4856 = vmatprep.mubr.bf16.mxu0 0
        %4857 = vmatmul.mubr.bf16.gmra.mrb[0].mxu0 %v4315
        %v4858 = vpop.f32.mrb[0].mxu0
        %v4859 = vadd.f32 %v4698, %v4858
        %v4860 = vpop.f32.mrb[0].mxu0
        %v4861 = vpop.f32.mrb[0].mxu0
        %v4862 = vadd.f32 %v4701, %v4861
        %v4863 = vpop.f32.mrb[0].mxu0
        %4864 = vmatprep.mubr.bf16.mxu0 0
        %4865 = vmatmul.mubr.bf16.gmra.mrb[0].mxu0 %v4327
        %v4866 = vpop.f32.mrb[0].mxu0
        %v4867 = vadd.f32 %v4706, %v4866
        %v4868 = vpop.f32.mrb[0].mxu0
        %v4869 = vpop.f32.mrb[0].mxu0
        %v4870 = vadd.f32 %v4709, %v4869
        %v4871 = vpop.f32.mrb[0].mxu0
        %4872 = vmatprep.mubr.bf16.mxu0 0
        %4873 = vmatmul.mubr.bf16.gmra.mrb[0].mxu0 %v4339
        %v4874 = vpop.f32.mrb[0].mxu0
        %v4875 = vadd.f32 %v4714, %v4874
        %v4876 = vpop.f32.mrb[0].mxu0
        %v4877 = vpop.f32.mrb[0].mxu0
        %v4878 = vadd.f32 %v4717, %v4877
        %v4879 = vpop.f32.mrb[0].mxu0
        %4880 = vmatprep.mubr.bf16.mxu0 0
        %4881 = vmatmul.mubr.bf16.gmra.mrb[0].mxu0 %v4351
        %v4882 = vpop.f32.mrb[0].mxu0
        %v4883 = vadd.f32 %v4722, %v4882
        %v4884 = vpop.f32.mrb[0].mxu0
        %v4885 = vpop.f32.mrb[0].mxu0
        %v4886 = vadd.f32 %v4725, %v4885
        %v4887 = vpop.f32.mrb[0].mxu0
        %4888 = vmatprep.mubr.bf16.mxu0 0
        %4889 = vmatmul.mubr.bf16.gmra.mrb[0].mxu0 %v4363
        %v4890 = vpop.f32.mrb[0].mxu0
        %v4891 = vadd.f32 %v4730, %v4890
        %v4892 = vpop.f32.mrb[0].mxu0
        %v4893 = vpop.f32.mrb[0].mxu0
        %v4894 = vadd.f32 %v4733, %v4893
        %v4895 = vpop.f32.mrb[0].mxu0
        %4896 = vdwg.mxu0
        %v4897 = vadd.f32 %v3986, %v4771
        %v4898 = vadd.f32 %v3989, %v4774
        %v4899 = vadd.f32 %v3994, %v4779
        %v4900 = vadd.f32 %v3997, %v4782
        %v4901 = vadd.f32 %v4002, %v4787
        %v4902 = vadd.f32 %v4005, %v4790
        %v4903 = vadd.f32 %v4010, %v4795
        %v4904 = vadd.f32 %v4013, %v4798
        %v4905 = vadd.f32 %v4018, %v4803
        %v4906 = vadd.f32 %v4021, %v4806
        %v4907 = vadd.f32 %v4026, %v4811
        %v4908 = vadd.f32 %v4029, %v4814
        %v4909 = vadd.f32 %v4034, %v4819
        %v4910 = vadd.f32 %v4037, %v4822
        %v4911 = vadd.f32 %v4042, %v4827
        %v4912 = vadd.f32 %v4045, %v4830
        %v4913 = vadd.f32 %v4050, %v4835
        %v4914 = vadd.f32 %v4053, %v4838
        %v4915 = vadd.f32 %v4058, %v4843
        %v4916 = vadd.f32 %v4061, %v4846
        %v4917 = vadd.f32 %v4066, %v4851
        %v4918 = vadd.f32 %v4069, %v4854
        %v4919 = vadd.f32 %v4074, %v4859
        %v4920 = vadd.f32 %v4077, %v4862
        %v4921 = vadd.f32 %v4082, %v4867
        %v4922 = vadd.f32 %v4085, %v4870
        %v4923 = vadd.f32 %v4090, %v4875
        %v4924 = vadd.f32 %v4093, %v4878
        %v4925 = vadd.f32 %v4098, %v4883
        %v4926 = vadd.f32 %v4101, %v4886
        %v4927 = vadd.f32 %v4106, %v4891
        %v4928 = vadd.f32 %v4109, %v4894
        %v4929 = vld [vmem:[%s4] sm:$0x1]
        %v4931 = vlaneseq
        %v4932 = vshrl.u32 %v4931, 7
        %v4933 = vsub.s32 0, %v4932
        %v4934 = vrot.slane %v4929, %v4933
        %v4936 = vadd.f32 %v4897, %v4934
        %v4937 = vadd.f32 %v4898, %v4934
        %v4938 = vadd.f32 %v4899, %v4934
        %v4939 = vadd.f32 %v4900, %v4934
        %v4940 = vadd.f32 %v4901, %v4934
        %v4941 = vadd.f32 %v4902, %v4934
        %v4942 = vadd.f32 %v4903, %v4934
        %v4943 = vadd.f32 %v4904, %v4934
        %v4944 = vadd.f32 %v4905, %v4934
        %v4945 = vadd.f32 %v4906, %v4934
        %v4946 = vadd.f32 %v4907, %v4934
        %v4947 = vadd.f32 %v4908, %v4934
        %v4948 = vadd.f32 %v4909, %v4934
        %v4949 = vadd.f32 %v4910, %v4934
        %v4950 = vadd.f32 %v4911, %v4934
        %v4951 = vadd.f32 %v4912, %v4934
        %v4952 = vadd.f32 %v4913, %v4934
        %v4953 = vadd.f32 %v4914, %v4934
        %v4954 = vadd.f32 %v4915, %v4934
        %v4955 = vadd.f32 %v4916, %v4934
        %v4956 = vadd.f32 %v4917, %v4934
        %v4957 = vadd.f32 %v4918, %v4934
        %v4958 = vadd.f32 %v4919, %v4934
        %v4959 = vadd.f32 %v4920, %v4934
        %v4960 = vadd.f32 %v4921, %v4934
        %v4961 = vadd.f32 %v4922, %v4934
        %v4962 = vadd.f32 %v4923, %v4934
        %v4963 = vadd.f32 %v4924, %v4934
        %v4964 = vadd.f32 %v4925, %v4934
        %v4965 = vadd.f32 %v4926, %v4934
        %v4966 = vadd.f32 %v4927, %v4934
        %v4967 = vadd.f32 %v4928, %v4934
        %4968 = vst [vmem:[#allocation5] sm:$0xff] %v4936
        %4969 = vst [vmem:[#allocation5 + $0x8] sm:$0xff] %v4937
        %4970 = vst [vmem:[#allocation5 + $0x10] sm:$0xff] %v4938
        %4971 = vst [vmem:[#allocation5 + $0x18] sm:$0xff] %v4939
        %4972 = vst [vmem:[#allocation5 + $0x20] sm:$0xff] %v4940
        %4973 = vst [vmem:[#allocation5 + $0x28] sm:$0xff] %v4941
        %4974 = vst [vmem:[#allocation5 + $0x30] sm:$0xff] %v4942
        %4975 = vst [vmem:[#allocation5 + $0x38] sm:$0xff] %v4943
        %4976 = vst [vmem:[#allocation5 + $0x40] sm:$0xff] %v4944
        %4977 = vst [vmem:[#allocation5 + $0x48] sm:$0xff] %v4945
        %4978 = vst [vmem:[#allocation5 + $0x50] sm:$0xff] %v4946
        %4979 = vst [vmem:[#allocation5 + $0x58] sm:$0xff] %v4947
        %4980 = vst [vmem:[#allocation5 + $0x60] sm:$0xff] %v4948
        %4981 = vst [vmem:[#allocation5 + $0x68] sm:$0xff] %v4949
        %4982 = vst [vmem:[#allocation5 + $0x70] sm:$0xff] %v4950
        %4983 = vst [vmem:[#allocation5 + $0x78] sm:$0xff] %v4951
        %4984 = vst [vmem:[#allocation5 + $0x80] sm:$0xff] %v4952
        %4985 = vst [vmem:[#allocation5 + $0x88] sm:$0xff] %v4953
        %4986 = vst [vmem:[#allocation5 + $0x90] sm:$0xff] %v4954
        %4987 = vst [vmem:[#allocation5 + $0x98] sm:$0xff] %v4955
        %4988 = vst [vmem:[#allocation5 + $0xa0] sm:$0xff] %v4956
        %4989 = vst [vmem:[#allocation5 + $0xa8] sm:$0xff] %v4957
        %4990 = vst [vmem:[#allocation5 + $0xb0] sm:$0xff] %v4958
        %4991 = vst [vmem:[#allocation5 + $0xb8] sm:$0xff] %v4959
        %4992 = vst [vmem:[#allocation5 + $0xc0] sm:$0xff] %v4960
        %4993 = vst [vmem:[#allocation5 + $0xc8] sm:$0xff] %v4961
        %4994 = vst [vmem:[#allocation5 + $0xd0] sm:$0xff] %v4962
        %4995 = vst [vmem:[#allocation5 + $0xd8] sm:$0xff] %v4963
        %4996 = vst [vmem:[#allocation5 + $0xe0] sm:$0xff] %v4964
        %4997 = vst [vmem:[#allocation5 + $0xe8] sm:$0xff] %v4965
        %4998 = vst [vmem:[#allocation5 + $0xf0] sm:$0xff] %v4966
        %4999 = vst [vmem:[#allocation5 + $0xf8] sm:$0xff] %v4967
        %v5000 = vpack.c.bf16 %v4937, %v4936
        %v5001 = vpack.c.bf16 %v4939, %v4938
        %v5002 = vpack.c.bf16 %v4941, %v4940
        %v5003 = vpack.c.bf16 %v4943, %v4942
        %v5004 = vpack.c.bf16 %v4945, %v4944
        %v5005 = vpack.c.bf16 %v4947, %v4946
        %v5006 = vpack.c.bf16 %v4949, %v4948
        %v5007 = vpack.c.bf16 %v4951, %v4950
        %v5008 = vpack.c.bf16 %v4953, %v4952
        %v5009 = vpack.c.bf16 %v4955, %v4954
        %v5010 = vpack.c.bf16 %v4957, %v4956
        %v5011 = vpack.c.bf16 %v4959, %v4958
        %v5012 = vpack.c.bf16 %v4961, %v4960
        %v5013 = vpack.c.bf16 %v4963, %v4962
        %v5014 = vpack.c.bf16 %v4965, %v4964
        %v5015 = vpack.c.bf16 %v4967, %v4966
        %5016 = vst [vmem:[%s495 + $0x8] sm:$0xff] %v5000
        %5017 = vst [vmem:[%s495 + $0x20] sm:$0xff] %v5001
        %5018 = vst [vmem:[%s495 + $0x38] sm:$0xff] %v5002
        %5019 = vst [vmem:[%s495 + $0x50] sm:$0xff] %v5003
        %5020 = vst [vmem:[%s495 + $0x68] sm:$0xff] %v5004
        %5021 = vst [vmem:[%s495 + $0x80] sm:$0xff] %v5005
        %5022 = vst [vmem:[%s495 + $0x98] sm:$0xff] %v5006
        %5023 = vst [vmem:[%s495 + $0xb0] sm:$0xff] %v5007
        %5024 = vst [vmem:[%s495 + $0xc8] sm:$0xff] %v5008
        %5025 = vst [vmem:[%s495 + $0xe0] sm:$0xff] %v5009
        %5026 = vst [vmem:[%s495 + $0xf8] sm:$0xff] %v5010
        %5027 = vst [vmem:[%s495 + $0x110] sm:$0xff] %v5011
        %5028 = vst [vmem:[%s495 + $0x128] sm:$0xff] %v5012
        %5029 = vst [vmem:[%s495 + $0x140] sm:$0xff] %v5013
        %5030 = vst [vmem:[%s495 + $0x158] sm:$0xff] %v5014
        %5031 = vst [vmem:[%s495 + $0x170] sm:$0xff] %v5015
        %v5032 = vadd.f32 %v4936, %v4937
        %v5033 = vadd.f32 %v5032, %v4938
        %v5034 = vadd.f32 %v5033, %v4939
        %v5035 = vadd.f32 %v5034, %v4940
        %v5036 = vadd.f32 %v5035, %v4941
        %v5037 = vadd.f32 %v5036, %v4942
        %v5038 = vadd.f32 %v5037, %v4943
        %v5039 = vadd.f32 %v5038, %v4944
        %v5040 = vadd.f32 %v5039, %v4945
        %v5041 = vadd.f32 %v5040, %v4946
        %v5042 = vadd.f32 %v5041, %v4947
        %v5043 = vadd.f32 %v5042, %v4948
        %v5044 = vadd.f32 %v5043, %v4949
        %v5045 = vadd.f32 %v5044, %v4950
        %v5046 = vadd.f32 %v5045, %v4951
        %v5047 = vadd.f32 %v5046, %v4952
        %v5048 = vadd.f32 %v5047, %v4953
        %v5049 = vadd.f32 %v5048, %v4954
        %v5050 = vadd.f32 %v5049, %v4955
        %v5051 = vadd.f32 %v5050, %v4956
        %v5052 = vadd.f32 %v5051, %v4957
        %v5053 = vadd.f32 %v5052, %v4958
        %v5054 = vadd.f32 %v5053, %v4959
        %v5055 = vadd.f32 %v5054, %v4960
        %v5056 = vadd.f32 %v5055, %v4961
        %v5057 = vadd.f32 %v5056, %v4962
        %v5058 = vadd.f32 %v5057, %v4963
        %v5059 = vadd.f32 %v5058, %v4964
        %v5060 = vadd.f32 %v5059, %v4965
        %v5061 = vadd.f32 %v5060, %v4966
        %v5062 = vadd.f32 %v5061, %v4967
        %v5063 = vrot.slane %v5062, 4
        %v5064 = vadd.f32 %v5062, %v5063
        %v5065 = vrot.slane %v5064, 2
        %v5066 = vadd.f32 %v5064, %v5065
        %v5067 = vrot.slane %v5066, 1
        %v5068 = vadd.f32 %v5066, %v5067
        %v5069 = vrcp.pop 256.0
        %v5070 = vmul.f32 %v5068, %v5069
        %v5071 = vld [vmem:[%s5] sm:$0xff]
        %v5072 = vld [vmem:[%s5 + $0x8] sm:$0xff]
        %v5073 = vld [vmem:[%s5 + $0x10] sm:$0xff]
        %v5074 = vld [vmem:[%s5 + $0x18] sm:$0xff]
        %v5075 = vld [vmem:[%s5 + $0x20] sm:$0xff]
        %v5076 = vld [vmem:[%s5 + $0x28] sm:$0xff]
        %v5077 = vld [vmem:[%s5 + $0x30] sm:$0xff]
        %v5078 = vld [vmem:[%s5 + $0x38] sm:$0xff]
        %v5079 = vld [vmem:[%s5 + $0x40] sm:$0xff]
        %v5080 = vld [vmem:[%s5 + $0x48] sm:$0xff]
        %v5081 = vld [vmem:[%s5 + $0x50] sm:$0xff]
        %v5082 = vld [vmem:[%s5 + $0x58] sm:$0xff]
        %v5083 = vld [vmem:[%s5 + $0x60] sm:$0xff]
        %v5084 = vld [vmem:[%s5 + $0x68] sm:$0xff]
        %v5085 = vld [vmem:[%s5 + $0x70] sm:$0xff]
        %v5086 = vld [vmem:[%s5 + $0x78] sm:$0xff]
        %v5087 = vld [vmem:[%s6] sm:$0x1]
        %5088 = vmatprep.subr.mxu0 0.0
        %5089 = vmatpush1.msra.mxu0 %v5071
        %5090 = vmatprep.subr.mxu0 0.0
        %5091 = vmatpush1.msra.mxu0 %v5072
        %5092 = vmatprep.subr.mxu0 0.0
        %5093 = vmatpush1.msra.mxu0 %v5073
        %5094 = vmatprep.subr.mxu0 0.0
        %5095 = vmatpush1.msra.mxu0 %v5074
        %5096 = vmatprep.subr.mxu0 0.0
        %5097 = vmatpush1.msra.mxu0 %v5075
        %5098 = vmatprep.subr.mxu0 0.0
        %5099 = vmatpush1.msra.mxu0 %v5076
        %5100 = vmatprep.subr.mxu0 0.0
        %5101 = vmatpush1.msra.mxu0 %v5077
        %5102 = vmatprep.subr.mxu0 0.0
        %5103 = vmatpush1.msra.mxu0 %v5078
        %5104 = vmatprep.subr.mxu0 0.0
        %5105 = vmatpush1.msra.mxu0 %v5079
        %5106 = vmatprep.subr.mxu0 0.0
        %5107 = vmatpush1.msra.mxu0 %v5080
        %5108 = vmatprep.subr.mxu0 0.0
        %5109 = vmatpush1.msra.mxu0 %v5081
        %5110 = vmatprep.subr.mxu0 0.0
        %5111 = vmatpush1.msra.mxu0 %v5082
        %5112 = vmatprep.subr.mxu0 0.0
        %5113 = vmatpush1.msra.mxu0 %v5083
        %5114 = vmatprep.subr.mxu0 0.0
        %5115 = vmatpush1.msra.mxu0 %v5084
        %5116 = vmatprep.subr.mxu0 0.0
        %5117 = vmatpush1.msra.mxu0 %v5085
        %5118 = vmatprep.subr.mxu0 0.0
        %5119 = vmatpush1.msra.mxu0 %v5086
        %5120 = vmatprep.subr.mxu0 0.0
        %5121 = vmatpush1.msra.mxu0 0.0
        %5122 = vmatprep.subr.mxu0 0.0
        %5123 = vmatpush1.msra.mxu0 0.0
        %5124 = vmatprep.subr.mxu0 0.0
        %5125 = vmatpush1.msra.mxu0 0.0
        %5126 = vmatprep.subr.mxu0 0.0
        %5127 = vmatpush1.msra.mxu0 0.0
        %5128 = vmatprep.subr.mxu0 0.0
        %5129 = vmatpush1.msra.mxu0 0.0
        %5130 = vmatprep.subr.mxu0 0.0
        %5131 = vmatpush1.msra.mxu0 0.0
        %5132 = vmatprep.subr.mxu0 0.0
        %5133 = vmatpush1.msra.mxu0 0.0
        %5134 = vmatprep.subr.mxu0 0.0
        %5135 = vmatpush1.msra.mxu0 0.0
        %5136 = vmatprep.subr.mxu0 0.0
        %5137 = vmatpush1.msra.mxu0 0.0
        %5138 = vmatprep.subr.mxu0 0.0
        %5139 = vmatpush1.msra.mxu0 0.0
        %5140 = vmatprep.subr.mxu0 0.0
        %5141 = vmatpush1.msra.mxu0 0.0
        %5142 = vmatprep.subr.mxu0 0.0
        %5143 = vmatpush1.msra.mxu0 0.0
        %5144 = vmatprep.subr.mxu0 0.0
        %5145 = vmatpush1.msra.mxu0 0.0
        %5146 = vmatprep.subr.mxu0 0.0
        %5147 = vmatpush1.msra.mxu0 0.0
        %5148 = vmatprep.subr.mxu0 0.0
        %5149 = vmatpush1.msra.mxu0 0.0
        %5150 = vmatprep.subr.mxu0 0.0
        %5151 = vmatpush1.msra.mxu0 0.0
        %5152 = vmatprep.mubr.f32.mxu0 0.0
        %5153 = vmatmul.mubr.f32.gmra.mrb[0].mxu0 %v5070
        %v5154 = vpop.f32.mrb[0].mxu0
        %v5155 = vadd.f32 %v5087, %v5154
        %v5156 = vpop.f32.mrb[0].mxu0
        %5157 = vdwg.mxu0
        %vm5158 = vcmp.gt.f32.partialorder %v5155, 0.0
        %v5159 = vmul.f32 %v5155, 0.01
        %v5160 = vsel %vm5158, %v5155, %v5159
        %v5161 = vld [vmem:[%s7] sm:$0xff]
        %v5162 = vld [vmem:[%s8] sm:$0x1]
        %vm5163 = vcmask 64512
        %v5165 = vsel %vm5163, %v5160, 0
        %5167 = vmatprep.subr.mxu0 0.0
        %5168 = vmatpush1.msra.mxu0 %v5161
        %5169 = vmatprep.subr.mxu0 0.0
        %5170 = vmatpush1.msra.mxu0 0.0
        %5171 = vmatprep.subr.mxu0 0.0
        %5172 = vmatpush1.msra.mxu0 0.0
        %5173 = vmatprep.subr.mxu0 0.0
        %5174 = vmatpush1.msra.mxu0 0.0
        %5175 = vmatprep.subr.mxu0 0.0
        %5176 = vmatpush1.msra.mxu0 0.0
        %5177 = vmatprep.subr.mxu0 0.0
        %5178 = vmatpush1.msra.mxu0 0.0
        %5179 = vmatprep.subr.mxu0 0.0
        %5180 = vmatpush1.msra.mxu0 0.0
        %5181 = vmatprep.subr.mxu0 0.0
        %5182 = vmatpush1.msra.mxu0 0.0
        %5183 = vmatprep.subr.mxu0 0.0
        %5184 = vmatpush1.msra.mxu0 0.0
        %5185 = vmatprep.subr.mxu0 0.0
        %5186 = vmatpush1.msra.mxu0 0.0
        %5187 = vmatprep.subr.mxu0 0.0
        %5188 = vmatpush1.msra.mxu0 0.0
        %5189 = vmatprep.subr.mxu0 0.0
        %5190 = vmatpush1.msra.mxu0 0.0
        %5191 = vmatprep.subr.mxu0 0.0
        %5192 = vmatpush1.msra.mxu0 0.0
        %5193 = vmatprep.subr.mxu0 0.0
        %5194 = vmatpush1.msra.mxu0 0.0
        %5195 = vmatprep.subr.mxu0 0.0
        %5196 = vmatpush1.msra.mxu0 0.0
        %5197 = vmatprep.subr.mxu0 0.0
        %5198 = vmatpush1.msra.mxu0 0.0
        %5199 = vmatprep.subr.mxu0 0.0
        %5200 = vmatpush1.msra.mxu0 0.0
        %5201 = vmatprep.subr.mxu0 0.0
        %5202 = vmatpush1.msra.mxu0 0.0
        %5203 = vmatprep.subr.mxu0 0.0
        %5204 = vmatpush1.msra.mxu0 0.0
        %5205 = vmatprep.subr.mxu0 0.0
        %5206 = vmatpush1.msra.mxu0 0.0
        %5207 = vmatprep.subr.mxu0 0.0
        %5208 = vmatpush1.msra.mxu0 0.0
        %5209 = vmatprep.subr.mxu0 0.0
        %5210 = vmatpush1.msra.mxu0 0.0
        %5211 = vmatprep.subr.mxu0 0.0
        %5212 = vmatpush1.msra.mxu0 0.0
        %5213 = vmatprep.subr.mxu0 0.0
        %5214 = vmatpush1.msra.mxu0 0.0
        %5215 = vmatprep.subr.mxu0 0.0
        %5216 = vmatpush1.msra.mxu0 0.0
        %5217 = vmatprep.subr.mxu0 0.0
        %5218 = vmatpush1.msra.mxu0 0.0
        %5219 = vmatprep.subr.mxu0 0.0
        %5220 = vmatpush1.msra.mxu0 0.0
        %5221 = vmatprep.subr.mxu0 0.0
        %5222 = vmatpush1.msra.mxu0 0.0
        %5223 = vmatprep.subr.mxu0 0.0
        %5224 = vmatpush1.msra.mxu0 0.0
        %5225 = vmatprep.subr.mxu0 0.0
        %5226 = vmatpush1.msra.mxu0 0.0
        %5227 = vmatprep.subr.mxu0 0.0
        %5228 = vmatpush1.msra.mxu0 0.0
        %5229 = vmatprep.subr.mxu0 0.0
        %5230 = vmatpush1.msra.mxu0 0.0
        %5231 = vmatprep.mubr.f32.mxu0 0.0
        %5232 = vmatmul.mubr.f32.gmra.mrb[0].mxu0 %v5165
        %v5233 = vpop.f32.mrb[0].mxu0
        %v5234 = vadd.f32 %v5162, %v5233
        %v5235 = vpop.f32.mrb[0].mxu0
        %5236 = vdwg.mxu0
        %v5237 = vxor.u32 %v5234, 2147483648
        %v5238 = vmul.f32 %v5237, 1.442695
        %v5239 = vpow.pop %v5238
        %v5240 = vadd.f32 %v5239, 1.0
        %v5241 = vrcp.pop %v5240
        %v5242 = vmul.f32 1.0, %v5241
        %v5243 = vld [vmem:[#allocation4] sm:$0x80]
        %v5244 = vld [vmem:[#allocation4 + $0x8] sm:$0xff]
        %v5245 = vld [vmem:[#allocation4 + $0x18] sm:$0x80]
        %v5246 = vld [vmem:[#allocation4 + $0x20] sm:$0xff]
        %v5247 = vld [vmem:[#allocation4 + $0x30] sm:$0x80]
        %v5248 = vld [vmem:[#allocation4 + $0x38] sm:$0xff]
        %v5249 = vld [vmem:[#allocation4 + $0x48] sm:$0x80]
        %v5250 = vld [vmem:[#allocation4 + $0x50] sm:$0xff]
        %v5251 = vld [vmem:[#allocation4 + $0x60] sm:$0x80]
        %v5252 = vld [vmem:[#allocation4 + $0x68] sm:$0xff]
        %v5253 = vld [vmem:[#allocation4 + $0x78] sm:$0x80]
        %v5254 = vld [vmem:[#allocation4 + $0x80] sm:$0xff]
        %v5255 = vld [vmem:[#allocation4 + $0x90] sm:$0x80]
        %v5256 = vld [vmem:[#allocation4 + $0x98] sm:$0xff]
        %v5257 = vld [vmem:[#allocation4 + $0xa8] sm:$0x80]
        %v5258 = vld [vmem:[#allocation4 + $0xb0] sm:$0xff]
        %v5259 = vld [vmem:[#allocation4 + $0xc0] sm:$0x80]
        %v5260 = vld [vmem:[#allocation4 + $0xc8] sm:$0xff]
        %v5261 = vld [vmem:[#allocation4 + $0xd8] sm:$0x80]
        %v5262 = vld [vmem:[#allocation4 + $0xe0] sm:$0xff]
        %v5263 = vld [vmem:[#allocation4 + $0xf0] sm:$0x80]
        %v5264 = vld [vmem:[#allocation4 + $0xf8] sm:$0xff]
        %v5265 = vld [vmem:[#allocation4 + $0x108] sm:$0x80]
        %v5266 = vld [vmem:[#allocation4 + $0x110] sm:$0xff]
        %v5267 = vld [vmem:[#allocation4 + $0x120] sm:$0x80]
        %v5268 = vld [vmem:[#allocation4 + $0x128] sm:$0xff]
        %v5269 = vld [vmem:[#allocation4 + $0x138] sm:$0x80]
        %v5270 = vld [vmem:[#allocation4 + $0x140] sm:$0xff]
        %v5271 = vld [vmem:[#allocation4 + $0x150] sm:$0x80]
        %v5272 = vld [vmem:[#allocation4 + $0x158] sm:$0xff]
        %v5273 = vld [vmem:[#allocation4 + $0x168] sm:$0x80]
        %v5274 = vld [vmem:[#allocation4 + $0x170] sm:$0xff]
        %vm5307 = vcmask 1043456
        %v5308 = vrot.slane %v5243, 4
        %v5309 = vrot.slane %v5244, 4
        %v5310 = vsel %vm5307, %v5308, %v5309
        %v5311 = vrot.slane %v5245, 4
        %v5312 = vrot.slane %v5246, 4
        %v5313 = vsel %vm5307, %v5311, %v5312
        %v5314 = vrot.slane %v5247, 4
        %v5315 = vrot.slane %v5248, 4
        %v5316 = vsel %vm5307, %v5314, %v5315
        %v5317 = vrot.slane %v5249, 4
        %v5318 = vrot.slane %v5250, 4
        %v5319 = vsel %vm5307, %v5317, %v5318
        %v5320 = vrot.slane %v5251, 4
        %v5321 = vrot.slane %v5252, 4
        %v5322 = vsel %vm5307, %v5320, %v5321
        %v5323 = vrot.slane %v5253, 4
        %v5324 = vrot.slane %v5254, 4
        %v5325 = vsel %vm5307, %v5323, %v5324
        %v5326 = vrot.slane %v5255, 4
        %v5327 = vrot.slane %v5256, 4
        %v5328 = vsel %vm5307, %v5326, %v5327
        %v5329 = vrot.slane %v5257, 4
        %v5330 = vrot.slane %v5258, 4
        %v5331 = vsel %vm5307, %v5329, %v5330
        %v5332 = vrot.slane %v5259, 4
        %v5333 = vrot.slane %v5260, 4
        %v5334 = vsel %vm5307, %v5332, %v5333
        %v5335 = vrot.slane %v5261, 4
        %v5336 = vrot.slane %v5262, 4
        %v5337 = vsel %vm5307, %v5335, %v5336
        %v5338 = vrot.slane %v5263, 4
        %v5339 = vrot.slane %v5264, 4
        %v5340 = vsel %vm5307, %v5338, %v5339
        %v5341 = vrot.slane %v5265, 4
        %v5342 = vrot.slane %v5266, 4
        %v5343 = vsel %vm5307, %v5341, %v5342
        %v5344 = vrot.slane %v5267, 4
        %v5345 = vrot.slane %v5268, 4
        %v5346 = vsel %vm5307, %v5344, %v5345
        %v5347 = vrot.slane %v5269, 4
        %v5348 = vrot.slane %v5270, 4
        %v5349 = vsel %vm5307, %v5347, %v5348
        %v5350 = vrot.slane %v5271, 4
        %v5351 = vrot.slane %v5272, 4
        %v5352 = vsel %vm5307, %v5350, %v5351
        %v5353 = vrot.slane %v5273, 4
        %v5354 = vrot.slane %v5274, 4
        %v5355 = vsel %vm5307, %v5353, %v5354
        %v5388 = vunpack.c.l.bf16 %v5310
        %v5389 = vunpack.c.h.bf16 %v5310
        %v5390 = vunpack.c.l.bf16 %v5309
        %v5391 = vunpack.c.l.bf16 %v5313
        %v5392 = vunpack.c.h.bf16 %v5313
        %v5393 = vunpack.c.l.bf16 %v5312
        %v5394 = vunpack.c.l.bf16 %v5316
        %v5395 = vunpack.c.h.bf16 %v5316
        %v5396 = vunpack.c.l.bf16 %v5315
        %v5397 = vunpack.c.l.bf16 %v5319
        %v5398 = vunpack.c.h.bf16 %v5319
        %v5399 = vunpack.c.l.bf16 %v5318
        %v5400 = vunpack.c.l.bf16 %v5322
        %v5401 = vunpack.c.h.bf16 %v5322
        %v5402 = vunpack.c.l.bf16 %v5321
        %v5403 = vunpack.c.l.bf16 %v5325
        %v5404 = vunpack.c.h.bf16 %v5325
        %v5405 = vunpack.c.l.bf16 %v5324
        %v5406 = vunpack.c.l.bf16 %v5328
        %v5407 = vunpack.c.h.bf16 %v5328
        %v5408 = vunpack.c.l.bf16 %v5327
        %v5409 = vunpack.c.l.bf16 %v5331
        %v5410 = vunpack.c.h.bf16 %v5331
        %v5411 = vunpack.c.l.bf16 %v5330
        %v5412 = vunpack.c.l.bf16 %v5334
        %v5413 = vunpack.c.h.bf16 %v5334
        %v5414 = vunpack.c.l.bf16 %v5333
        %v5415 = vunpack.c.l.bf16 %v5337
        %v5416 = vunpack.c.h.bf16 %v5337
        %v5417 = vunpack.c.l.bf16 %v5336
        %v5418 = vunpack.c.l.bf16 %v5340
        %v5419 = vunpack.c.h.bf16 %v5340
        %v5420 = vunpack.c.l.bf16 %v5339
        %v5421 = vunpack.c.l.bf16 %v5343
        %v5422 = vunpack.c.h.bf16 %v5343
        %v5423 = vunpack.c.l.bf16 %v5342
        %v5424 = vunpack.c.l.bf16 %v5346
        %v5425 = vunpack.c.h.bf16 %v5346
        %v5426 = vunpack.c.l.bf16 %v5345
        %v5427 = vunpack.c.l.bf16 %v5349
        %v5428 = vunpack.c.h.bf16 %v5349
        %v5429 = vunpack.c.l.bf16 %v5348
        %v5430 = vunpack.c.l.bf16 %v5352
        %v5431 = vunpack.c.h.bf16 %v5352
        %v5432 = vunpack.c.l.bf16 %v5351
        %v5433 = vunpack.c.l.bf16 %v5355
        %v5434 = vunpack.c.h.bf16 %v5355
        %v5435 = vunpack.c.l.bf16 %v5354
        %v5436 = vld [vmem:[%s9] sm:$0x1]
        %v5438 = vlaneseq
        %v5439 = vshrl.u32 %v5438, 7
        %v5440 = vsub.s32 0, %v5439
        %v5441 = vrot.slane %v5436, %v5440
        %v5443 = vmul.f32 %v5388, %v5441
        %v5444 = vmul.f32 %v5389, %v5441
        %v5445 = vmul.f32 %v5390, %v5441
        %v5446 = vmul.f32 %v5391, %v5441
        %v5447 = vmul.f32 %v5392, %v5441
        %v5448 = vmul.f32 %v5393, %v5441
        %v5449 = vmul.f32 %v5394, %v5441
        %v5450 = vmul.f32 %v5395, %v5441
        %v5451 = vmul.f32 %v5396, %v5441
        %v5452 = vmul.f32 %v5397, %v5441
        %v5453 = vmul.f32 %v5398, %v5441
        %v5454 = vmul.f32 %v5399, %v5441
        %v5455 = vmul.f32 %v5400, %v5441
        %v5456 = vmul.f32 %v5401, %v5441
        %v5457 = vmul.f32 %v5402, %v5441
        %v5458 = vmul.f32 %v5403, %v5441
        %v5459 = vmul.f32 %v5404, %v5441
        %v5460 = vmul.f32 %v5405, %v5441
        %v5461 = vmul.f32 %v5406, %v5441
        %v5462 = vmul.f32 %v5407, %v5441
        %v5463 = vmul.f32 %v5408, %v5441
        %v5464 = vmul.f32 %v5409, %v5441
        %v5465 = vmul.f32 %v5410, %v5441
        %v5466 = vmul.f32 %v5411, %v5441
        %v5467 = vmul.f32 %v5412, %v5441
        %v5468 = vmul.f32 %v5413, %v5441
        %v5469 = vmul.f32 %v5414, %v5441
        %v5470 = vmul.f32 %v5415, %v5441
        %v5471 = vmul.f32 %v5416, %v5441
        %v5472 = vmul.f32 %v5417, %v5441
        %v5473 = vmul.f32 %v5418, %v5441
        %v5474 = vmul.f32 %v5419, %v5441
        %v5475 = vmul.f32 %v5420, %v5441
        %v5476 = vmul.f32 %v5421, %v5441
        %v5477 = vmul.f32 %v5422, %v5441
        %v5478 = vmul.f32 %v5423, %v5441
        %v5479 = vmul.f32 %v5424, %v5441
        %v5480 = vmul.f32 %v5425, %v5441
        %v5481 = vmul.f32 %v5426, %v5441
        %v5482 = vmul.f32 %v5427, %v5441
        %v5483 = vmul.f32 %v5428, %v5441
        %v5484 = vmul.f32 %v5429, %v5441
        %v5485 = vmul.f32 %v5430, %v5441
        %v5486 = vmul.f32 %v5431, %v5441
        %v5487 = vmul.f32 %v5432, %v5441
        %v5488 = vmul.f32 %v5433, %v5441
        %v5489 = vmul.f32 %v5434, %v5441
        %v5490 = vmul.f32 %v5435, %v5441
        %v5491 = vunpack.c.l.bf16 %v5244
        %v5492 = vunpack.c.h.bf16 %v5244
        %v5493 = vunpack.c.l.bf16 %v5246
        %v5494 = vunpack.c.h.bf16 %v5246
        %v5495 = vunpack.c.l.bf16 %v5248
        %v5496 = vunpack.c.h.bf16 %v5248
        %v5497 = vunpack.c.l.bf16 %v5250
        %v5498 = vunpack.c.h.bf16 %v5250
        %v5499 = vunpack.c.l.bf16 %v5252
        %v5500 = vunpack.c.h.bf16 %v5252
        %v5501 = vunpack.c.l.bf16 %v5254
        %v5502 = vunpack.c.h.bf16 %v5254
        %v5503 = vunpack.c.l.bf16 %v5256
        %v5504 = vunpack.c.h.bf16 %v5256
        %v5505 = vunpack.c.l.bf16 %v5258
        %v5506 = vunpack.c.h.bf16 %v5258
        %v5507 = vunpack.c.l.bf16 %v5260
        %v5508 = vunpack.c.h.bf16 %v5260
        %v5509 = vunpack.c.l.bf16 %v5262
        %v5510 = vunpack.c.h.bf16 %v5262
        %v5511 = vunpack.c.l.bf16 %v5264
        %v5512 = vunpack.c.h.bf16 %v5264
        %v5513 = vunpack.c.l.bf16 %v5266
        %v5514 = vunpack.c.h.bf16 %v5266
        %v5515 = vunpack.c.l.bf16 %v5268
        %v5516 = vunpack.c.h.bf16 %v5268
        %v5517 = vunpack.c.l.bf16 %v5270
        %v5518 = vunpack.c.h.bf16 %v5270
        %v5519 = vunpack.c.l.bf16 %v5272
        %v5520 = vunpack.c.h.bf16 %v5272
        %v5521 = vunpack.c.l.bf16 %v5274
        %v5522 = vunpack.c.h.bf16 %v5274
        %s5523 = scalar_lea.vmem %s9, 1
        %v5524 = vld [vmem:[%s5523] sm:$0x1]
        %v5526 = vlaneseq
        %v5527 = vshrl.u32 %v5526, 7
        %v5528 = vsub.s32 0, %v5527
        %v5529 = vrot.slane %v5524, %v5528
        %v5531 = vmul.f32 %v5491, %v5529
        %v5532 = vmul.f32 %v5492, %v5529
        %v5533 = vmul.f32 %v5493, %v5529
        %v5534 = vmul.f32 %v5494, %v5529
        %v5535 = vmul.f32 %v5495, %v5529
        %v5536 = vmul.f32 %v5496, %v5529
        %v5537 = vmul.f32 %v5497, %v5529
        %v5538 = vmul.f32 %v5498, %v5529
        %v5539 = vmul.f32 %v5499, %v5529
        %v5540 = vmul.f32 %v5500, %v5529
        %v5541 = vmul.f32 %v5501, %v5529
        %v5542 = vmul.f32 %v5502, %v5529
        %v5543 = vmul.f32 %v5503, %v5529
        %v5544 = vmul.f32 %v5504, %v5529
        %v5545 = vmul.f32 %v5505, %v5529
        %v5546 = vmul.f32 %v5506, %v5529
        %v5547 = vmul.f32 %v5507, %v5529
        %v5548 = vmul.f32 %v5508, %v5529
        %v5549 = vmul.f32 %v5509, %v5529
        %v5550 = vmul.f32 %v5510, %v5529
        %v5551 = vmul.f32 %v5511, %v5529
        %v5552 = vmul.f32 %v5512, %v5529
        %v5553 = vmul.f32 %v5513, %v5529
        %v5554 = vmul.f32 %v5514, %v5529
        %v5555 = vmul.f32 %v5515, %v5529
        %v5556 = vmul.f32 %v5516, %v5529
        %v5557 = vmul.f32 %v5517, %v5529
        %v5558 = vmul.f32 %v5518, %v5529
        %v5559 = vmul.f32 %v5519, %v5529
        %v5560 = vmul.f32 %v5520, %v5529
        %v5561 = vmul.f32 %v5521, %v5529
        %v5562 = vmul.f32 %v5522, %v5529
        %vm5595 = vcmask 1046528
        %v5596 = vrot.slane %v5531, 1
        %v5597 = vrot.slane %v5532, 1
        %v5598 = vsel %vm5595, %v5596, %v5597
        %v5599 = vrot.slane %v5533, 1
        %v5600 = vrot.slane %v5534, 1
        %v5601 = vsel %vm5595, %v5599, %v5600
        %v5602 = vrot.slane %v5535, 1
        %v5603 = vrot.slane %v5536, 1
        %v5604 = vsel %vm5595, %v5602, %v5603
        %v5605 = vrot.slane %v5537, 1
        %v5606 = vrot.slane %v5538, 1
        %v5607 = vsel %vm5595, %v5605, %v5606
        %v5608 = vrot.slane %v5539, 1
        %v5609 = vrot.slane %v5540, 1
        %v5610 = vsel %vm5595, %v5608, %v5609
        %v5611 = vrot.slane %v5541, 1
        %v5612 = vrot.slane %v5542, 1
        %v5613 = vsel %vm5595, %v5611, %v5612
        %v5614 = vrot.slane %v5543, 1
        %v5615 = vrot.slane %v5544, 1
        %v5616 = vsel %vm5595, %v5614, %v5615
        %v5617 = vrot.slane %v5545, 1
        %v5618 = vrot.slane %v5546, 1
        %v5619 = vsel %vm5595, %v5617, %v5618
        %v5620 = vrot.slane %v5547, 1
        %v5621 = vrot.slane %v5548, 1
        %v5622 = vsel %vm5595, %v5620, %v5621
        %v5623 = vrot.slane %v5549, 1
        %v5624 = vrot.slane %v5550, 1
        %v5625 = vsel %vm5595, %v5623, %v5624
        %v5626 = vrot.slane %v5551, 1
        %v5627 = vrot.slane %v5552, 1
        %v5628 = vsel %vm5595, %v5626, %v5627
        %v5629 = vrot.slane %v5553, 1
        %v5630 = vrot.slane %v5554, 1
        %v5631 = vsel %vm5595, %v5629, %v5630
        %v5632 = vrot.slane %v5555, 1
        %v5633 = vrot.slane %v5556, 1
        %v5634 = vsel %vm5595, %v5632, %v5633
        %v5635 = vrot.slane %v5557, 1
        %v5636 = vrot.slane %v5558, 1
        %v5637 = vsel %vm5595, %v5635, %v5636
        %v5638 = vrot.slane %v5559, 1
        %v5639 = vrot.slane %v5560, 1
        %v5640 = vsel %vm5595, %v5638, %v5639
        %v5641 = vrot.slane %v5561, 1
        %v5642 = vrot.slane %v5562, 1
        %v5643 = vsel %vm5595, %v5641, %v5642
        %v5692 = vadd.f32 %v5443, %v5596
        %v5693 = vadd.f32 %v5444, %v5598
        %v5694 = vadd.f32 %v5445, %v5597
        %v5695 = vadd.f32 %v5446, %v5599
        %v5696 = vadd.f32 %v5447, %v5601
        %v5697 = vadd.f32 %v5448, %v5600
        %v5698 = vadd.f32 %v5449, %v5602
        %v5699 = vadd.f32 %v5450, %v5604
        %v5700 = vadd.f32 %v5451, %v5603
        %v5701 = vadd.f32 %v5452, %v5605
        %v5702 = vadd.f32 %v5453, %v5607
        %v5703 = vadd.f32 %v5454, %v5606
        %v5704 = vadd.f32 %v5455, %v5608
        %v5705 = vadd.f32 %v5456, %v5610
        %v5706 = vadd.f32 %v5457, %v5609
        %v5707 = vadd.f32 %v5458, %v5611
        %v5708 = vadd.f32 %v5459, %v5613
        %v5709 = vadd.f32 %v5460, %v5612
        %v5710 = vadd.f32 %v5461, %v5614
        %v5711 = vadd.f32 %v5462, %v5616
        %v5712 = vadd.f32 %v5463, %v5615
        %v5713 = vadd.f32 %v5464, %v5617
        %v5714 = vadd.f32 %v5465, %v5619
        %v5715 = vadd.f32 %v5466, %v5618
        %v5716 = vadd.f32 %v5467, %v5620
        %v5717 = vadd.f32 %v5468, %v5622
        %v5718 = vadd.f32 %v5469, %v5621
        %v5719 = vadd.f32 %v5470, %v5623
        %v5720 = vadd.f32 %v5471, %v5625
        %v5721 = vadd.f32 %v5472, %v5624
        %v5722 = vadd.f32 %v5473, %v5626
        %v5723 = vadd.f32 %v5474, %v5628
        %v5724 = vadd.f32 %v5475, %v5627
        %v5725 = vadd.f32 %v5476, %v5629
        %v5726 = vadd.f32 %v5477, %v5631
        %v5727 = vadd.f32 %v5478, %v5630
        %v5728 = vadd.f32 %v5479, %v5632
        %v5729 = vadd.f32 %v5480, %v5634
        %v5730 = vadd.f32 %v5481, %v5633
        %v5731 = vadd.f32 %v5482, %v5635
        %v5732 = vadd.f32 %v5483, %v5637
        %v5733 = vadd.f32 %v5484, %v5636
        %v5734 = vadd.f32 %v5485, %v5638
        %v5735 = vadd.f32 %v5486, %v5640
        %v5736 = vadd.f32 %v5487, %v5639
        %v5737 = vadd.f32 %v5488, %v5641
        %v5738 = vadd.f32 %v5489, %v5643
        %v5739 = vadd.f32 %v5490, %v5642
        %v5740 = vld [vmem:[#allocation4 + $0x10] sm:$0x1]
        %v5741 = vld [vmem:[#allocation4 + $0x28] sm:$0x1]
        %v5742 = vld [vmem:[#allocation4 + $0x40] sm:$0x1]
        %v5743 = vld [vmem:[#allocation4 + $0x58] sm:$0x1]
        %v5744 = vld [vmem:[#allocation4 + $0x70] sm:$0x1]
        %v5745 = vld [vmem:[#allocation4 + $0x88] sm:$0x1]
        %v5746 = vld [vmem:[#allocation4 + $0xa0] sm:$0x1]
        %v5747 = vld [vmem:[#allocation4 + $0xb8] sm:$0x1]
        %v5748 = vld [vmem:[#allocation4 + $0xd0] sm:$0x1]
        %v5749 = vld [vmem:[#allocation4 + $0xe8] sm:$0x1]
        %v5750 = vld [vmem:[#allocation4 + $0x100] sm:$0x1]
        %v5751 = vld [vmem:[#allocation4 + $0x118] sm:$0x1]
        %v5752 = vld [vmem:[#allocation4 + $0x130] sm:$0x1]
        %v5753 = vld [vmem:[#allocation4 + $0x148] sm:$0x1]
        %v5754 = vld [vmem:[#allocation4 + $0x160] sm:$0x1]
        %v5755 = vld [vmem:[#allocation4 + $0x178] sm:$0x1]
        %v5756 = vunpack.c.l.bf16 %v5740
        %v5757 = vunpack.c.l.bf16 %v5741
        %v5758 = vunpack.c.l.bf16 %v5742
        %v5759 = vunpack.c.l.bf16 %v5743
        %v5760 = vunpack.c.l.bf16 %v5744
        %v5761 = vunpack.c.l.bf16 %v5745
        %v5762 = vunpack.c.l.bf16 %v5746
        %v5763 = vunpack.c.l.bf16 %v5747
        %v5764 = vunpack.c.l.bf16 %v5748
        %v5765 = vunpack.c.l.bf16 %v5749
        %v5766 = vunpack.c.l.bf16 %v5750
        %v5767 = vunpack.c.l.bf16 %v5751
        %v5768 = vunpack.c.l.bf16 %v5752
        %v5769 = vunpack.c.l.bf16 %v5753
        %v5770 = vunpack.c.l.bf16 %v5754
        %v5771 = vunpack.c.l.bf16 %v5755
        %s5772 = scalar_lea.vmem %s9, 2
        %v5773 = vld [vmem:[%s5772] sm:$0x1]
        %v5775 = vlaneseq
        %v5776 = vshrl.u32 %v5775, 7
        %v5777 = vsub.s32 0, %v5776
        %v5778 = vrot.slane %v5773, %v5777
        %v5780 = vmul.f32 %v5491, %v5778
        %v5781 = vmul.f32 %v5492, %v5778
        %v5782 = vmul.f32 %v5756, %v5778
        %v5783 = vmul.f32 %v5493, %v5778
        %v5784 = vmul.f32 %v5494, %v5778
        %v5785 = vmul.f32 %v5757, %v5778
        %v5786 = vmul.f32 %v5495, %v5778
        %v5787 = vmul.f32 %v5496, %v5778
        %v5788 = vmul.f32 %v5758, %v5778
        %v5789 = vmul.f32 %v5497, %v5778
        %v5790 = vmul.f32 %v5498, %v5778
        %v5791 = vmul.f32 %v5759, %v5778
        %v5792 = vmul.f32 %v5499, %v5778
        %v5793 = vmul.f32 %v5500, %v5778
        %v5794 = vmul.f32 %v5760, %v5778
        %v5795 = vmul.f32 %v5501, %v5778
        %v5796 = vmul.f32 %v5502, %v5778
        %v5797 = vmul.f32 %v5761, %v5778
        %v5798 = vmul.f32 %v5503, %v5778
        %v5799 = vmul.f32 %v5504, %v5778
        %v5800 = vmul.f32 %v5762, %v5778
        %v5801 = vmul.f32 %v5505, %v5778
        %v5802 = vmul.f32 %v5506, %v5778
        %v5803 = vmul.f32 %v5763, %v5778
        %v5804 = vmul.f32 %v5507, %v5778
        %v5805 = vmul.f32 %v5508, %v5778
        %v5806 = vmul.f32 %v5764, %v5778
        %v5807 = vmul.f32 %v5509, %v5778
        %v5808 = vmul.f32 %v5510, %v5778
        %v5809 = vmul.f32 %v5765, %v5778
        %v5810 = vmul.f32 %v5511, %v5778
        %v5811 = vmul.f32 %v5512, %v5778
        %v5812 = vmul.f32 %v5766, %v5778
        %v5813 = vmul.f32 %v5513, %v5778
        %v5814 = vmul.f32 %v5514, %v5778
        %v5815 = vmul.f32 %v5767, %v5778
        %v5816 = vmul.f32 %v5515, %v5778
        %v5817 = vmul.f32 %v5516, %v5778
        %v5818 = vmul.f32 %v5768, %v5778
        %v5819 = vmul.f32 %v5517, %v5778
        %v5820 = vmul.f32 %v5518, %v5778
        %v5821 = vmul.f32 %v5769, %v5778
        %v5822 = vmul.f32 %v5519, %v5778
        %v5823 = vmul.f32 %v5520, %v5778
        %v5824 = vmul.f32 %v5770, %v5778
        %v5825 = vmul.f32 %v5521, %v5778
        %v5826 = vmul.f32 %v5522, %v5778
        %v5827 = vmul.f32 %v5771, %v5778
        %vm5876 = vcmask 1045504
        %v5877 = vrot.slane %v5780, 2
        %v5878 = vrot.slane %v5781, 2
        %v5879 = vsel %vm5876, %v5877, %v5878
        %v5880 = vrot.slane %v5782, 2
        %v5881 = vsel %vm5876, %v5878, %v5880
        %v5882 = vrot.slane %v5783, 2
        %v5883 = vrot.slane %v5784, 2
        %v5884 = vsel %vm5876, %v5882, %v5883
        %v5885 = vrot.slane %v5785, 2
        %v5886 = vsel %vm5876, %v5883, %v5885
        %v5887 = vrot.slane %v5786, 2
        %v5888 = vrot.slane %v5787, 2
        %v5889 = vsel %vm5876, %v5887, %v5888
        %v5890 = vrot.slane %v5788, 2
        %v5891 = vsel %vm5876, %v5888, %v5890
        %v5892 = vrot.slane %v5789, 2
        %v5893 = vrot.slane %v5790, 2
        %v5894 = vsel %vm5876, %v5892, %v5893
        %v5895 = vrot.slane %v5791, 2
        %v5896 = vsel %vm5876, %v5893, %v5895
        %v5897 = vrot.slane %v5792, 2
        %v5898 = vrot.slane %v5793, 2
        %v5899 = vsel %vm5876, %v5897, %v5898
        %v5900 = vrot.slane %v5794, 2
        %v5901 = vsel %vm5876, %v5898, %v5900
        %v5902 = vrot.slane %v5795, 2
        %v5903 = vrot.slane %v5796, 2
        %v5904 = vsel %vm5876, %v5902, %v5903
        %v5905 = vrot.slane %v5797, 2
        %v5906 = vsel %vm5876, %v5903, %v5905
        %v5907 = vrot.slane %v5798, 2
        %v5908 = vrot.slane %v5799, 2
        %v5909 = vsel %vm5876, %v5907, %v5908
        %v5910 = vrot.slane %v5800, 2
        %v5911 = vsel %vm5876, %v5908, %v5910
        %v5912 = vrot.slane %v5801, 2
        %v5913 = vrot.slane %v5802, 2
        %v5914 = vsel %vm5876, %v5912, %v5913
        %v5915 = vrot.slane %v5803, 2
        %v5916 = vsel %vm5876, %v5913, %v5915
        %v5917 = vrot.slane %v5804, 2
        %v5918 = vrot.slane %v5805, 2
        %v5919 = vsel %vm5876, %v5917, %v5918
        %v5920 = vrot.slane %v5806, 2
        %v5921 = vsel %vm5876, %v5918, %v5920
        %v5922 = vrot.slane %v5807, 2
        %v5923 = vrot.slane %v5808, 2
        %v5924 = vsel %vm5876, %v5922, %v5923
        %v5925 = vrot.slane %v5809, 2
        %v5926 = vsel %vm5876, %v5923, %v5925
        %v5927 = vrot.slane %v5810, 2
        %v5928 = vrot.slane %v5811, 2
        %v5929 = vsel %vm5876, %v5927, %v5928
        %v5930 = vrot.slane %v5812, 2
        %v5931 = vsel %vm5876, %v5928, %v5930
        %v5932 = vrot.slane %v5813, 2
        %v5933 = vrot.slane %v5814, 2
        %v5934 = vsel %vm5876, %v5932, %v5933
        %v5935 = vrot.slane %v5815, 2
        %v5936 = vsel %vm5876, %v5933, %v5935
        %v5937 = vrot.slane %v5816, 2
        %v5938 = vrot.slane %v5817, 2
        %v5939 = vsel %vm5876, %v5937, %v5938
        %v5940 = vrot.slane %v5818, 2
        %v5941 = vsel %vm5876, %v5938, %v5940
        %v5942 = vrot.slane %v5819, 2
        %v5943 = vrot.slane %v5820, 2
        %v5944 = vsel %vm5876, %v5942, %v5943
        %v5945 = vrot.slane %v5821, 2
        %v5946 = vsel %vm5876, %v5943, %v5945
        %v5947 = vrot.slane %v5822, 2
        %v5948 = vrot.slane %v5823, 2
        %v5949 = vsel %vm5876, %v5947, %v5948
        %v5950 = vrot.slane %v5824, 2
        %v5951 = vsel %vm5876, %v5948, %v5950
        %v5952 = vrot.slane %v5825, 2
        %v5953 = vrot.slane %v5826, 2
        %v5954 = vsel %vm5876, %v5952, %v5953
        %v5955 = vrot.slane %v5827, 2
        %v5956 = vsel %vm5876, %v5953, %v5955
        %v6005 = vadd.f32 %v5692, %v5877
        %v6006 = vadd.f32 %v5693, %v5879
        %v6007 = vadd.f32 %v5694, %v5881
        %v6008 = vadd.f32 %v5695, %v5882
        %v6009 = vadd.f32 %v5696, %v5884
        %v6010 = vadd.f32 %v5697, %v5886
        %v6011 = vadd.f32 %v5698, %v5887
        %v6012 = vadd.f32 %v5699, %v5889
        %v6013 = vadd.f32 %v5700, %v5891
        %v6014 = vadd.f32 %v5701, %v5892
        %v6015 = vadd.f32 %v5702, %v5894
        %v6016 = vadd.f32 %v5703, %v5896
        %v6017 = vadd.f32 %v5704, %v5897
        %v6018 = vadd.f32 %v5705, %v5899
        %v6019 = vadd.f32 %v5706, %v5901
        %v6020 = vadd.f32 %v5707, %v5902
        %v6021 = vadd.f32 %v5708, %v5904
        %v6022 = vadd.f32 %v5709, %v5906
        %v6023 = vadd.f32 %v5710, %v5907
        %v6024 = vadd.f32 %v5711, %v5909
        %v6025 = vadd.f32 %v5712, %v5911
        %v6026 = vadd.f32 %v5713, %v5912
        %v6027 = vadd.f32 %v5714, %v5914
        %v6028 = vadd.f32 %v5715, %v5916
        %v6029 = vadd.f32 %v5716, %v5917
        %v6030 = vadd.f32 %v5717, %v5919
        %v6031 = vadd.f32 %v5718, %v5921
        %v6032 = vadd.f32 %v5719, %v5922
        %v6033 = vadd.f32 %v5720, %v5924
        %v6034 = vadd.f32 %v5721, %v5926
        %v6035 = vadd.f32 %v5722, %v5927
        %v6036 = vadd.f32 %v5723, %v5929
        %v6037 = vadd.f32 %v5724, %v5931
        %v6038 = vadd.f32 %v5725, %v5932
        %v6039 = vadd.f32 %v5726, %v5934
        %v6040 = vadd.f32 %v5727, %v5936
        %v6041 = vadd.f32 %v5728, %v5937
        %v6042 = vadd.f32 %v5729, %v5939
        %v6043 = vadd.f32 %v5730, %v5941
        %v6044 = vadd.f32 %v5731, %v5942
        %v6045 = vadd.f32 %v5732, %v5944
        %v6046 = vadd.f32 %v5733, %v5946
        %v6047 = vadd.f32 %v5734, %v5947
        %v6048 = vadd.f32 %v5735, %v5949
        %v6049 = vadd.f32 %v5736, %v5951
        %v6050 = vadd.f32 %v5737, %v5952
        %v6051 = vadd.f32 %v5738, %v5954
        %v6052 = vadd.f32 %v5739, %v5956
        %v6053 = vld [vmem:[%s495] sm:$0x80]
        %v6054 = vld [vmem:[%s495 + $0x8] sm:$0xff]
        %v6055 = vld [vmem:[%s495 + $0x18] sm:$0x80]
        %v6056 = vld [vmem:[%s495 + $0x20] sm:$0xff]
        %v6057 = vld [vmem:[%s495 + $0x30] sm:$0x80]
        %v6058 = vld [vmem:[%s495 + $0x38] sm:$0xff]
        %v6059 = vld [vmem:[%s495 + $0x48] sm:$0x80]
        %v6060 = vld [vmem:[%s495 + $0x50] sm:$0xff]
        %v6061 = vld [vmem:[%s495 + $0x60] sm:$0x80]
        %v6062 = vld [vmem:[%s495 + $0x68] sm:$0xff]
        %v6063 = vld [vmem:[%s495 + $0x78] sm:$0x80]
        %v6064 = vld [vmem:[%s495 + $0x80] sm:$0xff]
        %v6065 = vld [vmem:[%s495 + $0x90] sm:$0x80]
        %v6066 = vld [vmem:[%s495 + $0x98] sm:$0xff]
        %v6067 = vld [vmem:[%s495 + $0xa8] sm:$0x80]
        %v6068 = vld [vmem:[%s495 + $0xb0] sm:$0xff]
        %v6069 = vld [vmem:[%s495 + $0xc0] sm:$0x80]
        %v6070 = vld [vmem:[%s495 + $0xc8] sm:$0xff]
        %v6071 = vld [vmem:[%s495 + $0xd8] sm:$0x80]
        %v6072 = vld [vmem:[%s495 + $0xe0] sm:$0xff]
        %v6073 = vld [vmem:[%s495 + $0xf0] sm:$0x80]
        %v6074 = vld [vmem:[%s495 + $0xf8] sm:$0xff]
        %v6075 = vld [vmem:[%s495 + $0x108] sm:$0x80]
        %v6076 = vld [vmem:[%s495 + $0x110] sm:$0xff]
        %v6077 = vld [vmem:[%s495 + $0x120] sm:$0x80]
        %v6078 = vld [vmem:[%s495 + $0x128] sm:$0xff]
        %v6079 = vld [vmem:[%s495 + $0x138] sm:$0x80]
        %v6080 = vld [vmem:[%s495 + $0x140] sm:$0xff]
        %v6081 = vld [vmem:[%s495 + $0x150] sm:$0x80]
        %v6082 = vld [vmem:[%s495 + $0x158] sm:$0xff]
        %v6083 = vld [vmem:[%s495 + $0x168] sm:$0x80]
        %v6084 = vld [vmem:[%s495 + $0x170] sm:$0xff]
        %v6117 = vrot.slane %v6053, 4
        %v6118 = vrot.slane %v6054, 4
        %v6119 = vsel %vm5307, %v6117, %v6118
        %v6120 = vrot.slane %v6055, 4
        %v6121 = vrot.slane %v6056, 4
        %v6122 = vsel %vm5307, %v6120, %v6121
        %v6123 = vrot.slane %v6057, 4
        %v6124 = vrot.slane %v6058, 4
        %v6125 = vsel %vm5307, %v6123, %v6124
        %v6126 = vrot.slane %v6059, 4
        %v6127 = vrot.slane %v6060, 4
        %v6128 = vsel %vm5307, %v6126, %v6127
        %v6129 = vrot.slane %v6061, 4
        %v6130 = vrot.slane %v6062, 4
        %v6131 = vsel %vm5307, %v6129, %v6130
        %v6132 = vrot.slane %v6063, 4
        %v6133 = vrot.slane %v6064, 4
        %v6134 = vsel %vm5307, %v6132, %v6133
        %v6135 = vrot.slane %v6065, 4
        %v6136 = vrot.slane %v6066, 4
        %v6137 = vsel %vm5307, %v6135, %v6136
        %v6138 = vrot.slane %v6067, 4
        %v6139 = vrot.slane %v6068, 4
        %v6140 = vsel %vm5307, %v6138, %v6139
        %v6141 = vrot.slane %v6069, 4
        %v6142 = vrot.slane %v6070, 4
        %v6143 = vsel %vm5307, %v6141, %v6142
        %v6144 = vrot.slane %v6071, 4
        %v6145 = vrot.slane %v6072, 4
        %v6146 = vsel %vm5307, %v6144, %v6145
        %v6147 = vrot.slane %v6073, 4
        %v6148 = vrot.slane %v6074, 4
        %v6149 = vsel %vm5307, %v6147, %v6148
        %v6150 = vrot.slane %v6075, 4
        %v6151 = vrot.slane %v6076, 4
        %v6152 = vsel %vm5307, %v6150, %v6151
        %v6153 = vrot.slane %v6077, 4
        %v6154 = vrot.slane %v6078, 4
        %v6155 = vsel %vm5307, %v6153, %v6154
        %v6156 = vrot.slane %v6079, 4
        %v6157 = vrot.slane %v6080, 4
        %v6158 = vsel %vm5307, %v6156, %v6157
        %v6159 = vrot.slane %v6081, 4
        %v6160 = vrot.slane %v6082, 4
        %v6161 = vsel %vm5307, %v6159, %v6160
        %v6162 = vrot.slane %v6083, 4
        %v6163 = vrot.slane %v6084, 4
        %v6164 = vsel %vm5307, %v6162, %v6163
        %v6197 = vunpack.c.l.bf16 %v6119
        %v6198 = vunpack.c.h.bf16 %v6119
        %v6199 = vunpack.c.l.bf16 %v6118
        %v6200 = vunpack.c.l.bf16 %v6122
        %v6201 = vunpack.c.h.bf16 %v6122
        %v6202 = vunpack.c.l.bf16 %v6121
        %v6203 = vunpack.c.l.bf16 %v6125
        %v6204 = vunpack.c.h.bf16 %v6125
        %v6205 = vunpack.c.l.bf16 %v6124
        %v6206 = vunpack.c.l.bf16 %v6128
        %v6207 = vunpack.c.h.bf16 %v6128
        %v6208 = vunpack.c.l.bf16 %v6127
        %v6209 = vunpack.c.l.bf16 %v6131
        %v6210 = vunpack.c.h.bf16 %v6131
        %v6211 = vunpack.c.l.bf16 %v6130
        %v6212 = vunpack.c.l.bf16 %v6134
        %v6213 = vunpack.c.h.bf16 %v6134
        %v6214 = vunpack.c.l.bf16 %v6133
        %v6215 = vunpack.c.l.bf16 %v6137
        %v6216 = vunpack.c.h.bf16 %v6137
        %v6217 = vunpack.c.l.bf16 %v6136
        %v6218 = vunpack.c.l.bf16 %v6140
        %v6219 = vunpack.c.h.bf16 %v6140
        %v6220 = vunpack.c.l.bf16 %v6139
        %v6221 = vunpack.c.l.bf16 %v6143
        %v6222 = vunpack.c.h.bf16 %v6143
        %v6223 = vunpack.c.l.bf16 %v6142
        %v6224 = vunpack.c.l.bf16 %v6146
        %v6225 = vunpack.c.h.bf16 %v6146
        %v6226 = vunpack.c.l.bf16 %v6145
        %v6227 = vunpack.c.l.bf16 %v6149
        %v6228 = vunpack.c.h.bf16 %v6149
        %v6229 = vunpack.c.l.bf16 %v6148
        %v6230 = vunpack.c.l.bf16 %v6152
        %v6231 = vunpack.c.h.bf16 %v6152
        %v6232 = vunpack.c.l.bf16 %v6151
        %v6233 = vunpack.c.l.bf16 %v6155
        %v6234 = vunpack.c.h.bf16 %v6155
        %v6235 = vunpack.c.l.bf16 %v6154
        %v6236 = vunpack.c.l.bf16 %v6158
        %v6237 = vunpack.c.h.bf16 %v6158
        %v6238 = vunpack.c.l.bf16 %v6157
        %v6239 = vunpack.c.l.bf16 %v6161
        %v6240 = vunpack.c.h.bf16 %v6161
        %v6241 = vunpack.c.l.bf16 %v6160
        %v6242 = vunpack.c.l.bf16 %v6164
        %v6243 = vunpack.c.h.bf16 %v6164
        %v6244 = vunpack.c.l.bf16 %v6163
        %s6245 = scalar_lea.vmem %s9, 3
        %v6246 = vld [vmem:[%s6245] sm:$0x1]
        %v6248 = vlaneseq
        %v6249 = vshrl.u32 %v6248, 7
        %v6250 = vsub.s32 0, %v6249
        %v6251 = vrot.slane %v6246, %v6250
        %v6253 = vmul.f32 %v6197, %v6251
        %v6254 = vmul.f32 %v6198, %v6251
        %v6255 = vmul.f32 %v6199, %v6251
        %v6256 = vmul.f32 %v6200, %v6251
        %v6257 = vmul.f32 %v6201, %v6251
        %v6258 = vmul.f32 %v6202, %v6251
        %v6259 = vmul.f32 %v6203, %v6251
        %v6260 = vmul.f32 %v6204, %v6251
        %v6261 = vmul.f32 %v6205, %v6251
        %v6262 = vmul.f32 %v6206, %v6251
        %v6263 = vmul.f32 %v6207, %v6251
        %v6264 = vmul.f32 %v6208, %v6251
        %v6265 = vmul.f32 %v6209, %v6251
        %v6266 = vmul.f32 %v6210, %v6251
        %v6267 = vmul.f32 %v6211, %v6251
        %v6268 = vmul.f32 %v6212, %v6251
        %v6269 = vmul.f32 %v6213, %v6251
        %v6270 = vmul.f32 %v6214, %v6251
        %v6271 = vmul.f32 %v6215, %v6251
        %v6272 = vmul.f32 %v6216, %v6251
        %v6273 = vmul.f32 %v6217, %v6251
        %v6274 = vmul.f32 %v6218, %v6251
        %v6275 = vmul.f32 %v6219, %v6251
        %v6276 = vmul.f32 %v6220, %v6251
        %v6277 = vmul.f32 %v6221, %v6251
        %v6278 = vmul.f32 %v6222, %v6251
        %v6279 = vmul.f32 %v6223, %v6251
        %v6280 = vmul.f32 %v6224, %v6251
        %v6281 = vmul.f32 %v6225, %v6251
        %v6282 = vmul.f32 %v6226, %v6251
        %v6283 = vmul.f32 %v6227, %v6251
        %v6284 = vmul.f32 %v6228, %v6251
        %v6285 = vmul.f32 %v6229, %v6251
        %v6286 = vmul.f32 %v6230, %v6251
        %v6287 = vmul.f32 %v6231, %v6251
        %v6288 = vmul.f32 %v6232, %v6251
        %v6289 = vmul.f32 %v6233, %v6251
        %v6290 = vmul.f32 %v6234, %v6251
        %v6291 = vmul.f32 %v6235, %v6251
        %v6292 = vmul.f32 %v6236, %v6251
        %v6293 = vmul.f32 %v6237, %v6251
        %v6294 = vmul.f32 %v6238, %v6251
        %v6295 = vmul.f32 %v6239, %v6251
        %v6296 = vmul.f32 %v6240, %v6251
        %v6297 = vmul.f32 %v6241, %v6251
        %v6298 = vmul.f32 %v6242, %v6251
        %v6299 = vmul.f32 %v6243, %v6251
        %v6300 = vmul.f32 %v6244, %v6251
        %v6301 = vadd.f32 %v6005, %v6253
        %v6302 = vadd.f32 %v6006, %v6254
        %v6303 = vadd.f32 %v6007, %v6255
        %v6304 = vadd.f32 %v6008, %v6256
        %v6305 = vadd.f32 %v6009, %v6257
        %v6306 = vadd.f32 %v6010, %v6258
        %v6307 = vadd.f32 %v6011, %v6259
        %v6308 = vadd.f32 %v6012, %v6260
        %v6309 = vadd.f32 %v6013, %v6261
        %v6310 = vadd.f32 %v6014, %v6262
        %v6311 = vadd.f32 %v6015, %v6263
        %v6312 = vadd.f32 %v6016, %v6264
        %v6313 = vadd.f32 %v6017, %v6265
        %v6314 = vadd.f32 %v6018, %v6266
        %v6315 = vadd.f32 %v6019, %v6267
        %v6316 = vadd.f32 %v6020, %v6268
        %v6317 = vadd.f32 %v6021, %v6269
        %v6318 = vadd.f32 %v6022, %v6270
        %v6319 = vadd.f32 %v6023, %v6271
        %v6320 = vadd.f32 %v6024, %v6272
        %v6321 = vadd.f32 %v6025, %v6273
        %v6322 = vadd.f32 %v6026, %v6274
        %v6323 = vadd.f32 %v6027, %v6275
        %v6324 = vadd.f32 %v6028, %v6276
        %v6325 = vadd.f32 %v6029, %v6277
        %v6326 = vadd.f32 %v6030, %v6278
        %v6327 = vadd.f32 %v6031, %v6279
        %v6328 = vadd.f32 %v6032, %v6280
        %v6329 = vadd.f32 %v6033, %v6281
        %v6330 = vadd.f32 %v6034, %v6282
        %v6331 = vadd.f32 %v6035, %v6283
        %v6332 = vadd.f32 %v6036, %v6284
        %v6333 = vadd.f32 %v6037, %v6285
        %v6334 = vadd.f32 %v6038, %v6286
        %v6335 = vadd.f32 %v6039, %v6287
        %v6336 = vadd.f32 %v6040, %v6288
        %v6337 = vadd.f32 %v6041, %v6289
        %v6338 = vadd.f32 %v6042, %v6290
        %v6339 = vadd.f32 %v6043, %v6291
        %v6340 = vadd.f32 %v6044, %v6292
        %v6341 = vadd.f32 %v6045, %v6293
        %v6342 = vadd.f32 %v6046, %v6294
        %v6343 = vadd.f32 %v6047, %v6295
        %v6344 = vadd.f32 %v6048, %v6296
        %v6345 = vadd.f32 %v6049, %v6297
        %v6346 = vadd.f32 %v6050, %v6298
        %v6347 = vadd.f32 %v6051, %v6299
        %v6348 = vadd.f32 %v6052, %v6300
        %v6349 = vunpack.c.l.bf16 %v6054
        %v6350 = vunpack.c.h.bf16 %v6054
        %v6351 = vunpack.c.l.bf16 %v6056
        %v6352 = vunpack.c.h.bf16 %v6056
        %v6353 = vunpack.c.l.bf16 %v6058
        %v6354 = vunpack.c.h.bf16 %v6058
        %v6355 = vunpack.c.l.bf16 %v6060
        %v6356 = vunpack.c.h.bf16 %v6060
        %v6357 = vunpack.c.l.bf16 %v6062
        %v6358 = vunpack.c.h.bf16 %v6062
        %v6359 = vunpack.c.l.bf16 %v6064
        %v6360 = vunpack.c.h.bf16 %v6064
        %v6361 = vunpack.c.l.bf16 %v6066
        %v6362 = vunpack.c.h.bf16 %v6066
        %v6363 = vunpack.c.l.bf16 %v6068
        %v6364 = vunpack.c.h.bf16 %v6068
        %v6365 = vunpack.c.l.bf16 %v6070
        %v6366 = vunpack.c.h.bf16 %v6070
        %v6367 = vunpack.c.l.bf16 %v6072
        %v6368 = vunpack.c.h.bf16 %v6072
        %v6369 = vunpack.c.l.bf16 %v6074
        %v6370 = vunpack.c.h.bf16 %v6074
        %v6371 = vunpack.c.l.bf16 %v6076
        %v6372 = vunpack.c.h.bf16 %v6076
        %v6373 = vunpack.c.l.bf16 %v6078
        %v6374 = vunpack.c.h.bf16 %v6078
        %v6375 = vunpack.c.l.bf16 %v6080
        %v6376 = vunpack.c.h.bf16 %v6080
        %v6377 = vunpack.c.l.bf16 %v6082
        %v6378 = vunpack.c.h.bf16 %v6082
        %v6379 = vunpack.c.l.bf16 %v6084
        %v6380 = vunpack.c.h.bf16 %v6084
        %s6381 = scalar_lea.vmem %s9, 4
        %v6382 = vld [vmem:[%s6381] sm:$0x1]
        %v6384 = vlaneseq
        %v6385 = vshrl.u32 %v6384, 7
        %v6386 = vsub.s32 0, %v6385
        %v6387 = vrot.slane %v6382, %v6386
        %v6389 = vmul.f32 %v6349, %v6387
        %v6390 = vmul.f32 %v6350, %v6387
        %v6391 = vmul.f32 %v6351, %v6387
        %v6392 = vmul.f32 %v6352, %v6387
        %v6393 = vmul.f32 %v6353, %v6387
        %v6394 = vmul.f32 %v6354, %v6387
        %v6395 = vmul.f32 %v6355, %v6387
        %v6396 = vmul.f32 %v6356, %v6387
        %v6397 = vmul.f32 %v6357, %v6387
        %v6398 = vmul.f32 %v6358, %v6387
        %v6399 = vmul.f32 %v6359, %v6387
        %v6400 = vmul.f32 %v6360, %v6387
        %v6401 = vmul.f32 %v6361, %v6387
        %v6402 = vmul.f32 %v6362, %v6387
        %v6403 = vmul.f32 %v6363, %v6387
        %v6404 = vmul.f32 %v6364, %v6387
        %v6405 = vmul.f32 %v6365, %v6387
        %v6406 = vmul.f32 %v6366, %v6387
        %v6407 = vmul.f32 %v6367, %v6387
        %v6408 = vmul.f32 %v6368, %v6387
        %v6409 = vmul.f32 %v6369, %v6387
        %v6410 = vmul.f32 %v6370, %v6387
        %v6411 = vmul.f32 %v6371, %v6387
        %v6412 = vmul.f32 %v6372, %v6387
        %v6413 = vmul.f32 %v6373, %v6387
        %v6414 = vmul.f32 %v6374, %v6387
        %v6415 = vmul.f32 %v6375, %v6387
        %v6416 = vmul.f32 %v6376, %v6387
        %v6417 = vmul.f32 %v6377, %v6387
        %v6418 = vmul.f32 %v6378, %v6387
        %v6419 = vmul.f32 %v6379, %v6387
        %v6420 = vmul.f32 %v6380, %v6387
        %v6453 = vrot.slane %v6389, 1
        %v6454 = vrot.slane %v6390, 1
        %v6455 = vsel %vm5595, %v6453, %v6454
        %v6456 = vrot.slane %v6391, 1
        %v6457 = vrot.slane %v6392, 1
        %v6458 = vsel %vm5595, %v6456, %v6457
        %v6459 = vrot.slane %v6393, 1
        %v6460 = vrot.slane %v6394, 1
        %v6461 = vsel %vm5595, %v6459, %v6460
        %v6462 = vrot.slane %v6395, 1
        %v6463 = vrot.slane %v6396, 1
        %v6464 = vsel %vm5595, %v6462, %v6463
        %v6465 = vrot.slane %v6397, 1
        %v6466 = vrot.slane %v6398, 1
        %v6467 = vsel %vm5595, %v6465, %v6466
        %v6468 = vrot.slane %v6399, 1
        %v6469 = vrot.slane %v6400, 1
        %v6470 = vsel %vm5595, %v6468, %v6469
        %v6471 = vrot.slane %v6401, 1
        %v6472 = vrot.slane %v6402, 1
        %v6473 = vsel %vm5595, %v6471, %v6472
        %v6474 = vrot.slane %v6403, 1
        %v6475 = vrot.slane %v6404, 1
        %v6476 = vsel %vm5595, %v6474, %v6475
        %v6477 = vrot.slane %v6405, 1
        %v6478 = vrot.slane %v6406, 1
        %v6479 = vsel %vm5595, %v6477, %v6478
        %v6480 = vrot.slane %v6407, 1
        %v6481 = vrot.slane %v6408, 1
        %v6482 = vsel %vm5595, %v6480, %v6481
        %v6483 = vrot.slane %v6409, 1
        %v6484 = vrot.slane %v6410, 1
        %v6485 = vsel %vm5595, %v6483, %v6484
        %v6486 = vrot.slane %v6411, 1
        %v6487 = vrot.slane %v6412, 1
        %v6488 = vsel %vm5595, %v6486, %v6487
        %v6489 = vrot.slane %v6413, 1
        %v6490 = vrot.slane %v6414, 1
        %v6491 = vsel %vm5595, %v6489, %v6490
        %v6492 = vrot.slane %v6415, 1
        %v6493 = vrot.slane %v6416, 1
        %v6494 = vsel %vm5595, %v6492, %v6493
        %v6495 = vrot.slane %v6417, 1
        %v6496 = vrot.slane %v6418, 1
        %v6497 = vsel %vm5595, %v6495, %v6496
        %v6498 = vrot.slane %v6419, 1
        %v6499 = vrot.slane %v6420, 1
        %v6500 = vsel %vm5595, %v6498, %v6499
        %v6549 = vadd.f32 %v6301, %v6453
        %v6550 = vadd.f32 %v6302, %v6455
        %v6551 = vadd.f32 %v6303, %v6454
        %v6552 = vadd.f32 %v6304, %v6456
        %v6553 = vadd.f32 %v6305, %v6458
        %v6554 = vadd.f32 %v6306, %v6457
        %v6555 = vadd.f32 %v6307, %v6459
        %v6556 = vadd.f32 %v6308, %v6461
        %v6557 = vadd.f32 %v6309, %v6460
        %v6558 = vadd.f32 %v6310, %v6462
        %v6559 = vadd.f32 %v6311, %v6464
        %v6560 = vadd.f32 %v6312, %v6463
        %v6561 = vadd.f32 %v6313, %v6465
        %v6562 = vadd.f32 %v6314, %v6467
        %v6563 = vadd.f32 %v6315, %v6466
        %v6564 = vadd.f32 %v6316, %v6468
        %v6565 = vadd.f32 %v6317, %v6470
        %v6566 = vadd.f32 %v6318, %v6469
        %v6567 = vadd.f32 %v6319, %v6471
        %v6568 = vadd.f32 %v6320, %v6473
        %v6569 = vadd.f32 %v6321, %v6472
        %v6570 = vadd.f32 %v6322, %v6474
        %v6571 = vadd.f32 %v6323, %v6476
        %v6572 = vadd.f32 %v6324, %v6475
        %v6573 = vadd.f32 %v6325, %v6477
        %v6574 = vadd.f32 %v6326, %v6479
        %v6575 = vadd.f32 %v6327, %v6478
        %v6576 = vadd.f32 %v6328, %v6480
        %v6577 = vadd.f32 %v6329, %v6482
        %v6578 = vadd.f32 %v6330, %v6481
        %v6579 = vadd.f32 %v6331, %v6483
        %v6580 = vadd.f32 %v6332, %v6485
        %v6581 = vadd.f32 %v6333, %v6484
        %v6582 = vadd.f32 %v6334, %v6486
        %v6583 = vadd.f32 %v6335, %v6488
        %v6584 = vadd.f32 %v6336, %v6487
        %v6585 = vadd.f32 %v6337, %v6489
        %v6586 = vadd.f32 %v6338, %v6491
        %v6587 = vadd.f32 %v6339, %v6490
        %v6588 = vadd.f32 %v6340, %v6492
        %v6589 = vadd.f32 %v6341, %v6494
        %v6590 = vadd.f32 %v6342, %v6493
        %v6591 = vadd.f32 %v6343, %v6495
        %v6592 = vadd.f32 %v6344, %v6497
        %v6593 = vadd.f32 %v6345, %v6496
        %v6594 = vadd.f32 %v6346, %v6498
        %v6595 = vadd.f32 %v6347, %v6500
        %v6596 = vadd.f32 %v6348, %v6499
        %v6597 = vld [vmem:[%s495 + $0x10] sm:$0x1]
        %v6598 = vld [vmem:[%s495 + $0x28] sm:$0x1]
        %v6599 = vld [vmem:[%s495 + $0x40] sm:$0x1]
        %v6600 = vld [vmem:[%s495 + $0x58] sm:$0x1]
        %v6601 = vld [vmem:[%s495 + $0x70] sm:$0x1]
        %v6602 = vld [vmem:[%s495 + $0x88] sm:$0x1]
        %v6603 = vld [vmem:[%s495 + $0xa0] sm:$0x1]
        %v6604 = vld [vmem:[%s495 + $0xb8] sm:$0x1]
        %v6605 = vld [vmem:[%s495 + $0xd0] sm:$0x1]
        %v6606 = vld [vmem:[%s495 + $0xe8] sm:$0x1]
        %v6607 = vld [vmem:[%s495 + $0x100] sm:$0x1]
        %v6608 = vld [vmem:[%s495 + $0x118] sm:$0x1]
        %v6609 = vld [vmem:[%s495 + $0x130] sm:$0x1]
        %v6610 = vld [vmem:[%s495 + $0x148] sm:$0x1]
        %v6611 = vld [vmem:[%s495 + $0x160] sm:$0x1]
        %v6612 = vld [vmem:[%s495 + $0x178] sm:$0x1]
        %v6613 = vunpack.c.l.bf16 %v6597
        %v6614 = vunpack.c.l.bf16 %v6598
        %v6615 = vunpack.c.l.bf16 %v6599
        %v6616 = vunpack.c.l.bf16 %v6600
        %v6617 = vunpack.c.l.bf16 %v6601
        %v6618 = vunpack.c.l.bf16 %v6602
        %v6619 = vunpack.c.l.bf16 %v6603
        %v6620 = vunpack.c.l.bf16 %v6604
        %v6621 = vunpack.c.l.bf16 %v6605
        %v6622 = vunpack.c.l.bf16 %v6606
        %v6623 = vunpack.c.l.bf16 %v6607
        %v6624 = vunpack.c.l.bf16 %v6608
        %v6625 = vunpack.c.l.bf16 %v6609
        %v6626 = vunpack.c.l.bf16 %v6610
        %v6627 = vunpack.c.l.bf16 %v6611
        %v6628 = vunpack.c.l.bf16 %v6612
        %s6629 = scalar_lea.vmem %s9, 5
        %v6630 = vld [vmem:[%s6629] sm:$0x1]
        %v6632 = vlaneseq
        %v6633 = vshrl.u32 %v6632, 7
        %v6634 = vsub.s32 0, %v6633
        %v6635 = vrot.slane %v6630, %v6634
        %v6637 = vmul.f32 %v6349, %v6635
        %v6638 = vmul.f32 %v6350, %v6635
        %v6639 = vmul.f32 %v6613, %v6635
        %v6640 = vmul.f32 %v6351, %v6635
        %v6641 = vmul.f32 %v6352, %v6635
        %v6642 = vmul.f32 %v6614, %v6635
        %v6643 = vmul.f32 %v6353, %v6635
        %v6644 = vmul.f32 %v6354, %v6635
        %v6645 = vmul.f32 %v6615, %v6635
        %v6646 = vmul.f32 %v6355, %v6635
        %v6647 = vmul.f32 %v6356, %v6635
        %v6648 = vmul.f32 %v6616, %v6635
        %v6649 = vmul.f32 %v6357, %v6635
        %v6650 = vmul.f32 %v6358, %v6635
        %v6651 = vmul.f32 %v6617, %v6635
        %v6652 = vmul.f32 %v6359, %v6635
        %v6653 = vmul.f32 %v6360, %v6635
        %v6654 = vmul.f32 %v6618, %v6635
        %v6655 = vmul.f32 %v6361, %v6635
        %v6656 = vmul.f32 %v6362, %v6635
        %v6657 = vmul.f32 %v6619, %v6635
        %v6658 = vmul.f32 %v6363, %v6635
        %v6659 = vmul.f32 %v6364, %v6635
        %v6660 = vmul.f32 %v6620, %v6635
        %v6661 = vmul.f32 %v6365, %v6635
        %v6662 = vmul.f32 %v6366, %v6635
        %v6663 = vmul.f32 %v6621, %v6635
        %v6664 = vmul.f32 %v6367, %v6635
        %v6665 = vmul.f32 %v6368, %v6635
        %v6666 = vmul.f32 %v6622, %v6635
        %v6667 = vmul.f32 %v6369, %v6635
        %v6668 = vmul.f32 %v6370, %v6635
        %v6669 = vmul.f32 %v6623, %v6635
        %v6670 = vmul.f32 %v6371, %v6635
        %v6671 = vmul.f32 %v6372, %v6635
        %v6672 = vmul.f32 %v6624, %v6635
        %v6673 = vmul.f32 %v6373, %v6635
        %v6674 = vmul.f32 %v6374, %v6635
        %v6675 = vmul.f32 %v6625, %v6635
        %v6676 = vmul.f32 %v6375, %v6635
        %v6677 = vmul.f32 %v6376, %v6635
        %v6678 = vmul.f32 %v6626, %v6635
        %v6679 = vmul.f32 %v6377, %v6635
        %v6680 = vmul.f32 %v6378, %v6635
        %v6681 = vmul.f32 %v6627, %v6635
        %v6682 = vmul.f32 %v6379, %v6635
        %v6683 = vmul.f32 %v6380, %v6635
        %v6684 = vmul.f32 %v6628, %v6635
        %v6733 = vrot.slane %v6637, 2
        %v6734 = vrot.slane %v6638, 2
        %v6735 = vsel %vm5876, %v6733, %v6734
        %v6736 = vrot.slane %v6639, 2
        %v6737 = vsel %vm5876, %v6734, %v6736
        %v6738 = vrot.slane %v6640, 2
        %v6739 = vrot.slane %v6641, 2
        %v6740 = vsel %vm5876, %v6738, %v6739
        %v6741 = vrot.slane %v6642, 2
        %v6742 = vsel %vm5876, %v6739, %v6741
        %v6743 = vrot.slane %v6643, 2
        %v6744 = vrot.slane %v6644, 2
        %v6745 = vsel %vm5876, %v6743, %v6744
        %v6746 = vrot.slane %v6645, 2
        %v6747 = vsel %vm5876, %v6744, %v6746
        %v6748 = vrot.slane %v6646, 2
        %v6749 = vrot.slane %v6647, 2
        %v6750 = vsel %vm5876, %v6748, %v6749
        %v6751 = vrot.slane %v6648, 2
        %v6752 = vsel %vm5876, %v6749, %v6751
        %v6753 = vrot.slane %v6649, 2
        %v6754 = vrot.slane %v6650, 2
        %v6755 = vsel %vm5876, %v6753, %v6754
        %v6756 = vrot.slane %v6651, 2
        %v6757 = vsel %vm5876, %v6754, %v6756
        %v6758 = vrot.slane %v6652, 2
        %v6759 = vrot.slane %v6653, 2
        %v6760 = vsel %vm5876, %v6758, %v6759
        %v6761 = vrot.slane %v6654, 2
        %v6762 = vsel %vm5876, %v6759, %v6761
        %v6763 = vrot.slane %v6655, 2
        %v6764 = vrot.slane %v6656, 2
        %v6765 = vsel %vm5876, %v6763, %v6764
        %v6766 = vrot.slane %v6657, 2
        %v6767 = vsel %vm5876, %v6764, %v6766
        %v6768 = vrot.slane %v6658, 2
        %v6769 = vrot.slane %v6659, 2
        %v6770 = vsel %vm5876, %v6768, %v6769
        %v6771 = vrot.slane %v6660, 2
        %v6772 = vsel %vm5876, %v6769, %v6771
        %v6773 = vrot.slane %v6661, 2
        %v6774 = vrot.slane %v6662, 2
        %v6775 = vsel %vm5876, %v6773, %v6774
        %v6776 = vrot.slane %v6663, 2
        %v6777 = vsel %vm5876, %v6774, %v6776
        %v6778 = vrot.slane %v6664, 2
        %v6779 = vrot.slane %v6665, 2
        %v6780 = vsel %vm5876, %v6778, %v6779
        %v6781 = vrot.slane %v6666, 2
        %v6782 = vsel %vm5876, %v6779, %v6781
        %v6783 = vrot.slane %v6667, 2
        %v6784 = vrot.slane %v6668, 2
        %v6785 = vsel %vm5876, %v6783, %v6784
        %v6786 = vrot.slane %v6669, 2
        %v6787 = vsel %vm5876, %v6784, %v6786
        %v6788 = vrot.slane %v6670, 2
        %v6789 = vrot.slane %v6671, 2
        %v6790 = vsel %vm5876, %v6788, %v6789
        %v6791 = vrot.slane %v6672, 2
        %v6792 = vsel %vm5876, %v6789, %v6791
        %v6793 = vrot.slane %v6673, 2
        %v6794 = vrot.slane %v6674, 2
        %v6795 = vsel %vm5876, %v6793, %v6794
        %v6796 = vrot.slane %v6675, 2
        %v6797 = vsel %vm5876, %v6794, %v6796
        %v6798 = vrot.slane %v6676, 2
        %v6799 = vrot.slane %v6677, 2
        %v6800 = vsel %vm5876, %v6798, %v6799
        %v6801 = vrot.slane %v6678, 2
        %v6802 = vsel %vm5876, %v6799, %v6801
        %v6803 = vrot.slane %v6679, 2
        %v6804 = vrot.slane %v6680, 2
        %v6805 = vsel %vm5876, %v6803, %v6804
        %v6806 = vrot.slane %v6681, 2
        %v6807 = vsel %vm5876, %v6804, %v6806
        %v6808 = vrot.slane %v6682, 2
        %v6809 = vrot.slane %v6683, 2
        %v6810 = vsel %vm5876, %v6808, %v6809
        %v6811 = vrot.slane %v6684, 2
        %v6812 = vsel %vm5876, %v6809, %v6811
        %v6861 = vadd.f32 %v6549, %v6733
        %v6862 = vadd.f32 %v6550, %v6735
        %v6863 = vadd.f32 %v6551, %v6737
        %v6864 = vadd.f32 %v6552, %v6738
        %v6865 = vadd.f32 %v6553, %v6740
        %v6866 = vadd.f32 %v6554, %v6742
        %v6867 = vadd.f32 %v6555, %v6743
        %v6868 = vadd.f32 %v6556, %v6745
        %v6869 = vadd.f32 %v6557, %v6747
        %v6870 = vadd.f32 %v6558, %v6748
        %v6871 = vadd.f32 %v6559, %v6750
        %v6872 = vadd.f32 %v6560, %v6752
        %v6873 = vadd.f32 %v6561, %v6753
        %v6874 = vadd.f32 %v6562, %v6755
        %v6875 = vadd.f32 %v6563, %v6757
        %v6876 = vadd.f32 %v6564, %v6758
        %v6877 = vadd.f32 %v6565, %v6760
        %v6878 = vadd.f32 %v6566, %v6762
        %v6879 = vadd.f32 %v6567, %v6763
        %v6880 = vadd.f32 %v6568, %v6765
        %v6881 = vadd.f32 %v6569, %v6767
        %v6882 = vadd.f32 %v6570, %v6768
        %v6883 = vadd.f32 %v6571, %v6770
        %v6884 = vadd.f32 %v6572, %v6772
        %v6885 = vadd.f32 %v6573, %v6773
        %v6886 = vadd.f32 %v6574, %v6775
        %v6887 = vadd.f32 %v6575, %v6777
        %v6888 = vadd.f32 %v6576, %v6778
        %v6889 = vadd.f32 %v6577, %v6780
        %v6890 = vadd.f32 %v6578, %v6782
        %v6891 = vadd.f32 %v6579, %v6783
        %v6892 = vadd.f32 %v6580, %v6785
        %v6893 = vadd.f32 %v6581, %v6787
        %v6894 = vadd.f32 %v6582, %v6788
        %v6895 = vadd.f32 %v6583, %v6790
        %v6896 = vadd.f32 %v6584, %v6792
        %v6897 = vadd.f32 %v6585, %v6793
        %v6898 = vadd.f32 %v6586, %v6795
        %v6899 = vadd.f32 %v6587, %v6797
        %v6900 = vadd.f32 %v6588, %v6798
        %v6901 = vadd.f32 %v6589, %v6800
        %v6902 = vadd.f32 %v6590, %v6802
        %v6903 = vadd.f32 %v6591, %v6803
        %v6904 = vadd.f32 %v6592, %v6805
        %v6905 = vadd.f32 %v6593, %v6807
        %v6906 = vadd.f32 %v6594, %v6808
        %v6907 = vadd.f32 %v6595, %v6810
        %v6908 = vadd.f32 %v6596, %v6812
        %s6909 = scalar_lea.vmem [#allocation4], 48
        %v6910 = vld [vmem:[%s6909] sm:$0x80]
        %v6911 = vld [vmem:[%s6909 + $0x8] sm:$0xff]
        %v6912 = vld [vmem:[%s6909 + $0x18] sm:$0x80]
        %v6913 = vld [vmem:[%s6909 + $0x20] sm:$0xff]
        %v6914 = vld [vmem:[%s6909 + $0x30] sm:$0x80]
        %v6915 = vld [vmem:[%s6909 + $0x38] sm:$0xff]
        %v6916 = vld [vmem:[%s6909 + $0x48] sm:$0x80]
        %v6917 = vld [vmem:[%s6909 + $0x50] sm:$0xff]
        %v6918 = vld [vmem:[%s6909 + $0x60] sm:$0x80]
        %v6919 = vld [vmem:[%s6909 + $0x68] sm:$0xff]
        %v6920 = vld [vmem:[%s6909 + $0x78] sm:$0x80]
        %v6921 = vld [vmem:[%s6909 + $0x80] sm:$0xff]
        %v6922 = vld [vmem:[%s6909 + $0x90] sm:$0x80]
        %v6923 = vld [vmem:[%s6909 + $0x98] sm:$0xff]
        %v6924 = vld [vmem:[%s6909 + $0xa8] sm:$0x80]
        %v6925 = vld [vmem:[%s6909 + $0xb0] sm:$0xff]
        %v6926 = vld [vmem:[%s6909 + $0xc0] sm:$0x80]
        %v6927 = vld [vmem:[%s6909 + $0xc8] sm:$0xff]
        %v6928 = vld [vmem:[%s6909 + $0xd8] sm:$0x80]
        %v6929 = vld [vmem:[%s6909 + $0xe0] sm:$0xff]
        %v6930 = vld [vmem:[%s6909 + $0xf0] sm:$0x80]
        %v6931 = vld [vmem:[%s6909 + $0xf8] sm:$0xff]
        %v6932 = vld [vmem:[%s6909 + $0x108] sm:$0x80]
        %v6933 = vld [vmem:[%s6909 + $0x110] sm:$0xff]
        %v6934 = vld [vmem:[%s6909 + $0x120] sm:$0x80]
        %v6935 = vld [vmem:[%s6909 + $0x128] sm:$0xff]
        %v6936 = vld [vmem:[%s6909 + $0x138] sm:$0x80]
        %v6937 = vld [vmem:[%s6909 + $0x140] sm:$0xff]
        %v6938 = vld [vmem:[%s6909 + $0x150] sm:$0x80]
        %v6939 = vld [vmem:[%s6909 + $0x158] sm:$0xff]
        %v6940 = vld [vmem:[%s6909 + $0x168] sm:$0x80]
        %v6941 = vld [vmem:[%s6909 + $0x170] sm:$0xff]
        %v6974 = vrot.slane %v6910, 4
        %v6975 = vrot.slane %v6911, 4
        %v6976 = vsel %vm5307, %v6974, %v6975
        %v6977 = vrot.slane %v6912, 4
        %v6978 = vrot.slane %v6913, 4
        %v6979 = vsel %vm5307, %v6977, %v6978
        %v6980 = vrot.slane %v6914, 4
        %v6981 = vrot.slane %v6915, 4
        %v6982 = vsel %vm5307, %v6980, %v6981
        %v6983 = vrot.slane %v6916, 4
        %v6984 = vrot.slane %v6917, 4
        %v6985 = vsel %vm5307, %v6983, %v6984
        %v6986 = vrot.slane %v6918, 4
        %v6987 = vrot.slane %v6919, 4
        %v6988 = vsel %vm5307, %v6986, %v6987
        %v6989 = vrot.slane %v6920, 4
        %v6990 = vrot.slane %v6921, 4
        %v6991 = vsel %vm5307, %v6989, %v6990
        %v6992 = vrot.slane %v6922, 4
        %v6993 = vrot.slane %v6923, 4
        %v6994 = vsel %vm5307, %v6992, %v6993
        %v6995 = vrot.slane %v6924, 4
        %v6996 = vrot.slane %v6925, 4
        %v6997 = vsel %vm5307, %v6995, %v6996
        %v6998 = vrot.slane %v6926, 4
        %v6999 = vrot.slane %v6927, 4
        %v7000 = vsel %vm5307, %v6998, %v6999
        %v7001 = vrot.slane %v6928, 4
        %v7002 = vrot.slane %v6929, 4
        %v7003 = vsel %vm5307, %v7001, %v7002
        %v7004 = vrot.slane %v6930, 4
        %v7005 = vrot.slane %v6931, 4
        %v7006 = vsel %vm5307, %v7004, %v7005
        %v7007 = vrot.slane %v6932, 4
        %v7008 = vrot.slane %v6933, 4
        %v7009 = vsel %vm5307, %v7007, %v7008
        %v7010 = vrot.slane %v6934, 4
        %v7011 = vrot.slane %v6935, 4
        %v7012 = vsel %vm5307, %v7010, %v7011
        %v7013 = vrot.slane %v6936, 4
        %v7014 = vrot.slane %v6937, 4
        %v7015 = vsel %vm5307, %v7013, %v7014
        %v7016 = vrot.slane %v6938, 4
        %v7017 = vrot.slane %v6939, 4
        %v7018 = vsel %vm5307, %v7016, %v7017
        %v7019 = vrot.slane %v6940, 4
        %v7020 = vrot.slane %v6941, 4
        %v7021 = vsel %vm5307, %v7019, %v7020
        %v7054 = vunpack.c.l.bf16 %v6976
        %v7055 = vunpack.c.h.bf16 %v6976
        %v7056 = vunpack.c.l.bf16 %v6975
        %v7057 = vunpack.c.l.bf16 %v6979
        %v7058 = vunpack.c.h.bf16 %v6979
        %v7059 = vunpack.c.l.bf16 %v6978
        %v7060 = vunpack.c.l.bf16 %v6982
        %v7061 = vunpack.c.h.bf16 %v6982
        %v7062 = vunpack.c.l.bf16 %v6981
        %v7063 = vunpack.c.l.bf16 %v6985
        %v7064 = vunpack.c.h.bf16 %v6985
        %v7065 = vunpack.c.l.bf16 %v6984
        %v7066 = vunpack.c.l.bf16 %v6988
        %v7067 = vunpack.c.h.bf16 %v6988
        %v7068 = vunpack.c.l.bf16 %v6987
        %v7069 = vunpack.c.l.bf16 %v6991
        %v7070 = vunpack.c.h.bf16 %v6991
        %v7071 = vunpack.c.l.bf16 %v6990
        %v7072 = vunpack.c.l.bf16 %v6994
        %v7073 = vunpack.c.h.bf16 %v6994
        %v7074 = vunpack.c.l.bf16 %v6993
        %v7075 = vunpack.c.l.bf16 %v6997
        %v7076 = vunpack.c.h.bf16 %v6997
        %v7077 = vunpack.c.l.bf16 %v6996
        %v7078 = vunpack.c.l.bf16 %v7000
        %v7079 = vunpack.c.h.bf16 %v7000
        %v7080 = vunpack.c.l.bf16 %v6999
        %v7081 = vunpack.c.l.bf16 %v7003
        %v7082 = vunpack.c.h.bf16 %v7003
        %v7083 = vunpack.c.l.bf16 %v7002
        %v7084 = vunpack.c.l.bf16 %v7006
        %v7085 = vunpack.c.h.bf16 %v7006
        %v7086 = vunpack.c.l.bf16 %v7005
        %v7087 = vunpack.c.l.bf16 %v7009
        %v7088 = vunpack.c.h.bf16 %v7009
        %v7089 = vunpack.c.l.bf16 %v7008
        %v7090 = vunpack.c.l.bf16 %v7012
        %v7091 = vunpack.c.h.bf16 %v7012
        %v7092 = vunpack.c.l.bf16 %v7011
        %v7093 = vunpack.c.l.bf16 %v7015
        %v7094 = vunpack.c.h.bf16 %v7015
        %v7095 = vunpack.c.l.bf16 %v7014
        %v7096 = vunpack.c.l.bf16 %v7018
        %v7097 = vunpack.c.h.bf16 %v7018
        %v7098 = vunpack.c.l.bf16 %v7017
        %v7099 = vunpack.c.l.bf16 %v7021
        %v7100 = vunpack.c.h.bf16 %v7021
        %v7101 = vunpack.c.l.bf16 %v7020
        %s7102 = scalar_lea.vmem %s9, 6
        %v7103 = vld [vmem:[%s7102] sm:$0x1]
        %v7105 = vlaneseq
        %v7106 = vshrl.u32 %v7105, 7
        %v7107 = vsub.s32 0, %v7106
        %v7108 = vrot.slane %v7103, %v7107
        %v7110 = vmul.f32 %v7054, %v7108
        %v7111 = vmul.f32 %v7055, %v7108
        %v7112 = vmul.f32 %v7056, %v7108
        %v7113 = vmul.f32 %v7057, %v7108
        %v7114 = vmul.f32 %v7058, %v7108
        %v7115 = vmul.f32 %v7059, %v7108
        %v7116 = vmul.f32 %v7060, %v7108
        %v7117 = vmul.f32 %v7061, %v7108
        %v7118 = vmul.f32 %v7062, %v7108
        %v7119 = vmul.f32 %v7063, %v7108
        %v7120 = vmul.f32 %v7064, %v7108
        %v7121 = vmul.f32 %v7065, %v7108
        %v7122 = vmul.f32 %v7066, %v7108
        %v7123 = vmul.f32 %v7067, %v7108
        %v7124 = vmul.f32 %v7068, %v7108
        %v7125 = vmul.f32 %v7069, %v7108
        %v7126 = vmul.f32 %v7070, %v7108
        %v7127 = vmul.f32 %v7071, %v7108
        %v7128 = vmul.f32 %v7072, %v7108
        %v7129 = vmul.f32 %v7073, %v7108
        %v7130 = vmul.f32 %v7074, %v7108
        %v7131 = vmul.f32 %v7075, %v7108
        %v7132 = vmul.f32 %v7076, %v7108
        %v7133 = vmul.f32 %v7077, %v7108
        %v7134 = vmul.f32 %v7078, %v7108
        %v7135 = vmul.f32 %v7079, %v7108
        %v7136 = vmul.f32 %v7080, %v7108
        %v7137 = vmul.f32 %v7081, %v7108
        %v7138 = vmul.f32 %v7082, %v7108
        %v7139 = vmul.f32 %v7083, %v7108
        %v7140 = vmul.f32 %v7084, %v7108
        %v7141 = vmul.f32 %v7085, %v7108
        %v7142 = vmul.f32 %v7086, %v7108
        %v7143 = vmul.f32 %v7087, %v7108
        %v7144 = vmul.f32 %v7088, %v7108
        %v7145 = vmul.f32 %v7089, %v7108
        %v7146 = vmul.f32 %v7090, %v7108
        %v7147 = vmul.f32 %v7091, %v7108
        %v7148 = vmul.f32 %v7092, %v7108
        %v7149 = vmul.f32 %v7093, %v7108
        %v7150 = vmul.f32 %v7094, %v7108
        %v7151 = vmul.f32 %v7095, %v7108
        %v7152 = vmul.f32 %v7096, %v7108
        %v7153 = vmul.f32 %v7097, %v7108
        %v7154 = vmul.f32 %v7098, %v7108
        %v7155 = vmul.f32 %v7099, %v7108
        %v7156 = vmul.f32 %v7100, %v7108
        %v7157 = vmul.f32 %v7101, %v7108
        %v7158 = vadd.f32 %v6861, %v7110
        %v7159 = vadd.f32 %v6862, %v7111
        %v7160 = vadd.f32 %v6863, %v7112
        %v7161 = vadd.f32 %v6864, %v7113
        %v7162 = vadd.f32 %v6865, %v7114
        %v7163 = vadd.f32 %v6866, %v7115
        %v7164 = vadd.f32 %v6867, %v7116
        %v7165 = vadd.f32 %v6868, %v7117
        %v7166 = vadd.f32 %v6869, %v7118
        %v7167 = vadd.f32 %v6870, %v7119
        %v7168 = vadd.f32 %v6871, %v7120
        %v7169 = vadd.f32 %v6872, %v7121
        %v7170 = vadd.f32 %v6873, %v7122
        %v7171 = vadd.f32 %v6874, %v7123
        %v7172 = vadd.f32 %v6875, %v7124
        %v7173 = vadd.f32 %v6876, %v7125
        %v7174 = vadd.f32 %v6877, %v7126
        %v7175 = vadd.f32 %v6878, %v7127
        %v7176 = vadd.f32 %v6879, %v7128
        %v7177 = vadd.f32 %v6880, %v7129
        %v7178 = vadd.f32 %v6881, %v7130
        %v7179 = vadd.f32 %v6882, %v7131
        %v7180 = vadd.f32 %v6883, %v7132
        %v7181 = vadd.f32 %v6884, %v7133
        %v7182 = vadd.f32 %v6885, %v7134
        %v7183 = vadd.f32 %v6886, %v7135
        %v7184 = vadd.f32 %v6887, %v7136
        %v7185 = vadd.f32 %v6888, %v7137
        %v7186 = vadd.f32 %v6889, %v7138
        %v7187 = vadd.f32 %v6890, %v7139
        %v7188 = vadd.f32 %v6891, %v7140
        %v7189 = vadd.f32 %v6892, %v7141
        %v7190 = vadd.f32 %v6893, %v7142
        %v7191 = vadd.f32 %v6894, %v7143
        %v7192 = vadd.f32 %v6895, %v7144
        %v7193 = vadd.f32 %v6896, %v7145
        %v7194 = vadd.f32 %v6897, %v7146
        %v7195 = vadd.f32 %v6898, %v7147
        %v7196 = vadd.f32 %v6899, %v7148
        %v7197 = vadd.f32 %v6900, %v7149
        %v7198 = vadd.f32 %v6901, %v7150
        %v7199 = vadd.f32 %v6902, %v7151
        %v7200 = vadd.f32 %v6903, %v7152
        %v7201 = vadd.f32 %v6904, %v7153
        %v7202 = vadd.f32 %v6905, %v7154
        %v7203 = vadd.f32 %v6906, %v7155
        %v7204 = vadd.f32 %v6907, %v7156
        %v7205 = vadd.f32 %v6908, %v7157
        %v7206 = vunpack.c.l.bf16 %v6911
        %v7207 = vunpack.c.h.bf16 %v6911
        %v7208 = vunpack.c.l.bf16 %v6913
        %v7209 = vunpack.c.h.bf16 %v6913
        %v7210 = vunpack.c.l.bf16 %v6915
        %v7211 = vunpack.c.h.bf16 %v6915
        %v7212 = vunpack.c.l.bf16 %v6917
        %v7213 = vunpack.c.h.bf16 %v6917
        %v7214 = vunpack.c.l.bf16 %v6919
        %v7215 = vunpack.c.h.bf16 %v6919
        %v7216 = vunpack.c.l.bf16 %v6921
        %v7217 = vunpack.c.h.bf16 %v6921
        %v7218 = vunpack.c.l.bf16 %v6923
        %v7219 = vunpack.c.h.bf16 %v6923
        %v7220 = vunpack.c.l.bf16 %v6925
        %v7221 = vunpack.c.h.bf16 %v6925
        %v7222 = vunpack.c.l.bf16 %v6927
        %v7223 = vunpack.c.h.bf16 %v6927
        %v7224 = vunpack.c.l.bf16 %v6929
        %v7225 = vunpack.c.h.bf16 %v6929
        %v7226 = vunpack.c.l.bf16 %v6931
        %v7227 = vunpack.c.h.bf16 %v6931
        %v7228 = vunpack.c.l.bf16 %v6933
        %v7229 = vunpack.c.h.bf16 %v6933
        %v7230 = vunpack.c.l.bf16 %v6935
        %v7231 = vunpack.c.h.bf16 %v6935
        %v7232 = vunpack.c.l.bf16 %v6937
        %v7233 = vunpack.c.h.bf16 %v6937
        %v7234 = vunpack.c.l.bf16 %v6939
        %v7235 = vunpack.c.h.bf16 %v6939
        %v7236 = vunpack.c.l.bf16 %v6941
        %v7237 = vunpack.c.h.bf16 %v6941
        %s7238 = scalar_lea.vmem %s9, 7
        %v7239 = vld [vmem:[%s7238] sm:$0x1]
        %v7241 = vlaneseq
        %v7242 = vshrl.u32 %v7241, 7
        %v7243 = vsub.s32 0, %v7242
        %v7244 = vrot.slane %v7239, %v7243
        %v7246 = vmul.f32 %v7206, %v7244
        %v7247 = vmul.f32 %v7207, %v7244
        %v7248 = vmul.f32 %v7208, %v7244
        %v7249 = vmul.f32 %v7209, %v7244
        %v7250 = vmul.f32 %v7210, %v7244
        %v7251 = vmul.f32 %v7211, %v7244
        %v7252 = vmul.f32 %v7212, %v7244
        %v7253 = vmul.f32 %v7213, %v7244
        %v7254 = vmul.f32 %v7214, %v7244
        %v7255 = vmul.f32 %v7215, %v7244
        %v7256 = vmul.f32 %v7216, %v7244
        %v7257 = vmul.f32 %v7217, %v7244
        %v7258 = vmul.f32 %v7218, %v7244
        %v7259 = vmul.f32 %v7219, %v7244
        %v7260 = vmul.f32 %v7220, %v7244
        %v7261 = vmul.f32 %v7221, %v7244
        %v7262 = vmul.f32 %v7222, %v7244
        %v7263 = vmul.f32 %v7223, %v7244
        %v7264 = vmul.f32 %v7224, %v7244
        %v7265 = vmul.f32 %v7225, %v7244
        %v7266 = vmul.f32 %v7226, %v7244
        %v7267 = vmul.f32 %v7227, %v7244
        %v7268 = vmul.f32 %v7228, %v7244
        %v7269 = vmul.f32 %v7229, %v7244
        %v7270 = vmul.f32 %v7230, %v7244
        %v7271 = vmul.f32 %v7231, %v7244
        %v7272 = vmul.f32 %v7232, %v7244
        %v7273 = vmul.f32 %v7233, %v7244
        %v7274 = vmul.f32 %v7234, %v7244
        %v7275 = vmul.f32 %v7235, %v7244
        %v7276 = vmul.f32 %v7236, %v7244
        %v7277 = vmul.f32 %v7237, %v7244
        %v7310 = vrot.slane %v7246, 1
        %v7311 = vrot.slane %v7247, 1
        %v7312 = vsel %vm5595, %v7310, %v7311
        %v7313 = vrot.slane %v7248, 1
        %v7314 = vrot.slane %v7249, 1
        %v7315 = vsel %vm5595, %v7313, %v7314
        %v7316 = vrot.slane %v7250, 1
        %v7317 = vrot.slane %v7251, 1
        %v7318 = vsel %vm5595, %v7316, %v7317
        %v7319 = vrot.slane %v7252, 1
        %v7320 = vrot.slane %v7253, 1
        %v7321 = vsel %vm5595, %v7319, %v7320
        %v7322 = vrot.slane %v7254, 1
        %v7323 = vrot.slane %v7255, 1
        %v7324 = vsel %vm5595, %v7322, %v7323
        %v7325 = vrot.slane %v7256, 1
        %v7326 = vrot.slane %v7257, 1
        %v7327 = vsel %vm5595, %v7325, %v7326
        %v7328 = vrot.slane %v7258, 1
        %v7329 = vrot.slane %v7259, 1
        %v7330 = vsel %vm5595, %v7328, %v7329
        %v7331 = vrot.slane %v7260, 1
        %v7332 = vrot.slane %v7261, 1
        %v7333 = vsel %vm5595, %v7331, %v7332
        %v7334 = vrot.slane %v7262, 1
        %v7335 = vrot.slane %v7263, 1
        %v7336 = vsel %vm5595, %v7334, %v7335
        %v7337 = vrot.slane %v7264, 1
        %v7338 = vrot.slane %v7265, 1
        %v7339 = vsel %vm5595, %v7337, %v7338
        %v7340 = vrot.slane %v7266, 1
        %v7341 = vrot.slane %v7267, 1
        %v7342 = vsel %vm5595, %v7340, %v7341
        %v7343 = vrot.slane %v7268, 1
        %v7344 = vrot.slane %v7269, 1
        %v7345 = vsel %vm5595, %v7343, %v7344
        %v7346 = vrot.slane %v7270, 1
        %v7347 = vrot.slane %v7271, 1
        %v7348 = vsel %vm5595, %v7346, %v7347
        %v7349 = vrot.slane %v7272, 1
        %v7350 = vrot.slane %v7273, 1
        %v7351 = vsel %vm5595, %v7349, %v7350
        %v7352 = vrot.slane %v7274, 1
        %v7353 = vrot.slane %v7275, 1
        %v7354 = vsel %vm5595, %v7352, %v7353
        %v7355 = vrot.slane %v7276, 1
        %v7356 = vrot.slane %v7277, 1
        %v7357 = vsel %vm5595, %v7355, %v7356
        %v7406 = vadd.f32 %v7158, %v7310
        %v7407 = vadd.f32 %v7159, %v7312
        %v7408 = vadd.f32 %v7160, %v7311
        %v7409 = vadd.f32 %v7161, %v7313
        %v7410 = vadd.f32 %v7162, %v7315
        %v7411 = vadd.f32 %v7163, %v7314
        %v7412 = vadd.f32 %v7164, %v7316
        %v7413 = vadd.f32 %v7165, %v7318
        %v7414 = vadd.f32 %v7166, %v7317
        %v7415 = vadd.f32 %v7167, %v7319
        %v7416 = vadd.f32 %v7168, %v7321
        %v7417 = vadd.f32 %v7169, %v7320
        %v7418 = vadd.f32 %v7170, %v7322
        %v7419 = vadd.f32 %v7171, %v7324
        %v7420 = vadd.f32 %v7172, %v7323
        %v7421 = vadd.f32 %v7173, %v7325
        %v7422 = vadd.f32 %v7174, %v7327
        %v7423 = vadd.f32 %v7175, %v7326
        %v7424 = vadd.f32 %v7176, %v7328
        %v7425 = vadd.f32 %v7177, %v7330
        %v7426 = vadd.f32 %v7178, %v7329
        %v7427 = vadd.f32 %v7179, %v7331
        %v7428 = vadd.f32 %v7180, %v7333
        %v7429 = vadd.f32 %v7181, %v7332
        %v7430 = vadd.f32 %v7182, %v7334
        %v7431 = vadd.f32 %v7183, %v7336
        %v7432 = vadd.f32 %v7184, %v7335
        %v7433 = vadd.f32 %v7185, %v7337
        %v7434 = vadd.f32 %v7186, %v7339
        %v7435 = vadd.f32 %v7187, %v7338
        %v7436 = vadd.f32 %v7188, %v7340
        %v7437 = vadd.f32 %v7189, %v7342
        %v7438 = vadd.f32 %v7190, %v7341
        %v7439 = vadd.f32 %v7191, %v7343
        %v7440 = vadd.f32 %v7192, %v7345
        %v7441 = vadd.f32 %v7193, %v7344
        %v7442 = vadd.f32 %v7194, %v7346
        %v7443 = vadd.f32 %v7195, %v7348
        %v7444 = vadd.f32 %v7196, %v7347
        %v7445 = vadd.f32 %v7197, %v7349
        %v7446 = vadd.f32 %v7198, %v7351
        %v7447 = vadd.f32 %v7199, %v7350
        %v7448 = vadd.f32 %v7200, %v7352
        %v7449 = vadd.f32 %v7201, %v7354
        %v7450 = vadd.f32 %v7202, %v7353
        %v7451 = vadd.f32 %v7203, %v7355
        %v7452 = vadd.f32 %v7204, %v7357
        %v7453 = vadd.f32 %v7205, %v7356
        %v7454 = vld [vmem:[%s6909 + $0x10] sm:$0x1]
        %v7455 = vld [vmem:[%s6909 + $0x28] sm:$0x1]
        %v7456 = vld [vmem:[%s6909 + $0x40] sm:$0x1]
        %v7457 = vld [vmem:[%s6909 + $0x58] sm:$0x1]
        %v7458 = vld [vmem:[%s6909 + $0x70] sm:$0x1]
        %v7459 = vld [vmem:[%s6909 + $0x88] sm:$0x1]
        %v7460 = vld [vmem:[%s6909 + $0xa0] sm:$0x1]
        %v7461 = vld [vmem:[%s6909 + $0xb8] sm:$0x1]
        %v7462 = vld [vmem:[%s6909 + $0xd0] sm:$0x1]
        %v7463 = vld [vmem:[%s6909 + $0xe8] sm:$0x1]
        %v7464 = vld [vmem:[%s6909 + $0x100] sm:$0x1]
        %v7465 = vld [vmem:[%s6909 + $0x118] sm:$0x1]
        %v7466 = vld [vmem:[%s6909 + $0x130] sm:$0x1]
        %v7467 = vld [vmem:[%s6909 + $0x148] sm:$0x1]
        %v7468 = vld [vmem:[%s6909 + $0x160] sm:$0x1]
        %v7469 = vld [vmem:[%s6909 + $0x178] sm:$0x1]
        %v7470 = vunpack.c.l.bf16 %v7454
        %v7471 = vunpack.c.l.bf16 %v7455
        %v7472 = vunpack.c.l.bf16 %v7456
        %v7473 = vunpack.c.l.bf16 %v7457
        %v7474 = vunpack.c.l.bf16 %v7458
        %v7475 = vunpack.c.l.bf16 %v7459
        %v7476 = vunpack.c.l.bf16 %v7460
        %v7477 = vunpack.c.l.bf16 %v7461
        %v7478 = vunpack.c.l.bf16 %v7462
        %v7479 = vunpack.c.l.bf16 %v7463
        %v7480 = vunpack.c.l.bf16 %v7464
        %v7481 = vunpack.c.l.bf16 %v7465
        %v7482 = vunpack.c.l.bf16 %v7466
        %v7483 = vunpack.c.l.bf16 %v7467
        %v7484 = vunpack.c.l.bf16 %v7468
        %v7485 = vunpack.c.l.bf16 %v7469
        %s7486 = scalar_lea.vmem %s9, 8
        %v7487 = vld [vmem:[%s7486] sm:$0x1]
        %v7489 = vlaneseq
        %v7490 = vshrl.u32 %v7489, 7
        %v7491 = vsub.s32 0, %v7490
        %v7492 = vrot.slane %v7487, %v7491
        %v7494 = vmul.f32 %v7206, %v7492
        %v7495 = vmul.f32 %v7207, %v7492
        %v7496 = vmul.f32 %v7470, %v7492
        %v7497 = vmul.f32 %v7208, %v7492
        %v7498 = vmul.f32 %v7209, %v7492
        %v7499 = vmul.f32 %v7471, %v7492
        %v7500 = vmul.f32 %v7210, %v7492
        %v7501 = vmul.f32 %v7211, %v7492
        %v7502 = vmul.f32 %v7472, %v7492
        %v7503 = vmul.f32 %v7212, %v7492
        %v7504 = vmul.f32 %v7213, %v7492
        %v7505 = vmul.f32 %v7473, %v7492
        %v7506 = vmul.f32 %v7214, %v7492
        %v7507 = vmul.f32 %v7215, %v7492
        %v7508 = vmul.f32 %v7474, %v7492
        %v7509 = vmul.f32 %v7216, %v7492
        %v7510 = vmul.f32 %v7217, %v7492
        %v7511 = vmul.f32 %v7475, %v7492
        %v7512 = vmul.f32 %v7218, %v7492
        %v7513 = vmul.f32 %v7219, %v7492
        %v7514 = vmul.f32 %v7476, %v7492
        %v7515 = vmul.f32 %v7220, %v7492
        %v7516 = vmul.f32 %v7221, %v7492
        %v7517 = vmul.f32 %v7477, %v7492
        %v7518 = vmul.f32 %v7222, %v7492
        %v7519 = vmul.f32 %v7223, %v7492
        %v7520 = vmul.f32 %v7478, %v7492
        %v7521 = vmul.f32 %v7224, %v7492
        %v7522 = vmul.f32 %v7225, %v7492
        %v7523 = vmul.f32 %v7479, %v7492
        %v7524 = vmul.f32 %v7226, %v7492
        %v7525 = vmul.f32 %v7227, %v7492
        %v7526 = vmul.f32 %v7480, %v7492
        %v7527 = vmul.f32 %v7228, %v7492
        %v7528 = vmul.f32 %v7229, %v7492
        %v7529 = vmul.f32 %v7481, %v7492
        %v7530 = vmul.f32 %v7230, %v7492
        %v7531 = vmul.f32 %v7231, %v7492
        %v7532 = vmul.f32 %v7482, %v7492
        %v7533 = vmul.f32 %v7232, %v7492
        %v7534 = vmul.f32 %v7233, %v7492
        %v7535 = vmul.f32 %v7483, %v7492
        %v7536 = vmul.f32 %v7234, %v7492
        %v7537 = vmul.f32 %v7235, %v7492
        %v7538 = vmul.f32 %v7484, %v7492
        %v7539 = vmul.f32 %v7236, %v7492
        %v7540 = vmul.f32 %v7237, %v7492
        %v7541 = vmul.f32 %v7485, %v7492
        %v7590 = vrot.slane %v7494, 2
        %v7591 = vrot.slane %v7495, 2
        %v7592 = vsel %vm5876, %v7590, %v7591
        %v7593 = vrot.slane %v7496, 2
        %v7594 = vsel %vm5876, %v7591, %v7593
        %v7595 = vrot.slane %v7497, 2
        %v7596 = vrot.slane %v7498, 2
        %v7597 = vsel %vm5876, %v7595, %v7596
        %v7598 = vrot.slane %v7499, 2
        %v7599 = vsel %vm5876, %v7596, %v7598
        %v7600 = vrot.slane %v7500, 2
        %v7601 = vrot.slane %v7501, 2
        %v7602 = vsel %vm5876, %v7600, %v7601
        %v7603 = vrot.slane %v7502, 2
        %v7604 = vsel %vm5876, %v7601, %v7603
        %v7605 = vrot.slane %v7503, 2
        %v7606 = vrot.slane %v7504, 2
        %v7607 = vsel %vm5876, %v7605, %v7606
        %v7608 = vrot.slane %v7505, 2
        %v7609 = vsel %vm5876, %v7606, %v7608
        %v7610 = vrot.slane %v7506, 2
        %v7611 = vrot.slane %v7507, 2
        %v7612 = vsel %vm5876, %v7610, %v7611
        %v7613 = vrot.slane %v7508, 2
        %v7614 = vsel %vm5876, %v7611, %v7613
        %v7615 = vrot.slane %v7509, 2
        %v7616 = vrot.slane %v7510, 2
        %v7617 = vsel %vm5876, %v7615, %v7616
        %v7618 = vrot.slane %v7511, 2
        %v7619 = vsel %vm5876, %v7616, %v7618
        %v7620 = vrot.slane %v7512, 2
        %v7621 = vrot.slane %v7513, 2
        %v7622 = vsel %vm5876, %v7620, %v7621
        %v7623 = vrot.slane %v7514, 2
        %v7624 = vsel %vm5876, %v7621, %v7623
        %v7625 = vrot.slane %v7515, 2
        %v7626 = vrot.slane %v7516, 2
        %v7627 = vsel %vm5876, %v7625, %v7626
        %v7628 = vrot.slane %v7517, 2
        %v7629 = vsel %vm5876, %v7626, %v7628
        %v7630 = vrot.slane %v7518, 2
        %v7631 = vrot.slane %v7519, 2
        %v7632 = vsel %vm5876, %v7630, %v7631
        %v7633 = vrot.slane %v7520, 2
        %v7634 = vsel %vm5876, %v7631, %v7633
        %v7635 = vrot.slane %v7521, 2
        %v7636 = vrot.slane %v7522, 2
        %v7637 = vsel %vm5876, %v7635, %v7636
        %v7638 = vrot.slane %v7523, 2
        %v7639 = vsel %vm5876, %v7636, %v7638
        %v7640 = vrot.slane %v7524, 2
        %v7641 = vrot.slane %v7525, 2
        %v7642 = vsel %vm5876, %v7640, %v7641
        %v7643 = vrot.slane %v7526, 2
        %v7644 = vsel %vm5876, %v7641, %v7643
        %v7645 = vrot.slane %v7527, 2
        %v7646 = vrot.slane %v7528, 2
        %v7647 = vsel %vm5876, %v7645, %v7646
        %v7648 = vrot.slane %v7529, 2
        %v7649 = vsel %vm5876, %v7646, %v7648
        %v7650 = vrot.slane %v7530, 2
        %v7651 = vrot.slane %v7531, 2
        %v7652 = vsel %vm5876, %v7650, %v7651
        %v7653 = vrot.slane %v7532, 2
        %v7654 = vsel %vm5876, %v7651, %v7653
        %v7655 = vrot.slane %v7533, 2
        %v7656 = vrot.slane %v7534, 2
        %v7657 = vsel %vm5876, %v7655, %v7656
        %v7658 = vrot.slane %v7535, 2
        %v7659 = vsel %vm5876, %v7656, %v7658
        %v7660 = vrot.slane %v7536, 2
        %v7661 = vrot.slane %v7537, 2
        %v7662 = vsel %vm5876, %v7660, %v7661
        %v7663 = vrot.slane %v7538, 2
        %v7664 = vsel %vm5876, %v7661, %v7663
        %v7665 = vrot.slane %v7539, 2
        %v7666 = vrot.slane %v7540, 2
        %v7667 = vsel %vm5876, %v7665, %v7666
        %v7668 = vrot.slane %v7541, 2
        %v7669 = vsel %vm5876, %v7666, %v7668
        %v7718 = vadd.f32 %v7406, %v7590
        %v7719 = vadd.f32 %v7407, %v7592
        %v7720 = vadd.f32 %v7408, %v7594
        %v7721 = vadd.f32 %v7409, %v7595
        %v7722 = vadd.f32 %v7410, %v7597
        %v7723 = vadd.f32 %v7411, %v7599
        %v7724 = vadd.f32 %v7412, %v7600
        %v7725 = vadd.f32 %v7413, %v7602
        %v7726 = vadd.f32 %v7414, %v7604
        %v7727 = vadd.f32 %v7415, %v7605
        %v7728 = vadd.f32 %v7416, %v7607
        %v7729 = vadd.f32 %v7417, %v7609
        %v7730 = vadd.f32 %v7418, %v7610
        %v7731 = vadd.f32 %v7419, %v7612
        %v7732 = vadd.f32 %v7420, %v7614
        %v7733 = vadd.f32 %v7421, %v7615
        %v7734 = vadd.f32 %v7422, %v7617
        %v7735 = vadd.f32 %v7423, %v7619
        %v7736 = vadd.f32 %v7424, %v7620
        %v7737 = vadd.f32 %v7425, %v7622
        %v7738 = vadd.f32 %v7426, %v7624
        %v7739 = vadd.f32 %v7427, %v7625
        %v7740 = vadd.f32 %v7428, %v7627
        %v7741 = vadd.f32 %v7429, %v7629
        %v7742 = vadd.f32 %v7430, %v7630
        %v7743 = vadd.f32 %v7431, %v7632
        %v7744 = vadd.f32 %v7432, %v7634
        %v7745 = vadd.f32 %v7433, %v7635
        %v7746 = vadd.f32 %v7434, %v7637
        %v7747 = vadd.f32 %v7435, %v7639
        %v7748 = vadd.f32 %v7436, %v7640
        %v7749 = vadd.f32 %v7437, %v7642
        %v7750 = vadd.f32 %v7438, %v7644
        %v7751 = vadd.f32 %v7439, %v7645
        %v7752 = vadd.f32 %v7440, %v7647
        %v7753 = vadd.f32 %v7441, %v7649
        %v7754 = vadd.f32 %v7442, %v7650
        %v7755 = vadd.f32 %v7443, %v7652
        %v7756 = vadd.f32 %v7444, %v7654
        %v7757 = vadd.f32 %v7445, %v7655
        %v7758 = vadd.f32 %v7446, %v7657
        %v7759 = vadd.f32 %v7447, %v7659
        %v7760 = vadd.f32 %v7448, %v7660
        %v7761 = vadd.f32 %v7449, %v7662
        %v7762 = vadd.f32 %v7450, %v7664
        %v7763 = vadd.f32 %v7451, %v7665
        %v7764 = vadd.f32 %v7452, %v7667
        %v7765 = vadd.f32 %v7453, %v7669
        %vm7766 = vcmask 1047559
        %v7767 = vsel %vm7766, %v7718, 0.0
        %7768 = vadd.xlane.f32.xlu0 %v7767
        %v7769 = vpop.xlane.xlu0 %7768
        %7770 = vadd.xlane.f32.xlu0 %v7719
        %v7771 = vpop.xlane.xlu0 %7770
        %v7772 = vsel %vm5595, %v7720, 0.0
        %7773 = vadd.xlane.f32.xlu0 %v7772
        %v7774 = vpop.xlane.xlu0 %7773
        %v7775 = vsel %vm7766, %v7721, 0.0
        %7776 = vadd.xlane.f32.xlu0 %v7775
        %v7777 = vpop.xlane.xlu0 %7776
        %7778 = vadd.xlane.f32.xlu0 %v7722
        %v7779 = vpop.xlane.xlu0 %7778
        %v7780 = vsel %vm5595, %v7723, 0.0
        %7781 = vadd.xlane.f32.xlu0 %v7780
        %v7782 = vpop.xlane.xlu0 %7781
        %v7783 = vsel %vm7766, %v7724, 0.0
        %7784 = vadd.xlane.f32.xlu0 %v7783
        %v7785 = vpop.xlane.xlu0 %7784
        %7786 = vadd.xlane.f32.xlu0 %v7725
        %v7787 = vpop.xlane.xlu0 %7786
        %v7788 = vsel %vm5595, %v7726, 0.0
        %7789 = vadd.xlane.f32.xlu0 %v7788
        %v7790 = vpop.xlane.xlu0 %7789
        %v7791 = vsel %vm7766, %v7727, 0.0
        %7792 = vadd.xlane.f32.xlu0 %v7791
        %v7793 = vpop.xlane.xlu0 %7792
        %7794 = vadd.xlane.f32.xlu0 %v7728
        %v7795 = vpop.xlane.xlu0 %7794
        %v7796 = vsel %vm5595, %v7729, 0.0
        %7797 = vadd.xlane.f32.xlu0 %v7796
        %v7798 = vpop.xlane.xlu0 %7797
        %v7799 = vsel %vm7766, %v7730, 0.0
        %7800 = vadd.xlane.f32.xlu0 %v7799
        %v7801 = vpop.xlane.xlu0 %7800
        %7802 = vadd.xlane.f32.xlu0 %v7731
        %v7803 = vpop.xlane.xlu0 %7802
        %v7804 = vsel %vm5595, %v7732, 0.0
        %7805 = vadd.xlane.f32.xlu0 %v7804
        %v7806 = vpop.xlane.xlu0 %7805
        %v7807 = vsel %vm7766, %v7733, 0.0
        %7808 = vadd.xlane.f32.xlu0 %v7807
        %v7809 = vpop.xlane.xlu0 %7808
        %7810 = vadd.xlane.f32.xlu0 %v7734
        %v7811 = vpop.xlane.xlu0 %7810
        %v7812 = vsel %vm5595, %v7735, 0.0
        %7813 = vadd.xlane.f32.xlu0 %v7812
        %v7814 = vpop.xlane.xlu0 %7813
        %v7815 = vsel %vm7766, %v7736, 0.0
        %7816 = vadd.xlane.f32.xlu0 %v7815
        %v7817 = vpop.xlane.xlu0 %7816
        %7818 = vadd.xlane.f32.xlu0 %v7737
        %v7819 = vpop.xlane.xlu0 %7818
        %v7820 = vsel %vm5595, %v7738, 0.0
        %7821 = vadd.xlane.f32.xlu0 %v7820
        %v7822 = vpop.xlane.xlu0 %7821
        %v7823 = vsel %vm7766, %v7739, 0.0
        %7824 = vadd.xlane.f32.xlu0 %v7823
        %v7825 = vpop.xlane.xlu0 %7824
        %7826 = vadd.xlane.f32.xlu0 %v7740
        %v7827 = vpop.xlane.xlu0 %7826
        %v7828 = vsel %vm5595, %v7741, 0.0
        %7829 = vadd.xlane.f32.xlu0 %v7828
        %v7830 = vpop.xlane.xlu0 %7829
        %v7831 = vsel %vm7766, %v7742, 0.0
        %7832 = vadd.xlane.f32.xlu0 %v7831
        %v7833 = vpop.xlane.xlu0 %7832
        %7834 = vadd.xlane.f32.xlu0 %v7743
        %v7835 = vpop.xlane.xlu0 %7834
        %v7836 = vsel %vm5595, %v7744, 0.0
        %7837 = vadd.xlane.f32.xlu0 %v7836
        %v7838 = vpop.xlane.xlu0 %7837
        %v7839 = vsel %vm7766, %v7745, 0.0
        %7840 = vadd.xlane.f32.xlu0 %v7839
        %v7841 = vpop.xlane.xlu0 %7840
        %7842 = vadd.xlane.f32.xlu0 %v7746
        %v7843 = vpop.xlane.xlu0 %7842
        %v7844 = vsel %vm5595, %v7747, 0.0
        %7845 = vadd.xlane.f32.xlu0 %v7844
        %v7846 = vpop.xlane.xlu0 %7845
        %v7847 = vsel %vm7766, %v7748, 0.0
        %7848 = vadd.xlane.f32.xlu0 %v7847
        %v7849 = vpop.xlane.xlu0 %7848
        %7850 = vadd.xlane.f32.xlu0 %v7749
        %v7851 = vpop.xlane.xlu0 %7850
        %v7852 = vsel %vm5595, %v7750, 0.0
        %7853 = vadd.xlane.f32.xlu0 %v7852
        %v7854 = vpop.xlane.xlu0 %7853
        %v7855 = vsel %vm7766, %v7751, 0.0
        %7856 = vadd.xlane.f32.xlu0 %v7855
        %v7857 = vpop.xlane.xlu0 %7856
        %7858 = vadd.xlane.f32.xlu0 %v7752
        %v7859 = vpop.xlane.xlu0 %7858
        %v7860 = vsel %vm5595, %v7753, 0.0
        %7861 = vadd.xlane.f32.xlu0 %v7860
        %v7862 = vpop.xlane.xlu0 %7861
        %v7863 = vsel %vm7766, %v7754, 0.0
        %7864 = vadd.xlane.f32.xlu0 %v7863
        %v7865 = vpop.xlane.xlu0 %7864
        %7866 = vadd.xlane.f32.xlu0 %v7755
        %v7867 = vpop.xlane.xlu0 %7866
        %v7868 = vsel %vm5595, %v7756, 0.0
        %7869 = vadd.xlane.f32.xlu0 %v7868
        %v7870 = vpop.xlane.xlu0 %7869
        %v7871 = vsel %vm7766, %v7757, 0.0
        %7872 = vadd.xlane.f32.xlu0 %v7871
        %v7873 = vpop.xlane.xlu0 %7872
        %7874 = vadd.xlane.f32.xlu0 %v7758
        %v7875 = vpop.xlane.xlu0 %7874
        %v7876 = vsel %vm5595, %v7759, 0.0
        %7877 = vadd.xlane.f32.xlu0 %v7876
        %v7878 = vpop.xlane.xlu0 %7877
        %v7879 = vsel %vm7766, %v7760, 0.0
        %7880 = vadd.xlane.f32.xlu0 %v7879
        %v7881 = vpop.xlane.xlu0 %7880
        %7882 = vadd.xlane.f32.xlu0 %v7761
        %v7883 = vpop.xlane.xlu0 %7882
        %v7884 = vsel %vm5595, %v7762, 0.0
        %7885 = vadd.xlane.f32.xlu0 %v7884
        %v7886 = vpop.xlane.xlu0 %7885
        %v7887 = vsel %vm7766, %v7763, 0.0
        %7888 = vadd.xlane.f32.xlu0 %v7887
        %v7889 = vpop.xlane.xlu0 %7888
        %7890 = vadd.xlane.f32.xlu0 %v7764
        %v7891 = vpop.xlane.xlu0 %7890
        %v7892 = vsel %vm5595, %v7765, 0.0
        %7893 = vadd.xlane.f32.xlu0 %v7892
        %v7894 = vpop.xlane.xlu0 %7893
        %v7895 = vlaneseq
        %v7896 = vshrl.u32 %v7895, 7
        %v7897 = vsub.s32 0, %v7896
        %v7898 = vrot.slane %v5242, %v7897
        %v7899 = vadd.f32 %v7898, %v7769
        %v7900 = vadd.f32 %v7898, %v7771
        %v7901 = vadd.f32 %v7898, %v7774
        %v7902 = vadd.f32 %v7898, %v7777
        %v7903 = vadd.f32 %v7898, %v7779
        %v7904 = vadd.f32 %v7898, %v7782
        %v7905 = vadd.f32 %v7898, %v7785
        %v7906 = vadd.f32 %v7898, %v7787
        %v7907 = vadd.f32 %v7898, %v7790
        %v7908 = vadd.f32 %v7898, %v7793
        %v7909 = vadd.f32 %v7898, %v7795
        %v7910 = vadd.f32 %v7898, %v7798
        %v7911 = vadd.f32 %v7898, %v7801
        %v7912 = vadd.f32 %v7898, %v7803
        %v7913 = vadd.f32 %v7898, %v7806
        %v7914 = vadd.f32 %v7898, %v7809
        %v7915 = vadd.f32 %v7898, %v7811
        %v7916 = vadd.f32 %v7898, %v7814
        %v7917 = vadd.f32 %v7898, %v7817
        %v7918 = vadd.f32 %v7898, %v7819
        %v7919 = vadd.f32 %v7898, %v7822
        %v7920 = vadd.f32 %v7898, %v7825
        %v7921 = vadd.f32 %v7898, %v7827
        %v7922 = vadd.f32 %v7898, %v7830
        %v7923 = vadd.f32 %v7898, %v7833
        %v7924 = vadd.f32 %v7898, %v7835
        %v7925 = vadd.f32 %v7898, %v7838
        %v7926 = vadd.f32 %v7898, %v7841
        %v7927 = vadd.f32 %v7898, %v7843
        %v7928 = vadd.f32 %v7898, %v7846
        %v7929 = vadd.f32 %v7898, %v7849
        %v7930 = vadd.f32 %v7898, %v7851
        %v7931 = vadd.f32 %v7898, %v7854
        %v7932 = vadd.f32 %v7898, %v7857
        %v7933 = vadd.f32 %v7898, %v7859
        %v7934 = vadd.f32 %v7898, %v7862
        %v7935 = vadd.f32 %v7898, %v7865
        %v7936 = vadd.f32 %v7898, %v7867
        %v7937 = vadd.f32 %v7898, %v7870
        %v7938 = vadd.f32 %v7898, %v7873
        %v7939 = vadd.f32 %v7898, %v7875
        %v7940 = vadd.f32 %v7898, %v7878
        %v7941 = vadd.f32 %v7898, %v7881
        %v7942 = vadd.f32 %v7898, %v7883
        %v7943 = vadd.f32 %v7898, %v7886
        %v7944 = vadd.f32 %v7898, %v7889
        %v7945 = vadd.f32 %v7898, %v7891
        %v7946 = vadd.f32 %v7898, %v7894
        %v7947 = vld [vmem:[%s362] sm:$0xff]
        %v7948 = vld [vmem:[%s362 + $0x8] sm:$0xff]
        %v7949 = vld [vmem:[%s362 + $0x10] sm:$0xff]
        %v7950 = vld [vmem:[%s362 + $0x18] sm:$0xff]
        %v7951 = vld [vmem:[%s362 + $0x20] sm:$0xff]
        %v7952 = vld [vmem:[%s362 + $0x28] sm:$0xff]
        %v7953 = vld [vmem:[%s362 + $0x30] sm:$0xff]
        %v7954 = vld [vmem:[%s362 + $0x38] sm:$0xff]
        %v7955 = vld [vmem:[%s362 + $0x40] sm:$0xff]
        %v7956 = vld [vmem:[%s362 + $0x48] sm:$0xff]
        %v7957 = vld [vmem:[%s362 + $0x50] sm:$0xff]
        %v7958 = vld [vmem:[%s362 + $0x58] sm:$0xff]
        %v7959 = vld [vmem:[%s362 + $0x60] sm:$0xff]
        %v7960 = vld [vmem:[%s362 + $0x68] sm:$0xff]
        %v7961 = vld [vmem:[%s362 + $0x70] sm:$0xff]
        %v7962 = vld [vmem:[%s362 + $0x78] sm:$0xff]
        %v7963 = vld [vmem:[%s362 + $0x80] sm:$0xff]
        %v7964 = vld [vmem:[%s362 + $0x88] sm:$0xff]
        %v7965 = vld [vmem:[%s362 + $0x90] sm:$0xff]
        %v7966 = vld [vmem:[%s362 + $0x98] sm:$0xff]
        %v7967 = vld [vmem:[%s362 + $0xa0] sm:$0xff]
        %v7968 = vld [vmem:[%s362 + $0xa8] sm:$0xff]
        %v7969 = vld [vmem:[%s362 + $0xb0] sm:$0xff]
        %v7970 = vld [vmem:[%s362 + $0xb8] sm:$0xff]
        %v7971 = vld [vmem:[%s362 + $0xc0] sm:$0xff]
        %v7972 = vld [vmem:[%s362 + $0xc8] sm:$0xff]
        %v7973 = vld [vmem:[%s362 + $0xd0] sm:$0xff]
        %v7974 = vld [vmem:[%s362 + $0xd8] sm:$0xff]
        %v7975 = vld [vmem:[%s362 + $0xe0] sm:$0xff]
        %v7976 = vld [vmem:[%s362 + $0xe8] sm:$0xff]
        %v7977 = vld [vmem:[%s362 + $0xf0] sm:$0xff]
        %v7978 = vld [vmem:[%s362 + $0xf8] sm:$0xff]
        %v7979 = vld [vmem:[#allocation5] sm:$0xff]
        %v7980 = vld [vmem:[#allocation5 + $0x8] sm:$0xff]
        %v7981 = vld [vmem:[#allocation5 + $0x10] sm:$0xff]
        %v7982 = vld [vmem:[#allocation5 + $0x18] sm:$0xff]
        %v7983 = vld [vmem:[#allocation5 + $0x20] sm:$0xff]
        %v7984 = vld [vmem:[#allocation5 + $0x28] sm:$0xff]
        %v7985 = vld [vmem:[#allocation5 + $0x30] sm:$0xff]
        %v7986 = vld [vmem:[#allocation5 + $0x38] sm:$0xff]
        %v7987 = vld [vmem:[#allocation5 + $0x40] sm:$0xff]
        %v7988 = vld [vmem:[#allocation5 + $0x48] sm:$0xff]
        %v7989 = vld [vmem:[#allocation5 + $0x50] sm:$0xff]
        %v7990 = vld [vmem:[#allocation5 + $0x58] sm:$0xff]
        %v7991 = vld [vmem:[#allocation5 + $0x60] sm:$0xff]
        %v7992 = vld [vmem:[#allocation5 + $0x68] sm:$0xff]
        %v7993 = vld [vmem:[#allocation5 + $0x70] sm:$0xff]
        %v7994 = vld [vmem:[#allocation5 + $0x78] sm:$0xff]
        %v7995 = vld [vmem:[#allocation5 + $0x80] sm:$0xff]
        %v7996 = vld [vmem:[#allocation5 + $0x88] sm:$0xff]
        %v7997 = vld [vmem:[#allocation5 + $0x90] sm:$0xff]
        %v7998 = vld [vmem:[#allocation5 + $0x98] sm:$0xff]
        %v7999 = vld [vmem:[#allocation5 + $0xa0] sm:$0xff]
        %v8000 = vld [vmem:[#allocation5 + $0xa8] sm:$0xff]
        %v8001 = vld [vmem:[#allocation5 + $0xb0] sm:$0xff]
        %v8002 = vld [vmem:[#allocation5 + $0xb8] sm:$0xff]
        %v8003 = vld [vmem:[#allocation5 + $0xc0] sm:$0xff]
        %v8004 = vld [vmem:[#allocation5 + $0xc8] sm:$0xff]
        %v8005 = vld [vmem:[#allocation5 + $0xd0] sm:$0xff]
        %v8006 = vld [vmem:[#allocation5 + $0xd8] sm:$0xff]
        %v8007 = vld [vmem:[#allocation5 + $0xe0] sm:$0xff]
        %v8008 = vld [vmem:[#allocation5 + $0xe8] sm:$0xff]
        %v8009 = vld [vmem:[#allocation5 + $0xf0] sm:$0xff]
        %v8010 = vld [vmem:[#allocation5 + $0xf8] sm:$0xff]
        %vm8059 = vcmask 1040384
        %v8060 = vrot.slane %v7899, 7
        %v8061 = vrot.slane %v7900, 7
        %v8062 = vsel %vm8059, %v8060, %v8061
        %v8063 = vrot.slane %v7901, 7
        %v8064 = vsel %vm8059, %v8061, %v8063
        %v8065 = vrot.slane %v7902, 7
        %v8066 = vrot.slane %v7903, 7
        %v8067 = vsel %vm8059, %v8065, %v8066
        %v8068 = vrot.slane %v7904, 7
        %v8069 = vsel %vm8059, %v8066, %v8068
        %v8070 = vrot.slane %v7905, 7
        %v8071 = vrot.slane %v7906, 7
        %v8072 = vsel %vm8059, %v8070, %v8071
        %v8073 = vrot.slane %v7907, 7
        %v8074 = vsel %vm8059, %v8071, %v8073
        %v8075 = vrot.slane %v7908, 7
        %v8076 = vrot.slane %v7909, 7
        %v8077 = vsel %vm8059, %v8075, %v8076
        %v8078 = vrot.slane %v7910, 7
        %v8079 = vsel %vm8059, %v8076, %v8078
        %v8080 = vrot.slane %v7911, 7
        %v8081 = vrot.slane %v7912, 7
        %v8082 = vsel %vm8059, %v8080, %v8081
        %v8083 = vrot.slane %v7913, 7
        %v8084 = vsel %vm8059, %v8081, %v8083
        %v8085 = vrot.slane %v7914, 7
        %v8086 = vrot.slane %v7915, 7
        %v8087 = vsel %vm8059, %v8085, %v8086
        %v8088 = vrot.slane %v7916, 7
        %v8089 = vsel %vm8059, %v8086, %v8088
        %v8090 = vrot.slane %v7917, 7
        %v8091 = vrot.slane %v7918, 7
        %v8092 = vsel %vm8059, %v8090, %v8091
        %v8093 = vrot.slane %v7919, 7
        %v8094 = vsel %vm8059, %v8091, %v8093
        %v8095 = vrot.slane %v7920, 7
        %v8096 = vrot.slane %v7921, 7
        %v8097 = vsel %vm8059, %v8095, %v8096
        %v8098 = vrot.slane %v7922, 7
        %v8099 = vsel %vm8059, %v8096, %v8098
        %v8100 = vrot.slane %v7923, 7
        %v8101 = vrot.slane %v7924, 7
        %v8102 = vsel %vm8059, %v8100, %v8101
        %v8103 = vrot.slane %v7925, 7
        %v8104 = vsel %vm8059, %v8101, %v8103
        %v8105 = vrot.slane %v7926, 7
        %v8106 = vrot.slane %v7927, 7
        %v8107 = vsel %vm8059, %v8105, %v8106
        %v8108 = vrot.slane %v7928, 7
        %v8109 = vsel %vm8059, %v8106, %v8108
        %v8110 = vrot.slane %v7929, 7
        %v8111 = vrot.slane %v7930, 7
        %v8112 = vsel %vm8059, %v8110, %v8111
        %v8113 = vrot.slane %v7931, 7
        %v8114 = vsel %vm8059, %v8111, %v8113
        %v8115 = vrot.slane %v7932, 7
        %v8116 = vrot.slane %v7933, 7
        %v8117 = vsel %vm8059, %v8115, %v8116
        %v8118 = vrot.slane %v7934, 7
        %v8119 = vsel %vm8059, %v8116, %v8118
        %v8120 = vrot.slane %v7935, 7
        %v8121 = vrot.slane %v7936, 7
        %v8122 = vsel %vm8059, %v8120, %v8121
        %v8123 = vrot.slane %v7937, 7
        %v8124 = vsel %vm8059, %v8121, %v8123
        %v8125 = vrot.slane %v7938, 7
        %v8126 = vrot.slane %v7939, 7
        %v8127 = vsel %vm8059, %v8125, %v8126
        %v8128 = vrot.slane %v7940, 7
        %v8129 = vsel %vm8059, %v8126, %v8128
        %v8130 = vrot.slane %v7941, 7
        %v8131 = vrot.slane %v7942, 7
        %v8132 = vsel %vm8059, %v8130, %v8131
        %v8133 = vrot.slane %v7943, 7
        %v8134 = vsel %vm8059, %v8131, %v8133
        %v8135 = vrot.slane %v7944, 7
        %v8136 = vrot.slane %v7945, 7
        %v8137 = vsel %vm8059, %v8135, %v8136
        %v8138 = vrot.slane %v7946, 7
        %v8139 = vsel %vm8059, %v8136, %v8138
        %v8172 = vmul.f32 %v7979, %v8062
        %v8173 = vmul.f32 %v7980, %v8064
        %v8174 = vmul.f32 %v7981, %v8067
        %v8175 = vmul.f32 %v7982, %v8069
        %v8176 = vmul.f32 %v7983, %v8072
        %v8177 = vmul.f32 %v7984, %v8074
        %v8178 = vmul.f32 %v7985, %v8077
        %v8179 = vmul.f32 %v7986, %v8079
        %v8180 = vmul.f32 %v7987, %v8082
        %v8181 = vmul.f32 %v7988, %v8084
        %v8182 = vmul.f32 %v7989, %v8087
        %v8183 = vmul.f32 %v7990, %v8089
        %v8184 = vmul.f32 %v7991, %v8092
        %v8185 = vmul.f32 %v7992, %v8094
        %v8186 = vmul.f32 %v7993, %v8097
        %v8187 = vmul.f32 %v7994, %v8099
        %v8188 = vmul.f32 %v7995, %v8102
        %v8189 = vmul.f32 %v7996, %v8104
        %v8190 = vmul.f32 %v7997, %v8107
        %v8191 = vmul.f32 %v7998, %v8109
        %v8192 = vmul.f32 %v7999, %v8112
        %v8193 = vmul.f32 %v8000, %v8114
        %v8194 = vmul.f32 %v8001, %v8117
        %v8195 = vmul.f32 %v8002, %v8119
        %v8196 = vmul.f32 %v8003, %v8122
        %v8197 = vmul.f32 %v8004, %v8124
        %v8198 = vmul.f32 %v8005, %v8127
        %v8199 = vmul.f32 %v8006, %v8129
        %v8200 = vmul.f32 %v8007, %v8132
        %v8201 = vmul.f32 %v8008, %v8134
        %v8202 = vmul.f32 %v8009, %v8137
        %v8203 = vmul.f32 %v8010, %v8139
        %v8204 = vadd.f32 %v7947, %v8172
        %v8205 = vadd.f32 %v7948, %v8173
        %v8206 = vadd.f32 %v7949, %v8174
        %v8207 = vadd.f32 %v7950, %v8175
        %v8208 = vadd.f32 %v7951, %v8176
        %v8209 = vadd.f32 %v7952, %v8177
        %v8210 = vadd.f32 %v7953, %v8178
        %v8211 = vadd.f32 %v7954, %v8179
        %v8212 = vadd.f32 %v7955, %v8180
        %v8213 = vadd.f32 %v7956, %v8181
        %v8214 = vadd.f32 %v7957, %v8182
        %v8215 = vadd.f32 %v7958, %v8183
        %v8216 = vadd.f32 %v7959, %v8184
        %v8217 = vadd.f32 %v7960, %v8185
        %v8218 = vadd.f32 %v7961, %v8186
        %v8219 = vadd.f32 %v7962, %v8187
        %v8220 = vadd.f32 %v7963, %v8188
        %v8221 = vadd.f32 %v7964, %v8189
        %v8222 = vadd.f32 %v7965, %v8190
        %v8223 = vadd.f32 %v7966, %v8191
        %v8224 = vadd.f32 %v7967, %v8192
        %v8225 = vadd.f32 %v7968, %v8193
        %v8226 = vadd.f32 %v7969, %v8194
        %v8227 = vadd.f32 %v7970, %v8195
        %v8228 = vadd.f32 %v7971, %v8196
        %v8229 = vadd.f32 %v7972, %v8197
        %v8230 = vadd.f32 %v7973, %v8198
        %v8231 = vadd.f32 %v7974, %v8199
        %v8232 = vadd.f32 %v7975, %v8200
        %v8233 = vadd.f32 %v7976, %v8201
        %v8234 = vadd.f32 %v7977, %v8202
        %v8235 = vadd.f32 %v7978, %v8203
        %8236 = vst [vmem:[%s406] sm:$0xff] %v8204
        %8237 = vst [vmem:[%s406 + $0x8] sm:$0xff] %v8205
        %8238 = vst [vmem:[%s406 + $0x10] sm:$0xff] %v8206
        %8239 = vst [vmem:[%s406 + $0x18] sm:$0xff] %v8207
        %8240 = vst [vmem:[%s406 + $0x20] sm:$0xff] %v8208
        %8241 = vst [vmem:[%s406 + $0x28] sm:$0xff] %v8209
        %8242 = vst [vmem:[%s406 + $0x30] sm:$0xff] %v8210
        %8243 = vst [vmem:[%s406 + $0x38] sm:$0xff] %v8211
        %8244 = vst [vmem:[%s406 + $0x40] sm:$0xff] %v8212
        %8245 = vst [vmem:[%s406 + $0x48] sm:$0xff] %v8213
        %8246 = vst [vmem:[%s406 + $0x50] sm:$0xff] %v8214
        %8247 = vst [vmem:[%s406 + $0x58] sm:$0xff] %v8215
        %8248 = vst [vmem:[%s406 + $0x60] sm:$0xff] %v8216
        %8249 = vst [vmem:[%s406 + $0x68] sm:$0xff] %v8217
        %8250 = vst [vmem:[%s406 + $0x70] sm:$0xff] %v8218
        %8251 = vst [vmem:[%s406 + $0x78] sm:$0xff] %v8219
        %8252 = vst [vmem:[%s406 + $0x80] sm:$0xff] %v8220
        %8253 = vst [vmem:[%s406 + $0x88] sm:$0xff] %v8221
        %8254 = vst [vmem:[%s406 + $0x90] sm:$0xff] %v8222
        %8255 = vst [vmem:[%s406 + $0x98] sm:$0xff] %v8223
        %8256 = vst [vmem:[%s406 + $0xa0] sm:$0xff] %v8224
        %8257 = vst [vmem:[%s406 + $0xa8] sm:$0xff] %v8225
        %8258 = vst [vmem:[%s406 + $0xb0] sm:$0xff] %v8226
        %8259 = vst [vmem:[%s406 + $0xb8] sm:$0xff] %v8227
        %8260 = vst [vmem:[%s406 + $0xc0] sm:$0xff] %v8228
        %8261 = vst [vmem:[%s406 + $0xc8] sm:$0xff] %v8229
        %8262 = vst [vmem:[%s406 + $0xd0] sm:$0xff] %v8230
        %8263 = vst [vmem:[%s406 + $0xd8] sm:$0xff] %v8231
        %8264 = vst [vmem:[%s406 + $0xe0] sm:$0xff] %v8232
        %8265 = vst [vmem:[%s406 + $0xe8] sm:$0xff] %v8233
        %8266 = vst [vmem:[%s406 + $0xf0] sm:$0xff] %v8234
        %8267 = vst [vmem:[%s406 + $0xf8] sm:$0xff] %v8235
        %s8268 = sand.u32 %s251, 1
        %s8269 = scalar_lea.sflag [#allocation8], %s8268
        %s8270 = sand.u32 %s251, 1
        %s8271 = smul.addr %s8270, 256
        %s8272 = scalar_lea.vmem [#allocation12], %s8271
        // Predicated region
        $region73: #{tpu_custom_call.1} parent=59 // pred_check
          %p8273 = pneg %p261
        $region74: #{tpu_custom_call.1} parent=59 // pred_check_branch
          %8275 = sbr.rel (%p8273) target = $region76
        $region75: #{tpu_custom_call.1} parent=59 // pred_region
          %s8277 = ssub.s32 4096, 4096
          %8278 = vsyncadd %s8269, %s8277
          %s8279 = smul.addr %s28, 32
          %s8280 = smul.addr %s8279, 128
          %s8281 = scalar_lea.hbm %s10, %s8280
          %s8282 = sshll.u32 %s8272, 4
          %s8283 = int_to_ptr.vmem [resolvable:$true] %s8282
          %8288 = dma.vmem_to_hbm [thread:$0]  %s8283, 4096, %s8281, %s8269, 128, 128, 8
        $region76: #{tpu_custom_call.1} parent=59 // pred_fallthru
          _
      $region60: #{tpu_custom_call.1} parent=5 // pred_fallthru
        _
      %p8289 = scmp.le.s32.totalorder 2, %s23
      // Predicated region
      $region77: #{tpu_custom_call.1} parent=5 // pred_check
        %p8290 = pneg %p8289
      $region78: #{tpu_custom_call.1} parent=5 // pred_check_branch
        %8292 = sbr.rel (%p8290) target = $region80
      $region79: #{tpu_custom_call.1} parent=5 // pred_region
        %s8293 = ssub.s32 %s23, 2
        // Predicated region
        $region81: #{tpu_custom_call.1} parent=79 // pred_check
          %p8294 = pneg %p267
        $region82: #{tpu_custom_call.1} parent=79 // pred_check_branch
          %8296 = sbr.rel (%p8294) target = $region84
        $region83: #{tpu_custom_call.1} parent=79 // pred_region
          %s8297 = sand.u32 %s252, 1
          %s8298 = scalar_lea.sflag [#allocation8], %s8297
          %s8299 = sand.u32 %s252, 1
          %s8300 = smul.addr %s8299, 256
          %s8301 = scalar_lea.vmem [#allocation12], %s8300
          %8302 = dma.done %s8298, 4096
        $region84: #{tpu_custom_call.1} parent=79 // pred_fallthru
          _
      $region80: #{tpu_custom_call.1} parent=5 // pred_fallthru
        _
    $region6: #{tpu_custom_call.1} parent=1 // loop_footer
      %s27 = sadd.s32 1, %s23
    $region7: #{tpu_custom_call.1} parent=1 // loop_footer_branch
      %22 = sbr.rel target = $region3
    $region8: #{tpu_custom_call.1} parent=1 // loop_exit
      _
    %8303 = vsyncpa [#allocation7], 1
    %s8304 = scalar_lea.sflag [#allocation7], 1
    %8305 = vsyncpa %s8304, 1
    %8306 = vsyncpa [#allocation10], 1
    %8307 = vsyncpa [#allocation8], 1
    %s8308 = scalar_lea.sflag [#allocation8], 1
    %8309 = vsyncpa %s8308, 1

</llo_original>
